<compile_context>
chip_gen: v7x
topology: tpu7x:2x2x1
jax: 0.10.0
libtpu: 0.0.40
codegen_flags: <defaults>
</compile_context>

<pallas_src>
import functools

import jax
import jax.numpy as jnp
from jax.experimental import pallas as pl
from jax.experimental.pallas import tpu as pltpu  # noqa: F401  (TPU backend)


# ----------------------------------------------------------------------------
# Fused Pallas kernel: whole STGCN forward, whole batch, VMEM-resident
# ----------------------------------------------------------------------------
def _stgcn_kernel(x_ref, a1_ref, a2_ref,
                  w1a_ref, b1a_ref, th1_ref, bc1_ref, w1b_ref, b1b_ref,
                  w2a_ref, b2a_ref, th2_ref, bc2_ref, w2b_ref, b2b_ref,
                  lw_ref, lb_ref, o_ref, *, B, V, C, Kt, Kg, T):
    f32 = jnp.float32

    def gated_tconv(h4, Tin, Cin, wa_ref, ba_ref):
        """relu(P * sigmoid(Q) + R) with all Kt taps merged into one GEMM."""
        T1 = Tin - Kt + 1
        n = B * T1 * V
        taps = [h4[:, k:k + T1].reshape(n, Cin) for k in range(Kt)]
        xc = jnp.concatenate(taps, axis=-1)                    # (n, Kt*Cin)
        acc = jnp.dot(xc, wa_ref[...],
                      preferred_element_type=f32) + ba_ref[...]
        p, q, r = acc[:, :C], acc[:, C:2 * C], acc[:, 2 * C:]
        gate = 1.0 / (1.0 + jnp.exp(-q))       # exp rides the EUP slot
        return jnp.maximum(p * gate + r, 0.0), T1              # (n, C)

    def cheb_relu(h, a_ref, th_ref, bc_ref):
        """Chebyshev conv: one 2-D GEMM per hop (A = kron(I, L_hat)), then one
        combined K = Kg*C GEMM against the stacked thetas, then ReLU."""
        txs = [h]
        if Kg > 1:
            tx0 = h
            tx1 = jnp.dot(a_ref[...], h, preferred_element_type=f32)
            txs.append(tx1)
            for _ in range(2, Kg):
                tx2 = 2.0 * jnp.dot(a_ref[...], tx1,
                                    preferred_element_type=f32) - tx0
                txs.append(tx2)
                tx0, tx1 = tx1, tx2
        stacked = jnp.concatenate(txs, axis=-1)                 # (n, Kg*C)
        out = jnp.dot(stacked, th_ref[...],
                      preferred_element_type=f32) + bc_ref[...]
        return jnp.maximum(out, 0.0)                            # (n, C)

    def batch_norm_nodes(h, Tcur):
        """BatchNorm2d(num_nodes), training-mode stats over (B, Tcur, C)."""
        h4 = h.reshape(B, Tcur, V, C)
        inv_cnt = 1.0 / float(B * Tcur * C)
        s = jnp.sum(jnp.sum(h4, axis=0), axis=0)                # (V, C)
        mean = (jnp.sum(s, axis=1, keepdims=True) * inv_cnt)[None, None]
        d = h4 - mean                                           # (B,Tcur,V,C)
        s2 = jnp.sum(jnp.sum(d * d, axis=0), axis=0)
        var = (jnp.sum(s2, axis=1, keepdims=True) * inv_cnt)[None, None]
        return d * jax.lax.rsqrt(var + 1e-5)                    # (B,Tcur,V,C)

    def st_block(h4, Tin, Cin, a_ref, wa, ba, th, bc, wb, bb):
        h1, T1 = gated_tconv(h4, Tin, Cin, wa, ba)              # (B*T1*V, C)
        g = cheb_relu(h1, a_ref, th, bc)                        # (B*T1*V, C)
        h2, T2 = gated_tconv(g.reshape(B, T1, V, C), T1, C, wb, bb)
        return batch_norm_nodes(h2, T2), T2                     # (B,T2,V,C)

    x = x_ref[...]                                              # (B, T, V, F)
    h, Ta = st_block(x, T, x.shape[3], a1_ref,
                     w1a_ref, b1a_ref, th1_ref, bc1_ref, w1b_ref, b1b_ref)
    h, Tb = st_block(h, Ta, C, a2_ref,
                     w2a_ref, b2a_ref, th2_ref, bc2_ref, w2b_ref, b2b_ref)

    # head: permute(0,2,1,3) + flatten(2,3) + Linear == one K = Tb*C GEMM
    feats = jnp.concatenate([h[:, t].reshape(B * V, C) for t in range(Tb)],
                            axis=-1)                            # (B*V, Tb*C)
    y = jnp.dot(feats, lw_ref[...],
                preferred_element_type=f32) + lb_ref[...]       # (B*V, npad)
    o_ref[...] = y.reshape(o_ref.shape)


# ----------------------------------------------------------------------------
# Model glue (Laplacian, parameters, forward wrapper)
# ----------------------------------------------------------------------------
def build_scaled_laplacian(edge_index, edge_weight, num_nodes):
    """ChebConv 'sym' normalization with lambda_max = 2.0:
       L_hat = (2/lambda_max)*(I - D^-1/2 A D^-1/2) - I = -D^-1/2 A D^-1/2."""
    src, dst = edge_index[0], edge_index[1]
    deg = jnp.zeros((num_nodes,), jnp.float32).at[src].add(edge_weight)
    dinv = jnp.where(deg > 0, 1.0 / jnp.sqrt(deg), 0.0)
    norm = dinv[src] * edge_weight * dinv[dst]
    return jnp.zeros((num_nodes, num_nodes), jnp.float32).at[dst, src].add(-norm)


def _uniform(key, shape, bound):
    return jax.random.uniform(key, shape, jnp.float32, -bound, bound)


def init_stconv_params(key, Cin, C, Kt, Kg):
    ks = jax.random.split(key, 5)
    b1 = 1.0 / jnp.sqrt(Cin * Kt)
    b2 = 1.0 / jnp.sqrt(C * Kt)
    glorot = jnp.sqrt(6.0 / (C + C))
    return {
        "tc1_w": _uniform(ks[0], (Kt, Cin, 3 * C), b1),   # fused [P|Q|R] taps
        "tc1_b": _uniform(ks[1], (1, 3 * C), b1),
        "cheb_theta": _uniform(ks[2], (Kg, C, C), glorot),
        "cheb_bias": jnp.zeros((1, C), jnp.float32),
        "tc2_w": _uniform(ks[3], (Kt, C, 3 * C), b2),
        "tc2_b": _uniform(ks[4], (1, 3 * C), b2),
    }


def init_params(key, Fin, C, Kt, Kg):
    k1, k2, k3, k4 = jax.random.split(key, 4)
    bl = 1.0 / jnp.sqrt(4 * C)
    return {
        "st1": init_stconv_params(k1, Fin, C, Kt, Kg),
        "st2": init_stconv_params(k2, C, C, Kt, Kg),
        "lin_w": _uniform(k3, (4 * C, 12), bl),           # stored as W^T
        "lin_b": _uniform(k4, (1, 12), bl),
    }


def stgcn_forward(params, x, edge_index, edge_weight, *, Kt, Kg, C):
    # x: (B, V, F, T)  ->  (B, T, V, F)   (matches torch.permute(x, (0,3,1,2)))
    B, V, Fin, T = x.shape
    X = jnp.transpose(x, (0, 3, 1, 2)).astype(jnp.float32)
    L = build_scaled_laplacian(edge_index, edge_weight, V)

    T1a = T - (Kt - 1); T2a = T1a - (Kt - 1)
    T1b = T2a - (Kt - 1); T2b = T1b - (Kt - 1)
    assert T2b >= 1 and params["lin_w"].shape[0] == T2b * C, \
        "Linear head expects T_out*C input features"

    # Block-diagonal kron(I_{B*T1}, L_hat): lets the kernel apply L_hat to
    # every (batch, time) snapshot with a single 2-D MXU GEMM per hop.
    A1 = jnp.kron(jnp.eye(B * T1a, dtype=jnp.float32), L)
    A2 = jnp.kron(jnp.eye(B * T1b, dtype=jnp.float32), L)

    p1, p2 = params["st1"], params["st2"]
    n_out = params["lin_w"].shape[1]
    npad = pl.cdiv(n_out, 128) * 128          # lane-dense (unmasked) head store
    lw = jnp.pad(params["lin_w"], ((0, 0), (0, npad - n_out)))
    lb = jnp.pad(params["lin_b"], ((0, 0), (0, npad - n_out)))

    out = pl.pallas_call(
        functools.partial(_stgcn_kernel, B=B, V=V, C=C, Kt=Kt, Kg=Kg, T=T),
        out_shape=jax.ShapeDtypeStruct((B, V, npad), jnp.float32),
    )(X, A1, A2,
      p1["tc1_w"].reshape(Kt * Fin, 3 * C), p1["tc1_b"],
      p1["cheb_theta"].reshape(Kg * C, C), p1["cheb_bias"],
      p1["tc2_w"].reshape(Kt * C, 3 * C), p1["tc2_b"],
      p2["tc1_w"].reshape(Kt * C, 3 * C), p2["tc1_b"],
      p2["cheb_theta"].reshape(Kg * C, C), p2["cheb_bias"],
      p2["tc2_w"].reshape(Kt * C, 3 * C), p2["tc2_b"],
      lw, lb)
    return out[:, :, :n_out]


# ----------------------------------------------------------------------------
if __name__ == "__main__":
    # num_nodes V=16, num_features F=4, hidden C=32, Kt=3, Kg=3.
    # Linear(4*C -> 12) requires T - 4*(Kt-1) = 4  ->  T = 12.
    B, V, F, T = 2, 16, 4, 12
    C, Kt, Kg = 32, 3, 3

    root = jax.random.PRNGKey(0)
    kx, kw, kp = jax.random.split(root, 3)

    x = jax.random.normal(kx, (B, V, F, T), jnp.float32)

    # deterministic undirected ring graph on V nodes
    src = jnp.arange(V, dtype=jnp.int32)
    dst = (src + 1) % V
    edge_index = jnp.concatenate(
        [jnp.stack([src, dst]), jnp.stack([dst, src])], axis=1)   # (2, 2V)
    w_half = 0.5 + jax.random.uniform(kw, (V,), jnp.float32)
    edge_weight = jnp.concatenate([w_half, w_half])               # symmetric

    params = init_params(kp, F, C, Kt, Kg)

    fwd = jax.jit(functools.partial(stgcn_forward, Kt=Kt, Kg=Kg, C=C))
    out = jax.block_until_ready(fwd(params, x, edge_index, edge_weight))
    assert out.shape == (B, V, 12), out.shape
    assert bool(jnp.all(jnp.isfinite(out)))
    print("KERNEL_OK")
</pallas_src>

<mosaic_0001>
module attributes {stable_mosaic.version = 11 : i64} {
  func.func private @main(%arg0: i32) attributes {dimension_semantics = [#tpu.dimension_semantics<core_parallel>], iteration_bounds = array<i64: 2>, tpu.core_type = #tpu.core_type<sc_scalar_subcore>, window_params = []} {
    return
  }
}

module attributes {stable_mosaic.version = 11 : i64} {
  func.func private @main(%arg0: i32) attributes {dimension_semantics = [#tpu.dimension_semantics<core_parallel>], iteration_bounds = array<i64: 2>, tpu.core_type = #tpu.core_type<sc_scalar_subcore>, window_params = []} {
    return
  }
}

module attributes {stable_mosaic.version = 11 : i64} {
  func.func @_stgcn_kernel(%arg0: memref<2x12x16x4xf32, #tpu.memory_space<vmem>>, %arg1: memref<320x320xf32, #tpu.memory_space<vmem>>, %arg2: memref<192x192xf32, #tpu.memory_space<vmem>>, %arg3: memref<12x96xf32, #tpu.memory_space<vmem>>, %arg4: memref<1x96xf32, #tpu.memory_space<vmem>>, %arg5: memref<96x32xf32, #tpu.memory_space<vmem>>, %arg6: memref<1x32xf32, #tpu.memory_space<vmem>>, %arg7: memref<96x96xf32, #tpu.memory_space<vmem>>, %arg8: memref<1x96xf32, #tpu.memory_space<vmem>>, %arg9: memref<96x96xf32, #tpu.memory_space<vmem>>, %arg10: memref<1x96xf32, #tpu.memory_space<vmem>>, %arg11: memref<96x32xf32, #tpu.memory_space<vmem>>, %arg12: memref<1x32xf32, #tpu.memory_space<vmem>>, %arg13: memref<96x96xf32, #tpu.memory_space<vmem>>, %arg14: memref<1x96xf32, #tpu.memory_space<vmem>>, %arg15: memref<128x128xf32, #tpu.memory_space<vmem>>, %arg16: memref<1x128xf32, #tpu.memory_space<vmem>>, %arg17: memref<2x16x128xf32, #tpu.memory_space<vmem>>) attributes {dimension_semantics = [], scalar_prefetch = 0 : i64, scratch_operands = 0 : i64, tpu.core_type = #tpu.core_type<tc>} {
    %c0 = arith.constant 0 : index
    %c0_0 = arith.constant 0 : index
    %c0_1 = arith.constant 0 : index
    %c0_2 = arith.constant 0 : index
    %0 = vector.load %arg0[%c0, %c0_0, %c0_1, %c0_2] : memref<2x12x16x4xf32, #tpu.memory_space<vmem>>, vector<2x12x16x4xf32>
    %1 = vector.extract_strided_slice %0 {offsets = [0, 0, 0, 0], sizes = [2, 10, 16, 4], strides = [1, 1, 1, 1]} : vector<2x12x16x4xf32> to vector<2x10x16x4xf32>
    %2 = vector.shape_cast %1 : vector<2x10x16x4xf32> to vector<320x4xf32>
    %3 = vector.extract_strided_slice %0 {offsets = [0, 1, 0, 0], sizes = [2, 10, 16, 4], strides = [1, 1, 1, 1]} : vector<2x12x16x4xf32> to vector<2x10x16x4xf32>
    %4 = vector.shape_cast %3 : vector<2x10x16x4xf32> to vector<320x4xf32>
    %5 = vector.extract_strided_slice %0 {offsets = [0, 2, 0, 0], sizes = [2, 10, 16, 4], strides = [1, 1, 1, 1]} : vector<2x12x16x4xf32> to vector<2x10x16x4xf32>
    %6 = vector.shape_cast %5 : vector<2x10x16x4xf32> to vector<320x4xf32>
    %7 = tpu.concatenate %2, %4, %6 in 1 : vector<320x4xf32>, vector<320x4xf32>, vector<320x4xf32> -> vector<320x12xf32>
    %c0_3 = arith.constant 0 : index
    %c0_4 = arith.constant 0 : index
    %8 = vector.load %arg3[%c0_3, %c0_4] : memref<12x96xf32, #tpu.memory_space<vmem>>, vector<12x96xf32>
    %cst = arith.constant dense<0.000000e+00> : vector<320x96xf32>
    %9 = tpu.matmul %7, %8, %cst {dimension_numbers = #tpu.dot_dimension_numbers<[1], [0], [0], [1], [0, 0, 1, 1], [], []>} : vector<320x12xf32>, vector<12x96xf32>, vector<320x96xf32> -> vector<320x96xf32>
    %c0_5 = arith.constant 0 : index
    %c0_6 = arith.constant 0 : index
    %10 = vector.load %arg4[%c0_5, %c0_6] : memref<1x96xf32, #tpu.memory_space<vmem>>, vector<1x96xf32>
    %11 = vector.broadcast %10 : vector<1x96xf32> to vector<320x96xf32>
    %12 = arith.addf %9, %11 : vector<320x96xf32>
    %13 = vector.extract_strided_slice %12 {offsets = [0, 0], sizes = [320, 32], strides = [1, 1]} : vector<320x96xf32> to vector<320x32xf32>
    %14 = vector.extract_strided_slice %12 {offsets = [0, 32], sizes = [320, 32], strides = [1, 1]} : vector<320x96xf32> to vector<320x32xf32>
    %15 = vector.extract_strided_slice %12 {offsets = [0, 64], sizes = [320, 32], strides = [1, 1]} : vector<320x96xf32> to vector<320x32xf32>
    %cst_7 = arith.constant 0.000000e+00 : f32
    %16 = vector.broadcast %cst_7 : f32 to vector<320x32xf32>
    %17 = arith.subf %16, %14 : vector<320x32xf32>
    %18 = math.exp %17 : vector<320x32xf32>
    %cst_8 = arith.constant 1.000000e+00 : f32
    %19 = vector.broadcast %cst_8 : f32 to vector<320x32xf32>
    %20 = arith.addf %19, %18 : vector<320x32xf32>
    %cst_9 = arith.constant 1.000000e+00 : f32
    %21 = vector.broadcast %cst_9 : f32 to vector<320x32xf32>
    %22 = arith.divf %21, %20 : vector<320x32xf32>
    %23 = arith.mulf %13, %22 : vector<320x32xf32>
    %24 = arith.addf %23, %15 : vector<320x32xf32>
    %cst_10 = arith.constant 0.000000e+00 : f32
    %25 = vector.broadcast %cst_10 : f32 to vector<320x32xf32>
    %26 = arith.maximumf %24, %25 : vector<320x32xf32>
    %c0_11 = arith.constant 0 : index
    %c0_12 = arith.constant 0 : index
    %27 = vector.load %arg1[%c0_11, %c0_12] : memref<320x320xf32, #tpu.memory_space<vmem>>, vector<320x320xf32>
    %cst_13 = arith.constant dense<0.000000e+00> : vector<320x32xf32>
    %28 = tpu.matmul %27, %26, %cst_13 {dimension_numbers = #tpu.dot_dimension_numbers<[1], [0], [0], [1], [0, 0, 1, 1], [], []>} : vector<320x320xf32>, vector<320x32xf32>, vector<320x32xf32> -> vector<320x32xf32>
    %c0_14 = arith.constant 0 : index
    %c0_15 = arith.constant 0 : index
    %29 = vector.load %arg1[%c0_14, %c0_15] : memref<320x320xf32, #tpu.memory_space<vmem>>, vector<320x320xf32>
    %cst_16 = arith.constant dense<0.000000e+00> : vector<320x32xf32>
    %30 = tpu.matmul %29, %28, %cst_16 {dimension_numbers = #tpu.dot_dimension_numbers<[1], [0], [0], [1], [0, 0, 1, 1], [], []>} : vector<320x320xf32>, vector<320x32xf32>, vector<320x32xf32> -> vector<320x32xf32>
    %cst_17 = arith.constant 2.000000e+00 : f32
    %31 = vector.broadcast %cst_17 : f32 to vector<320x32xf32>
    %32 = arith.mulf %31, %30 : vector<320x32xf32>
    %33 = arith.subf %32, %26 : vector<320x32xf32>
    %34 = tpu.concatenate %26, %28, %33 in 1 : vector<320x32xf32>, vector<320x32xf32>, vector<320x32xf32> -> vector<320x96xf32>
    %c0_18 = arith.constant 0 : index
    %c0_19 = arith.constant 0 : index
    %35 = vector.load %arg5[%c0_18, %c0_19] : memref<96x32xf32, #tpu.memory_space<vmem>>, vector<96x32xf32>
    %cst_20 = arith.constant dense<0.000000e+00> : vector<320x32xf32>
    %36 = tpu.matmul %34, %35, %cst_20 {dimension_numbers = #tpu.dot_dimension_numbers<[1], [0], [0], [1], [0, 0, 1, 1], [], []>} : vector<320x96xf32>, vector<96x32xf32>, vector<320x32xf32> -> vector<320x32xf32>
    %c0_21 = arith.constant 0 : index
    %c0_22 = arith.constant 0 : index
    %37 = vector.load %arg6[%c0_21, %c0_22] : memref<1x32xf32, #tpu.memory_space<vmem>>, vector<1x32xf32>
    %38 = vector.broadcast %37 : vector<1x32xf32> to vector<320x32xf32>
    %39 = arith.addf %36, %38 : vector<320x32xf32>
    %cst_23 = arith.constant 0.000000e+00 : f32
    %40 = vector.broadcast %cst_23 : f32 to vector<320x32xf32>
    %41 = arith.maximumf %39, %40 : vector<320x32xf32>
    %42 = vector.shape_cast %41 : vector<320x32xf32> to vector<2x10x16x32xf32>
    %43 = vector.extract_strided_slice %42 {offsets = [0, 0, 0, 0], sizes = [2, 8, 16, 32], strides = [1, 1, 1, 1]} : vector<2x10x16x32xf32> to vector<2x8x16x32xf32>
    %44 = vector.shape_cast %43 : vector<2x8x16x32xf32> to vector<256x32xf32>
    %45 = vector.extract_strided_slice %42 {offsets = [0, 1, 0, 0], sizes = [2, 8, 16, 32], strides = [1, 1, 1, 1]} : vector<2x10x16x32xf32> to vector<2x8x16x32xf32>
    %46 = vector.shape_cast %45 : vector<2x8x16x32xf32> to vector<256x32xf32>
    %47 = vector.extract_strided_slice %42 {offsets = [0, 2, 0, 0], sizes = [2, 8, 16, 32], strides = [1, 1, 1, 1]} : vector<2x10x16x32xf32> to vector<2x8x16x32xf32>
    %48 = vector.shape_cast %47 : vector<2x8x16x32xf32> to vector<256x32xf32>
    %49 = tpu.concatenate %44, %46, %48 in 1 : vector<256x32xf32>, vector<256x32xf32>, vector<256x32xf32> -> vector<256x96xf32>
    %c0_24 = arith.constant 0 : index
    %c0_25 = arith.constant 0 : index
    %50 = vector.load %arg7[%c0_24, %c0_25] : memref<96x96xf32, #tpu.memory_space<vmem>>, vector<96x96xf32>
    %cst_26 = arith.constant dense<0.000000e+00> : vector<256x96xf32>
    %51 = tpu.matmul %49, %50, %cst_26 {dimension_numbers = #tpu.dot_dimension_numbers<[1], [0], [0], [1], [0, 0, 1, 1], [], []>} : vector<256x96xf32>, vector<96x96xf32>, vector<256x96xf32> -> vector<256x96xf32>
    %c0_27 = arith.constant 0 : index
    %c0_28 = arith.constant 0 : index
    %52 = vector.load %arg8[%c0_27, %c0_28] : memref<1x96xf32, #tpu.memory_space<vmem>>, vector<1x96xf32>
    %53 = vector.broadcast %52 : vector<1x96xf32> to vector<256x96xf32>
    %54 = arith.addf %51, %53 : vector<256x96xf32>
    %55 = vector.extract_strided_slice %54 {offsets = [0, 0], sizes = [256, 32], strides = [1, 1]} : vector<256x96xf32> to vector<256x32xf32>
    %56 = vector.extract_strided_slice %54 {offsets = [0, 32], sizes = [256, 32], strides = [1, 1]} : vector<256x96xf32> to vector<256x32xf32>
    %57 = vector.extract_strided_slice %54 {offsets = [0, 64], sizes = [256, 32], strides = [1, 1]} : vector<256x96xf32> to vector<256x32xf32>
    %cst_29 = arith.constant 0.000000e+00 : f32
    %58 = vector.broadcast %cst_29 : f32 to vector<256x32xf32>
    %59 = arith.subf %58, %56 : vector<256x32xf32>
    %60 = math.exp %59 : vector<256x32xf32>
    %cst_30 = arith.constant 1.000000e+00 : f32
    %61 = vector.broadcast %cst_30 : f32 to vector<256x32xf32>
    %62 = arith.addf %61, %60 : vector<256x32xf32>
    %cst_31 = arith.constant 1.000000e+00 : f32
    %63 = vector.broadcast %cst_31 : f32 to vector<256x32xf32>
    %64 = arith.divf %63, %62 : vector<256x32xf32>
    %65 = arith.mulf %55, %64 : vector<256x32xf32>
    %66 = arith.addf %65, %57 : vector<256x32xf32>
    %cst_32 = arith.constant 0.000000e+00 : f32
    %67 = vector.broadcast %cst_32 : f32 to vector<256x32xf32>
    %68 = arith.maximumf %66, %67 : vector<256x32xf32>
    %69 = vector.shape_cast %68 : vector<256x32xf32> to vector<2x8x16x32xf32>
    %cst_33 = arith.constant dense<0.000000e+00> : vector<8x16x32xf32>
    %70 = vector.multi_reduction <add>, %69, %cst_33 [0] : vector<2x8x16x32xf32> to vector<8x16x32xf32>
    %cst_34 = arith.constant dense<0.000000e+00> : vector<16x32xf32>
    %71 = vector.multi_reduction <add>, %70, %cst_34 [0] : vector<8x16x32xf32> to vector<16x32xf32>
    %cst_35 = arith.constant dense<0.000000e+00> : vector<16xf32>
    %72 = vector.multi_reduction <add>, %71, %cst_35 [1] : vector<16x32xf32> to vector<16xf32>
    %73 = vector.shape_cast %72 : vector<16xf32> to vector<16x1xf32>
    %cst_36 = arith.constant 0.001953125 : f32
    %74 = vector.broadcast %cst_36 : f32 to vector<16x1xf32>
    %75 = arith.mulf %73, %74 : vector<16x1xf32>
    %76 = vector.shape_cast %75 : vector<16x1xf32> to vector<1x1x16x1xf32>
    %77 = vector.broadcast %76 : vector<1x1x16x1xf32> to vector<2x8x16x32xf32>
    %78 = arith.subf %69, %77 : vector<2x8x16x32xf32>
    %79 = arith.mulf %78, %78 : vector<2x8x16x32xf32>
    %cst_37 = arith.constant dense<0.000000e+00> : vector<8x16x32xf32>
    %80 = vector.multi_reduction <add>, %79, %cst_37 [0] : vector<2x8x16x32xf32> to vector<8x16x32xf32>
    %cst_38 = arith.constant dense<0.000000e+00> : vector<16x32xf32>
    %81 = vector.multi_reduction <add>, %80, %cst_38 [0] : vector<8x16x32xf32> to vector<16x32xf32>
    %cst_39 = arith.constant dense<0.000000e+00> : vector<16xf32>
    %82 = vector.multi_reduction <add>, %81, %cst_39 [1] : vector<16x32xf32> to vector<16xf32>
    %83 = vector.shape_cast %82 : vector<16xf32> to vector<16x1xf32>
    %cst_40 = arith.constant 0.001953125 : f32
    %84 = vector.broadcast %cst_40 : f32 to vector<16x1xf32>
    %85 = arith.mulf %83, %84 : vector<16x1xf32>
    %86 = vector.shape_cast %85 : vector<16x1xf32> to vector<1x1x16x1xf32>
    %cst_41 = arith.constant 9.99999974E-6 : f32
    %87 = vector.broadcast %cst_41 : f32 to vector<1x1x16x1xf32>
    %88 = arith.addf %86, %87 : vector<1x1x16x1xf32>
    %89 = math.rsqrt %88 : vector<1x1x16x1xf32>
    %90 = vector.broadcast %89 : vector<1x1x16x1xf32> to vector<2x8x16x32xf32>
    %91 = arith.mulf %78, %90 : vector<2x8x16x32xf32>
    %92 = vector.extract_strided_slice %91 {offsets = [0, 0, 0, 0], sizes = [2, 6, 16, 32], strides = [1, 1, 1, 1]} : vector<2x8x16x32xf32> to vector<2x6x16x32xf32>
    %93 = vector.shape_cast %92 : vector<2x6x16x32xf32> to vector<192x32xf32>
    %94 = vector.extract_strided_slice %91 {offsets = [0, 1, 0, 0], sizes = [2, 6, 16, 32], strides = [1, 1, 1, 1]} : vector<2x8x16x32xf32> to vector<2x6x16x32xf32>
    %95 = vector.shape_cast %94 : vector<2x6x16x32xf32> to vector<192x32xf32>
    %96 = vector.extract_strided_slice %91 {offsets = [0, 2, 0, 0], sizes = [2, 6, 16, 32], strides = [1, 1, 1, 1]} : vector<2x8x16x32xf32> to vector<2x6x16x32xf32>
    %97 = vector.shape_cast %96 : vector<2x6x16x32xf32> to vector<192x32xf32>
    %98 = tpu.concatenate %93, %95, %97 in 1 : vector<192x32xf32>, vector<192x32xf32>, vector<192x32xf32> -> vector<192x96xf32>
    %c0_42 = arith.constant 0 : index
    %c0_43 = arith.constant 0 : index
    %99 = vector.load %arg9[%c0_42, %c0_43] : memref<96x96xf32, #tpu.memory_space<vmem>>, vector<96x96xf32>
    %cst_44 = arith.constant dense<0.000000e+00> : vector<192x96xf32>
    %100 = tpu.matmul %98, %99, %cst_44 {dimension_numbers = #tpu.dot_dimension_numbers<[1], [0], [0], [1], [0, 0, 1, 1], [], []>} : vector<192x96xf32>, vector<96x96xf32>, vector<192x96xf32> -> vector<192x96xf32>
    %c0_45 = arith.constant 0 : index
    %c0_46 = arith.constant 0 : index
    %101 = vector.load %arg10[%c0_45, %c0_46] : memref<1x96xf32, #tpu.memory_space<vmem>>, vector<1x96xf32>
    %102 = vector.broadcast %101 : vector<1x96xf32> to vector<192x96xf32>
    %103 = arith.addf %100, %102 : vector<192x96xf32>
    %104 = vector.extract_strided_slice %103 {offsets = [0, 0], sizes = [192, 32], strides = [1, 1]} : vector<192x96xf32> to vector<192x32xf32>
    %105 = vector.extract_strided_slice %103 {offsets = [0, 32], sizes = [192, 32], strides = [1, 1]} : vector<192x96xf32> to vector<192x32xf32>
    %106 = vector.extract_strided_slice %103 {offsets = [0, 64], sizes = [192, 32], strides = [1, 1]} : vector<192x96xf32> to vector<192x32xf32>
    %cst_47 = arith.constant 0.000000e+00 : f32
    %107 = vector.broadcast %cst_47 : f32 to vector<192x32xf32>
    %108 = arith.subf %107, %105 : vector<192x32xf32>
    %109 = math.exp %108 : vector<192x32xf32>
    %cst_48 = arith.constant 1.000000e+00 : f32
    %110 = vector.broadcast %cst_48 : f32 to vector<192x32xf32>
    %111 = arith.addf %110, %109 : vector<192x32xf32>
    %cst_49 = arith.constant 1.000000e+00 : f32
    %112 = vector.broadcast %cst_49 : f32 to vector<192x32xf32>
    %113 = arith.divf %112, %111 : vector<192x32xf32>
    %114 = arith.mulf %104, %113 : vector<192x32xf32>
    %115 = arith.addf %114, %106 : vector<192x32xf32>
    %cst_50 = arith.constant 0.000000e+00 : f32
    %116 = vector.broadcast %cst_50 : f32 to vector<192x32xf32>
    %117 = arith.maximumf %115, %116 : vector<192x32xf32>
    %c0_51 = arith.constant 0 : index
    %c0_52 = arith.constant 0 : index
    %118 = vector.load %arg2[%c0_51, %c0_52] : memref<192x192xf32, #tpu.memory_space<vmem>>, vector<192x192xf32>
    %cst_53 = arith.constant dense<0.000000e+00> : vector<192x32xf32>
    %119 = tpu.matmul %118, %117, %cst_53 {dimension_numbers = #tpu.dot_dimension_numbers<[1], [0], [0], [1], [0, 0, 1, 1], [], []>} : vector<192x192xf32>, vector<192x32xf32>, vector<192x32xf32> -> vector<192x32xf32>
    %c0_54 = arith.constant 0 : index
    %c0_55 = arith.constant 0 : index
    %120 = vector.load %arg2[%c0_54, %c0_55] : memref<192x192xf32, #tpu.memory_space<vmem>>, vector<192x192xf32>
    %cst_56 = arith.constant dense<0.000000e+00> : vector<192x32xf32>
    %121 = tpu.matmul %120, %119, %cst_56 {dimension_numbers = #tpu.dot_dimension_numbers<[1], [0], [0], [1], [0, 0, 1, 1], [], []>} : vector<192x192xf32>, vector<192x32xf32>, vector<192x32xf32> -> vector<192x32xf32>
    %cst_57 = arith.constant 2.000000e+00 : f32
    %122 = vector.broadcast %cst_57 : f32 to vector<192x32xf32>
    %123 = arith.mulf %122, %121 : vector<192x32xf32>
    %124 = arith.subf %123, %117 : vector<192x32xf32>
    %125 = tpu.concatenate %117, %119, %124 in 1 : vector<192x32xf32>, vector<192x32xf32>, vector<192x32xf32> -> vector<192x96xf32>
    %c0_58 = arith.constant 0 : index
    %c0_59 = arith.constant 0 : index
    %126 = vector.load %arg11[%c0_58, %c0_59] : memref<96x32xf32, #tpu.memory_space<vmem>>, vector<96x32xf32>
    %cst_60 = arith.constant dense<0.000000e+00> : vector<192x32xf32>
    %127 = tpu.matmul %125, %126, %cst_60 {dimension_numbers = #tpu.dot_dimension_numbers<[1], [0], [0], [1], [0, 0, 1, 1], [], []>} : vector<192x96xf32>, vector<96x32xf32>, vector<192x32xf32> -> vector<192x32xf32>
    %c0_61 = arith.constant 0 : index
    %c0_62 = arith.constant 0 : index
    %128 = vector.load %arg12[%c0_61, %c0_62] : memref<1x32xf32, #tpu.memory_space<vmem>>, vector<1x32xf32>
    %129 = vector.broadcast %128 : vector<1x32xf32> to vector<192x32xf32>
    %130 = arith.addf %127, %129 : vector<192x32xf32>
    %cst_63 = arith.constant 0.000000e+00 : f32
    %131 = vector.broadcast %cst_63 : f32 to vector<192x32xf32>
    %132 = arith.maximumf %130, %131 : vector<192x32xf32>
    %133 = vector.shape_cast %132 : vector<192x32xf32> to vector<2x6x16x32xf32>
    %134 = vector.extract_strided_slice %133 {offsets = [0, 0, 0, 0], sizes = [2, 4, 16, 32], strides = [1, 1, 1, 1]} : vector<2x6x16x32xf32> to vector<2x4x16x32xf32>
    %135 = vector.shape_cast %134 : vector<2x4x16x32xf32> to vector<128x32xf32>
    %136 = vector.extract_strided_slice %133 {offsets = [0, 1, 0, 0], sizes = [2, 4, 16, 32], strides = [1, 1, 1, 1]} : vector<2x6x16x32xf32> to vector<2x4x16x32xf32>
    %137 = vector.shape_cast %136 : vector<2x4x16x32xf32> to vector<128x32xf32>
    %138 = vector.extract_strided_slice %133 {offsets = [0, 2, 0, 0], sizes = [2, 4, 16, 32], strides = [1, 1, 1, 1]} : vector<2x6x16x32xf32> to vector<2x4x16x32xf32>
    %139 = vector.shape_cast %138 : vector<2x4x16x32xf32> to vector<128x32xf32>
    %140 = tpu.concatenate %135, %137, %139 in 1 : vector<128x32xf32>, vector<128x32xf32>, vector<128x32xf32> -> vector<128x96xf32>
    %c0_64 = arith.constant 0 : index
    %c0_65 = arith.constant 0 : index
    %141 = vector.load %arg13[%c0_64, %c0_65] : memref<96x96xf32, #tpu.memory_space<vmem>>, vector<96x96xf32>
    %cst_66 = arith.constant dense<0.000000e+00> : vector<128x96xf32>
    %142 = tpu.matmul %140, %141, %cst_66 {dimension_numbers = #tpu.dot_dimension_numbers<[1], [0], [0], [1], [0, 0, 1, 1], [], []>} : vector<128x96xf32>, vector<96x96xf32>, vector<128x96xf32> -> vector<128x96xf32>
    %c0_67 = arith.constant 0 : index
    %c0_68 = arith.constant 0 : index
    %143 = vector.load %arg14[%c0_67, %c0_68] : memref<1x96xf32, #tpu.memory_space<vmem>>, vector<1x96xf32>
    %144 = vector.broadcast %143 : vector<1x96xf32> to vector<128x96xf32>
    %145 = arith.addf %142, %144 : vector<128x96xf32>
    %146 = vector.extract_strided_slice %145 {offsets = [0, 0], sizes = [128, 32], strides = [1, 1]} : vector<128x96xf32> to vector<128x32xf32>
    %147 = vector.extract_strided_slice %145 {offsets = [0, 32], sizes = [128, 32], strides = [1, 1]} : vector<128x96xf32> to vector<128x32xf32>
    %148 = vector.extract_strided_slice %145 {offsets = [0, 64], sizes = [128, 32], strides = [1, 1]} : vector<128x96xf32> to vector<128x32xf32>
    %cst_69 = arith.constant 0.000000e+00 : f32
    %149 = vector.broadcast %cst_69 : f32 to vector<128x32xf32>
    %150 = arith.subf %149, %147 : vector<128x32xf32>
    %151 = math.exp %150 : vector<128x32xf32>
    %cst_70 = arith.constant 1.000000e+00 : f32
    %152 = vector.broadcast %cst_70 : f32 to vector<128x32xf32>
    %153 = arith.addf %152, %151 : vector<128x32xf32>
    %cst_71 = arith.constant 1.000000e+00 : f32
    %154 = vector.broadcast %cst_71 : f32 to vector<128x32xf32>
    %155 = arith.divf %154, %153 : vector<128x32xf32>
    %156 = arith.mulf %146, %155 : vector<128x32xf32>
    %157 = arith.addf %156, %148 : vector<128x32xf32>
    %cst_72 = arith.constant 0.000000e+00 : f32
    %158 = vector.broadcast %cst_72 : f32 to vector<128x32xf32>
    %159 = arith.maximumf %157, %158 : vector<128x32xf32>
    %160 = vector.shape_cast %159 : vector<128x32xf32> to vector<2x4x16x32xf32>
    %cst_73 = arith.constant dense<0.000000e+00> : vector<4x16x32xf32>
    %161 = vector.multi_reduction <add>, %160, %cst_73 [0] : vector<2x4x16x32xf32> to vector<4x16x32xf32>
    %cst_74 = arith.constant dense<0.000000e+00> : vector<16x32xf32>
    %162 = vector.multi_reduction <add>, %161, %cst_74 [0] : vector<4x16x32xf32> to vector<16x32xf32>
    %cst_75 = arith.constant dense<0.000000e+00> : vector<16xf32>
    %163 = vector.multi_reduction <add>, %162, %cst_75 [1] : vector<16x32xf32> to vector<16xf32>
    %164 = vector.shape_cast %163 : vector<16xf32> to vector<16x1xf32>
    %cst_76 = arith.constant 3.906250e-03 : f32
    %165 = vector.broadcast %cst_76 : f32 to vector<16x1xf32>
    %166 = arith.mulf %164, %165 : vector<16x1xf32>
    %167 = vector.shape_cast %166 : vector<16x1xf32> to vector<1x1x16x1xf32>
    %168 = vector.broadcast %167 : vector<1x1x16x1xf32> to vector<2x4x16x32xf32>
    %169 = arith.subf %160, %168 : vector<2x4x16x32xf32>
    %170 = arith.mulf %169, %169 : vector<2x4x16x32xf32>
    %cst_77 = arith.constant dense<0.000000e+00> : vector<4x16x32xf32>
    %171 = vector.multi_reduction <add>, %170, %cst_77 [0] : vector<2x4x16x32xf32> to vector<4x16x32xf32>
    %cst_78 = arith.constant dense<0.000000e+00> : vector<16x32xf32>
    %172 = vector.multi_reduction <add>, %171, %cst_78 [0] : vector<4x16x32xf32> to vector<16x32xf32>
    %cst_79 = arith.constant dense<0.000000e+00> : vector<16xf32>
    %173 = vector.multi_reduction <add>, %172, %cst_79 [1] : vector<16x32xf32> to vector<16xf32>
    %174 = vector.shape_cast %173 : vector<16xf32> to vector<16x1xf32>
    %cst_80 = arith.constant 3.906250e-03 : f32
    %175 = vector.broadcast %cst_80 : f32 to vector<16x1xf32>
    %176 = arith.mulf %174, %175 : vector<16x1xf32>
    %177 = vector.shape_cast %176 : vector<16x1xf32> to vector<1x1x16x1xf32>
    %cst_81 = arith.constant 9.99999974E-6 : f32
    %178 = vector.broadcast %cst_81 : f32 to vector<1x1x16x1xf32>
    %179 = arith.addf %177, %178 : vector<1x1x16x1xf32>
    %180 = math.rsqrt %179 : vector<1x1x16x1xf32>
    %181 = vector.broadcast %180 : vector<1x1x16x1xf32> to vector<2x4x16x32xf32>
    %182 = arith.mulf %169, %181 : vector<2x4x16x32xf32>
    %183 = vector.extract_strided_slice %182 {offsets = [0, 0, 0, 0], sizes = [2, 1, 16, 32], strides = [1, 1, 1, 1]} : vector<2x4x16x32xf32> to vector<2x1x16x32xf32>
    %184 = vector.shape_cast %183 : vector<2x1x16x32xf32> to vector<2x16x32xf32>
    %185 = vector.shape_cast %184 : vector<2x16x32xf32> to vector<32x32xf32>
    %186 = vector.extract_strided_slice %182 {offsets = [0, 1, 0, 0], sizes = [2, 1, 16, 32], strides = [1, 1, 1, 1]} : vector<2x4x16x32xf32> to vector<2x1x16x32xf32>
    %187 = vector.shape_cast %186 : vector<2x1x16x32xf32> to vector<2x16x32xf32>
    %188 = vector.shape_cast %187 : vector<2x16x32xf32> to vector<32x32xf32>
    %189 = vector.extract_strided_slice %182 {offsets = [0, 2, 0, 0], sizes = [2, 1, 16, 32], strides = [1, 1, 1, 1]} : vector<2x4x16x32xf32> to vector<2x1x16x32xf32>
    %190 = vector.shape_cast %189 : vector<2x1x16x32xf32> to vector<2x16x32xf32>
    %191 = vector.shape_cast %190 : vector<2x16x32xf32> to vector<32x32xf32>
    %192 = vector.extract_strided_slice %182 {offsets = [0, 3, 0, 0], sizes = [2, 1, 16, 32], strides = [1, 1, 1, 1]} : vector<2x4x16x32xf32> to vector<2x1x16x32xf32>
    %193 = vector.shape_cast %192 : vector<2x1x16x32xf32> to vector<2x16x32xf32>
    %194 = vector.shape_cast %193 : vector<2x16x32xf32> to vector<32x32xf32>
    %195 = tpu.concatenate %185, %188, %191, %194 in 1 : vector<32x32xf32>, vector<32x32xf32>, vector<32x32xf32>, vector<32x32xf32> -> vector<32x128xf32>
    %c0_82 = arith.constant 0 : index
    %c0_83 = arith.constant 0 : index
    %196 = vector.load %arg15[%c0_82, %c0_83] : memref<128x128xf32, #tpu.memory_space<vmem>>, vector<128x128xf32>
    %cst_84 = arith.constant dense<0.000000e+00> : vector<32x128xf32>
    %197 = tpu.matmul %195, %196, %cst_84 {dimension_numbers = #tpu.dot_dimension_numbers<[1], [0], [0], [1], [0, 0, 1, 1], [], []>} : vector<32x128xf32>, vector<128x128xf32>, vector<32x128xf32> -> vector<32x128xf32>
    %c0_85 = arith.constant 0 : index
    %c0_86 = arith.constant 0 : index
    %198 = vector.load %arg16[%c0_85, %c0_86] : memref<1x128xf32, #tpu.memory_space<vmem>>, vector<1x128xf32>
    %199 = vector.broadcast %198 : vector<1x128xf32> to vector<32x128xf32>
    %200 = arith.addf %197, %199 : vector<32x128xf32>
    %201 = vector.shape_cast %200 : vector<32x128xf32> to vector<2x16x128xf32>
    %c0_87 = arith.constant 0 : index
    %c0_88 = arith.constant 0 : index
    %c0_89 = arith.constant 0 : index
    %202 = vector.load %arg17[%c0_87, %c0_88, %c0_89] : memref<2x16x128xf32, #tpu.memory_space<vmem>>, vector<2x16x128xf32>
    tpu.vector_store %arg17[%c0_87, %c0_88, %c0_89], %201 {strides = array<i32>} : memref<2x16x128xf32, #tpu.memory_space<vmem>>, vector<2x16x128xf32>,
    return
  }
}

</mosaic_0001>

<llo_original>
// kernel: stgcn_forward.1
$region0: #{stgcn_forward.1}
  #allocation0 [shape = 'u32[]', space=smem, size = 0x4, offset = 0x4, fixed_abs, tag = 'smem constant byte address 0x4 - core index']
  #allocation1 [shape = 'u32[144,128]{1,0:T(1,128)}', space=vmem, size = 0x12000, scoped, tag = 'internal scratch']
  %s0 = inlined_call_operand.vmem [shape: f32[2,12,16,4], index: 0, kind: input, shape index: {}]
  %s1 = inlined_call_operand.vmem [shape: f32[320,320], index: 1, kind: input, shape index: {}]
  %s2 = inlined_call_operand.vmem [shape: f32[192,192], index: 2, kind: input, shape index: {}]
  %s3 = inlined_call_operand.vmem [shape: f32[12,96], index: 3, kind: input, shape index: {}]
  %s4 = inlined_call_operand.vmem [shape: f32[1,96], index: 4, kind: input, shape index: {}]
  %s5 = inlined_call_operand.vmem [shape: f32[96,32], index: 5, kind: input, shape index: {}]
  %s6 = inlined_call_operand.vmem [shape: f32[1,32], index: 6, kind: input, shape index: {}]
  %s7 = inlined_call_operand.vmem [shape: f32[96,96], index: 7, kind: input, shape index: {}]
  %s8 = inlined_call_operand.vmem [shape: f32[1,96], index: 8, kind: input, shape index: {}]
  %s9 = inlined_call_operand.vmem [shape: f32[96,96], index: 9, kind: input, shape index: {}]
  %s10 = inlined_call_operand.vmem [shape: f32[1,96], index: 10, kind: input, shape index: {}]
  %s11 = inlined_call_operand.vmem [shape: f32[96,32], index: 11, kind: input, shape index: {}]
  %s12 = inlined_call_operand.vmem [shape: f32[1,32], index: 12, kind: input, shape index: {}]
  %s13 = inlined_call_operand.vmem [shape: f32[96,96], index: 13, kind: input, shape index: {}]
  %s14 = inlined_call_operand.vmem [shape: f32[1,96], index: 14, kind: input, shape index: {}]
  %s15 = inlined_call_operand.vmem [shape: f32[128,128], index: 15, kind: input, shape index: {}]
  %s16 = inlined_call_operand.vmem [shape: f32[1,128], index: 16, kind: input, shape index: {}]
  %s17 = inlined_call_operand.vmem [shape: f32[2,16,128], index: 17, kind: output, shape index: {}]
  %s18 = sld [smem:[#allocation0]]
  $region78: #{stgcn_forward.1} parent=0
    _
  %s20 = ssub.s32 1, %s18
  %s21 = scalar_select 0, %s20, %s18
  // Predicated region
  $region2: #{stgcn_forward.1} parent=0 // pred_check
    _
  $region3: #{stgcn_forward.1} parent=0 // pred_check_branch
    %23 = sbr.rel (0) target = $region5
  $region4: #{stgcn_forward.1} parent=0 // pred_region
    _
  $region5: #{stgcn_forward.1} parent=0 // pred_fallthru
    _
  // Predicated region
  $region6: #{stgcn_forward.1} parent=0 // pred_check
    _
  $region7: #{stgcn_forward.1} parent=0 // pred_check_branch
    %25 = sbr.rel (0) target = $region9
  $region8: #{stgcn_forward.1} parent=0 // pred_region
    _
  $region9: #{stgcn_forward.1} parent=0 // pred_fallthru
    _
  // Predicated region
  $region10: #{stgcn_forward.1} parent=0 // pred_check
    _
  $region11: #{stgcn_forward.1} parent=0 // pred_check_branch
    %27 = sbr.rel (0) target = $region13
  $region12: #{stgcn_forward.1} parent=0 // pred_region
    _
  $region13: #{stgcn_forward.1} parent=0 // pred_fallthru
    _
  // Predicated region
  $region14: #{stgcn_forward.1} parent=0 // pred_check
    _
  $region15: #{stgcn_forward.1} parent=0 // pred_check_branch
    %29 = sbr.rel (0) target = $region17
  $region16: #{stgcn_forward.1} parent=0 // pred_region
    _
  $region17: #{stgcn_forward.1} parent=0 // pred_fallthru
    _
  // Predicated region
  $region18: #{stgcn_forward.1} parent=0 // pred_check
    _
  $region19: #{stgcn_forward.1} parent=0 // pred_check_branch
    %31 = sbr.rel (0) target = $region21
  $region20: #{stgcn_forward.1} parent=0 // pred_region
    _
  $region21: #{stgcn_forward.1} parent=0 // pred_fallthru
    _
  // Predicated region
  $region22: #{stgcn_forward.1} parent=0 // pred_check
    _
  $region23: #{stgcn_forward.1} parent=0 // pred_check_branch
    %33 = sbr.rel (0) target = $region25
  $region24: #{stgcn_forward.1} parent=0 // pred_region
    _
  $region25: #{stgcn_forward.1} parent=0 // pred_fallthru
    _
  // Predicated region
  $region26: #{stgcn_forward.1} parent=0 // pred_check
    _
  $region27: #{stgcn_forward.1} parent=0 // pred_check_branch
    %35 = sbr.rel (0) target = $region29
  $region28: #{stgcn_forward.1} parent=0 // pred_region
    _
  $region29: #{stgcn_forward.1} parent=0 // pred_fallthru
    _
  // Predicated region
  $region30: #{stgcn_forward.1} parent=0 // pred_check
    _
  $region31: #{stgcn_forward.1} parent=0 // pred_check_branch
    %37 = sbr.rel (0) target = $region33
  $region32: #{stgcn_forward.1} parent=0 // pred_region
    _
  $region33: #{stgcn_forward.1} parent=0 // pred_fallthru
    _
  // Predicated region
  $region34: #{stgcn_forward.1} parent=0 // pred_check
    _
  $region35: #{stgcn_forward.1} parent=0 // pred_check_branch
    %39 = sbr.rel (0) target = $region37
  $region36: #{stgcn_forward.1} parent=0 // pred_region
    _
  $region37: #{stgcn_forward.1} parent=0 // pred_fallthru
    _
  // Predicated region
  $region38: #{stgcn_forward.1} parent=0 // pred_check
    _
  $region39: #{stgcn_forward.1} parent=0 // pred_check_branch
    %41 = sbr.rel (0) target = $region41
  $region40: #{stgcn_forward.1} parent=0 // pred_region
    _
  $region41: #{stgcn_forward.1} parent=0 // pred_fallthru
    _
  // Predicated region
  $region42: #{stgcn_forward.1} parent=0 // pred_check
    _
  $region43: #{stgcn_forward.1} parent=0 // pred_check_branch
    %43 = sbr.rel (0) target = $region45
  $region44: #{stgcn_forward.1} parent=0 // pred_region
    _
  $region45: #{stgcn_forward.1} parent=0 // pred_fallthru
    _
  // Predicated region
  $region46: #{stgcn_forward.1} parent=0 // pred_check
    _
  $region47: #{stgcn_forward.1} parent=0 // pred_check_branch
    %45 = sbr.rel (0) target = $region49
  $region48: #{stgcn_forward.1} parent=0 // pred_region
    _
  $region49: #{stgcn_forward.1} parent=0 // pred_fallthru
    _
  // Predicated region
  $region50: #{stgcn_forward.1} parent=0 // pred_check
    _
  $region51: #{stgcn_forward.1} parent=0 // pred_check_branch
    %47 = sbr.rel (0) target = $region53
  $region52: #{stgcn_forward.1} parent=0 // pred_region
    _
  $region53: #{stgcn_forward.1} parent=0 // pred_fallthru
    _
  // Predicated region
  $region54: #{stgcn_forward.1} parent=0 // pred_check
    _
  $region55: #{stgcn_forward.1} parent=0 // pred_check_branch
    %49 = sbr.rel (0) target = $region57
  $region56: #{stgcn_forward.1} parent=0 // pred_region
    _
  $region57: #{stgcn_forward.1} parent=0 // pred_fallthru
    _
  // Predicated region
  $region58: #{stgcn_forward.1} parent=0 // pred_check
    _
  $region59: #{stgcn_forward.1} parent=0 // pred_check_branch
    %51 = sbr.rel (0) target = $region61
  $region60: #{stgcn_forward.1} parent=0 // pred_region
    _
  $region61: #{stgcn_forward.1} parent=0 // pred_fallthru
    _
  // Predicated region
  $region62: #{stgcn_forward.1} parent=0 // pred_check
    _
  $region63: #{stgcn_forward.1} parent=0 // pred_check_branch
    %53 = sbr.rel (0) target = $region65
  $region64: #{stgcn_forward.1} parent=0 // pred_region
    _
  $region65: #{stgcn_forward.1} parent=0 // pred_fallthru
    _
  // Predicated region
  $region66: #{stgcn_forward.1} parent=0 // pred_check
    _
  $region67: #{stgcn_forward.1} parent=0 // pred_check_branch
    %55 = sbr.rel (0) target = $region69
  $region68: #{stgcn_forward.1} parent=0 // pred_region
    _
  $region69: #{stgcn_forward.1} parent=0 // pred_fallthru
    _
  %v56 = vld [vmem:[%s0] sm:$0xff]
  %v57 = vld [vmem:[%s0 + $0x8] sm:$0xff]
  %v58 = vld [vmem:[%s0 + $0x10] sm:$0xff]
  %v59 = vld [vmem:[%s0 + $0x18] sm:$0xff]
  %v60 = vld [vmem:[%s0 + $0x20] sm:$0xff]
  %v61 = vld [vmem:[%s0 + $0x28] sm:$0xff]
  %v62 = vld [vmem:[%s0 + $0x30] sm:$0xff]
  %v63 = vld [vmem:[%s0 + $0x38] sm:$0xff]
  %v64 = vld [vmem:[%s0 + $0x40] sm:$0xff]
  %v65 = vld [vmem:[%s0 + $0x48] sm:$0xff]
  %v66 = vld [vmem:[%s0 + $0x50] sm:$0xff]
  %v67 = vld [vmem:[%s0 + $0x58] sm:$0xff]
  %v68 = vld [vmem:[%s0 + $0x60] sm:$0xff]
  %v69 = vld [vmem:[%s0 + $0x68] sm:$0xff]
  %v70 = vld [vmem:[%s0 + $0x70] sm:$0xff]
  %v71 = vld [vmem:[%s0 + $0x78] sm:$0xff]
  %v72 = vld [vmem:[%s0 + $0x80] sm:$0xff]
  %v73 = vld [vmem:[%s0 + $0x88] sm:$0xff]
  %v74 = vld [vmem:[%s0 + $0x90] sm:$0xff]
  %v75 = vld [vmem:[%s0 + $0x98] sm:$0xff]
  %v76 = vld [vmem:[%s0 + $0xa0] sm:$0xff]
  %v77 = vld [vmem:[%s0 + $0xa8] sm:$0xff]
  %v78 = vld [vmem:[%s0 + $0xb0] sm:$0xff]
  %v79 = vld [vmem:[%s0 + $0xb8] sm:$0xff]
  %v80 = vld [vmem:[%s0 + $0xc0] sm:$0xff]
  %v81 = vld [vmem:[%s0 + $0xc8] sm:$0xff]
  %v82 = vld [vmem:[%s0 + $0xd0] sm:$0xff]
  %v83 = vld [vmem:[%s0 + $0xd8] sm:$0xff]
  %v84 = vld [vmem:[%s0 + $0xe0] sm:$0xff]
  %v85 = vld [vmem:[%s0 + $0xe8] sm:$0xff]
  %v86 = vld [vmem:[%s0 + $0xf0] sm:$0xff]
  %v87 = vld [vmem:[%s0 + $0xf8] sm:$0xff]
  %v88 = vld [vmem:[%s0 + $0x100] sm:$0xff]
  %v89 = vld [vmem:[%s0 + $0x108] sm:$0xff]
  %v90 = vld [vmem:[%s0 + $0x110] sm:$0xff]
  %v91 = vld [vmem:[%s0 + $0x118] sm:$0xff]
  %v92 = vld [vmem:[%s0 + $0x120] sm:$0xff]
  %v93 = vld [vmem:[%s0 + $0x128] sm:$0xff]
  %v94 = vld [vmem:[%s0 + $0x130] sm:$0xff]
  %v95 = vld [vmem:[%s0 + $0x138] sm:$0xff]
  %v96 = vld [vmem:[%s0 + $0x140] sm:$0xff]
  %v97 = vld [vmem:[%s0 + $0x148] sm:$0xff]
  %v98 = vld [vmem:[%s0 + $0x150] sm:$0xff]
  %v99 = vld [vmem:[%s0 + $0x158] sm:$0xff]
  %v100 = vld [vmem:[%s0 + $0x160] sm:$0xff]
  %v101 = vld [vmem:[%s0 + $0x168] sm:$0xff]
  %v102 = vld [vmem:[%s0 + $0x170] sm:$0xff]
  %v103 = vld [vmem:[%s0 + $0x178] sm:$0xff]
  %144 = vrot.lane.b32.xlu0 %v58, 4
  %v145 = vpop.permute.xlu0 %144
  %146 = vrot.lane.b32.xlu0 %v59, 4
  %v147 = vpop.permute.xlu0 %146
  %148 = vrot.lane.b32.xlu0 %v60, 4
  %v149 = vpop.permute.xlu0 %148
  %150 = vrot.lane.b32.xlu0 %v61, 4
  %v151 = vpop.permute.xlu0 %150
  %152 = vrot.lane.b32.xlu0 %v62, 4
  %v153 = vpop.permute.xlu0 %152
  %154 = vrot.lane.b32.xlu0 %v63, 4
  %v155 = vpop.permute.xlu0 %154
  %156 = vrot.lane.b32.xlu0 %v64, 4
  %v157 = vpop.permute.xlu0 %156
  %158 = vrot.lane.b32.xlu0 %v65, 4
  %v159 = vpop.permute.xlu0 %158
  %160 = vrot.lane.b32.xlu0 %v66, 4
  %v161 = vpop.permute.xlu0 %160
  %162 = vrot.lane.b32.xlu0 %v67, 4
  %v163 = vpop.permute.xlu0 %162
  %164 = vrot.lane.b32.xlu0 %v68, 4
  %v165 = vpop.permute.xlu0 %164
  %166 = vrot.lane.b32.xlu0 %v69, 4
  %v167 = vpop.permute.xlu0 %166
  %168 = vrot.lane.b32.xlu0 %v70, 4
  %v169 = vpop.permute.xlu0 %168
  %170 = vrot.lane.b32.xlu0 %v71, 4
  %v171 = vpop.permute.xlu0 %170
  %172 = vrot.lane.b32.xlu0 %v72, 4
  %v173 = vpop.permute.xlu0 %172
  %174 = vrot.lane.b32.xlu0 %v73, 4
  %v175 = vpop.permute.xlu0 %174
  %176 = vrot.lane.b32.xlu0 %v74, 4
  %v177 = vpop.permute.xlu0 %176
  %178 = vrot.lane.b32.xlu0 %v75, 4
  %v179 = vpop.permute.xlu0 %178
  %180 = vrot.lane.b32.xlu0 %v76, 4
  %v181 = vpop.permute.xlu0 %180
  %182 = vrot.lane.b32.xlu0 %v77, 4
  %v183 = vpop.permute.xlu0 %182
  %184 = vrot.lane.b32.xlu0 %v82, 4
  %v185 = vpop.permute.xlu0 %184
  %186 = vrot.lane.b32.xlu0 %v83, 4
  %v187 = vpop.permute.xlu0 %186
  %188 = vrot.lane.b32.xlu0 %v84, 4
  %v189 = vpop.permute.xlu0 %188
  %190 = vrot.lane.b32.xlu0 %v85, 4
  %v191 = vpop.permute.xlu0 %190
  %192 = vrot.lane.b32.xlu0 %v86, 4
  %v193 = vpop.permute.xlu0 %192
  %194 = vrot.lane.b32.xlu0 %v87, 4
  %v195 = vpop.permute.xlu0 %194
  %196 = vrot.lane.b32.xlu0 %v88, 4
  %v197 = vpop.permute.xlu0 %196
  %198 = vrot.lane.b32.xlu0 %v89, 4
  %v199 = vpop.permute.xlu0 %198
  %200 = vrot.lane.b32.xlu0 %v90, 4
  %v201 = vpop.permute.xlu0 %200
  %202 = vrot.lane.b32.xlu0 %v91, 4
  %v203 = vpop.permute.xlu0 %202
  %204 = vrot.lane.b32.xlu0 %v92, 4
  %v205 = vpop.permute.xlu0 %204
  %206 = vrot.lane.b32.xlu0 %v93, 4
  %v207 = vpop.permute.xlu0 %206
  %208 = vrot.lane.b32.xlu0 %v94, 4
  %v209 = vpop.permute.xlu0 %208
  %210 = vrot.lane.b32.xlu0 %v95, 4
  %v211 = vpop.permute.xlu0 %210
  %212 = vrot.lane.b32.xlu0 %v96, 4
  %v213 = vpop.permute.xlu0 %212
  %214 = vrot.lane.b32.xlu0 %v97, 4
  %v215 = vpop.permute.xlu0 %214
  %216 = vrot.lane.b32.xlu0 %v98, 4
  %v217 = vpop.permute.xlu0 %216
  %218 = vrot.lane.b32.xlu0 %v99, 4
  %v219 = vpop.permute.xlu0 %218
  %220 = vrot.lane.b32.xlu0 %v100, 4
  %v221 = vpop.permute.xlu0 %220
  %222 = vrot.lane.b32.xlu0 %v101, 4
  %v223 = vpop.permute.xlu0 %222
  %268 = vrot.lane.b32.xlu0 %v60, 8
  %v269 = vpop.permute.xlu0 %268
  %270 = vrot.lane.b32.xlu0 %v61, 8
  %v271 = vpop.permute.xlu0 %270
  %272 = vrot.lane.b32.xlu0 %v62, 8
  %v273 = vpop.permute.xlu0 %272
  %274 = vrot.lane.b32.xlu0 %v63, 8
  %v275 = vpop.permute.xlu0 %274
  %276 = vrot.lane.b32.xlu0 %v64, 8
  %v277 = vpop.permute.xlu0 %276
  %278 = vrot.lane.b32.xlu0 %v65, 8
  %v279 = vpop.permute.xlu0 %278
  %280 = vrot.lane.b32.xlu0 %v66, 8
  %v281 = vpop.permute.xlu0 %280
  %282 = vrot.lane.b32.xlu0 %v67, 8
  %v283 = vpop.permute.xlu0 %282
  %284 = vrot.lane.b32.xlu0 %v68, 8
  %v285 = vpop.permute.xlu0 %284
  %286 = vrot.lane.b32.xlu0 %v69, 8
  %v287 = vpop.permute.xlu0 %286
  %288 = vrot.lane.b32.xlu0 %v70, 8
  %v289 = vpop.permute.xlu0 %288
  %290 = vrot.lane.b32.xlu0 %v71, 8
  %v291 = vpop.permute.xlu0 %290
  %292 = vrot.lane.b32.xlu0 %v72, 8
  %v293 = vpop.permute.xlu0 %292
  %294 = vrot.lane.b32.xlu0 %v73, 8
  %v295 = vpop.permute.xlu0 %294
  %296 = vrot.lane.b32.xlu0 %v74, 8
  %v297 = vpop.permute.xlu0 %296
  %298 = vrot.lane.b32.xlu0 %v75, 8
  %v299 = vpop.permute.xlu0 %298
  %300 = vrot.lane.b32.xlu0 %v76, 8
  %v301 = vpop.permute.xlu0 %300
  %302 = vrot.lane.b32.xlu0 %v77, 8
  %v303 = vpop.permute.xlu0 %302
  %304 = vrot.lane.b32.xlu0 %v78, 8
  %v305 = vpop.permute.xlu0 %304
  %306 = vrot.lane.b32.xlu0 %v79, 8
  %v307 = vpop.permute.xlu0 %306
  %308 = vrot.lane.b32.xlu0 %v84, 8
  %v309 = vpop.permute.xlu0 %308
  %310 = vrot.lane.b32.xlu0 %v85, 8
  %v311 = vpop.permute.xlu0 %310
  %312 = vrot.lane.b32.xlu0 %v86, 8
  %v313 = vpop.permute.xlu0 %312
  %314 = vrot.lane.b32.xlu0 %v87, 8
  %v315 = vpop.permute.xlu0 %314
  %316 = vrot.lane.b32.xlu0 %v88, 8
  %v317 = vpop.permute.xlu0 %316
  %318 = vrot.lane.b32.xlu0 %v89, 8
  %v319 = vpop.permute.xlu0 %318
  %320 = vrot.lane.b32.xlu0 %v90, 8
  %v321 = vpop.permute.xlu0 %320
  %322 = vrot.lane.b32.xlu0 %v91, 8
  %v323 = vpop.permute.xlu0 %322
  %324 = vrot.lane.b32.xlu0 %v92, 8
  %v325 = vpop.permute.xlu0 %324
  %326 = vrot.lane.b32.xlu0 %v93, 8
  %v327 = vpop.permute.xlu0 %326
  %328 = vrot.lane.b32.xlu0 %v94, 8
  %v329 = vpop.permute.xlu0 %328
  %330 = vrot.lane.b32.xlu0 %v95, 8
  %v331 = vpop.permute.xlu0 %330
  %332 = vrot.lane.b32.xlu0 %v96, 8
  %v333 = vpop.permute.xlu0 %332
  %334 = vrot.lane.b32.xlu0 %v97, 8
  %v335 = vpop.permute.xlu0 %334
  %336 = vrot.lane.b32.xlu0 %v98, 8
  %v337 = vpop.permute.xlu0 %336
  %338 = vrot.lane.b32.xlu0 %v99, 8
  %v339 = vpop.permute.xlu0 %338
  %340 = vrot.lane.b32.xlu0 %v100, 8
  %v341 = vpop.permute.xlu0 %340
  %342 = vrot.lane.b32.xlu0 %v101, 8
  %v343 = vpop.permute.xlu0 %342
  %344 = vrot.lane.b32.xlu0 %v102, 8
  %v345 = vpop.permute.xlu0 %344
  %346 = vrot.lane.b32.xlu0 %v103, 8
  %v347 = vpop.permute.xlu0 %346
  %vm388 = vcmask 31744
  %v389 = vsel %vm388, %v56, %v145
  %v390 = vsel %vm388, %v57, %v147
  %v391 = vsel %vm388, %v58, %v149
  %v392 = vsel %vm388, %v59, %v151
  %v393 = vsel %vm388, %v60, %v153
  %v394 = vsel %vm388, %v61, %v155
  %v395 = vsel %vm388, %v62, %v157
  %v396 = vsel %vm388, %v63, %v159
  %v397 = vsel %vm388, %v64, %v161
  %v398 = vsel %vm388, %v65, %v163
  %v399 = vsel %vm388, %v66, %v165
  %v400 = vsel %vm388, %v67, %v167
  %v401 = vsel %vm388, %v68, %v169
  %v402 = vsel %vm388, %v69, %v171
  %v403 = vsel %vm388, %v70, %v173
  %v404 = vsel %vm388, %v71, %v175
  %v405 = vsel %vm388, %v72, %v177
  %v406 = vsel %vm388, %v73, %v179
  %v407 = vsel %vm388, %v74, %v181
  %v408 = vsel %vm388, %v75, %v183
  %v409 = vsel %vm388, %v80, %v185
  %v410 = vsel %vm388, %v81, %v187
  %v411 = vsel %vm388, %v82, %v189
  %v412 = vsel %vm388, %v83, %v191
  %v413 = vsel %vm388, %v84, %v193
  %v414 = vsel %vm388, %v85, %v195
  %v415 = vsel %vm388, %v86, %v197
  %v416 = vsel %vm388, %v87, %v199
  %v417 = vsel %vm388, %v88, %v201
  %v418 = vsel %vm388, %v89, %v203
  %v419 = vsel %vm388, %v90, %v205
  %v420 = vsel %vm388, %v91, %v207
  %v421 = vsel %vm388, %v92, %v209
  %v422 = vsel %vm388, %v93, %v211
  %v423 = vsel %vm388, %v94, %v213
  %v424 = vsel %vm388, %v95, %v215
  %v425 = vsel %vm388, %v96, %v217
  %v426 = vsel %vm388, %v97, %v219
  %v427 = vsel %vm388, %v98, %v221
  %v428 = vsel %vm388, %v99, %v223
  %vm429 = vcmask 64512
  %v430 = vsel %vm429, %v389, %v269
  %v431 = vsel %vm429, %v390, %v271
  %v432 = vsel %vm429, %v391, %v273
  %v433 = vsel %vm429, %v392, %v275
  %v434 = vsel %vm429, %v393, %v277
  %v435 = vsel %vm429, %v394, %v279
  %v436 = vsel %vm429, %v395, %v281
  %v437 = vsel %vm429, %v396, %v283
  %v438 = vsel %vm429, %v397, %v285
  %v439 = vsel %vm429, %v398, %v287
  %v440 = vsel %vm429, %v399, %v289
  %v441 = vsel %vm429, %v400, %v291
  %v442 = vsel %vm429, %v401, %v293
  %v443 = vsel %vm429, %v402, %v295
  %v444 = vsel %vm429, %v403, %v297
  %v445 = vsel %vm429, %v404, %v299
  %v446 = vsel %vm429, %v405, %v301
  %v447 = vsel %vm429, %v406, %v303
  %v448 = vsel %vm429, %v407, %v305
  %v449 = vsel %vm429, %v408, %v307
  %v450 = vsel %vm429, %v409, %v309
  %v451 = vsel %vm429, %v410, %v311
  %v452 = vsel %vm429, %v411, %v313
  %v453 = vsel %vm429, %v412, %v315
  %v454 = vsel %vm429, %v413, %v317
  %v455 = vsel %vm429, %v414, %v319
  %v456 = vsel %vm429, %v415, %v321
  %v457 = vsel %vm429, %v416, %v323
  %v458 = vsel %vm429, %v417, %v325
  %v459 = vsel %vm429, %v418, %v327
  %v460 = vsel %vm429, %v419, %v329
  %v461 = vsel %vm429, %v420, %v331
  %v462 = vsel %vm429, %v421, %v333
  %v463 = vsel %vm429, %v422, %v335
  %v464 = vsel %vm429, %v423, %v337
  %v465 = vsel %vm429, %v424, %v339
  %v466 = vsel %vm429, %v425, %v341
  %v467 = vsel %vm429, %v426, %v343
  %v468 = vsel %vm429, %v427, %v345
  %v469 = vsel %vm429, %v428, %v347
  %v470 = vld [vmem:[%s3] sm:$0xff]
  %v471 = vld [vmem:[%s3 + $0x8] sm:$0xf]
  %v472 = vld [vmem:[%s4] sm:$0x1]
  %v474 = vlaneseq
  %v475 = vshrl.u32 %v474, 7
  %v476 = vsub.s32 0, %v475
  %v477 = vrot.slane %v472, %v476
  %vm479 = vcmask 97280
  %v481 = vsel %vm479, %v430, 0
  %v484 = vsel %vm479, %v431, 0
  %v487 = vsel %vm479, %v432, 0
  %v490 = vsel %vm479, %v433, 0
  %v493 = vsel %vm479, %v434, 0
  %v496 = vsel %vm479, %v435, 0
  %v499 = vsel %vm479, %v436, 0
  %v502 = vsel %vm479, %v437, 0
  %v505 = vsel %vm479, %v438, 0
  %v508 = vsel %vm479, %v439, 0
  %v511 = vsel %vm479, %v440, 0
  %v514 = vsel %vm479, %v441, 0
  %v517 = vsel %vm479, %v442, 0
  %v520 = vsel %vm479, %v443, 0
  %v523 = vsel %vm479, %v444, 0
  %v526 = vsel %vm479, %v445, 0
  %v529 = vsel %vm479, %v446, 0
  %v532 = vsel %vm479, %v447, 0
  %v535 = vsel %vm479, %v448, 0
  %v538 = vsel %vm479, %v449, 0
  %v541 = vsel %vm479, %v450, 0
  %v544 = vsel %vm479, %v451, 0
  %v547 = vsel %vm479, %v452, 0
  %v550 = vsel %vm479, %v453, 0
  %v553 = vsel %vm479, %v454, 0
  %v556 = vsel %vm479, %v455, 0
  %v559 = vsel %vm479, %v456, 0
  %v562 = vsel %vm479, %v457, 0
  %v565 = vsel %vm479, %v458, 0
  %v568 = vsel %vm479, %v459, 0
  %v571 = vsel %vm479, %v460, 0
  %v574 = vsel %vm479, %v461, 0
  %v577 = vsel %vm479, %v462, 0
  %v580 = vsel %vm479, %v463, 0
  %v583 = vsel %vm479, %v464, 0
  %v586 = vsel %vm479, %v465, 0
  %v589 = vsel %vm479, %v466, 0
  %v592 = vsel %vm479, %v467, 0
  %v595 = vsel %vm479, %v468, 0
  %v598 = vsel %vm479, %v469, 0
  %vm600 = vcmask 1043456
  %v602 = vsel %vm600, %v471, 0
  %604 = vmatprep.subr.mxu0 0.0
  %605 = vmatpush1.msra.mxu0 %v470
  %606 = vmatprep.subr.mxu0 0.0
  %607 = vmatpush1.msra.mxu0 %v602
  %608 = vmatprep.subr.mxu0 0.0
  %609 = vmatpush1.msra.mxu0 0.0
  %610 = vmatprep.subr.mxu0 0.0
  %611 = vmatpush1.msra.mxu0 0.0
  %612 = vmatprep.subr.mxu0 0.0
  %613 = vmatpush1.msra.mxu0 0.0
  %614 = vmatprep.subr.mxu0 0.0
  %615 = vmatpush1.msra.mxu0 0.0
  %616 = vmatprep.subr.mxu0 0.0
  %617 = vmatpush1.msra.mxu0 0.0
  %618 = vmatprep.subr.mxu0 0.0
  %619 = vmatpush1.msra.mxu0 0.0
  %620 = vmatprep.subr.mxu0 0.0
  %621 = vmatpush1.msra.mxu0 0.0
  %622 = vmatprep.subr.mxu0 0.0
  %623 = vmatpush1.msra.mxu0 0.0
  %624 = vmatprep.subr.mxu0 0.0
  %625 = vmatpush1.msra.mxu0 0.0
  %626 = vmatprep.subr.mxu0 0.0
  %627 = vmatpush1.msra.mxu0 0.0
  %628 = vmatprep.subr.mxu0 0.0
  %629 = vmatpush1.msra.mxu0 0.0
  %630 = vmatprep.subr.mxu0 0.0
  %631 = vmatpush1.msra.mxu0 0.0
  %632 = vmatprep.subr.mxu0 0.0
  %633 = vmatpush1.msra.mxu0 0.0
  %634 = vmatprep.subr.mxu0 0.0
  %635 = vmatpush1.msra.mxu0 0.0
  %636 = vmatprep.subr.mxu0 0.0
  %637 = vmatpush1.msra.mxu0 0.0
  %638 = vmatprep.subr.mxu0 0.0
  %639 = vmatpush1.msra.mxu0 0.0
  %640 = vmatprep.subr.mxu0 0.0
  %641 = vmatpush1.msra.mxu0 0.0
  %642 = vmatprep.subr.mxu0 0.0
  %643 = vmatpush1.msra.mxu0 0.0
  %644 = vmatprep.subr.mxu0 0.0
  %645 = vmatpush1.msra.mxu0 0.0
  %646 = vmatprep.subr.mxu0 0.0
  %647 = vmatpush1.msra.mxu0 0.0
  %648 = vmatprep.subr.mxu0 0.0
  %649 = vmatpush1.msra.mxu0 0.0
  %650 = vmatprep.subr.mxu0 0.0
  %651 = vmatpush1.msra.mxu0 0.0
  %652 = vmatprep.subr.mxu0 0.0
  %653 = vmatpush1.msra.mxu0 0.0
  %654 = vmatprep.subr.mxu0 0.0
  %655 = vmatpush1.msra.mxu0 0.0
  %656 = vmatprep.subr.mxu0 0.0
  %657 = vmatpush1.msra.mxu0 0.0
  %658 = vmatprep.subr.mxu0 0.0
  %659 = vmatpush1.msra.mxu0 0.0
  %660 = vmatprep.subr.mxu0 0.0
  %661 = vmatpush1.msra.mxu0 0.0
  %662 = vmatprep.subr.mxu0 0.0
  %663 = vmatpush1.msra.mxu0 0.0
  %664 = vmatprep.subr.mxu0 0.0
  %665 = vmatpush1.msra.mxu0 0.0
  %666 = vmatprep.subr.mxu0 0.0
  %667 = vmatpush1.msra.mxu0 0.0
  %668 = vmatprep.mubr.f32.mxu0 0.0
  %669 = vmatmul.mubr.f32.gmra.mrb[0].mxu0 %v481
  %v670 = vpop.f32.mrb[0].mxu0
  %v671 = vadd.f32 %v477, %v670
  %v672 = vpop.f32.mrb[0].mxu0
  %673 = vmatprep.mubr.f32.mxu0 0.0
  %674 = vmatmul.mubr.f32.gmra.mrb[0].mxu0 %v484
  %v675 = vpop.f32.mrb[0].mxu0
  %v676 = vadd.f32 %v477, %v675
  %v677 = vpop.f32.mrb[0].mxu0
  %678 = vmatprep.mubr.f32.mxu0 0.0
  %679 = vmatmul.mubr.f32.gmra.mrb[0].mxu0 %v487
  %v680 = vpop.f32.mrb[0].mxu0
  %v681 = vadd.f32 %v477, %v680
  %v682 = vpop.f32.mrb[0].mxu0
  %683 = vmatprep.mubr.f32.mxu0 0.0
  %684 = vmatmul.mubr.f32.gmra.mrb[0].mxu0 %v490
  %v685 = vpop.f32.mrb[0].mxu0
  %v686 = vadd.f32 %v477, %v685
  %v687 = vpop.f32.mrb[0].mxu0
  %688 = vmatprep.mubr.f32.mxu0 0.0
  %689 = vmatmul.mubr.f32.gmra.mrb[0].mxu0 %v493
  %v690 = vpop.f32.mrb[0].mxu0
  %v691 = vadd.f32 %v477, %v690
  %v692 = vpop.f32.mrb[0].mxu0
  %693 = vmatprep.mubr.f32.mxu0 0.0
  %694 = vmatmul.mubr.f32.gmra.mrb[0].mxu0 %v496
  %v695 = vpop.f32.mrb[0].mxu0
  %v696 = vadd.f32 %v477, %v695
  %v697 = vpop.f32.mrb[0].mxu0
  %698 = vmatprep.mubr.f32.mxu0 0.0
  %699 = vmatmul.mubr.f32.gmra.mrb[0].mxu0 %v499
  %v700 = vpop.f32.mrb[0].mxu0
  %v701 = vadd.f32 %v477, %v700
  %v702 = vpop.f32.mrb[0].mxu0
  %703 = vmatprep.mubr.f32.mxu0 0.0
  %704 = vmatmul.mubr.f32.gmra.mrb[0].mxu0 %v502
  %v705 = vpop.f32.mrb[0].mxu0
  %v706 = vadd.f32 %v477, %v705
  %v707 = vpop.f32.mrb[0].mxu0
  %708 = vmatprep.mubr.f32.mxu0 0.0
  %709 = vmatmul.mubr.f32.gmra.mrb[0].mxu0 %v505
  %v710 = vpop.f32.mrb[0].mxu0
  %v711 = vadd.f32 %v477, %v710
  %v712 = vpop.f32.mrb[0].mxu0
  %713 = vmatprep.mubr.f32.mxu0 0.0
  %714 = vmatmul.mubr.f32.gmra.mrb[0].mxu0 %v508
  %v715 = vpop.f32.mrb[0].mxu0
  %v716 = vadd.f32 %v477, %v715
  %v717 = vpop.f32.mrb[0].mxu0
  %718 = vmatprep.mubr.f32.mxu0 0.0
  %719 = vmatmul.mubr.f32.gmra.mrb[0].mxu0 %v511
  %v720 = vpop.f32.mrb[0].mxu0
  %v721 = vadd.f32 %v477, %v720
  %v722 = vpop.f32.mrb[0].mxu0
  %723 = vmatprep.mubr.f32.mxu0 0.0
  %724 = vmatmul.mubr.f32.gmra.mrb[0].mxu0 %v514
  %v725 = vpop.f32.mrb[0].mxu0
  %v726 = vadd.f32 %v477, %v725
  %v727 = vpop.f32.mrb[0].mxu0
  %728 = vmatprep.mubr.f32.mxu0 0.0
  %729 = vmatmul.mubr.f32.gmra.mrb[0].mxu0 %v517
  %v730 = vpop.f32.mrb[0].mxu0
  %v731 = vadd.f32 %v477, %v730
  %v732 = vpop.f32.mrb[0].mxu0
  %733 = vmatprep.mubr.f32.mxu0 0.0
  %734 = vmatmul.mubr.f32.gmra.mrb[0].mxu0 %v520
  %v735 = vpop.f32.mrb[0].mxu0
  %v736 = vadd.f32 %v477, %v735
  %v737 = vpop.f32.mrb[0].mxu0
  %738 = vmatprep.mubr.f32.mxu0 0.0
  %739 = vmatmul.mubr.f32.gmra.mrb[0].mxu0 %v523
  %v740 = vpop.f32.mrb[0].mxu0
  %v741 = vadd.f32 %v477, %v740
  %v742 = vpop.f32.mrb[0].mxu0
  %743 = vmatprep.mubr.f32.mxu0 0.0
  %744 = vmatmul.mubr.f32.gmra.mrb[0].mxu0 %v526
  %v745 = vpop.f32.mrb[0].mxu0
  %v746 = vadd.f32 %v477, %v745
  %v747 = vpop.f32.mrb[0].mxu0
  %748 = vmatprep.mubr.f32.mxu0 0.0
  %749 = vmatmul.mubr.f32.gmra.mrb[0].mxu0 %v529
  %v750 = vpop.f32.mrb[0].mxu0
  %v751 = vadd.f32 %v477, %v750
  %v752 = vpop.f32.mrb[0].mxu0
  %753 = vmatprep.mubr.f32.mxu0 0.0
  %754 = vmatmul.mubr.f32.gmra.mrb[0].mxu0 %v532
  %v755 = vpop.f32.mrb[0].mxu0
  %v756 = vadd.f32 %v477, %v755
  %v757 = vpop.f32.mrb[0].mxu0
  %758 = vmatprep.mubr.f32.mxu0 0.0
  %759 = vmatmul.mubr.f32.gmra.mrb[0].mxu0 %v535
  %v760 = vpop.f32.mrb[0].mxu0
  %v761 = vadd.f32 %v477, %v760
  %v762 = vpop.f32.mrb[0].mxu0
  %763 = vmatprep.mubr.f32.mxu0 0.0
  %764 = vmatmul.mubr.f32.gmra.mrb[0].mxu0 %v538
  %v765 = vpop.f32.mrb[0].mxu0
  %v766 = vadd.f32 %v477, %v765
  %v767 = vpop.f32.mrb[0].mxu0
  %768 = vmatprep.mubr.f32.mxu0 0.0
  %769 = vmatmul.mubr.f32.gmra.mrb[0].mxu0 %v541
  %v770 = vpop.f32.mrb[0].mxu0
  %v771 = vadd.f32 %v477, %v770
  %v772 = vpop.f32.mrb[0].mxu0
  %773 = vmatprep.mubr.f32.mxu0 0.0
  %774 = vmatmul.mubr.f32.gmra.mrb[0].mxu0 %v544
  %v775 = vpop.f32.mrb[0].mxu0
  %v776 = vadd.f32 %v477, %v775
  %v777 = vpop.f32.mrb[0].mxu0
  %778 = vmatprep.mubr.f32.mxu0 0.0
  %779 = vmatmul.mubr.f32.gmra.mrb[0].mxu0 %v547
  %v780 = vpop.f32.mrb[0].mxu0
  %v781 = vadd.f32 %v477, %v780
  %v782 = vpop.f32.mrb[0].mxu0
  %783 = vmatprep.mubr.f32.mxu0 0.0
  %784 = vmatmul.mubr.f32.gmra.mrb[0].mxu0 %v550
  %v785 = vpop.f32.mrb[0].mxu0
  %v786 = vadd.f32 %v477, %v785
  %v787 = vpop.f32.mrb[0].mxu0
  %788 = vmatprep.mubr.f32.mxu0 0.0
  %789 = vmatmul.mubr.f32.gmra.mrb[0].mxu0 %v553
  %v790 = vpop.f32.mrb[0].mxu0
  %v791 = vadd.f32 %v477, %v790
  %v792 = vpop.f32.mrb[0].mxu0
  %793 = vmatprep.mubr.f32.mxu0 0.0
  %794 = vmatmul.mubr.f32.gmra.mrb[0].mxu0 %v556
  %v795 = vpop.f32.mrb[0].mxu0
  %v796 = vadd.f32 %v477, %v795
  %v797 = vpop.f32.mrb[0].mxu0
  %798 = vmatprep.mubr.f32.mxu0 0.0
  %799 = vmatmul.mubr.f32.gmra.mrb[0].mxu0 %v559
  %v800 = vpop.f32.mrb[0].mxu0
  %v801 = vadd.f32 %v477, %v800
  %v802 = vpop.f32.mrb[0].mxu0
  %803 = vmatprep.mubr.f32.mxu0 0.0
  %804 = vmatmul.mubr.f32.gmra.mrb[0].mxu0 %v562
  %v805 = vpop.f32.mrb[0].mxu0
  %v806 = vadd.f32 %v477, %v805
  %v807 = vpop.f32.mrb[0].mxu0
  %808 = vmatprep.mubr.f32.mxu0 0.0
  %809 = vmatmul.mubr.f32.gmra.mrb[0].mxu0 %v565
  %v810 = vpop.f32.mrb[0].mxu0
  %v811 = vadd.f32 %v477, %v810
  %v812 = vpop.f32.mrb[0].mxu0
  %813 = vmatprep.mubr.f32.mxu0 0.0
  %814 = vmatmul.mubr.f32.gmra.mrb[0].mxu0 %v568
  %v815 = vpop.f32.mrb[0].mxu0
  %v816 = vadd.f32 %v477, %v815
  %v817 = vpop.f32.mrb[0].mxu0
  %818 = vmatprep.mubr.f32.mxu0 0.0
  %819 = vmatmul.mubr.f32.gmra.mrb[0].mxu0 %v571
  %v820 = vpop.f32.mrb[0].mxu0
  %v821 = vadd.f32 %v477, %v820
  %v822 = vpop.f32.mrb[0].mxu0
  %823 = vmatprep.mubr.f32.mxu0 0.0
  %824 = vmatmul.mubr.f32.gmra.mrb[0].mxu0 %v574
  %v825 = vpop.f32.mrb[0].mxu0
  %v826 = vadd.f32 %v477, %v825
  %v827 = vpop.f32.mrb[0].mxu0
  %828 = vmatprep.mubr.f32.mxu0 0.0
  %829 = vmatmul.mubr.f32.gmra.mrb[0].mxu0 %v577
  %v830 = vpop.f32.mrb[0].mxu0
  %v831 = vadd.f32 %v477, %v830
  %v832 = vpop.f32.mrb[0].mxu0
  %833 = vmatprep.mubr.f32.mxu0 0.0
  %834 = vmatmul.mubr.f32.gmra.mrb[0].mxu0 %v580
  %v835 = vpop.f32.mrb[0].mxu0
  %v836 = vadd.f32 %v477, %v835
  %v837 = vpop.f32.mrb[0].mxu0
  %838 = vmatprep.mubr.f32.mxu0 0.0
  %839 = vmatmul.mubr.f32.gmra.mrb[0].mxu0 %v583
  %v840 = vpop.f32.mrb[0].mxu0
  %v841 = vadd.f32 %v477, %v840
  %v842 = vpop.f32.mrb[0].mxu0
  %843 = vmatprep.mubr.f32.mxu0 0.0
  %844 = vmatmul.mubr.f32.gmra.mrb[0].mxu0 %v586
  %v845 = vpop.f32.mrb[0].mxu0
  %v846 = vadd.f32 %v477, %v845
  %v847 = vpop.f32.mrb[0].mxu0
  %848 = vmatprep.mubr.f32.mxu0 0.0
  %849 = vmatmul.mubr.f32.gmra.mrb[0].mxu0 %v589
  %v850 = vpop.f32.mrb[0].mxu0
  %v851 = vadd.f32 %v477, %v850
  %v852 = vpop.f32.mrb[0].mxu0
  %853 = vmatprep.mubr.f32.mxu0 0.0
  %854 = vmatmul.mubr.f32.gmra.mrb[0].mxu0 %v592
  %v855 = vpop.f32.mrb[0].mxu0
  %v856 = vadd.f32 %v477, %v855
  %v857 = vpop.f32.mrb[0].mxu0
  %858 = vmatprep.mubr.f32.mxu0 0.0
  %859 = vmatmul.mubr.f32.gmra.mrb[0].mxu0 %v595
  %v860 = vpop.f32.mrb[0].mxu0
  %v861 = vadd.f32 %v477, %v860
  %v862 = vpop.f32.mrb[0].mxu0
  %863 = vmatprep.mubr.f32.mxu0 0.0
  %864 = vmatmul.mubr.f32.gmra.mrb[0].mxu0 %v598
  %v865 = vpop.f32.mrb[0].mxu0
  %v866 = vadd.f32 %v477, %v865
  %v867 = vpop.f32.mrb[0].mxu0
  %868 = vdwg.mxu0
  %v869 = vsub.f32 0.0, %v671
  %v870 = vsub.f32 0.0, %v676
  %v871 = vsub.f32 0.0, %v681
  %v872 = vsub.f32 0.0, %v686
  %v873 = vsub.f32 0.0, %v691
  %v874 = vsub.f32 0.0, %v696
  %v875 = vsub.f32 0.0, %v701
  %v876 = vsub.f32 0.0, %v706
  %v877 = vsub.f32 0.0, %v711
  %v878 = vsub.f32 0.0, %v716
  %v879 = vsub.f32 0.0, %v721
  %v880 = vsub.f32 0.0, %v726
  %v881 = vsub.f32 0.0, %v731
  %v882 = vsub.f32 0.0, %v736
  %v883 = vsub.f32 0.0, %v741
  %v884 = vsub.f32 0.0, %v746
  %v885 = vsub.f32 0.0, %v751
  %v886 = vsub.f32 0.0, %v756
  %v887 = vsub.f32 0.0, %v761
  %v888 = vsub.f32 0.0, %v766
  %v889 = vsub.f32 0.0, %v771
  %v890 = vsub.f32 0.0, %v776
  %v891 = vsub.f32 0.0, %v781
  %v892 = vsub.f32 0.0, %v786
  %v893 = vsub.f32 0.0, %v791
  %v894 = vsub.f32 0.0, %v796
  %v895 = vsub.f32 0.0, %v801
  %v896 = vsub.f32 0.0, %v806
  %v897 = vsub.f32 0.0, %v811
  %v898 = vsub.f32 0.0, %v816
  %v899 = vsub.f32 0.0, %v821
  %v900 = vsub.f32 0.0, %v826
  %v901 = vsub.f32 0.0, %v831
  %v902 = vsub.f32 0.0, %v836
  %v903 = vsub.f32 0.0, %v841
  %v904 = vsub.f32 0.0, %v846
  %v905 = vsub.f32 0.0, %v851
  %v906 = vsub.f32 0.0, %v856
  %v907 = vsub.f32 0.0, %v861
  %v908 = vsub.f32 0.0, %v866
  %v909 = vmul.f32 %v869, 1.442695
  %v910 = vpow.pop %v909
  %v911 = vmul.f32 %v870, 1.442695
  %v912 = vpow.pop %v911
  %v913 = vmul.f32 %v871, 1.442695
  %v914 = vpow.pop %v913
  %v915 = vmul.f32 %v872, 1.442695
  %v916 = vpow.pop %v915
  %v917 = vmul.f32 %v873, 1.442695
  %v918 = vpow.pop %v917
  %v919 = vmul.f32 %v874, 1.442695
  %v920 = vpow.pop %v919
  %v921 = vmul.f32 %v875, 1.442695
  %v922 = vpow.pop %v921
  %v923 = vmul.f32 %v876, 1.442695
  %v924 = vpow.pop %v923
  %v925 = vmul.f32 %v877, 1.442695
  %v926 = vpow.pop %v925
  %v927 = vmul.f32 %v878, 1.442695
  %v928 = vpow.pop %v927
  %v929 = vmul.f32 %v879, 1.442695
  %v930 = vpow.pop %v929
  %v931 = vmul.f32 %v880, 1.442695
  %v932 = vpow.pop %v931
  %v933 = vmul.f32 %v881, 1.442695
  %v934 = vpow.pop %v933
  %v935 = vmul.f32 %v882, 1.442695
  %v936 = vpow.pop %v935
  %v937 = vmul.f32 %v883, 1.442695
  %v938 = vpow.pop %v937
  %v939 = vmul.f32 %v884, 1.442695
  %v940 = vpow.pop %v939
  %v941 = vmul.f32 %v885, 1.442695
  %v942 = vpow.pop %v941
  %v943 = vmul.f32 %v886, 1.442695
  %v944 = vpow.pop %v943
  %v945 = vmul.f32 %v887, 1.442695
  %v946 = vpow.pop %v945
  %v947 = vmul.f32 %v888, 1.442695
  %v948 = vpow.pop %v947
  %v949 = vmul.f32 %v889, 1.442695
  %v950 = vpow.pop %v949
  %v951 = vmul.f32 %v890, 1.442695
  %v952 = vpow.pop %v951
  %v953 = vmul.f32 %v891, 1.442695
  %v954 = vpow.pop %v953
  %v955 = vmul.f32 %v892, 1.442695
  %v956 = vpow.pop %v955
  %v957 = vmul.f32 %v893, 1.442695
  %v958 = vpow.pop %v957
  %v959 = vmul.f32 %v894, 1.442695
  %v960 = vpow.pop %v959
  %v961 = vmul.f32 %v895, 1.442695
  %v962 = vpow.pop %v961
  %v963 = vmul.f32 %v896, 1.442695
  %v964 = vpow.pop %v963
  %v965 = vmul.f32 %v897, 1.442695
  %v966 = vpow.pop %v965
  %v967 = vmul.f32 %v898, 1.442695
  %v968 = vpow.pop %v967
  %v969 = vmul.f32 %v899, 1.442695
  %v970 = vpow.pop %v969
  %v971 = vmul.f32 %v900, 1.442695
  %v972 = vpow.pop %v971
  %v973 = vmul.f32 %v901, 1.442695
  %v974 = vpow.pop %v973
  %v975 = vmul.f32 %v902, 1.442695
  %v976 = vpow.pop %v975
  %v977 = vmul.f32 %v903, 1.442695
  %v978 = vpow.pop %v977
  %v979 = vmul.f32 %v904, 1.442695
  %v980 = vpow.pop %v979
  %v981 = vmul.f32 %v905, 1.442695
  %v982 = vpow.pop %v981
  %v983 = vmul.f32 %v906, 1.442695
  %v984 = vpow.pop %v983
  %v985 = vmul.f32 %v907, 1.442695
  %v986 = vpow.pop %v985
  %v987 = vmul.f32 %v908, 1.442695
  %v988 = vpow.pop %v987
  %v989 = vadd.f32 %v910, 1.0
  %v990 = vadd.f32 %v912, 1.0
  %v991 = vadd.f32 %v914, 1.0
  %v992 = vadd.f32 %v916, 1.0
  %v993 = vadd.f32 %v918, 1.0
  %v994 = vadd.f32 %v920, 1.0
  %v995 = vadd.f32 %v922, 1.0
  %v996 = vadd.f32 %v924, 1.0
  %v997 = vadd.f32 %v926, 1.0
  %v998 = vadd.f32 %v928, 1.0
  %v999 = vadd.f32 %v930, 1.0
  %v1000 = vadd.f32 %v932, 1.0
  %v1001 = vadd.f32 %v934, 1.0
  %v1002 = vadd.f32 %v936, 1.0
  %v1003 = vadd.f32 %v938, 1.0
  %v1004 = vadd.f32 %v940, 1.0
  %v1005 = vadd.f32 %v942, 1.0
  %v1006 = vadd.f32 %v944, 1.0
  %v1007 = vadd.f32 %v946, 1.0
  %v1008 = vadd.f32 %v948, 1.0
  %v1009 = vadd.f32 %v950, 1.0
  %v1010 = vadd.f32 %v952, 1.0
  %v1011 = vadd.f32 %v954, 1.0
  %v1012 = vadd.f32 %v956, 1.0
  %v1013 = vadd.f32 %v958, 1.0
  %v1014 = vadd.f32 %v960, 1.0
  %v1015 = vadd.f32 %v962, 1.0
  %v1016 = vadd.f32 %v964, 1.0
  %v1017 = vadd.f32 %v966, 1.0
  %v1018 = vadd.f32 %v968, 1.0
  %v1019 = vadd.f32 %v970, 1.0
  %v1020 = vadd.f32 %v972, 1.0
  %v1021 = vadd.f32 %v974, 1.0
  %v1022 = vadd.f32 %v976, 1.0
  %v1023 = vadd.f32 %v978, 1.0
  %v1024 = vadd.f32 %v980, 1.0
  %v1025 = vadd.f32 %v982, 1.0
  %v1026 = vadd.f32 %v984, 1.0
  %v1027 = vadd.f32 %v986, 1.0
  %v1028 = vadd.f32 %v988, 1.0
  %v1029 = vrcp.pop %v989
  %v1030 = vmul.f32 1.0, %v1029
  %v1031 = vrcp.pop %v990
  %v1032 = vmul.f32 1.0, %v1031
  %v1033 = vrcp.pop %v991
  %v1034 = vmul.f32 1.0, %v1033
  %v1035 = vrcp.pop %v992
  %v1036 = vmul.f32 1.0, %v1035
  %v1037 = vrcp.pop %v993
  %v1038 = vmul.f32 1.0, %v1037
  %v1039 = vrcp.pop %v994
  %v1040 = vmul.f32 1.0, %v1039
  %v1041 = vrcp.pop %v995
  %v1042 = vmul.f32 1.0, %v1041
  %v1043 = vrcp.pop %v996
  %v1044 = vmul.f32 1.0, %v1043
  %v1045 = vrcp.pop %v997
  %v1046 = vmul.f32 1.0, %v1045
  %v1047 = vrcp.pop %v998
  %v1048 = vmul.f32 1.0, %v1047
  %v1049 = vrcp.pop %v999
  %v1050 = vmul.f32 1.0, %v1049
  %v1051 = vrcp.pop %v1000
  %v1052 = vmul.f32 1.0, %v1051
  %v1053 = vrcp.pop %v1001
  %v1054 = vmul.f32 1.0, %v1053
  %v1055 = vrcp.pop %v1002
  %v1056 = vmul.f32 1.0, %v1055
  %v1057 = vrcp.pop %v1003
  %v1058 = vmul.f32 1.0, %v1057
  %v1059 = vrcp.pop %v1004
  %v1060 = vmul.f32 1.0, %v1059
  %v1061 = vrcp.pop %v1005
  %v1062 = vmul.f32 1.0, %v1061
  %v1063 = vrcp.pop %v1006
  %v1064 = vmul.f32 1.0, %v1063
  %v1065 = vrcp.pop %v1007
  %v1066 = vmul.f32 1.0, %v1065
  %v1067 = vrcp.pop %v1008
  %v1068 = vmul.f32 1.0, %v1067
  %v1069 = vrcp.pop %v1009
  %v1070 = vmul.f32 1.0, %v1069
  %v1071 = vrcp.pop %v1010
  %v1072 = vmul.f32 1.0, %v1071
  %v1073 = vrcp.pop %v1011
  %v1074 = vmul.f32 1.0, %v1073
  %v1075 = vrcp.pop %v1012
  %v1076 = vmul.f32 1.0, %v1075
  %v1077 = vrcp.pop %v1013
  %v1078 = vmul.f32 1.0, %v1077
  %v1079 = vrcp.pop %v1014
  %v1080 = vmul.f32 1.0, %v1079
  %v1081 = vrcp.pop %v1015
  %v1082 = vmul.f32 1.0, %v1081
  %v1083 = vrcp.pop %v1016
  %v1084 = vmul.f32 1.0, %v1083
  %v1085 = vrcp.pop %v1017
  %v1086 = vmul.f32 1.0, %v1085
  %v1087 = vrcp.pop %v1018
  %v1088 = vmul.f32 1.0, %v1087
  %v1089 = vrcp.pop %v1019
  %v1090 = vmul.f32 1.0, %v1089
  %v1091 = vrcp.pop %v1020
  %v1092 = vmul.f32 1.0, %v1091
  %v1093 = vrcp.pop %v1021
  %v1094 = vmul.f32 1.0, %v1093
  %v1095 = vrcp.pop %v1022
  %v1096 = vmul.f32 1.0, %v1095
  %v1097 = vrcp.pop %v1023
  %v1098 = vmul.f32 1.0, %v1097
  %v1099 = vrcp.pop %v1024
  %v1100 = vmul.f32 1.0, %v1099
  %v1101 = vrcp.pop %v1025
  %v1102 = vmul.f32 1.0, %v1101
  %v1103 = vrcp.pop %v1026
  %v1104 = vmul.f32 1.0, %v1103
  %v1105 = vrcp.pop %v1027
  %v1106 = vmul.f32 1.0, %v1105
  %v1107 = vrcp.pop %v1028
  %v1108 = vmul.f32 1.0, %v1107
  %1149 = vrot.lane.b32.xlu0 %v1030, 96
  %v1150 = vpop.permute.xlu0 %1149
  %1151 = vrot.lane.b32.xlu0 %v1032, 96
  %v1152 = vpop.permute.xlu0 %1151
  %1153 = vrot.lane.b32.xlu0 %v1034, 96
  %v1154 = vpop.permute.xlu0 %1153
  %1155 = vrot.lane.b32.xlu0 %v1036, 96
  %v1156 = vpop.permute.xlu0 %1155
  %1157 = vrot.lane.b32.xlu0 %v1038, 96
  %v1158 = vpop.permute.xlu0 %1157
  %1159 = vrot.lane.b32.xlu0 %v1040, 96
  %v1160 = vpop.permute.xlu0 %1159
  %1161 = vrot.lane.b32.xlu0 %v1042, 96
  %v1162 = vpop.permute.xlu0 %1161
  %1163 = vrot.lane.b32.xlu0 %v1044, 96
  %v1164 = vpop.permute.xlu0 %1163
  %1165 = vrot.lane.b32.xlu0 %v1046, 96
  %v1166 = vpop.permute.xlu0 %1165
  %1167 = vrot.lane.b32.xlu0 %v1048, 96
  %v1168 = vpop.permute.xlu0 %1167
  %1169 = vrot.lane.b32.xlu0 %v1050, 96
  %v1170 = vpop.permute.xlu0 %1169
  %1171 = vrot.lane.b32.xlu0 %v1052, 96
  %v1172 = vpop.permute.xlu0 %1171
  %1173 = vrot.lane.b32.xlu0 %v1054, 96
  %v1174 = vpop.permute.xlu0 %1173
  %1175 = vrot.lane.b32.xlu0 %v1056, 96
  %v1176 = vpop.permute.xlu0 %1175
  %1177 = vrot.lane.b32.xlu0 %v1058, 96
  %v1178 = vpop.permute.xlu0 %1177
  %1179 = vrot.lane.b32.xlu0 %v1060, 96
  %v1180 = vpop.permute.xlu0 %1179
  %1181 = vrot.lane.b32.xlu0 %v1062, 96
  %v1182 = vpop.permute.xlu0 %1181
  %1183 = vrot.lane.b32.xlu0 %v1064, 96
  %v1184 = vpop.permute.xlu0 %1183
  %1185 = vrot.lane.b32.xlu0 %v1066, 96
  %v1186 = vpop.permute.xlu0 %1185
  %1187 = vrot.lane.b32.xlu0 %v1068, 96
  %v1188 = vpop.permute.xlu0 %1187
  %1189 = vrot.lane.b32.xlu0 %v1070, 96
  %v1190 = vpop.permute.xlu0 %1189
  %1191 = vrot.lane.b32.xlu0 %v1072, 96
  %v1192 = vpop.permute.xlu0 %1191
  %1193 = vrot.lane.b32.xlu0 %v1074, 96
  %v1194 = vpop.permute.xlu0 %1193
  %1195 = vrot.lane.b32.xlu0 %v1076, 96
  %v1196 = vpop.permute.xlu0 %1195
  %1197 = vrot.lane.b32.xlu0 %v1078, 96
  %v1198 = vpop.permute.xlu0 %1197
  %1199 = vrot.lane.b32.xlu0 %v1080, 96
  %v1200 = vpop.permute.xlu0 %1199
  %1201 = vrot.lane.b32.xlu0 %v1082, 96
  %v1202 = vpop.permute.xlu0 %1201
  %1203 = vrot.lane.b32.xlu0 %v1084, 96
  %v1204 = vpop.permute.xlu0 %1203
  %1205 = vrot.lane.b32.xlu0 %v1086, 96
  %v1206 = vpop.permute.xlu0 %1205
  %1207 = vrot.lane.b32.xlu0 %v1088, 96
  %v1208 = vpop.permute.xlu0 %1207
  %1209 = vrot.lane.b32.xlu0 %v1090, 96
  %v1210 = vpop.permute.xlu0 %1209
  %1211 = vrot.lane.b32.xlu0 %v1092, 96
  %v1212 = vpop.permute.xlu0 %1211
  %1213 = vrot.lane.b32.xlu0 %v1094, 96
  %v1214 = vpop.permute.xlu0 %1213
  %1215 = vrot.lane.b32.xlu0 %v1096, 96
  %v1216 = vpop.permute.xlu0 %1215
  %1217 = vrot.lane.b32.xlu0 %v1098, 96
  %v1218 = vpop.permute.xlu0 %1217
  %1219 = vrot.lane.b32.xlu0 %v1100, 96
  %v1220 = vpop.permute.xlu0 %1219
  %1221 = vrot.lane.b32.xlu0 %v1102, 96
  %v1222 = vpop.permute.xlu0 %1221
  %1223 = vrot.lane.b32.xlu0 %v1104, 96
  %v1224 = vpop.permute.xlu0 %1223
  %1225 = vrot.lane.b32.xlu0 %v1106, 96
  %v1226 = vpop.permute.xlu0 %1225
  %1227 = vrot.lane.b32.xlu0 %v1108, 96
  %v1228 = vpop.permute.xlu0 %1227
  %v1269 = vmul.f32 %v671, %v1150
  %v1270 = vmul.f32 %v676, %v1152
  %v1271 = vmul.f32 %v681, %v1154
  %v1272 = vmul.f32 %v686, %v1156
  %v1273 = vmul.f32 %v691, %v1158
  %v1274 = vmul.f32 %v696, %v1160
  %v1275 = vmul.f32 %v701, %v1162
  %v1276 = vmul.f32 %v706, %v1164
  %v1277 = vmul.f32 %v711, %v1166
  %v1278 = vmul.f32 %v716, %v1168
  %v1279 = vmul.f32 %v721, %v1170
  %v1280 = vmul.f32 %v726, %v1172
  %v1281 = vmul.f32 %v731, %v1174
  %v1282 = vmul.f32 %v736, %v1176
  %v1283 = vmul.f32 %v741, %v1178
  %v1284 = vmul.f32 %v746, %v1180
  %v1285 = vmul.f32 %v751, %v1182
  %v1286 = vmul.f32 %v756, %v1184
  %v1287 = vmul.f32 %v761, %v1186
  %v1288 = vmul.f32 %v766, %v1188
  %v1289 = vmul.f32 %v771, %v1190
  %v1290 = vmul.f32 %v776, %v1192
  %v1291 = vmul.f32 %v781, %v1194
  %v1292 = vmul.f32 %v786, %v1196
  %v1293 = vmul.f32 %v791, %v1198
  %v1294 = vmul.f32 %v796, %v1200
  %v1295 = vmul.f32 %v801, %v1202
  %v1296 = vmul.f32 %v806, %v1204
  %v1297 = vmul.f32 %v811, %v1206
  %v1298 = vmul.f32 %v816, %v1208
  %v1299 = vmul.f32 %v821, %v1210
  %v1300 = vmul.f32 %v826, %v1212
  %v1301 = vmul.f32 %v831, %v1214
  %v1302 = vmul.f32 %v836, %v1216
  %v1303 = vmul.f32 %v841, %v1218
  %v1304 = vmul.f32 %v846, %v1220
  %v1305 = vmul.f32 %v851, %v1222
  %v1306 = vmul.f32 %v856, %v1224
  %v1307 = vmul.f32 %v861, %v1226
  %v1308 = vmul.f32 %v866, %v1228
  %1349 = vrot.lane.b32.xlu0 %v671, 64
  %v1350 = vpop.permute.xlu0 %1349
  %1351 = vrot.lane.b32.xlu0 %v676, 64
  %v1352 = vpop.permute.xlu0 %1351
  %1353 = vrot.lane.b32.xlu0 %v681, 64
  %v1354 = vpop.permute.xlu0 %1353
  %1355 = vrot.lane.b32.xlu0 %v686, 64
  %v1356 = vpop.permute.xlu0 %1355
  %1357 = vrot.lane.b32.xlu0 %v691, 64
  %v1358 = vpop.permute.xlu0 %1357
  %1359 = vrot.lane.b32.xlu0 %v696, 64
  %v1360 = vpop.permute.xlu0 %1359
  %1361 = vrot.lane.b32.xlu0 %v701, 64
  %v1362 = vpop.permute.xlu0 %1361
  %1363 = vrot.lane.b32.xlu0 %v706, 64
  %v1364 = vpop.permute.xlu0 %1363
  %1365 = vrot.lane.b32.xlu0 %v711, 64
  %v1366 = vpop.permute.xlu0 %1365
  %1367 = vrot.lane.b32.xlu0 %v716, 64
  %v1368 = vpop.permute.xlu0 %1367
  %1369 = vrot.lane.b32.xlu0 %v721, 64
  %v1370 = vpop.permute.xlu0 %1369
  %1371 = vrot.lane.b32.xlu0 %v726, 64
  %v1372 = vpop.permute.xlu0 %1371
  %1373 = vrot.lane.b32.xlu0 %v731, 64
  %v1374 = vpop.permute.xlu0 %1373
  %1375 = vrot.lane.b32.xlu0 %v736, 64
  %v1376 = vpop.permute.xlu0 %1375
  %1377 = vrot.lane.b32.xlu0 %v741, 64
  %v1378 = vpop.permute.xlu0 %1377
  %1379 = vrot.lane.b32.xlu0 %v746, 64
  %v1380 = vpop.permute.xlu0 %1379
  %1381 = vrot.lane.b32.xlu0 %v751, 64
  %v1382 = vpop.permute.xlu0 %1381
  %1383 = vrot.lane.b32.xlu0 %v756, 64
  %v1384 = vpop.permute.xlu0 %1383
  %1385 = vrot.lane.b32.xlu0 %v761, 64
  %v1386 = vpop.permute.xlu0 %1385
  %1387 = vrot.lane.b32.xlu0 %v766, 64
  %v1388 = vpop.permute.xlu0 %1387
  %1389 = vrot.lane.b32.xlu0 %v771, 64
  %v1390 = vpop.permute.xlu0 %1389
  %1391 = vrot.lane.b32.xlu0 %v776, 64
  %v1392 = vpop.permute.xlu0 %1391
  %1393 = vrot.lane.b32.xlu0 %v781, 64
  %v1394 = vpop.permute.xlu0 %1393
  %1395 = vrot.lane.b32.xlu0 %v786, 64
  %v1396 = vpop.permute.xlu0 %1395
  %1397 = vrot.lane.b32.xlu0 %v791, 64
  %v1398 = vpop.permute.xlu0 %1397
  %1399 = vrot.lane.b32.xlu0 %v796, 64
  %v1400 = vpop.permute.xlu0 %1399
  %1401 = vrot.lane.b32.xlu0 %v801, 64
  %v1402 = vpop.permute.xlu0 %1401
  %1403 = vrot.lane.b32.xlu0 %v806, 64
  %v1404 = vpop.permute.xlu0 %1403
  %1405 = vrot.lane.b32.xlu0 %v811, 64
  %v1406 = vpop.permute.xlu0 %1405
  %1407 = vrot.lane.b32.xlu0 %v816, 64
  %v1408 = vpop.permute.xlu0 %1407
  %1409 = vrot.lane.b32.xlu0 %v821, 64
  %v1410 = vpop.permute.xlu0 %1409
  %1411 = vrot.lane.b32.xlu0 %v826, 64
  %v1412 = vpop.permute.xlu0 %1411
  %1413 = vrot.lane.b32.xlu0 %v831, 64
  %v1414 = vpop.permute.xlu0 %1413
  %1415 = vrot.lane.b32.xlu0 %v836, 64
  %v1416 = vpop.permute.xlu0 %1415
  %1417 = vrot.lane.b32.xlu0 %v841, 64
  %v1418 = vpop.permute.xlu0 %1417
  %1419 = vrot.lane.b32.xlu0 %v846, 64
  %v1420 = vpop.permute.xlu0 %1419
  %1421 = vrot.lane.b32.xlu0 %v851, 64
  %v1422 = vpop.permute.xlu0 %1421
  %1423 = vrot.lane.b32.xlu0 %v856, 64
  %v1424 = vpop.permute.xlu0 %1423
  %1425 = vrot.lane.b32.xlu0 %v861, 64
  %v1426 = vpop.permute.xlu0 %1425
  %1427 = vrot.lane.b32.xlu0 %v866, 64
  %v1428 = vpop.permute.xlu0 %1427
  %v1469 = vadd.f32 %v1269, %v1350
  %v1470 = vadd.f32 %v1270, %v1352
  %v1471 = vadd.f32 %v1271, %v1354
  %v1472 = vadd.f32 %v1272, %v1356
  %v1473 = vadd.f32 %v1273, %v1358
  %v1474 = vadd.f32 %v1274, %v1360
  %v1475 = vadd.f32 %v1275, %v1362
  %v1476 = vadd.f32 %v1276, %v1364
  %v1477 = vadd.f32 %v1277, %v1366
  %v1478 = vadd.f32 %v1278, %v1368
  %v1479 = vadd.f32 %v1279, %v1370
  %v1480 = vadd.f32 %v1280, %v1372
  %v1481 = vadd.f32 %v1281, %v1374
  %v1482 = vadd.f32 %v1282, %v1376
  %v1483 = vadd.f32 %v1283, %v1378
  %v1484 = vadd.f32 %v1284, %v1380
  %v1485 = vadd.f32 %v1285, %v1382
  %v1486 = vadd.f32 %v1286, %v1384
  %v1487 = vadd.f32 %v1287, %v1386
  %v1488 = vadd.f32 %v1288, %v1388
  %v1489 = vadd.f32 %v1289, %v1390
  %v1490 = vadd.f32 %v1290, %v1392
  %v1491 = vadd.f32 %v1291, %v1394
  %v1492 = vadd.f32 %v1292, %v1396
  %v1493 = vadd.f32 %v1293, %v1398
  %v1494 = vadd.f32 %v1294, %v1400
  %v1495 = vadd.f32 %v1295, %v1402
  %v1496 = vadd.f32 %v1296, %v1404
  %v1497 = vadd.f32 %v1297, %v1406
  %v1498 = vadd.f32 %v1298, %v1408
  %v1499 = vadd.f32 %v1299, %v1410
  %v1500 = vadd.f32 %v1300, %v1412
  %v1501 = vadd.f32 %v1301, %v1414
  %v1502 = vadd.f32 %v1302, %v1416
  %v1503 = vadd.f32 %v1303, %v1418
  %v1504 = vadd.f32 %v1304, %v1420
  %v1505 = vadd.f32 %v1305, %v1422
  %v1506 = vadd.f32 %v1306, %v1424
  %v1507 = vadd.f32 %v1307, %v1426
  %v1508 = vadd.f32 %v1308, %v1428
  %v1509 = vmax.f32 %v1469, 0.0
  %v1510 = vmax.f32 %v1470, 0.0
  %v1511 = vmax.f32 %v1471, 0.0
  %v1512 = vmax.f32 %v1472, 0.0
  %v1513 = vmax.f32 %v1473, 0.0
  %v1514 = vmax.f32 %v1474, 0.0
  %v1515 = vmax.f32 %v1475, 0.0
  %v1516 = vmax.f32 %v1476, 0.0
  %v1517 = vmax.f32 %v1477, 0.0
  %v1518 = vmax.f32 %v1478, 0.0
  %v1519 = vmax.f32 %v1479, 0.0
  %v1520 = vmax.f32 %v1480, 0.0
  %v1521 = vmax.f32 %v1481, 0.0
  %v1522 = vmax.f32 %v1482, 0.0
  %v1523 = vmax.f32 %v1483, 0.0
  %v1524 = vmax.f32 %v1484, 0.0
  %v1525 = vmax.f32 %v1485, 0.0
  %v1526 = vmax.f32 %v1486, 0.0
  %v1527 = vmax.f32 %v1487, 0.0
  %v1528 = vmax.f32 %v1488, 0.0
  %v1529 = vmax.f32 %v1489, 0.0
  %v1530 = vmax.f32 %v1490, 0.0
  %v1531 = vmax.f32 %v1491, 0.0
  %v1532 = vmax.f32 %v1492, 0.0
  %v1533 = vmax.f32 %v1493, 0.0
  %v1534 = vmax.f32 %v1494, 0.0
  %v1535 = vmax.f32 %v1495, 0.0
  %v1536 = vmax.f32 %v1496, 0.0
  %v1537 = vmax.f32 %v1497, 0.0
  %v1538 = vmax.f32 %v1498, 0.0
  %v1539 = vmax.f32 %v1499, 0.0
  %v1540 = vmax.f32 %v1500, 0.0
  %v1541 = vmax.f32 %v1501, 0.0
  %v1542 = vmax.f32 %v1502, 0.0
  %v1543 = vmax.f32 %v1503, 0.0
  %v1544 = vmax.f32 %v1504, 0.0
  %v1545 = vmax.f32 %v1505, 0.0
  %v1546 = vmax.f32 %v1506, 0.0
  %v1547 = vmax.f32 %v1507, 0.0
  %v1548 = vmax.f32 %v1508, 0.0
  %v1549 = vld [vmem:[%s1] sm:$0xff]
  %v1550 = vld [vmem:[%s1 + $0x8] sm:$0xff]
  %v1551 = vld [vmem:[%s1 + $0x10] sm:$0xff]
  %v1552 = vld [vmem:[%s1 + $0x18] sm:$0xff]
  %v1553 = vld [vmem:[%s1 + $0x20] sm:$0xff]
  %v1554 = vld [vmem:[%s1 + $0x28] sm:$0xff]
  %v1555 = vld [vmem:[%s1 + $0x30] sm:$0xff]
  %v1556 = vld [vmem:[%s1 + $0x38] sm:$0xff]
  %v1557 = vld [vmem:[%s1 + $0x40] sm:$0xff]
  %v1558 = vld [vmem:[%s1 + $0x48] sm:$0xff]
  %v1559 = vld [vmem:[%s1 + $0x50] sm:$0xff]
  %v1560 = vld [vmem:[%s1 + $0x58] sm:$0xff]
  %v1561 = vld [vmem:[%s1 + $0x60] sm:$0xff]
  %v1562 = vld [vmem:[%s1 + $0x68] sm:$0xff]
  %v1563 = vld [vmem:[%s1 + $0x70] sm:$0xff]
  %v1564 = vld [vmem:[%s1 + $0x78] sm:$0xff]
  %v1565 = vld [vmem:[%s1 + $0x80] sm:$0xff]
  %v1566 = vld [vmem:[%s1 + $0x88] sm:$0xff]
  %v1567 = vld [vmem:[%s1 + $0x90] sm:$0xff]
  %v1568 = vld [vmem:[%s1 + $0x98] sm:$0xff]
  %v1569 = vld [vmem:[%s1 + $0xa0] sm:$0xff]
  %v1570 = vld [vmem:[%s1 + $0xa8] sm:$0xff]
  %v1571 = vld [vmem:[%s1 + $0xb0] sm:$0xff]
  %v1572 = vld [vmem:[%s1 + $0xb8] sm:$0xff]
  %v1573 = vld [vmem:[%s1 + $0xc0] sm:$0xff]
  %v1574 = vld [vmem:[%s1 + $0xc8] sm:$0xff]
  %v1575 = vld [vmem:[%s1 + $0xd0] sm:$0xff]
  %v1576 = vld [vmem:[%s1 + $0xd8] sm:$0xff]
  %v1577 = vld [vmem:[%s1 + $0xe0] sm:$0xff]
  %v1578 = vld [vmem:[%s1 + $0xe8] sm:$0xff]
  %v1579 = vld [vmem:[%s1 + $0xf0] sm:$0xff]
  %v1580 = vld [vmem:[%s1 + $0xf8] sm:$0xff]
  %v1581 = vld [vmem:[%s1 + $0x100] sm:$0xff]
  %v1582 = vld [vmem:[%s1 + $0x108] sm:$0xff]
  %v1583 = vld [vmem:[%s1 + $0x110] sm:$0xff]
  %v1584 = vld [vmem:[%s1 + $0x118] sm:$0xff]
  %v1585 = vld [vmem:[%s1 + $0x120] sm:$0xff]
  %v1586 = vld [vmem:[%s1 + $0x128] sm:$0xff]
  %v1587 = vld [vmem:[%s1 + $0x130] sm:$0xff]
  %v1588 = vld [vmem:[%s1 + $0x138] sm:$0xff]
  %v1589 = vld [vmem:[%s1 + $0x140] sm:$0xff]
  %v1590 = vld [vmem:[%s1 + $0x148] sm:$0xff]
  %v1591 = vld [vmem:[%s1 + $0x150] sm:$0xff]
  %v1592 = vld [vmem:[%s1 + $0x158] sm:$0xff]
  %v1593 = vld [vmem:[%s1 + $0x160] sm:$0xff]
  %v1594 = vld [vmem:[%s1 + $0x168] sm:$0xff]
  %v1595 = vld [vmem:[%s1 + $0x170] sm:$0xff]
  %v1596 = vld [vmem:[%s1 + $0x178] sm:$0xff]
  %v1597 = vld [vmem:[%s1 + $0x180] sm:$0xff]
  %v1598 = vld [vmem:[%s1 + $0x188] sm:$0xff]
  %v1599 = vld [vmem:[%s1 + $0x190] sm:$0xff]
  %v1600 = vld [vmem:[%s1 + $0x198] sm:$0xff]
  %v1601 = vld [vmem:[%s1 + $0x1a0] sm:$0xff]
  %v1602 = vld [vmem:[%s1 + $0x1a8] sm:$0xff]
  %v1603 = vld [vmem:[%s1 + $0x1b0] sm:$0xff]
  %v1604 = vld [vmem:[%s1 + $0x1b8] sm:$0xff]
  %v1605 = vld [vmem:[%s1 + $0x1c0] sm:$0xff]
  %v1606 = vld [vmem:[%s1 + $0x1c8] sm:$0xff]
  %v1607 = vld [vmem:[%s1 + $0x1d0] sm:$0xff]
  %v1608 = vld [vmem:[%s1 + $0x1d8] sm:$0xff]
  %v1609 = vld [vmem:[%s1 + $0x1e0] sm:$0xff]
  %v1610 = vld [vmem:[%s1 + $0x1e8] sm:$0xff]
  %v1611 = vld [vmem:[%s1 + $0x1f0] sm:$0xff]
  %v1612 = vld [vmem:[%s1 + $0x1f8] sm:$0xff]
  %v1613 = vld [vmem:[%s1 + $0x200] sm:$0xff]
  %v1614 = vld [vmem:[%s1 + $0x208] sm:$0xff]
  %v1615 = vld [vmem:[%s1 + $0x210] sm:$0xff]
  %v1616 = vld [vmem:[%s1 + $0x218] sm:$0xff]
  %v1617 = vld [vmem:[%s1 + $0x220] sm:$0xff]
  %v1618 = vld [vmem:[%s1 + $0x228] sm:$0xff]
  %v1619 = vld [vmem:[%s1 + $0x230] sm:$0xff]
  %v1620 = vld [vmem:[%s1 + $0x238] sm:$0xff]
  %v1621 = vld [vmem:[%s1 + $0x240] sm:$0xff]
  %v1622 = vld [vmem:[%s1 + $0x248] sm:$0xff]
  %v1623 = vld [vmem:[%s1 + $0x250] sm:$0xff]
  %v1624 = vld [vmem:[%s1 + $0x258] sm:$0xff]
  %v1625 = vld [vmem:[%s1 + $0x260] sm:$0xff]
  %v1626 = vld [vmem:[%s1 + $0x268] sm:$0xff]
  %v1627 = vld [vmem:[%s1 + $0x270] sm:$0xff]
  %v1628 = vld [vmem:[%s1 + $0x278] sm:$0xff]
  %v1629 = vld [vmem:[%s1 + $0x280] sm:$0xff]
  %v1630 = vld [vmem:[%s1 + $0x288] sm:$0xff]
  %v1631 = vld [vmem:[%s1 + $0x290] sm:$0xff]
  %v1632 = vld [vmem:[%s1 + $0x298] sm:$0xff]
  %v1633 = vld [vmem:[%s1 + $0x2a0] sm:$0xff]
  %v1634 = vld [vmem:[%s1 + $0x2a8] sm:$0xff]
  %v1635 = vld [vmem:[%s1 + $0x2b0] sm:$0xff]
  %v1636 = vld [vmem:[%s1 + $0x2b8] sm:$0xff]
  %v1637 = vld [vmem:[%s1 + $0x2c0] sm:$0xff]
  %v1638 = vld [vmem:[%s1 + $0x2c8] sm:$0xff]
  %v1639 = vld [vmem:[%s1 + $0x2d0] sm:$0xff]
  %v1640 = vld [vmem:[%s1 + $0x2d8] sm:$0xff]
  %v1641 = vld [vmem:[%s1 + $0x2e0] sm:$0xff]
  %v1642 = vld [vmem:[%s1 + $0x2e8] sm:$0xff]
  %v1643 = vld [vmem:[%s1 + $0x2f0] sm:$0xff]
  %v1644 = vld [vmem:[%s1 + $0x2f8] sm:$0xff]
  %v1645 = vld [vmem:[%s1 + $0x300] sm:$0xff]
  %v1646 = vld [vmem:[%s1 + $0x308] sm:$0xff]
  %v1647 = vld [vmem:[%s1 + $0x310] sm:$0xff]
  %v1648 = vld [vmem:[%s1 + $0x318] sm:$0xff]
  %v1649 = vld [vmem:[%s1 + $0x320] sm:$0xff]
  %v1650 = vld [vmem:[%s1 + $0x328] sm:$0xff]
  %v1651 = vld [vmem:[%s1 + $0x330] sm:$0xff]
  %v1652 = vld [vmem:[%s1 + $0x338] sm:$0xff]
  %v1653 = vld [vmem:[%s1 + $0x340] sm:$0xff]
  %v1654 = vld [vmem:[%s1 + $0x348] sm:$0xff]
  %v1655 = vld [vmem:[%s1 + $0x350] sm:$0xff]
  %v1656 = vld [vmem:[%s1 + $0x358] sm:$0xff]
  %v1657 = vld [vmem:[%s1 + $0x360] sm:$0xff]
  %v1658 = vld [vmem:[%s1 + $0x368] sm:$0xff]
  %v1659 = vld [vmem:[%s1 + $0x370] sm:$0xff]
  %v1660 = vld [vmem:[%s1 + $0x378] sm:$0xff]
  %v1661 = vld [vmem:[%s1 + $0x380] sm:$0xff]
  %v1662 = vld [vmem:[%s1 + $0x388] sm:$0xff]
  %v1663 = vld [vmem:[%s1 + $0x390] sm:$0xff]
  %v1664 = vld [vmem:[%s1 + $0x398] sm:$0xff]
  %v1665 = vld [vmem:[%s1 + $0x3a0] sm:$0xff]
  %v1666 = vld [vmem:[%s1 + $0x3a8] sm:$0xff]
  %v1667 = vld [vmem:[%s1 + $0x3b0] sm:$0xff]
  %v1668 = vld [vmem:[%s1 + $0x3b8] sm:$0xff]
  %vm1669 = vcmask 523264
  %v1671 = vsel %vm1669, %v1551, 0
  %v1674 = vsel %vm1669, %v1554, 0
  %v1677 = vsel %vm1669, %v1557, 0
  %v1680 = vsel %vm1669, %v1560, 0
  %v1683 = vsel %vm1669, %v1563, 0
  %v1686 = vsel %vm1669, %v1566, 0
  %v1689 = vsel %vm1669, %v1569, 0
  %v1692 = vsel %vm1669, %v1572, 0
  %v1695 = vsel %vm1669, %v1575, 0
  %v1698 = vsel %vm1669, %v1578, 0
  %v1701 = vsel %vm1669, %v1581, 0
  %v1704 = vsel %vm1669, %v1584, 0
  %v1707 = vsel %vm1669, %v1587, 0
  %v1710 = vsel %vm1669, %v1590, 0
  %v1713 = vsel %vm1669, %v1593, 0
  %v1716 = vsel %vm1669, %v1596, 0
  %v1719 = vsel %vm1669, %v1599, 0
  %v1722 = vsel %vm1669, %v1602, 0
  %v1725 = vsel %vm1669, %v1605, 0
  %v1728 = vsel %vm1669, %v1608, 0
  %v1731 = vsel %vm1669, %v1611, 0
  %v1734 = vsel %vm1669, %v1614, 0
  %v1737 = vsel %vm1669, %v1617, 0
  %v1740 = vsel %vm1669, %v1620, 0
  %v1743 = vsel %vm1669, %v1623, 0
  %v1746 = vsel %vm1669, %v1626, 0
  %v1749 = vsel %vm1669, %v1629, 0
  %v1752 = vsel %vm1669, %v1632, 0
  %v1755 = vsel %vm1669, %v1635, 0
  %v1758 = vsel %vm1669, %v1638, 0
  %v1761 = vsel %vm1669, %v1641, 0
  %v1764 = vsel %vm1669, %v1644, 0
  %v1767 = vsel %vm1669, %v1647, 0
  %v1770 = vsel %vm1669, %v1650, 0
  %v1773 = vsel %vm1669, %v1653, 0
  %v1776 = vsel %vm1669, %v1656, 0
  %v1779 = vsel %vm1669, %v1659, 0
  %v1782 = vsel %vm1669, %v1662, 0
  %v1785 = vsel %vm1669, %v1665, 0
  %v1788 = vsel %vm1669, %v1668, 0
  %1790 = vmatprep.subr.mxu0 0.0
  %1791 = vmatpush1.msra.mxu0 %v1509
  %1792 = vmatprep.subr.mxu0 0.0
  %1793 = vmatpush1.msra.mxu0 %v1510
  %1794 = vmatprep.subr.mxu0 0.0
  %1795 = vmatpush1.msra.mxu0 %v1511
  %1796 = vmatprep.subr.mxu0 0.0
  %1797 = vmatpush1.msra.mxu0 %v1512
  %1798 = vmatprep.subr.mxu0 0.0
  %1799 = vmatpush1.msra.mxu0 %v1513
  %1800 = vmatprep.subr.mxu0 0.0
  %1801 = vmatpush1.msra.mxu0 %v1514
  %1802 = vmatprep.subr.mxu0 0.0
  %1803 = vmatpush1.msra.mxu0 %v1515
  %1804 = vmatprep.subr.mxu0 0.0
  %1805 = vmatpush1.msra.mxu0 %v1516
  %1806 = vmatprep.subr.mxu0 0.0
  %1807 = vmatpush1.msra.mxu0 %v1517
  %1808 = vmatprep.subr.mxu0 0.0
  %1809 = vmatpush1.msra.mxu0 %v1518
  %1810 = vmatprep.subr.mxu0 0.0
  %1811 = vmatpush1.msra.mxu0 %v1519
  %1812 = vmatprep.subr.mxu0 0.0
  %1813 = vmatpush1.msra.mxu0 %v1520
  %1814 = vmatprep.subr.mxu0 0.0
  %1815 = vmatpush1.msra.mxu0 %v1521
  %1816 = vmatprep.subr.mxu0 0.0
  %1817 = vmatpush1.msra.mxu0 %v1522
  %1818 = vmatprep.subr.mxu0 0.0
  %1819 = vmatpush1.msra.mxu0 %v1523
  %1820 = vmatprep.subr.mxu0 0.0
  %1821 = vmatpush1.msra.mxu0 %v1524
  %1822 = vmatprep.subr.mxu0 0.0
  %1823 = vmatpush1.msra.mxu0 %v1525
  %1824 = vmatprep.subr.mxu0 0.0
  %1825 = vmatpush1.msra.mxu0 %v1526
  %1826 = vmatprep.subr.mxu0 0.0
  %1827 = vmatpush1.msra.mxu0 %v1527
  %1828 = vmatprep.subr.mxu0 0.0
  %1829 = vmatpush1.msra.mxu0 %v1528
  %1830 = vmatprep.subr.mxu0 0.0
  %1831 = vmatpush1.msra.mxu0 %v1529
  %1832 = vmatprep.subr.mxu0 0.0
  %1833 = vmatpush1.msra.mxu0 %v1530
  %1834 = vmatprep.subr.mxu0 0.0
  %1835 = vmatpush1.msra.mxu0 %v1531
  %1836 = vmatprep.subr.mxu0 0.0
  %1837 = vmatpush1.msra.mxu0 %v1532
  %1838 = vmatprep.subr.mxu0 0.0
  %1839 = vmatpush1.msra.mxu0 %v1533
  %1840 = vmatprep.subr.mxu0 0.0
  %1841 = vmatpush1.msra.mxu0 %v1534
  %1842 = vmatprep.subr.mxu0 0.0
  %1843 = vmatpush1.msra.mxu0 %v1535
  %1844 = vmatprep.subr.mxu0 0.0
  %1845 = vmatpush1.msra.mxu0 %v1536
  %1846 = vmatprep.subr.mxu0 0.0
  %1847 = vmatpush1.msra.mxu0 %v1537
  %1848 = vmatprep.subr.mxu0 0.0
  %1849 = vmatpush1.msra.mxu0 %v1538
  %1850 = vmatprep.subr.mxu0 0.0
  %1851 = vmatpush1.msra.mxu0 %v1539
  %1852 = vmatprep.subr.mxu0 0.0
  %1853 = vmatpush1.msra.mxu0 %v1540
  %1854 = vmatprep.mubr.f32.mxu0 %v1550
  %1855 = vmatmul.mubr.f32.gmra.mrb[0].mxu0 %v1549
  %v1856 = vpop.f32.mrb[0].mxu0
  %v1857 = vadd.f32 0.0, %v1856
  %v1858 = vpop.f32.mrb[0].mxu0
  %1859 = vmatprep.mubr.f32.mxu0 %v1553
  %1860 = vmatmul.mubr.f32.gmra.mrb[0].mxu0 %v1552
  %v1861 = vpop.f32.mrb[0].mxu0
  %v1862 = vadd.f32 0.0, %v1861
  %v1863 = vpop.f32.mrb[0].mxu0
  %1864 = vmatprep.mubr.f32.mxu0 %v1556
  %1865 = vmatmul.mubr.f32.gmra.mrb[0].mxu0 %v1555
  %v1866 = vpop.f32.mrb[0].mxu0
  %v1867 = vadd.f32 0.0, %v1866
  %v1868 = vpop.f32.mrb[0].mxu0
  %1869 = vmatprep.mubr.f32.mxu0 %v1559
  %1870 = vmatmul.mubr.f32.gmra.mrb[0].mxu0 %v1558
  %v1871 = vpop.f32.mrb[0].mxu0
  %v1872 = vadd.f32 0.0, %v1871
  %v1873 = vpop.f32.mrb[0].mxu0
  %1874 = vmatprep.mubr.f32.mxu0 %v1562
  %1875 = vmatmul.mubr.f32.gmra.mrb[0].mxu0 %v1561
  %v1876 = vpop.f32.mrb[0].mxu0
  %v1877 = vadd.f32 0.0, %v1876
  %v1878 = vpop.f32.mrb[0].mxu0
  %1879 = vmatprep.mubr.f32.mxu0 %v1565
  %1880 = vmatmul.mubr.f32.gmra.mrb[0].mxu0 %v1564
  %v1881 = vpop.f32.mrb[0].mxu0
  %v1882 = vadd.f32 0.0, %v1881
  %v1883 = vpop.f32.mrb[0].mxu0
  %1884 = vmatprep.mubr.f32.mxu0 %v1568
  %1885 = vmatmul.mubr.f32.gmra.mrb[0].mxu0 %v1567
  %v1886 = vpop.f32.mrb[0].mxu0
  %v1887 = vadd.f32 0.0, %v1886
  %v1888 = vpop.f32.mrb[0].mxu0
  %1889 = vmatprep.mubr.f32.mxu0 %v1571
  %1890 = vmatmul.mubr.f32.gmra.mrb[0].mxu0 %v1570
  %v1891 = vpop.f32.mrb[0].mxu0
  %v1892 = vadd.f32 0.0, %v1891
  %v1893 = vpop.f32.mrb[0].mxu0
  %1894 = vmatprep.mubr.f32.mxu0 %v1574
  %1895 = vmatmul.mubr.f32.gmra.mrb[0].mxu0 %v1573
  %v1896 = vpop.f32.mrb[0].mxu0
  %v1897 = vadd.f32 0.0, %v1896
  %v1898 = vpop.f32.mrb[0].mxu0
  %1899 = vmatprep.mubr.f32.mxu0 %v1577
  %1900 = vmatmul.mubr.f32.gmra.mrb[0].mxu0 %v1576
  %v1901 = vpop.f32.mrb[0].mxu0
  %v1902 = vadd.f32 0.0, %v1901
  %v1903 = vpop.f32.mrb[0].mxu0
  %1904 = vmatprep.mubr.f32.mxu0 %v1580
  %1905 = vmatmul.mubr.f32.gmra.mrb[0].mxu0 %v1579
  %v1906 = vpop.f32.mrb[0].mxu0
  %v1907 = vadd.f32 0.0, %v1906
  %v1908 = vpop.f32.mrb[0].mxu0
  %1909 = vmatprep.mubr.f32.mxu0 %v1583
  %1910 = vmatmul.mubr.f32.gmra.mrb[0].mxu0 %v1582
  %v1911 = vpop.f32.mrb[0].mxu0
  %v1912 = vadd.f32 0.0, %v1911
  %v1913 = vpop.f32.mrb[0].mxu0
  %1914 = vmatprep.mubr.f32.mxu0 %v1586
  %1915 = vmatmul.mubr.f32.gmra.mrb[0].mxu0 %v1585
  %v1916 = vpop.f32.mrb[0].mxu0
  %v1917 = vadd.f32 0.0, %v1916
  %v1918 = vpop.f32.mrb[0].mxu0
  %1919 = vmatprep.mubr.f32.mxu0 %v1589
  %1920 = vmatmul.mubr.f32.gmra.mrb[0].mxu0 %v1588
  %v1921 = vpop.f32.mrb[0].mxu0
  %v1922 = vadd.f32 0.0, %v1921
  %v1923 = vpop.f32.mrb[0].mxu0
  %1924 = vmatprep.mubr.f32.mxu0 %v1592
  %1925 = vmatmul.mubr.f32.gmra.mrb[0].mxu0 %v1591
  %v1926 = vpop.f32.mrb[0].mxu0
  %v1927 = vadd.f32 0.0, %v1926
  %v1928 = vpop.f32.mrb[0].mxu0
  %1929 = vmatprep.mubr.f32.mxu0 %v1595
  %1930 = vmatmul.mubr.f32.gmra.mrb[0].mxu0 %v1594
  %v1931 = vpop.f32.mrb[0].mxu0
  %v1932 = vadd.f32 0.0, %v1931
  %v1933 = vpop.f32.mrb[0].mxu0
  %1934 = vmatprep.mubr.f32.mxu0 %v1598
  %1935 = vmatmul.mubr.f32.gmra.mrb[0].mxu0 %v1597
  %v1936 = vpop.f32.mrb[0].mxu0
  %v1937 = vadd.f32 0.0, %v1936
  %v1938 = vpop.f32.mrb[0].mxu0
  %1939 = vmatprep.mubr.f32.mxu0 %v1601
  %1940 = vmatmul.mubr.f32.gmra.mrb[0].mxu0 %v1600
  %v1941 = vpop.f32.mrb[0].mxu0
  %v1942 = vadd.f32 0.0, %v1941
  %v1943 = vpop.f32.mrb[0].mxu0
  %1944 = vmatprep.mubr.f32.mxu0 %v1604
  %1945 = vmatmul.mubr.f32.gmra.mrb[0].mxu0 %v1603
  %v1946 = vpop.f32.mrb[0].mxu0
  %v1947 = vadd.f32 0.0, %v1946
  %v1948 = vpop.f32.mrb[0].mxu0
  %1949 = vmatprep.mubr.f32.mxu0 %v1607
  %1950 = vmatmul.mubr.f32.gmra.mrb[0].mxu0 %v1606
  %v1951 = vpop.f32.mrb[0].mxu0
  %v1952 = vadd.f32 0.0, %v1951
  %v1953 = vpop.f32.mrb[0].mxu0
  %1954 = vmatprep.mubr.f32.mxu0 %v1610
  %1955 = vmatmul.mubr.f32.gmra.mrb[0].mxu0 %v1609
  %v1956 = vpop.f32.mrb[0].mxu0
  %v1957 = vadd.f32 0.0, %v1956
  %v1958 = vpop.f32.mrb[0].mxu0
  %1959 = vmatprep.mubr.f32.mxu0 %v1613
  %1960 = vmatmul.mubr.f32.gmra.mrb[0].mxu0 %v1612
  %v1961 = vpop.f32.mrb[0].mxu0
  %v1962 = vadd.f32 0.0, %v1961
  %v1963 = vpop.f32.mrb[0].mxu0
  %1964 = vmatprep.mubr.f32.mxu0 %v1616
  %1965 = vmatmul.mubr.f32.gmra.mrb[0].mxu0 %v1615
  %v1966 = vpop.f32.mrb[0].mxu0
  %v1967 = vadd.f32 0.0, %v1966
  %v1968 = vpop.f32.mrb[0].mxu0
  %1969 = vmatprep.mubr.f32.mxu0 %v1619
  %1970 = vmatmul.mubr.f32.gmra.mrb[0].mxu0 %v1618
  %v1971 = vpop.f32.mrb[0].mxu0
  %v1972 = vadd.f32 0.0, %v1971
  %v1973 = vpop.f32.mrb[0].mxu0
  %1974 = vmatprep.mubr.f32.mxu0 %v1622
  %1975 = vmatmul.mubr.f32.gmra.mrb[0].mxu0 %v1621
  %v1976 = vpop.f32.mrb[0].mxu0
  %v1977 = vadd.f32 0.0, %v1976
  %v1978 = vpop.f32.mrb[0].mxu0
  %1979 = vmatprep.mubr.f32.mxu0 %v1625
  %1980 = vmatmul.mubr.f32.gmra.mrb[0].mxu0 %v1624
  %v1981 = vpop.f32.mrb[0].mxu0
  %v1982 = vadd.f32 0.0, %v1981
  %v1983 = vpop.f32.mrb[0].mxu0
  %1984 = vmatprep.mubr.f32.mxu0 %v1628
  %1985 = vmatmul.mubr.f32.gmra.mrb[0].mxu0 %v1627
  %v1986 = vpop.f32.mrb[0].mxu0
  %v1987 = vadd.f32 0.0, %v1986
  %v1988 = vpop.f32.mrb[0].mxu0
  %1989 = vmatprep.mubr.f32.mxu0 %v1631
  %1990 = vmatmul.mubr.f32.gmra.mrb[0].mxu0 %v1630
  %v1991 = vpop.f32.mrb[0].mxu0
  %v1992 = vadd.f32 0.0, %v1991
  %v1993 = vpop.f32.mrb[0].mxu0
  %1994 = vmatprep.mubr.f32.mxu0 %v1634
  %1995 = vmatmul.mubr.f32.gmra.mrb[0].mxu0 %v1633
  %v1996 = vpop.f32.mrb[0].mxu0
  %v1997 = vadd.f32 0.0, %v1996
  %v1998 = vpop.f32.mrb[0].mxu0
  %1999 = vmatprep.mubr.f32.mxu0 %v1637
  %2000 = vmatmul.mubr.f32.gmra.mrb[0].mxu0 %v1636
  %v2001 = vpop.f32.mrb[0].mxu0
  %v2002 = vadd.f32 0.0, %v2001
  %v2003 = vpop.f32.mrb[0].mxu0
  %2004 = vmatprep.mubr.f32.mxu0 %v1640
  %2005 = vmatmul.mubr.f32.gmra.mrb[0].mxu0 %v1639
  %v2006 = vpop.f32.mrb[0].mxu0
  %v2007 = vadd.f32 0.0, %v2006
  %v2008 = vpop.f32.mrb[0].mxu0
  %2009 = vmatprep.mubr.f32.mxu0 %v1643
  %2010 = vmatmul.mubr.f32.gmra.mrb[0].mxu0 %v1642
  %v2011 = vpop.f32.mrb[0].mxu0
  %v2012 = vadd.f32 0.0, %v2011
  %v2013 = vpop.f32.mrb[0].mxu0
  %2014 = vmatprep.mubr.f32.mxu0 %v1646
  %2015 = vmatmul.mubr.f32.gmra.mrb[0].mxu0 %v1645
  %v2016 = vpop.f32.mrb[0].mxu0
  %v2017 = vadd.f32 0.0, %v2016
  %v2018 = vpop.f32.mrb[0].mxu0
  %2019 = vmatprep.mubr.f32.mxu0 %v1649
  %2020 = vmatmul.mubr.f32.gmra.mrb[0].mxu0 %v1648
  %v2021 = vpop.f32.mrb[0].mxu0
  %v2022 = vadd.f32 0.0, %v2021
  %v2023 = vpop.f32.mrb[0].mxu0
  %2024 = vmatprep.mubr.f32.mxu0 %v1652
  %2025 = vmatmul.mubr.f32.gmra.mrb[0].mxu0 %v1651
  %v2026 = vpop.f32.mrb[0].mxu0
  %v2027 = vadd.f32 0.0, %v2026
  %v2028 = vpop.f32.mrb[0].mxu0
  %2029 = vmatprep.mubr.f32.mxu0 %v1655
  %2030 = vmatmul.mubr.f32.gmra.mrb[0].mxu0 %v1654
  %v2031 = vpop.f32.mrb[0].mxu0
  %v2032 = vadd.f32 0.0, %v2031
  %v2033 = vpop.f32.mrb[0].mxu0
  %2034 = vmatprep.mubr.f32.mxu0 %v1658
  %2035 = vmatmul.mubr.f32.gmra.mrb[0].mxu0 %v1657
  %v2036 = vpop.f32.mrb[0].mxu0
  %v2037 = vadd.f32 0.0, %v2036
  %v2038 = vpop.f32.mrb[0].mxu0
  %2039 = vmatprep.mubr.f32.mxu0 %v1661
  %2040 = vmatmul.mubr.f32.gmra.mrb[0].mxu0 %v1660
  %v2041 = vpop.f32.mrb[0].mxu0
  %v2042 = vadd.f32 0.0, %v2041
  %v2043 = vpop.f32.mrb[0].mxu0
  %2044 = vmatprep.mubr.f32.mxu0 %v1664
  %2045 = vmatmul.mubr.f32.gmra.mrb[0].mxu0 %v1663
  %v2046 = vpop.f32.mrb[0].mxu0
  %v2047 = vadd.f32 0.0, %v2046
  %v2048 = vpop.f32.mrb[0].mxu0
  %2049 = vmatprep.mubr.f32.mxu0 %v1667
  %2050 = vmatmul.mubr.f32.gmra.mrb[0].mxu0 %v1666
  %v2051 = vpop.f32.mrb[0].mxu0
  %v2052 = vadd.f32 0.0, %v2051
  %v2053 = vpop.f32.mrb[0].mxu0
  %2054 = vdwg.mxu0
  %2055 = vmatprep.subr.mxu0 0.0
  %2056 = vmatpush1.msra.mxu0 %v1541
  %2057 = vmatprep.subr.mxu0 0.0
  %2058 = vmatpush1.msra.mxu0 %v1542
  %2059 = vmatprep.subr.mxu0 0.0
  %2060 = vmatpush1.msra.mxu0 %v1543
  %2061 = vmatprep.subr.mxu0 0.0
  %2062 = vmatpush1.msra.mxu0 %v1544
  %2063 = vmatprep.subr.mxu0 0.0
  %2064 = vmatpush1.msra.mxu0 %v1545
  %2065 = vmatprep.subr.mxu0 0.0
  %2066 = vmatpush1.msra.mxu0 %v1546
  %2067 = vmatprep.subr.mxu0 0.0
  %2068 = vmatpush1.msra.mxu0 %v1547
  %2069 = vmatprep.subr.mxu0 0.0
  %2070 = vmatpush1.msra.mxu0 %v1548
  %2071 = vmatprep.subr.mxu0 0.0
  %2072 = vmatpush1.msra.mxu0 0.0
  %2073 = vmatprep.subr.mxu0 0.0
  %2074 = vmatpush1.msra.mxu0 0.0
  %2075 = vmatprep.subr.mxu0 0.0
  %2076 = vmatpush1.msra.mxu0 0.0
  %2077 = vmatprep.subr.mxu0 0.0
  %2078 = vmatpush1.msra.mxu0 0.0
  %2079 = vmatprep.subr.mxu0 0.0
  %2080 = vmatpush1.msra.mxu0 0.0
  %2081 = vmatprep.subr.mxu0 0.0
  %2082 = vmatpush1.msra.mxu0 0.0
  %2083 = vmatprep.subr.mxu0 0.0
  %2084 = vmatpush1.msra.mxu0 0.0
  %2085 = vmatprep.subr.mxu0 0.0
  %2086 = vmatpush1.msra.mxu0 0.0
  %2087 = vmatprep.subr.mxu0 0.0
  %2088 = vmatpush1.msra.mxu0 0.0
  %2089 = vmatprep.subr.mxu0 0.0
  %2090 = vmatpush1.msra.mxu0 0.0
  %2091 = vmatprep.subr.mxu0 0.0
  %2092 = vmatpush1.msra.mxu0 0.0
  %2093 = vmatprep.subr.mxu0 0.0
  %2094 = vmatpush1.msra.mxu0 0.0
  %2095 = vmatprep.subr.mxu0 0.0
  %2096 = vmatpush1.msra.mxu0 0.0
  %2097 = vmatprep.subr.mxu0 0.0
  %2098 = vmatpush1.msra.mxu0 0.0
  %2099 = vmatprep.subr.mxu0 0.0
  %2100 = vmatpush1.msra.mxu0 0.0
  %2101 = vmatprep.subr.mxu0 0.0
  %2102 = vmatpush1.msra.mxu0 0.0
  %2103 = vmatprep.subr.mxu0 0.0
  %2104 = vmatpush1.msra.mxu0 0.0
  %2105 = vmatprep.subr.mxu0 0.0
  %2106 = vmatpush1.msra.mxu0 0.0
  %2107 = vmatprep.subr.mxu0 0.0
  %2108 = vmatpush1.msra.mxu0 0.0
  %2109 = vmatprep.subr.mxu0 0.0
  %2110 = vmatpush1.msra.mxu0 0.0
  %2111 = vmatprep.subr.mxu0 0.0
  %2112 = vmatpush1.msra.mxu0 0.0
  %2113 = vmatprep.subr.mxu0 0.0
  %2114 = vmatpush1.msra.mxu0 0.0
  %2115 = vmatprep.subr.mxu0 0.0
  %2116 = vmatpush1.msra.mxu0 0.0
  %2117 = vmatprep.subr.mxu0 0.0
  %2118 = vmatpush1.msra.mxu0 0.0
  %2119 = vmatprep.mubr.f32.mxu0 0.0
  %2120 = vmatmul.mubr.f32.gmra.mrb[0].mxu0 %v1671
  %v2121 = vpop.f32.mrb[0].mxu0
  %v2122 = vadd.f32 %v1857, %v2121
  %v2123 = vpop.f32.mrb[0].mxu0
  %2124 = vmatprep.mubr.f32.mxu0 0.0
  %2125 = vmatmul.mubr.f32.gmra.mrb[0].mxu0 %v1674
  %v2126 = vpop.f32.mrb[0].mxu0
  %v2127 = vadd.f32 %v1862, %v2126
  %v2128 = vpop.f32.mrb[0].mxu0
  %2129 = vmatprep.mubr.f32.mxu0 0.0
  %2130 = vmatmul.mubr.f32.gmra.mrb[0].mxu0 %v1677
  %v2131 = vpop.f32.mrb[0].mxu0
  %v2132 = vadd.f32 %v1867, %v2131
  %v2133 = vpop.f32.mrb[0].mxu0
  %2134 = vmatprep.mubr.f32.mxu0 0.0
  %2135 = vmatmul.mubr.f32.gmra.mrb[0].mxu0 %v1680
  %v2136 = vpop.f32.mrb[0].mxu0
  %v2137 = vadd.f32 %v1872, %v2136
  %v2138 = vpop.f32.mrb[0].mxu0
  %2139 = vmatprep.mubr.f32.mxu0 0.0
  %2140 = vmatmul.mubr.f32.gmra.mrb[0].mxu0 %v1683
  %v2141 = vpop.f32.mrb[0].mxu0
  %v2142 = vadd.f32 %v1877, %v2141
  %v2143 = vpop.f32.mrb[0].mxu0
  %2144 = vmatprep.mubr.f32.mxu0 0.0
  %2145 = vmatmul.mubr.f32.gmra.mrb[0].mxu0 %v1686
  %v2146 = vpop.f32.mrb[0].mxu0
  %v2147 = vadd.f32 %v1882, %v2146
  %v2148 = vpop.f32.mrb[0].mxu0
  %2149 = vmatprep.mubr.f32.mxu0 0.0
  %2150 = vmatmul.mubr.f32.gmra.mrb[0].mxu0 %v1689
  %v2151 = vpop.f32.mrb[0].mxu0
  %v2152 = vadd.f32 %v1887, %v2151
  %v2153 = vpop.f32.mrb[0].mxu0
  %2154 = vmatprep.mubr.f32.mxu0 0.0
  %2155 = vmatmul.mubr.f32.gmra.mrb[0].mxu0 %v1692
  %v2156 = vpop.f32.mrb[0].mxu0
  %v2157 = vadd.f32 %v1892, %v2156
  %v2158 = vpop.f32.mrb[0].mxu0
  %2159 = vmatprep.mubr.f32.mxu0 0.0
  %2160 = vmatmul.mubr.f32.gmra.mrb[0].mxu0 %v1695
  %v2161 = vpop.f32.mrb[0].mxu0
  %v2162 = vadd.f32 %v1897, %v2161
  %v2163 = vpop.f32.mrb[0].mxu0
  %2164 = vmatprep.mubr.f32.mxu0 0.0
  %2165 = vmatmul.mubr.f32.gmra.mrb[0].mxu0 %v1698
  %v2166 = vpop.f32.mrb[0].mxu0
  %v2167 = vadd.f32 %v1902, %v2166
  %v2168 = vpop.f32.mrb[0].mxu0
  %2169 = vmatprep.mubr.f32.mxu0 0.0
  %2170 = vmatmul.mubr.f32.gmra.mrb[0].mxu0 %v1701
  %v2171 = vpop.f32.mrb[0].mxu0
  %v2172 = vadd.f32 %v1907, %v2171
  %v2173 = vpop.f32.mrb[0].mxu0
  %2174 = vmatprep.mubr.f32.mxu0 0.0
  %2175 = vmatmul.mubr.f32.gmra.mrb[0].mxu0 %v1704
  %v2176 = vpop.f32.mrb[0].mxu0
  %v2177 = vadd.f32 %v1912, %v2176
  %v2178 = vpop.f32.mrb[0].mxu0
  %2179 = vmatprep.mubr.f32.mxu0 0.0
  %2180 = vmatmul.mubr.f32.gmra.mrb[0].mxu0 %v1707
  %v2181 = vpop.f32.mrb[0].mxu0
  %v2182 = vadd.f32 %v1917, %v2181
  %v2183 = vpop.f32.mrb[0].mxu0
  %2184 = vmatprep.mubr.f32.mxu0 0.0
  %2185 = vmatmul.mubr.f32.gmra.mrb[0].mxu0 %v1710
  %v2186 = vpop.f32.mrb[0].mxu0
  %v2187 = vadd.f32 %v1922, %v2186
  %v2188 = vpop.f32.mrb[0].mxu0
  %2189 = vmatprep.mubr.f32.mxu0 0.0
  %2190 = vmatmul.mubr.f32.gmra.mrb[0].mxu0 %v1713
  %v2191 = vpop.f32.mrb[0].mxu0
  %v2192 = vadd.f32 %v1927, %v2191
  %v2193 = vpop.f32.mrb[0].mxu0
  %2194 = vmatprep.mubr.f32.mxu0 0.0
  %2195 = vmatmul.mubr.f32.gmra.mrb[0].mxu0 %v1716
  %v2196 = vpop.f32.mrb[0].mxu0
  %v2197 = vadd.f32 %v1932, %v2196
  %v2198 = vpop.f32.mrb[0].mxu0
  %2199 = vmatprep.mubr.f32.mxu0 0.0
  %2200 = vmatmul.mubr.f32.gmra.mrb[0].mxu0 %v1719
  %v2201 = vpop.f32.mrb[0].mxu0
  %v2202 = vadd.f32 %v1937, %v2201
  %v2203 = vpop.f32.mrb[0].mxu0
  %2204 = vmatprep.mubr.f32.mxu0 0.0
  %2205 = vmatmul.mubr.f32.gmra.mrb[0].mxu0 %v1722
  %v2206 = vpop.f32.mrb[0].mxu0
  %v2207 = vadd.f32 %v1942, %v2206
  %v2208 = vpop.f32.mrb[0].mxu0
  %2209 = vmatprep.mubr.f32.mxu0 0.0
  %2210 = vmatmul.mubr.f32.gmra.mrb[0].mxu0 %v1725
  %v2211 = vpop.f32.mrb[0].mxu0
  %v2212 = vadd.f32 %v1947, %v2211
  %v2213 = vpop.f32.mrb[0].mxu0
  %2214 = vmatprep.mubr.f32.mxu0 0.0
  %2215 = vmatmul.mubr.f32.gmra.mrb[0].mxu0 %v1728
  %v2216 = vpop.f32.mrb[0].mxu0
  %v2217 = vadd.f32 %v1952, %v2216
  %v2218 = vpop.f32.mrb[0].mxu0
  %2219 = vmatprep.mubr.f32.mxu0 0.0
  %2220 = vmatmul.mubr.f32.gmra.mrb[0].mxu0 %v1731
  %v2221 = vpop.f32.mrb[0].mxu0
  %v2222 = vadd.f32 %v1957, %v2221
  %v2223 = vpop.f32.mrb[0].mxu0
  %2224 = vmatprep.mubr.f32.mxu0 0.0
  %2225 = vmatmul.mubr.f32.gmra.mrb[0].mxu0 %v1734
  %v2226 = vpop.f32.mrb[0].mxu0
  %v2227 = vadd.f32 %v1962, %v2226
  %v2228 = vpop.f32.mrb[0].mxu0
  %2229 = vmatprep.mubr.f32.mxu0 0.0
  %2230 = vmatmul.mubr.f32.gmra.mrb[0].mxu0 %v1737
  %v2231 = vpop.f32.mrb[0].mxu0
  %v2232 = vadd.f32 %v1967, %v2231
  %v2233 = vpop.f32.mrb[0].mxu0
  %2234 = vmatprep.mubr.f32.mxu0 0.0
  %2235 = vmatmul.mubr.f32.gmra.mrb[0].mxu0 %v1740
  %v2236 = vpop.f32.mrb[0].mxu0
  %v2237 = vadd.f32 %v1972, %v2236
  %v2238 = vpop.f32.mrb[0].mxu0
  %2239 = vmatprep.mubr.f32.mxu0 0.0
  %2240 = vmatmul.mubr.f32.gmra.mrb[0].mxu0 %v1743
  %v2241 = vpop.f32.mrb[0].mxu0
  %v2242 = vadd.f32 %v1977, %v2241
  %v2243 = vpop.f32.mrb[0].mxu0
  %2244 = vmatprep.mubr.f32.mxu0 0.0
  %2245 = vmatmul.mubr.f32.gmra.mrb[0].mxu0 %v1746
  %v2246 = vpop.f32.mrb[0].mxu0
  %v2247 = vadd.f32 %v1982, %v2246
  %v2248 = vpop.f32.mrb[0].mxu0
  %2249 = vmatprep.mubr.f32.mxu0 0.0
  %2250 = vmatmul.mubr.f32.gmra.mrb[0].mxu0 %v1749
  %v2251 = vpop.f32.mrb[0].mxu0
  %v2252 = vadd.f32 %v1987, %v2251
  %v2253 = vpop.f32.mrb[0].mxu0
  %2254 = vmatprep.mubr.f32.mxu0 0.0
  %2255 = vmatmul.mubr.f32.gmra.mrb[0].mxu0 %v1752
  %v2256 = vpop.f32.mrb[0].mxu0
  %v2257 = vadd.f32 %v1992, %v2256
  %v2258 = vpop.f32.mrb[0].mxu0
  %2259 = vmatprep.mubr.f32.mxu0 0.0
  %2260 = vmatmul.mubr.f32.gmra.mrb[0].mxu0 %v1755
  %v2261 = vpop.f32.mrb[0].mxu0
  %v2262 = vadd.f32 %v1997, %v2261
  %v2263 = vpop.f32.mrb[0].mxu0
  %2264 = vmatprep.mubr.f32.mxu0 0.0
  %2265 = vmatmul.mubr.f32.gmra.mrb[0].mxu0 %v1758
  %v2266 = vpop.f32.mrb[0].mxu0
  %v2267 = vadd.f32 %v2002, %v2266
  %v2268 = vpop.f32.mrb[0].mxu0
  %2269 = vmatprep.mubr.f32.mxu0 0.0
  %2270 = vmatmul.mubr.f32.gmra.mrb[0].mxu0 %v1761
  %v2271 = vpop.f32.mrb[0].mxu0
  %v2272 = vadd.f32 %v2007, %v2271
  %v2273 = vpop.f32.mrb[0].mxu0
  %2274 = vmatprep.mubr.f32.mxu0 0.0
  %2275 = vmatmul.mubr.f32.gmra.mrb[0].mxu0 %v1764
  %v2276 = vpop.f32.mrb[0].mxu0
  %v2277 = vadd.f32 %v2012, %v2276
  %v2278 = vpop.f32.mrb[0].mxu0
  %2279 = vmatprep.mubr.f32.mxu0 0.0
  %2280 = vmatmul.mubr.f32.gmra.mrb[0].mxu0 %v1767
  %v2281 = vpop.f32.mrb[0].mxu0
  %v2282 = vadd.f32 %v2017, %v2281
  %v2283 = vpop.f32.mrb[0].mxu0
  %2284 = vmatprep.mubr.f32.mxu0 0.0
  %2285 = vmatmul.mubr.f32.gmra.mrb[0].mxu0 %v1770
  %v2286 = vpop.f32.mrb[0].mxu0
  %v2287 = vadd.f32 %v2022, %v2286
  %v2288 = vpop.f32.mrb[0].mxu0
  %2289 = vmatprep.mubr.f32.mxu0 0.0
  %2290 = vmatmul.mubr.f32.gmra.mrb[0].mxu0 %v1773
  %v2291 = vpop.f32.mrb[0].mxu0
  %v2292 = vadd.f32 %v2027, %v2291
  %v2293 = vpop.f32.mrb[0].mxu0
  %2294 = vmatprep.mubr.f32.mxu0 0.0
  %2295 = vmatmul.mubr.f32.gmra.mrb[0].mxu0 %v1776
  %v2296 = vpop.f32.mrb[0].mxu0
  %v2297 = vadd.f32 %v2032, %v2296
  %v2298 = vpop.f32.mrb[0].mxu0
  %2299 = vmatprep.mubr.f32.mxu0 0.0
  %2300 = vmatmul.mubr.f32.gmra.mrb[0].mxu0 %v1779
  %v2301 = vpop.f32.mrb[0].mxu0
  %v2302 = vadd.f32 %v2037, %v2301
  %v2303 = vpop.f32.mrb[0].mxu0
  %2304 = vmatprep.mubr.f32.mxu0 0.0
  %2305 = vmatmul.mubr.f32.gmra.mrb[0].mxu0 %v1782
  %v2306 = vpop.f32.mrb[0].mxu0
  %v2307 = vadd.f32 %v2042, %v2306
  %v2308 = vpop.f32.mrb[0].mxu0
  %2309 = vmatprep.mubr.f32.mxu0 0.0
  %2310 = vmatmul.mubr.f32.gmra.mrb[0].mxu0 %v1785
  %v2311 = vpop.f32.mrb[0].mxu0
  %v2312 = vadd.f32 %v2047, %v2311
  %v2313 = vpop.f32.mrb[0].mxu0
  %2314 = vmatprep.mubr.f32.mxu0 0.0
  %2315 = vmatmul.mubr.f32.gmra.mrb[0].mxu0 %v1788
  %v2316 = vpop.f32.mrb[0].mxu0
  %v2317 = vadd.f32 %v2052, %v2316
  %v2318 = vpop.f32.mrb[0].mxu0
  %2319 = vdwg.mxu0
  %2320 = vmatprep.subr.mxu0 0.0
  %2321 = vmatpush1.msra.mxu0 %v2122
  %2322 = vmatprep.subr.mxu0 0.0
  %2323 = vmatpush1.msra.mxu0 %v2127
  %2324 = vmatprep.subr.mxu0 0.0
  %2325 = vmatpush1.msra.mxu0 %v2132
  %2326 = vmatprep.subr.mxu0 0.0
  %2327 = vmatpush1.msra.mxu0 %v2137
  %2328 = vmatprep.subr.mxu0 0.0
  %2329 = vmatpush1.msra.mxu0 %v2142
  %2330 = vmatprep.subr.mxu0 0.0
  %2331 = vmatpush1.msra.mxu0 %v2147
  %2332 = vmatprep.subr.mxu0 0.0
  %2333 = vmatpush1.msra.mxu0 %v2152
  %2334 = vmatprep.subr.mxu0 0.0
  %2335 = vmatpush1.msra.mxu0 %v2157
  %2336 = vmatprep.subr.mxu0 0.0
  %2337 = vmatpush1.msra.mxu0 %v2162
  %2338 = vmatprep.subr.mxu0 0.0
  %2339 = vmatpush1.msra.mxu0 %v2167
  %2340 = vmatprep.subr.mxu0 0.0
  %2341 = vmatpush1.msra.mxu0 %v2172
  %2342 = vmatprep.subr.mxu0 0.0
  %2343 = vmatpush1.msra.mxu0 %v2177
  %2344 = vmatprep.subr.mxu0 0.0
  %2345 = vmatpush1.msra.mxu0 %v2182
  %2346 = vmatprep.subr.mxu0 0.0
  %2347 = vmatpush1.msra.mxu0 %v2187
  %2348 = vmatprep.subr.mxu0 0.0
  %2349 = vmatpush1.msra.mxu0 %v2192
  %2350 = vmatprep.subr.mxu0 0.0
  %2351 = vmatpush1.msra.mxu0 %v2197
  %2352 = vmatprep.subr.mxu0 0.0
  %2353 = vmatpush1.msra.mxu0 %v2202
  %2354 = vmatprep.subr.mxu0 0.0
  %2355 = vmatpush1.msra.mxu0 %v2207
  %2356 = vmatprep.subr.mxu0 0.0
  %2357 = vmatpush1.msra.mxu0 %v2212
  %2358 = vmatprep.subr.mxu0 0.0
  %2359 = vmatpush1.msra.mxu0 %v2217
  %2360 = vmatprep.subr.mxu0 0.0
  %2361 = vmatpush1.msra.mxu0 %v2222
  %2362 = vmatprep.subr.mxu0 0.0
  %2363 = vmatpush1.msra.mxu0 %v2227
  %2364 = vmatprep.subr.mxu0 0.0
  %2365 = vmatpush1.msra.mxu0 %v2232
  %2366 = vmatprep.subr.mxu0 0.0
  %2367 = vmatpush1.msra.mxu0 %v2237
  %2368 = vmatprep.subr.mxu0 0.0
  %2369 = vmatpush1.msra.mxu0 %v2242
  %2370 = vmatprep.subr.mxu0 0.0
  %2371 = vmatpush1.msra.mxu0 %v2247
  %2372 = vmatprep.subr.mxu0 0.0
  %2373 = vmatpush1.msra.mxu0 %v2252
  %2374 = vmatprep.subr.mxu0 0.0
  %2375 = vmatpush1.msra.mxu0 %v2257
  %2376 = vmatprep.subr.mxu0 0.0
  %2377 = vmatpush1.msra.mxu0 %v2262
  %2378 = vmatprep.subr.mxu0 0.0
  %2379 = vmatpush1.msra.mxu0 %v2267
  %2380 = vmatprep.subr.mxu0 0.0
  %2381 = vmatpush1.msra.mxu0 %v2272
  %2382 = vmatprep.subr.mxu0 0.0
  %2383 = vmatpush1.msra.mxu0 %v2277
  %2384 = vmatprep.mubr.f32.mxu0 %v1550
  %2385 = vmatmul.mubr.f32.gmra.mrb[0].mxu0 %v1549
  %v2386 = vpop.f32.mrb[0].mxu0
  %v2387 = vadd.f32 0.0, %v2386
  %v2388 = vpop.f32.mrb[0].mxu0
  %2389 = vmatprep.mubr.f32.mxu0 %v1553
  %2390 = vmatmul.mubr.f32.gmra.mrb[0].mxu0 %v1552
  %v2391 = vpop.f32.mrb[0].mxu0
  %v2392 = vadd.f32 0.0, %v2391
  %v2393 = vpop.f32.mrb[0].mxu0
  %2394 = vmatprep.mubr.f32.mxu0 %v1556
  %2395 = vmatmul.mubr.f32.gmra.mrb[0].mxu0 %v1555
  %v2396 = vpop.f32.mrb[0].mxu0
  %v2397 = vadd.f32 0.0, %v2396
  %v2398 = vpop.f32.mrb[0].mxu0
  %2399 = vmatprep.mubr.f32.mxu0 %v1559
  %2400 = vmatmul.mubr.f32.gmra.mrb[0].mxu0 %v1558
  %v2401 = vpop.f32.mrb[0].mxu0
  %v2402 = vadd.f32 0.0, %v2401
  %v2403 = vpop.f32.mrb[0].mxu0
  %2404 = vmatprep.mubr.f32.mxu0 %v1562
  %2405 = vmatmul.mubr.f32.gmra.mrb[0].mxu0 %v1561
  %v2406 = vpop.f32.mrb[0].mxu0
  %v2407 = vadd.f32 0.0, %v2406
  %v2408 = vpop.f32.mrb[0].mxu0
  %2409 = vmatprep.mubr.f32.mxu0 %v1565
  %2410 = vmatmul.mubr.f32.gmra.mrb[0].mxu0 %v1564
  %v2411 = vpop.f32.mrb[0].mxu0
  %v2412 = vadd.f32 0.0, %v2411
  %v2413 = vpop.f32.mrb[0].mxu0
  %2414 = vmatprep.mubr.f32.mxu0 %v1568
  %2415 = vmatmul.mubr.f32.gmra.mrb[0].mxu0 %v1567
  %v2416 = vpop.f32.mrb[0].mxu0
  %v2417 = vadd.f32 0.0, %v2416
  %v2418 = vpop.f32.mrb[0].mxu0
  %2419 = vmatprep.mubr.f32.mxu0 %v1571
  %2420 = vmatmul.mubr.f32.gmra.mrb[0].mxu0 %v1570
  %v2421 = vpop.f32.mrb[0].mxu0
  %v2422 = vadd.f32 0.0, %v2421
  %v2423 = vpop.f32.mrb[0].mxu0
  %2424 = vmatprep.mubr.f32.mxu0 %v1574
  %2425 = vmatmul.mubr.f32.gmra.mrb[0].mxu0 %v1573
  %v2426 = vpop.f32.mrb[0].mxu0
  %v2427 = vadd.f32 0.0, %v2426
  %v2428 = vpop.f32.mrb[0].mxu0
  %2429 = vmatprep.mubr.f32.mxu0 %v1577
  %2430 = vmatmul.mubr.f32.gmra.mrb[0].mxu0 %v1576
  %v2431 = vpop.f32.mrb[0].mxu0
  %v2432 = vadd.f32 0.0, %v2431
  %v2433 = vpop.f32.mrb[0].mxu0
  %2434 = vmatprep.mubr.f32.mxu0 %v1580
  %2435 = vmatmul.mubr.f32.gmra.mrb[0].mxu0 %v1579
  %v2436 = vpop.f32.mrb[0].mxu0
  %v2437 = vadd.f32 0.0, %v2436
  %v2438 = vpop.f32.mrb[0].mxu0
  %2439 = vmatprep.mubr.f32.mxu0 %v1583
  %2440 = vmatmul.mubr.f32.gmra.mrb[0].mxu0 %v1582
  %v2441 = vpop.f32.mrb[0].mxu0
  %v2442 = vadd.f32 0.0, %v2441
  %v2443 = vpop.f32.mrb[0].mxu0
  %2444 = vmatprep.mubr.f32.mxu0 %v1586
  %2445 = vmatmul.mubr.f32.gmra.mrb[0].mxu0 %v1585
  %v2446 = vpop.f32.mrb[0].mxu0
  %v2447 = vadd.f32 0.0, %v2446
  %v2448 = vpop.f32.mrb[0].mxu0
  %2449 = vmatprep.mubr.f32.mxu0 %v1589
  %2450 = vmatmul.mubr.f32.gmra.mrb[0].mxu0 %v1588
  %v2451 = vpop.f32.mrb[0].mxu0
  %v2452 = vadd.f32 0.0, %v2451
  %v2453 = vpop.f32.mrb[0].mxu0
  %2454 = vmatprep.mubr.f32.mxu0 %v1592
  %2455 = vmatmul.mubr.f32.gmra.mrb[0].mxu0 %v1591
  %v2456 = vpop.f32.mrb[0].mxu0
  %v2457 = vadd.f32 0.0, %v2456
  %v2458 = vpop.f32.mrb[0].mxu0
  %2459 = vmatprep.mubr.f32.mxu0 %v1595
  %2460 = vmatmul.mubr.f32.gmra.mrb[0].mxu0 %v1594
  %v2461 = vpop.f32.mrb[0].mxu0
  %v2462 = vadd.f32 0.0, %v2461
  %v2463 = vpop.f32.mrb[0].mxu0
  %2464 = vmatprep.mubr.f32.mxu0 %v1598
  %2465 = vmatmul.mubr.f32.gmra.mrb[0].mxu0 %v1597
  %v2466 = vpop.f32.mrb[0].mxu0
  %v2467 = vadd.f32 0.0, %v2466
  %v2468 = vpop.f32.mrb[0].mxu0
  %2469 = vmatprep.mubr.f32.mxu0 %v1601
  %2470 = vmatmul.mubr.f32.gmra.mrb[0].mxu0 %v1600
  %v2471 = vpop.f32.mrb[0].mxu0
  %v2472 = vadd.f32 0.0, %v2471
  %v2473 = vpop.f32.mrb[0].mxu0
  %2474 = vmatprep.mubr.f32.mxu0 %v1604
  %2475 = vmatmul.mubr.f32.gmra.mrb[0].mxu0 %v1603
  %v2476 = vpop.f32.mrb[0].mxu0
  %v2477 = vadd.f32 0.0, %v2476
  %v2478 = vpop.f32.mrb[0].mxu0
  %2479 = vmatprep.mubr.f32.mxu0 %v1607
  %2480 = vmatmul.mubr.f32.gmra.mrb[0].mxu0 %v1606
  %v2481 = vpop.f32.mrb[0].mxu0
  %v2482 = vadd.f32 0.0, %v2481
  %v2483 = vpop.f32.mrb[0].mxu0
  %2484 = vmatprep.mubr.f32.mxu0 %v1610
  %2485 = vmatmul.mubr.f32.gmra.mrb[0].mxu0 %v1609
  %v2486 = vpop.f32.mrb[0].mxu0
  %v2487 = vadd.f32 0.0, %v2486
  %v2488 = vpop.f32.mrb[0].mxu0
  %2489 = vmatprep.mubr.f32.mxu0 %v1613
  %2490 = vmatmul.mubr.f32.gmra.mrb[0].mxu0 %v1612
  %v2491 = vpop.f32.mrb[0].mxu0
  %v2492 = vadd.f32 0.0, %v2491
  %v2493 = vpop.f32.mrb[0].mxu0
  %2494 = vmatprep.mubr.f32.mxu0 %v1616
  %2495 = vmatmul.mubr.f32.gmra.mrb[0].mxu0 %v1615
  %v2496 = vpop.f32.mrb[0].mxu0
  %v2497 = vadd.f32 0.0, %v2496
  %v2498 = vpop.f32.mrb[0].mxu0
  %2499 = vmatprep.mubr.f32.mxu0 %v1619
  %2500 = vmatmul.mubr.f32.gmra.mrb[0].mxu0 %v1618
  %v2501 = vpop.f32.mrb[0].mxu0
  %v2502 = vadd.f32 0.0, %v2501
  %v2503 = vpop.f32.mrb[0].mxu0
  %2504 = vmatprep.mubr.f32.mxu0 %v1622
  %2505 = vmatmul.mubr.f32.gmra.mrb[0].mxu0 %v1621
  %v2506 = vpop.f32.mrb[0].mxu0
  %v2507 = vadd.f32 0.0, %v2506
  %v2508 = vpop.f32.mrb[0].mxu0
  %2509 = vmatprep.mubr.f32.mxu0 %v1625
  %2510 = vmatmul.mubr.f32.gmra.mrb[0].mxu0 %v1624
  %v2511 = vpop.f32.mrb[0].mxu0
  %v2512 = vadd.f32 0.0, %v2511
  %v2513 = vpop.f32.mrb[0].mxu0
  %2514 = vmatprep.mubr.f32.mxu0 %v1628
  %2515 = vmatmul.mubr.f32.gmra.mrb[0].mxu0 %v1627
  %v2516 = vpop.f32.mrb[0].mxu0
  %v2517 = vadd.f32 0.0, %v2516
  %v2518 = vpop.f32.mrb[0].mxu0
  %2519 = vmatprep.mubr.f32.mxu0 %v1631
  %2520 = vmatmul.mubr.f32.gmra.mrb[0].mxu0 %v1630
  %v2521 = vpop.f32.mrb[0].mxu0
  %v2522 = vadd.f32 0.0, %v2521
  %v2523 = vpop.f32.mrb[0].mxu0
  %2524 = vmatprep.mubr.f32.mxu0 %v1634
  %2525 = vmatmul.mubr.f32.gmra.mrb[0].mxu0 %v1633
  %v2526 = vpop.f32.mrb[0].mxu0
  %v2527 = vadd.f32 0.0, %v2526
  %v2528 = vpop.f32.mrb[0].mxu0
  %2529 = vmatprep.mubr.f32.mxu0 %v1637
  %2530 = vmatmul.mubr.f32.gmra.mrb[0].mxu0 %v1636
  %v2531 = vpop.f32.mrb[0].mxu0
  %v2532 = vadd.f32 0.0, %v2531
  %v2533 = vpop.f32.mrb[0].mxu0
  %2534 = vmatprep.mubr.f32.mxu0 %v1640
  %2535 = vmatmul.mubr.f32.gmra.mrb[0].mxu0 %v1639
  %v2536 = vpop.f32.mrb[0].mxu0
  %v2537 = vadd.f32 0.0, %v2536
  %v2538 = vpop.f32.mrb[0].mxu0
  %2539 = vmatprep.mubr.f32.mxu0 %v1643
  %2540 = vmatmul.mubr.f32.gmra.mrb[0].mxu0 %v1642
  %v2541 = vpop.f32.mrb[0].mxu0
  %v2542 = vadd.f32 0.0, %v2541
  %v2543 = vpop.f32.mrb[0].mxu0
  %2544 = vmatprep.mubr.f32.mxu0 %v1646
  %2545 = vmatmul.mubr.f32.gmra.mrb[0].mxu0 %v1645
  %v2546 = vpop.f32.mrb[0].mxu0
  %v2547 = vadd.f32 0.0, %v2546
  %v2548 = vpop.f32.mrb[0].mxu0
  %2549 = vmatprep.mubr.f32.mxu0 %v1649
  %2550 = vmatmul.mubr.f32.gmra.mrb[0].mxu0 %v1648
  %v2551 = vpop.f32.mrb[0].mxu0
  %v2552 = vadd.f32 0.0, %v2551
  %v2553 = vpop.f32.mrb[0].mxu0
  %2554 = vmatprep.mubr.f32.mxu0 %v1652
  %2555 = vmatmul.mubr.f32.gmra.mrb[0].mxu0 %v1651
  %v2556 = vpop.f32.mrb[0].mxu0
  %v2557 = vadd.f32 0.0, %v2556
  %v2558 = vpop.f32.mrb[0].mxu0
  %2559 = vmatprep.mubr.f32.mxu0 %v1655
  %2560 = vmatmul.mubr.f32.gmra.mrb[0].mxu0 %v1654
  %v2561 = vpop.f32.mrb[0].mxu0
  %v2562 = vadd.f32 0.0, %v2561
  %v2563 = vpop.f32.mrb[0].mxu0
  %2564 = vmatprep.mubr.f32.mxu0 %v1658
  %2565 = vmatmul.mubr.f32.gmra.mrb[0].mxu0 %v1657
  %v2566 = vpop.f32.mrb[0].mxu0
  %v2567 = vadd.f32 0.0, %v2566
  %v2568 = vpop.f32.mrb[0].mxu0
  %2569 = vmatprep.mubr.f32.mxu0 %v1661
  %2570 = vmatmul.mubr.f32.gmra.mrb[0].mxu0 %v1660
  %v2571 = vpop.f32.mrb[0].mxu0
  %v2572 = vadd.f32 0.0, %v2571
  %v2573 = vpop.f32.mrb[0].mxu0
  %2574 = vmatprep.mubr.f32.mxu0 %v1664
  %2575 = vmatmul.mubr.f32.gmra.mrb[0].mxu0 %v1663
  %v2576 = vpop.f32.mrb[0].mxu0
  %v2577 = vadd.f32 0.0, %v2576
  %v2578 = vpop.f32.mrb[0].mxu0
  %2579 = vmatprep.mubr.f32.mxu0 %v1667
  %2580 = vmatmul.mubr.f32.gmra.mrb[0].mxu0 %v1666
  %v2581 = vpop.f32.mrb[0].mxu0
  %v2582 = vadd.f32 0.0, %v2581
  %v2583 = vpop.f32.mrb[0].mxu0
  %2584 = vdwg.mxu0
  %2585 = vmatprep.subr.mxu0 0.0
  %2586 = vmatpush1.msra.mxu0 %v2282
  %2587 = vmatprep.subr.mxu0 0.0
  %2588 = vmatpush1.msra.mxu0 %v2287
  %2589 = vmatprep.subr.mxu0 0.0
  %2590 = vmatpush1.msra.mxu0 %v2292
  %2591 = vmatprep.subr.mxu0 0.0
  %2592 = vmatpush1.msra.mxu0 %v2297
  %2593 = vmatprep.subr.mxu0 0.0
  %2594 = vmatpush1.msra.mxu0 %v2302
  %2595 = vmatprep.subr.mxu0 0.0
  %2596 = vmatpush1.msra.mxu0 %v2307
  %2597 = vmatprep.subr.mxu0 0.0
  %2598 = vmatpush1.msra.mxu0 %v2312
  %2599 = vmatprep.subr.mxu0 0.0
  %2600 = vmatpush1.msra.mxu0 %v2317
  %2601 = vmatprep.subr.mxu0 0.0
  %2602 = vmatpush1.msra.mxu0 0.0
  %2603 = vmatprep.subr.mxu0 0.0
  %2604 = vmatpush1.msra.mxu0 0.0
  %2605 = vmatprep.subr.mxu0 0.0
  %2606 = vmatpush1.msra.mxu0 0.0
  %2607 = vmatprep.subr.mxu0 0.0
  %2608 = vmatpush1.msra.mxu0 0.0
  %2609 = vmatprep.subr.mxu0 0.0
  %2610 = vmatpush1.msra.mxu0 0.0
  %2611 = vmatprep.subr.mxu0 0.0
  %2612 = vmatpush1.msra.mxu0 0.0
  %2613 = vmatprep.subr.mxu0 0.0
  %2614 = vmatpush1.msra.mxu0 0.0
  %2615 = vmatprep.subr.mxu0 0.0
  %2616 = vmatpush1.msra.mxu0 0.0
  %2617 = vmatprep.subr.mxu0 0.0
  %2618 = vmatpush1.msra.mxu0 0.0
  %2619 = vmatprep.subr.mxu0 0.0
  %2620 = vmatpush1.msra.mxu0 0.0
  %2621 = vmatprep.subr.mxu0 0.0
  %2622 = vmatpush1.msra.mxu0 0.0
  %2623 = vmatprep.subr.mxu0 0.0
  %2624 = vmatpush1.msra.mxu0 0.0
  %2625 = vmatprep.subr.mxu0 0.0
  %2626 = vmatpush1.msra.mxu0 0.0
  %2627 = vmatprep.subr.mxu0 0.0
  %2628 = vmatpush1.msra.mxu0 0.0
  %2629 = vmatprep.subr.mxu0 0.0
  %2630 = vmatpush1.msra.mxu0 0.0
  %2631 = vmatprep.subr.mxu0 0.0
  %2632 = vmatpush1.msra.mxu0 0.0
  %2633 = vmatprep.subr.mxu0 0.0
  %2634 = vmatpush1.msra.mxu0 0.0
  %2635 = vmatprep.subr.mxu0 0.0
  %2636 = vmatpush1.msra.mxu0 0.0
  %2637 = vmatprep.subr.mxu0 0.0
  %2638 = vmatpush1.msra.mxu0 0.0
  %2639 = vmatprep.subr.mxu0 0.0
  %2640 = vmatpush1.msra.mxu0 0.0
  %2641 = vmatprep.subr.mxu0 0.0
  %2642 = vmatpush1.msra.mxu0 0.0
  %2643 = vmatprep.subr.mxu0 0.0
  %2644 = vmatpush1.msra.mxu0 0.0
  %2645 = vmatprep.subr.mxu0 0.0
  %2646 = vmatpush1.msra.mxu0 0.0
  %2647 = vmatprep.subr.mxu0 0.0
  %2648 = vmatpush1.msra.mxu0 0.0
  %2649 = vmatprep.mubr.f32.mxu0 0.0
  %2650 = vmatmul.mubr.f32.gmra.mrb[0].mxu0 %v1671
  %v2651 = vpop.f32.mrb[0].mxu0
  %v2652 = vadd.f32 %v2387, %v2651
  %v2653 = vpop.f32.mrb[0].mxu0
  %2654 = vmatprep.mubr.f32.mxu0 0.0
  %2655 = vmatmul.mubr.f32.gmra.mrb[0].mxu0 %v1674
  %v2656 = vpop.f32.mrb[0].mxu0
  %v2657 = vadd.f32 %v2392, %v2656
  %v2658 = vpop.f32.mrb[0].mxu0
  %2659 = vmatprep.mubr.f32.mxu0 0.0
  %2660 = vmatmul.mubr.f32.gmra.mrb[0].mxu0 %v1677
  %v2661 = vpop.f32.mrb[0].mxu0
  %v2662 = vadd.f32 %v2397, %v2661
  %v2663 = vpop.f32.mrb[0].mxu0
  %2664 = vmatprep.mubr.f32.mxu0 0.0
  %2665 = vmatmul.mubr.f32.gmra.mrb[0].mxu0 %v1680
  %v2666 = vpop.f32.mrb[0].mxu0
  %v2667 = vadd.f32 %v2402, %v2666
  %v2668 = vpop.f32.mrb[0].mxu0
  %2669 = vmatprep.mubr.f32.mxu0 0.0
  %2670 = vmatmul.mubr.f32.gmra.mrb[0].mxu0 %v1683
  %v2671 = vpop.f32.mrb[0].mxu0
  %v2672 = vadd.f32 %v2407, %v2671
  %v2673 = vpop.f32.mrb[0].mxu0
  %2674 = vmatprep.mubr.f32.mxu0 0.0
  %2675 = vmatmul.mubr.f32.gmra.mrb[0].mxu0 %v1686
  %v2676 = vpop.f32.mrb[0].mxu0
  %v2677 = vadd.f32 %v2412, %v2676
  %v2678 = vpop.f32.mrb[0].mxu0
  %2679 = vmatprep.mubr.f32.mxu0 0.0
  %2680 = vmatmul.mubr.f32.gmra.mrb[0].mxu0 %v1689
  %v2681 = vpop.f32.mrb[0].mxu0
  %v2682 = vadd.f32 %v2417, %v2681
  %v2683 = vpop.f32.mrb[0].mxu0
  %2684 = vmatprep.mubr.f32.mxu0 0.0
  %2685 = vmatmul.mubr.f32.gmra.mrb[0].mxu0 %v1692
  %v2686 = vpop.f32.mrb[0].mxu0
  %v2687 = vadd.f32 %v2422, %v2686
  %v2688 = vpop.f32.mrb[0].mxu0
  %2689 = vmatprep.mubr.f32.mxu0 0.0
  %2690 = vmatmul.mubr.f32.gmra.mrb[0].mxu0 %v1695
  %v2691 = vpop.f32.mrb[0].mxu0
  %v2692 = vadd.f32 %v2427, %v2691
  %v2693 = vpop.f32.mrb[0].mxu0
  %2694 = vmatprep.mubr.f32.mxu0 0.0
  %2695 = vmatmul.mubr.f32.gmra.mrb[0].mxu0 %v1698
  %v2696 = vpop.f32.mrb[0].mxu0
  %v2697 = vadd.f32 %v2432, %v2696
  %v2698 = vpop.f32.mrb[0].mxu0
  %2699 = vmatprep.mubr.f32.mxu0 0.0
  %2700 = vmatmul.mubr.f32.gmra.mrb[0].mxu0 %v1701
  %v2701 = vpop.f32.mrb[0].mxu0
  %v2702 = vadd.f32 %v2437, %v2701
  %v2703 = vpop.f32.mrb[0].mxu0
  %2704 = vmatprep.mubr.f32.mxu0 0.0
  %2705 = vmatmul.mubr.f32.gmra.mrb[0].mxu0 %v1704
  %v2706 = vpop.f32.mrb[0].mxu0
  %v2707 = vadd.f32 %v2442, %v2706
  %v2708 = vpop.f32.mrb[0].mxu0
  %2709 = vmatprep.mubr.f32.mxu0 0.0
  %2710 = vmatmul.mubr.f32.gmra.mrb[0].mxu0 %v1707
  %v2711 = vpop.f32.mrb[0].mxu0
  %v2712 = vadd.f32 %v2447, %v2711
  %v2713 = vpop.f32.mrb[0].mxu0
  %2714 = vmatprep.mubr.f32.mxu0 0.0
  %2715 = vmatmul.mubr.f32.gmra.mrb[0].mxu0 %v1710
  %v2716 = vpop.f32.mrb[0].mxu0
  %v2717 = vadd.f32 %v2452, %v2716
  %v2718 = vpop.f32.mrb[0].mxu0
  %2719 = vmatprep.mubr.f32.mxu0 0.0
  %2720 = vmatmul.mubr.f32.gmra.mrb[0].mxu0 %v1713
  %v2721 = vpop.f32.mrb[0].mxu0
  %v2722 = vadd.f32 %v2457, %v2721
  %v2723 = vpop.f32.mrb[0].mxu0
  %2724 = vmatprep.mubr.f32.mxu0 0.0
  %2725 = vmatmul.mubr.f32.gmra.mrb[0].mxu0 %v1716
  %v2726 = vpop.f32.mrb[0].mxu0
  %v2727 = vadd.f32 %v2462, %v2726
  %v2728 = vpop.f32.mrb[0].mxu0
  %2729 = vmatprep.mubr.f32.mxu0 0.0
  %2730 = vmatmul.mubr.f32.gmra.mrb[0].mxu0 %v1719
  %v2731 = vpop.f32.mrb[0].mxu0
  %v2732 = vadd.f32 %v2467, %v2731
  %v2733 = vpop.f32.mrb[0].mxu0
  %2734 = vmatprep.mubr.f32.mxu0 0.0
  %2735 = vmatmul.mubr.f32.gmra.mrb[0].mxu0 %v1722
  %v2736 = vpop.f32.mrb[0].mxu0
  %v2737 = vadd.f32 %v2472, %v2736
  %v2738 = vpop.f32.mrb[0].mxu0
  %2739 = vmatprep.mubr.f32.mxu0 0.0
  %2740 = vmatmul.mubr.f32.gmra.mrb[0].mxu0 %v1725
  %v2741 = vpop.f32.mrb[0].mxu0
  %v2742 = vadd.f32 %v2477, %v2741
  %v2743 = vpop.f32.mrb[0].mxu0
  %2744 = vmatprep.mubr.f32.mxu0 0.0
  %2745 = vmatmul.mubr.f32.gmra.mrb[0].mxu0 %v1728
  %v2746 = vpop.f32.mrb[0].mxu0
  %v2747 = vadd.f32 %v2482, %v2746
  %v2748 = vpop.f32.mrb[0].mxu0
  %2749 = vmatprep.mubr.f32.mxu0 0.0
  %2750 = vmatmul.mubr.f32.gmra.mrb[0].mxu0 %v1731
  %v2751 = vpop.f32.mrb[0].mxu0
  %v2752 = vadd.f32 %v2487, %v2751
  %v2753 = vpop.f32.mrb[0].mxu0
  %2754 = vmatprep.mubr.f32.mxu0 0.0
  %2755 = vmatmul.mubr.f32.gmra.mrb[0].mxu0 %v1734
  %v2756 = vpop.f32.mrb[0].mxu0
  %v2757 = vadd.f32 %v2492, %v2756
  %v2758 = vpop.f32.mrb[0].mxu0
  %2759 = vmatprep.mubr.f32.mxu0 0.0
  %2760 = vmatmul.mubr.f32.gmra.mrb[0].mxu0 %v1737
  %v2761 = vpop.f32.mrb[0].mxu0
  %v2762 = vadd.f32 %v2497, %v2761
  %v2763 = vpop.f32.mrb[0].mxu0
  %2764 = vmatprep.mubr.f32.mxu0 0.0
  %2765 = vmatmul.mubr.f32.gmra.mrb[0].mxu0 %v1740
  %v2766 = vpop.f32.mrb[0].mxu0
  %v2767 = vadd.f32 %v2502, %v2766
  %v2768 = vpop.f32.mrb[0].mxu0
  %2769 = vmatprep.mubr.f32.mxu0 0.0
  %2770 = vmatmul.mubr.f32.gmra.mrb[0].mxu0 %v1743
  %v2771 = vpop.f32.mrb[0].mxu0
  %v2772 = vadd.f32 %v2507, %v2771
  %v2773 = vpop.f32.mrb[0].mxu0
  %2774 = vmatprep.mubr.f32.mxu0 0.0
  %2775 = vmatmul.mubr.f32.gmra.mrb[0].mxu0 %v1746
  %v2776 = vpop.f32.mrb[0].mxu0
  %v2777 = vadd.f32 %v2512, %v2776
  %v2778 = vpop.f32.mrb[0].mxu0
  %2779 = vmatprep.mubr.f32.mxu0 0.0
  %2780 = vmatmul.mubr.f32.gmra.mrb[0].mxu0 %v1749
  %v2781 = vpop.f32.mrb[0].mxu0
  %v2782 = vadd.f32 %v2517, %v2781
  %v2783 = vpop.f32.mrb[0].mxu0
  %2784 = vmatprep.mubr.f32.mxu0 0.0
  %2785 = vmatmul.mubr.f32.gmra.mrb[0].mxu0 %v1752
  %v2786 = vpop.f32.mrb[0].mxu0
  %v2787 = vadd.f32 %v2522, %v2786
  %v2788 = vpop.f32.mrb[0].mxu0
  %2789 = vmatprep.mubr.f32.mxu0 0.0
  %2790 = vmatmul.mubr.f32.gmra.mrb[0].mxu0 %v1755
  %v2791 = vpop.f32.mrb[0].mxu0
  %v2792 = vadd.f32 %v2527, %v2791
  %v2793 = vpop.f32.mrb[0].mxu0
  %2794 = vmatprep.mubr.f32.mxu0 0.0
  %2795 = vmatmul.mubr.f32.gmra.mrb[0].mxu0 %v1758
  %v2796 = vpop.f32.mrb[0].mxu0
  %v2797 = vadd.f32 %v2532, %v2796
  %v2798 = vpop.f32.mrb[0].mxu0
  %2799 = vmatprep.mubr.f32.mxu0 0.0
  %2800 = vmatmul.mubr.f32.gmra.mrb[0].mxu0 %v1761
  %v2801 = vpop.f32.mrb[0].mxu0
  %v2802 = vadd.f32 %v2537, %v2801
  %v2803 = vpop.f32.mrb[0].mxu0
  %2804 = vmatprep.mubr.f32.mxu0 0.0
  %2805 = vmatmul.mubr.f32.gmra.mrb[0].mxu0 %v1764
  %v2806 = vpop.f32.mrb[0].mxu0
  %v2807 = vadd.f32 %v2542, %v2806
  %v2808 = vpop.f32.mrb[0].mxu0
  %2809 = vmatprep.mubr.f32.mxu0 0.0
  %2810 = vmatmul.mubr.f32.gmra.mrb[0].mxu0 %v1767
  %v2811 = vpop.f32.mrb[0].mxu0
  %v2812 = vadd.f32 %v2547, %v2811
  %v2813 = vpop.f32.mrb[0].mxu0
  %2814 = vmatprep.mubr.f32.mxu0 0.0
  %2815 = vmatmul.mubr.f32.gmra.mrb[0].mxu0 %v1770
  %v2816 = vpop.f32.mrb[0].mxu0
  %v2817 = vadd.f32 %v2552, %v2816
  %v2818 = vpop.f32.mrb[0].mxu0
  %2819 = vmatprep.mubr.f32.mxu0 0.0
  %2820 = vmatmul.mubr.f32.gmra.mrb[0].mxu0 %v1773
  %v2821 = vpop.f32.mrb[0].mxu0
  %v2822 = vadd.f32 %v2557, %v2821
  %v2823 = vpop.f32.mrb[0].mxu0
  %2824 = vmatprep.mubr.f32.mxu0 0.0
  %2825 = vmatmul.mubr.f32.gmra.mrb[0].mxu0 %v1776
  %v2826 = vpop.f32.mrb[0].mxu0
  %v2827 = vadd.f32 %v2562, %v2826
  %v2828 = vpop.f32.mrb[0].mxu0
  %2829 = vmatprep.mubr.f32.mxu0 0.0
  %2830 = vmatmul.mubr.f32.gmra.mrb[0].mxu0 %v1779
  %v2831 = vpop.f32.mrb[0].mxu0
  %v2832 = vadd.f32 %v2567, %v2831
  %v2833 = vpop.f32.mrb[0].mxu0
  %2834 = vmatprep.mubr.f32.mxu0 0.0
  %2835 = vmatmul.mubr.f32.gmra.mrb[0].mxu0 %v1782
  %v2836 = vpop.f32.mrb[0].mxu0
  %v2837 = vadd.f32 %v2572, %v2836
  %v2838 = vpop.f32.mrb[0].mxu0
  %2839 = vmatprep.mubr.f32.mxu0 0.0
  %2840 = vmatmul.mubr.f32.gmra.mrb[0].mxu0 %v1785
  %v2841 = vpop.f32.mrb[0].mxu0
  %v2842 = vadd.f32 %v2577, %v2841
  %v2843 = vpop.f32.mrb[0].mxu0
  %2844 = vmatprep.mubr.f32.mxu0 0.0
  %2845 = vmatmul.mubr.f32.gmra.mrb[0].mxu0 %v1788
  %v2846 = vpop.f32.mrb[0].mxu0
  %v2847 = vadd.f32 %v2582, %v2846
  %v2848 = vpop.f32.mrb[0].mxu0
  %2849 = vdwg.mxu0
  %v2850 = vmul.f32 %v2652, 2.0
  %v2851 = vmul.f32 %v2657, 2.0
  %v2852 = vmul.f32 %v2662, 2.0
  %v2853 = vmul.f32 %v2667, 2.0
  %v2854 = vmul.f32 %v2672, 2.0
  %v2855 = vmul.f32 %v2677, 2.0
  %v2856 = vmul.f32 %v2682, 2.0
  %v2857 = vmul.f32 %v2687, 2.0
  %v2858 = vmul.f32 %v2692, 2.0
  %v2859 = vmul.f32 %v2697, 2.0
  %v2860 = vmul.f32 %v2702, 2.0
  %v2861 = vmul.f32 %v2707, 2.0
  %v2862 = vmul.f32 %v2712, 2.0
  %v2863 = vmul.f32 %v2717, 2.0
  %v2864 = vmul.f32 %v2722, 2.0
  %v2865 = vmul.f32 %v2727, 2.0
  %v2866 = vmul.f32 %v2732, 2.0
  %v2867 = vmul.f32 %v2737, 2.0
  %v2868 = vmul.f32 %v2742, 2.0
  %v2869 = vmul.f32 %v2747, 2.0
  %v2870 = vmul.f32 %v2752, 2.0
  %v2871 = vmul.f32 %v2757, 2.0
  %v2872 = vmul.f32 %v2762, 2.0
  %v2873 = vmul.f32 %v2767, 2.0
  %v2874 = vmul.f32 %v2772, 2.0
  %v2875 = vmul.f32 %v2777, 2.0
  %v2876 = vmul.f32 %v2782, 2.0
  %v2877 = vmul.f32 %v2787, 2.0
  %v2878 = vmul.f32 %v2792, 2.0
  %v2879 = vmul.f32 %v2797, 2.0
  %v2880 = vmul.f32 %v2802, 2.0
  %v2881 = vmul.f32 %v2807, 2.0
  %v2882 = vmul.f32 %v2812, 2.0
  %v2883 = vmul.f32 %v2817, 2.0
  %v2884 = vmul.f32 %v2822, 2.0
  %v2885 = vmul.f32 %v2827, 2.0
  %v2886 = vmul.f32 %v2832, 2.0
  %v2887 = vmul.f32 %v2837, 2.0
  %v2888 = vmul.f32 %v2842, 2.0
  %v2889 = vmul.f32 %v2847, 2.0
  %v2890 = vsub.f32 %v2850, %v1509
  %v2891 = vsub.f32 %v2851, %v1510
  %v2892 = vsub.f32 %v2852, %v1511
  %v2893 = vsub.f32 %v2853, %v1512
  %v2894 = vsub.f32 %v2854, %v1513
  %v2895 = vsub.f32 %v2855, %v1514
  %v2896 = vsub.f32 %v2856, %v1515
  %v2897 = vsub.f32 %v2857, %v1516
  %v2898 = vsub.f32 %v2858, %v1517
  %v2899 = vsub.f32 %v2859, %v1518
  %v2900 = vsub.f32 %v2860, %v1519
  %v2901 = vsub.f32 %v2861, %v1520
  %v2902 = vsub.f32 %v2862, %v1521
  %v2903 = vsub.f32 %v2863, %v1522
  %v2904 = vsub.f32 %v2864, %v1523
  %v2905 = vsub.f32 %v2865, %v1524
  %v2906 = vsub.f32 %v2866, %v1525
  %v2907 = vsub.f32 %v2867, %v1526
  %v2908 = vsub.f32 %v2868, %v1527
  %v2909 = vsub.f32 %v2869, %v1528
  %v2910 = vsub.f32 %v2870, %v1529
  %v2911 = vsub.f32 %v2871, %v1530
  %v2912 = vsub.f32 %v2872, %v1531
  %v2913 = vsub.f32 %v2873, %v1532
  %v2914 = vsub.f32 %v2874, %v1533
  %v2915 = vsub.f32 %v2875, %v1534
  %v2916 = vsub.f32 %v2876, %v1535
  %v2917 = vsub.f32 %v2877, %v1536
  %v2918 = vsub.f32 %v2878, %v1537
  %v2919 = vsub.f32 %v2879, %v1538
  %v2920 = vsub.f32 %v2880, %v1539
  %v2921 = vsub.f32 %v2881, %v1540
  %v2922 = vsub.f32 %v2882, %v1541
  %v2923 = vsub.f32 %v2883, %v1542
  %v2924 = vsub.f32 %v2884, %v1543
  %v2925 = vsub.f32 %v2885, %v1544
  %v2926 = vsub.f32 %v2886, %v1545
  %v2927 = vsub.f32 %v2887, %v1546
  %v2928 = vsub.f32 %v2888, %v1547
  %v2929 = vsub.f32 %v2889, %v1548
  %2970 = vrot.lane.b32.xlu0 %v2122, 32
  %v2971 = vpop.permute.xlu0 %2970
  %2972 = vrot.lane.b32.xlu0 %v2127, 32
  %v2973 = vpop.permute.xlu0 %2972
  %2974 = vrot.lane.b32.xlu0 %v2132, 32
  %v2975 = vpop.permute.xlu0 %2974
  %2976 = vrot.lane.b32.xlu0 %v2137, 32
  %v2977 = vpop.permute.xlu0 %2976
  %2978 = vrot.lane.b32.xlu0 %v2142, 32
  %v2979 = vpop.permute.xlu0 %2978
  %2980 = vrot.lane.b32.xlu0 %v2147, 32
  %v2981 = vpop.permute.xlu0 %2980
  %2982 = vrot.lane.b32.xlu0 %v2152, 32
  %v2983 = vpop.permute.xlu0 %2982
  %2984 = vrot.lane.b32.xlu0 %v2157, 32
  %v2985 = vpop.permute.xlu0 %2984
  %2986 = vrot.lane.b32.xlu0 %v2162, 32
  %v2987 = vpop.permute.xlu0 %2986
  %2988 = vrot.lane.b32.xlu0 %v2167, 32
  %v2989 = vpop.permute.xlu0 %2988
  %2990 = vrot.lane.b32.xlu0 %v2172, 32
  %v2991 = vpop.permute.xlu0 %2990
  %2992 = vrot.lane.b32.xlu0 %v2177, 32
  %v2993 = vpop.permute.xlu0 %2992
  %2994 = vrot.lane.b32.xlu0 %v2182, 32
  %v2995 = vpop.permute.xlu0 %2994
  %2996 = vrot.lane.b32.xlu0 %v2187, 32
  %v2997 = vpop.permute.xlu0 %2996
  %2998 = vrot.lane.b32.xlu0 %v2192, 32
  %v2999 = vpop.permute.xlu0 %2998
  %3000 = vrot.lane.b32.xlu0 %v2197, 32
  %v3001 = vpop.permute.xlu0 %3000
  %3002 = vrot.lane.b32.xlu0 %v2202, 32
  %v3003 = vpop.permute.xlu0 %3002
  %3004 = vrot.lane.b32.xlu0 %v2207, 32
  %v3005 = vpop.permute.xlu0 %3004
  %3006 = vrot.lane.b32.xlu0 %v2212, 32
  %v3007 = vpop.permute.xlu0 %3006
  %3008 = vrot.lane.b32.xlu0 %v2217, 32
  %v3009 = vpop.permute.xlu0 %3008
  %3010 = vrot.lane.b32.xlu0 %v2222, 32
  %v3011 = vpop.permute.xlu0 %3010
  %3012 = vrot.lane.b32.xlu0 %v2227, 32
  %v3013 = vpop.permute.xlu0 %3012
  %3014 = vrot.lane.b32.xlu0 %v2232, 32
  %v3015 = vpop.permute.xlu0 %3014
  %3016 = vrot.lane.b32.xlu0 %v2237, 32
  %v3017 = vpop.permute.xlu0 %3016
  %3018 = vrot.lane.b32.xlu0 %v2242, 32
  %v3019 = vpop.permute.xlu0 %3018
  %3020 = vrot.lane.b32.xlu0 %v2247, 32
  %v3021 = vpop.permute.xlu0 %3020
  %3022 = vrot.lane.b32.xlu0 %v2252, 32
  %v3023 = vpop.permute.xlu0 %3022
  %3024 = vrot.lane.b32.xlu0 %v2257, 32
  %v3025 = vpop.permute.xlu0 %3024
  %3026 = vrot.lane.b32.xlu0 %v2262, 32
  %v3027 = vpop.permute.xlu0 %3026
  %3028 = vrot.lane.b32.xlu0 %v2267, 32
  %v3029 = vpop.permute.xlu0 %3028
  %3030 = vrot.lane.b32.xlu0 %v2272, 32
  %v3031 = vpop.permute.xlu0 %3030
  %3032 = vrot.lane.b32.xlu0 %v2277, 32
  %v3033 = vpop.permute.xlu0 %3032
  %3034 = vrot.lane.b32.xlu0 %v2282, 32
  %v3035 = vpop.permute.xlu0 %3034
  %3036 = vrot.lane.b32.xlu0 %v2287, 32
  %v3037 = vpop.permute.xlu0 %3036
  %3038 = vrot.lane.b32.xlu0 %v2292, 32
  %v3039 = vpop.permute.xlu0 %3038
  %3040 = vrot.lane.b32.xlu0 %v2297, 32
  %v3041 = vpop.permute.xlu0 %3040
  %3042 = vrot.lane.b32.xlu0 %v2302, 32
  %v3043 = vpop.permute.xlu0 %3042
  %3044 = vrot.lane.b32.xlu0 %v2307, 32
  %v3045 = vpop.permute.xlu0 %3044
  %3046 = vrot.lane.b32.xlu0 %v2312, 32
  %v3047 = vpop.permute.xlu0 %3046
  %3048 = vrot.lane.b32.xlu0 %v2317, 32
  %v3049 = vpop.permute.xlu0 %3048
  %3130 = vrot.lane.b32.xlu0 %v2890, 64
  %v3131 = vpop.permute.xlu0 %3130
  %3132 = vrot.lane.b32.xlu0 %v2891, 64
  %v3133 = vpop.permute.xlu0 %3132
  %3134 = vrot.lane.b32.xlu0 %v2892, 64
  %v3135 = vpop.permute.xlu0 %3134
  %3136 = vrot.lane.b32.xlu0 %v2893, 64
  %v3137 = vpop.permute.xlu0 %3136
  %3138 = vrot.lane.b32.xlu0 %v2894, 64
  %v3139 = vpop.permute.xlu0 %3138
  %3140 = vrot.lane.b32.xlu0 %v2895, 64
  %v3141 = vpop.permute.xlu0 %3140
  %3142 = vrot.lane.b32.xlu0 %v2896, 64
  %v3143 = vpop.permute.xlu0 %3142
  %3144 = vrot.lane.b32.xlu0 %v2897, 64
  %v3145 = vpop.permute.xlu0 %3144
  %3146 = vrot.lane.b32.xlu0 %v2898, 64
  %v3147 = vpop.permute.xlu0 %3146
  %3148 = vrot.lane.b32.xlu0 %v2899, 64
  %v3149 = vpop.permute.xlu0 %3148
  %3150 = vrot.lane.b32.xlu0 %v2900, 64
  %v3151 = vpop.permute.xlu0 %3150
  %3152 = vrot.lane.b32.xlu0 %v2901, 64
  %v3153 = vpop.permute.xlu0 %3152
  %3154 = vrot.lane.b32.xlu0 %v2902, 64
  %v3155 = vpop.permute.xlu0 %3154
  %3156 = vrot.lane.b32.xlu0 %v2903, 64
  %v3157 = vpop.permute.xlu0 %3156
  %3158 = vrot.lane.b32.xlu0 %v2904, 64
  %v3159 = vpop.permute.xlu0 %3158
  %3160 = vrot.lane.b32.xlu0 %v2905, 64
  %v3161 = vpop.permute.xlu0 %3160
  %3162 = vrot.lane.b32.xlu0 %v2906, 64
  %v3163 = vpop.permute.xlu0 %3162
  %3164 = vrot.lane.b32.xlu0 %v2907, 64
  %v3165 = vpop.permute.xlu0 %3164
  %3166 = vrot.lane.b32.xlu0 %v2908, 64
  %v3167 = vpop.permute.xlu0 %3166
  %3168 = vrot.lane.b32.xlu0 %v2909, 64
  %v3169 = vpop.permute.xlu0 %3168
  %3170 = vrot.lane.b32.xlu0 %v2910, 64
  %v3171 = vpop.permute.xlu0 %3170
  %3172 = vrot.lane.b32.xlu0 %v2911, 64
  %v3173 = vpop.permute.xlu0 %3172
  %3174 = vrot.lane.b32.xlu0 %v2912, 64
  %v3175 = vpop.permute.xlu0 %3174
  %3176 = vrot.lane.b32.xlu0 %v2913, 64
  %v3177 = vpop.permute.xlu0 %3176
  %3178 = vrot.lane.b32.xlu0 %v2914, 64
  %v3179 = vpop.permute.xlu0 %3178
  %3180 = vrot.lane.b32.xlu0 %v2915, 64
  %v3181 = vpop.permute.xlu0 %3180
  %3182 = vrot.lane.b32.xlu0 %v2916, 64
  %v3183 = vpop.permute.xlu0 %3182
  %3184 = vrot.lane.b32.xlu0 %v2917, 64
  %v3185 = vpop.permute.xlu0 %3184
  %3186 = vrot.lane.b32.xlu0 %v2918, 64
  %v3187 = vpop.permute.xlu0 %3186
  %3188 = vrot.lane.b32.xlu0 %v2919, 64
  %v3189 = vpop.permute.xlu0 %3188
  %3190 = vrot.lane.b32.xlu0 %v2920, 64
  %v3191 = vpop.permute.xlu0 %3190
  %3192 = vrot.lane.b32.xlu0 %v2921, 64
  %v3193 = vpop.permute.xlu0 %3192
  %3194 = vrot.lane.b32.xlu0 %v2922, 64
  %v3195 = vpop.permute.xlu0 %3194
  %3196 = vrot.lane.b32.xlu0 %v2923, 64
  %v3197 = vpop.permute.xlu0 %3196
  %3198 = vrot.lane.b32.xlu0 %v2924, 64
  %v3199 = vpop.permute.xlu0 %3198
  %3200 = vrot.lane.b32.xlu0 %v2925, 64
  %v3201 = vpop.permute.xlu0 %3200
  %3202 = vrot.lane.b32.xlu0 %v2926, 64
  %v3203 = vpop.permute.xlu0 %3202
  %3204 = vrot.lane.b32.xlu0 %v2927, 64
  %v3205 = vpop.permute.xlu0 %3204
  %3206 = vrot.lane.b32.xlu0 %v2928, 64
  %v3207 = vpop.permute.xlu0 %3206
  %3208 = vrot.lane.b32.xlu0 %v2929, 64
  %v3209 = vpop.permute.xlu0 %3208
  %vm3250 = vcmask 261120
  %v3251 = vsel %vm3250, %v1509, %v2971
  %v3252 = vsel %vm3250, %v1510, %v2973
  %v3253 = vsel %vm3250, %v1511, %v2975
  %v3254 = vsel %vm3250, %v1512, %v2977
  %v3255 = vsel %vm3250, %v1513, %v2979
  %v3256 = vsel %vm3250, %v1514, %v2981
  %v3257 = vsel %vm3250, %v1515, %v2983
  %v3258 = vsel %vm3250, %v1516, %v2985
  %v3259 = vsel %vm3250, %v1517, %v2987
  %v3260 = vsel %vm3250, %v1518, %v2989
  %v3261 = vsel %vm3250, %v1519, %v2991
  %v3262 = vsel %vm3250, %v1520, %v2993
  %v3263 = vsel %vm3250, %v1521, %v2995
  %v3264 = vsel %vm3250, %v1522, %v2997
  %v3265 = vsel %vm3250, %v1523, %v2999
  %v3266 = vsel %vm3250, %v1524, %v3001
  %v3267 = vsel %vm3250, %v1525, %v3003
  %v3268 = vsel %vm3250, %v1526, %v3005
  %v3269 = vsel %vm3250, %v1527, %v3007
  %v3270 = vsel %vm3250, %v1528, %v3009
  %v3271 = vsel %vm3250, %v1529, %v3011
  %v3272 = vsel %vm3250, %v1530, %v3013
  %v3273 = vsel %vm3250, %v1531, %v3015
  %v3274 = vsel %vm3250, %v1532, %v3017
  %v3275 = vsel %vm3250, %v1533, %v3019
  %v3276 = vsel %vm3250, %v1534, %v3021
  %v3277 = vsel %vm3250, %v1535, %v3023
  %v3278 = vsel %vm3250, %v1536, %v3025
  %v3279 = vsel %vm3250, %v1537, %v3027
  %v3280 = vsel %vm3250, %v1538, %v3029
  %v3281 = vsel %vm3250, %v1539, %v3031
  %v3282 = vsel %vm3250, %v1540, %v3033
  %v3283 = vsel %vm3250, %v1541, %v3035
  %v3284 = vsel %vm3250, %v1542, %v3037
  %v3285 = vsel %vm3250, %v1543, %v3039
  %v3286 = vsel %vm3250, %v1544, %v3041
  %v3287 = vsel %vm3250, %v1545, %v3043
  %v3288 = vsel %vm3250, %v1546, %v3045
  %v3289 = vsel %vm3250, %v1547, %v3047
  %v3290 = vsel %vm3250, %v1548, %v3049
  %v3291 = vsel %vm1669, %v3251, %v3131
  %v3292 = vsel %vm1669, %v3252, %v3133
  %v3293 = vsel %vm1669, %v3253, %v3135
  %v3294 = vsel %vm1669, %v3254, %v3137
  %v3295 = vsel %vm1669, %v3255, %v3139
  %v3296 = vsel %vm1669, %v3256, %v3141
  %v3297 = vsel %vm1669, %v3257, %v3143
  %v3298 = vsel %vm1669, %v3258, %v3145
  %v3299 = vsel %vm1669, %v3259, %v3147
  %v3300 = vsel %vm1669, %v3260, %v3149
  %v3301 = vsel %vm1669, %v3261, %v3151
  %v3302 = vsel %vm1669, %v3262, %v3153
  %v3303 = vsel %vm1669, %v3263, %v3155
  %v3304 = vsel %vm1669, %v3264, %v3157
  %v3305 = vsel %vm1669, %v3265, %v3159
  %v3306 = vsel %vm1669, %v3266, %v3161
  %v3307 = vsel %vm1669, %v3267, %v3163
  %v3308 = vsel %vm1669, %v3268, %v3165
  %v3309 = vsel %vm1669, %v3269, %v3167
  %v3310 = vsel %vm1669, %v3270, %v3169
  %v3311 = vsel %vm1669, %v3271, %v3171
  %v3312 = vsel %vm1669, %v3272, %v3173
  %v3313 = vsel %vm1669, %v3273, %v3175
  %v3314 = vsel %vm1669, %v3274, %v3177
  %v3315 = vsel %vm1669, %v3275, %v3179
  %v3316 = vsel %vm1669, %v3276, %v3181
  %v3317 = vsel %vm1669, %v3277, %v3183
  %v3318 = vsel %vm1669, %v3278, %v3185
  %v3319 = vsel %vm1669, %v3279, %v3187
  %v3320 = vsel %vm1669, %v3280, %v3189
  %v3321 = vsel %vm1669, %v3281, %v3191
  %v3322 = vsel %vm1669, %v3282, %v3193
  %v3323 = vsel %vm1669, %v3283, %v3195
  %v3324 = vsel %vm1669, %v3284, %v3197
  %v3325 = vsel %vm1669, %v3285, %v3199
  %v3326 = vsel %vm1669, %v3286, %v3201
  %v3327 = vsel %vm1669, %v3287, %v3203
  %v3328 = vsel %vm1669, %v3288, %v3205
  %v3329 = vsel %vm1669, %v3289, %v3207
  %v3330 = vsel %vm1669, %v3290, %v3209
  %v3331 = vld [vmem:[%s5] sm:$0xff]
  %v3332 = vld [vmem:[%s5 + $0x8] sm:$0xff]
  %v3333 = vld [vmem:[%s5 + $0x10] sm:$0xff]
  %v3334 = vld [vmem:[%s5 + $0x18] sm:$0xff]
  %v3335 = vld [vmem:[%s5 + $0x20] sm:$0xff]
  %v3336 = vld [vmem:[%s5 + $0x28] sm:$0xff]
  %v3337 = vld [vmem:[%s5 + $0x30] sm:$0xff]
  %v3338 = vld [vmem:[%s5 + $0x38] sm:$0xff]
  %v3339 = vld [vmem:[%s5 + $0x40] sm:$0xff]
  %v3340 = vld [vmem:[%s5 + $0x48] sm:$0xff]
  %v3341 = vld [vmem:[%s5 + $0x50] sm:$0xff]
  %v3342 = vld [vmem:[%s5 + $0x58] sm:$0xff]
  %v3343 = vld [vmem:[%s6] sm:$0x1]
  %v3345 = vlaneseq
  %v3346 = vshrl.u32 %v3345, 7
  %v3347 = vsub.s32 0, %v3346
  %v3348 = vrot.slane %v3343, %v3347
  %vm3350 = vcmask 785408
  %v3352 = vsel %vm3350, %v3291, 0
  %v3355 = vsel %vm3350, %v3292, 0
  %v3358 = vsel %vm3350, %v3293, 0
  %v3361 = vsel %vm3350, %v3294, 0
  %v3364 = vsel %vm3350, %v3295, 0
  %v3367 = vsel %vm3350, %v3296, 0
  %v3370 = vsel %vm3350, %v3297, 0
  %v3373 = vsel %vm3350, %v3298, 0
  %v3376 = vsel %vm3350, %v3299, 0
  %v3379 = vsel %vm3350, %v3300, 0
  %v3382 = vsel %vm3350, %v3301, 0
  %v3385 = vsel %vm3350, %v3302, 0
  %v3388 = vsel %vm3350, %v3303, 0
  %v3391 = vsel %vm3350, %v3304, 0
  %v3394 = vsel %vm3350, %v3305, 0
  %v3397 = vsel %vm3350, %v3306, 0
  %v3400 = vsel %vm3350, %v3307, 0
  %v3403 = vsel %vm3350, %v3308, 0
  %v3406 = vsel %vm3350, %v3309, 0
  %v3409 = vsel %vm3350, %v3310, 0
  %v3412 = vsel %vm3350, %v3311, 0
  %v3415 = vsel %vm3350, %v3312, 0
  %v3418 = vsel %vm3350, %v3313, 0
  %v3421 = vsel %vm3350, %v3314, 0
  %v3424 = vsel %vm3350, %v3315, 0
  %v3427 = vsel %vm3350, %v3316, 0
  %v3430 = vsel %vm3350, %v3317, 0
  %v3433 = vsel %vm3350, %v3318, 0
  %v3436 = vsel %vm3350, %v3319, 0
  %v3439 = vsel %vm3350, %v3320, 0
  %v3442 = vsel %vm3350, %v3321, 0
  %v3445 = vsel %vm3350, %v3322, 0
  %v3448 = vsel %vm3350, %v3323, 0
  %v3451 = vsel %vm3350, %v3324, 0
  %v3454 = vsel %vm3350, %v3325, 0
  %v3457 = vsel %vm3350, %v3326, 0
  %v3460 = vsel %vm3350, %v3327, 0
  %v3463 = vsel %vm3350, %v3328, 0
  %v3466 = vsel %vm3350, %v3329, 0
  %v3469 = vsel %vm3350, %v3330, 0
  %3471 = vmatprep.subr.mxu0 0.0
  %3472 = vmatpush1.msra.mxu0 %v3331
  %3473 = vmatprep.subr.mxu0 0.0
  %3474 = vmatpush1.msra.mxu0 %v3332
  %3475 = vmatprep.subr.mxu0 0.0
  %3476 = vmatpush1.msra.mxu0 %v3333
  %3477 = vmatprep.subr.mxu0 0.0
  %3478 = vmatpush1.msra.mxu0 %v3334
  %3479 = vmatprep.subr.mxu0 0.0
  %3480 = vmatpush1.msra.mxu0 %v3335
  %3481 = vmatprep.subr.mxu0 0.0
  %3482 = vmatpush1.msra.mxu0 %v3336
  %3483 = vmatprep.subr.mxu0 0.0
  %3484 = vmatpush1.msra.mxu0 %v3337
  %3485 = vmatprep.subr.mxu0 0.0
  %3486 = vmatpush1.msra.mxu0 %v3338
  %3487 = vmatprep.subr.mxu0 0.0
  %3488 = vmatpush1.msra.mxu0 %v3339
  %3489 = vmatprep.subr.mxu0 0.0
  %3490 = vmatpush1.msra.mxu0 %v3340
  %3491 = vmatprep.subr.mxu0 0.0
  %3492 = vmatpush1.msra.mxu0 %v3341
  %3493 = vmatprep.subr.mxu0 0.0
  %3494 = vmatpush1.msra.mxu0 %v3342
  %3495 = vmatprep.subr.mxu0 0.0
  %3496 = vmatpush1.msra.mxu0 0.0
  %3497 = vmatprep.subr.mxu0 0.0
  %3498 = vmatpush1.msra.mxu0 0.0
  %3499 = vmatprep.subr.mxu0 0.0
  %3500 = vmatpush1.msra.mxu0 0.0
  %3501 = vmatprep.subr.mxu0 0.0
  %3502 = vmatpush1.msra.mxu0 0.0
  %3503 = vmatprep.subr.mxu0 0.0
  %3504 = vmatpush1.msra.mxu0 0.0
  %3505 = vmatprep.subr.mxu0 0.0
  %3506 = vmatpush1.msra.mxu0 0.0
  %3507 = vmatprep.subr.mxu0 0.0
  %3508 = vmatpush1.msra.mxu0 0.0
  %3509 = vmatprep.subr.mxu0 0.0
  %3510 = vmatpush1.msra.mxu0 0.0
  %3511 = vmatprep.subr.mxu0 0.0
  %3512 = vmatpush1.msra.mxu0 0.0
  %3513 = vmatprep.subr.mxu0 0.0
  %3514 = vmatpush1.msra.mxu0 0.0
  %3515 = vmatprep.subr.mxu0 0.0
  %3516 = vmatpush1.msra.mxu0 0.0
  %3517 = vmatprep.subr.mxu0 0.0
  %3518 = vmatpush1.msra.mxu0 0.0
  %3519 = vmatprep.subr.mxu0 0.0
  %3520 = vmatpush1.msra.mxu0 0.0
  %3521 = vmatprep.subr.mxu0 0.0
  %3522 = vmatpush1.msra.mxu0 0.0
  %3523 = vmatprep.subr.mxu0 0.0
  %3524 = vmatpush1.msra.mxu0 0.0
  %3525 = vmatprep.subr.mxu0 0.0
  %3526 = vmatpush1.msra.mxu0 0.0
  %3527 = vmatprep.subr.mxu0 0.0
  %3528 = vmatpush1.msra.mxu0 0.0
  %3529 = vmatprep.subr.mxu0 0.0
  %3530 = vmatpush1.msra.mxu0 0.0
  %3531 = vmatprep.subr.mxu0 0.0
  %3532 = vmatpush1.msra.mxu0 0.0
  %3533 = vmatprep.subr.mxu0 0.0
  %3534 = vmatpush1.msra.mxu0 0.0
  %3535 = vmatprep.mubr.f32.mxu0 0.0
  %3536 = vmatmul.mubr.f32.gmra.mrb[0].mxu0 %v3352
  %v3537 = vpop.f32.mrb[0].mxu0
  %v3538 = vadd.f32 %v3348, %v3537
  %v3539 = vpop.f32.mrb[0].mxu0
  %3540 = vmatprep.mubr.f32.mxu0 0.0
  %3541 = vmatmul.mubr.f32.gmra.mrb[0].mxu0 %v3355
  %v3542 = vpop.f32.mrb[0].mxu0
  %v3543 = vadd.f32 %v3348, %v3542
  %v3544 = vpop.f32.mrb[0].mxu0
  %3545 = vmatprep.mubr.f32.mxu0 0.0
  %3546 = vmatmul.mubr.f32.gmra.mrb[0].mxu0 %v3358
  %v3547 = vpop.f32.mrb[0].mxu0
  %v3548 = vadd.f32 %v3348, %v3547
  %v3549 = vpop.f32.mrb[0].mxu0
  %3550 = vmatprep.mubr.f32.mxu0 0.0
  %3551 = vmatmul.mubr.f32.gmra.mrb[0].mxu0 %v3361
  %v3552 = vpop.f32.mrb[0].mxu0
  %v3553 = vadd.f32 %v3348, %v3552
  %v3554 = vpop.f32.mrb[0].mxu0
  %3555 = vmatprep.mubr.f32.mxu0 0.0
  %3556 = vmatmul.mubr.f32.gmra.mrb[0].mxu0 %v3364
  %v3557 = vpop.f32.mrb[0].mxu0
  %v3558 = vadd.f32 %v3348, %v3557
  %v3559 = vpop.f32.mrb[0].mxu0
  %3560 = vmatprep.mubr.f32.mxu0 0.0
  %3561 = vmatmul.mubr.f32.gmra.mrb[0].mxu0 %v3367
  %v3562 = vpop.f32.mrb[0].mxu0
  %v3563 = vadd.f32 %v3348, %v3562
  %v3564 = vpop.f32.mrb[0].mxu0
  %3565 = vmatprep.mubr.f32.mxu0 0.0
  %3566 = vmatmul.mubr.f32.gmra.mrb[0].mxu0 %v3370
  %v3567 = vpop.f32.mrb[0].mxu0
  %v3568 = vadd.f32 %v3348, %v3567
  %v3569 = vpop.f32.mrb[0].mxu0
  %3570 = vmatprep.mubr.f32.mxu0 0.0
  %3571 = vmatmul.mubr.f32.gmra.mrb[0].mxu0 %v3373
  %v3572 = vpop.f32.mrb[0].mxu0
  %v3573 = vadd.f32 %v3348, %v3572
  %v3574 = vpop.f32.mrb[0].mxu0
  %3575 = vmatprep.mubr.f32.mxu0 0.0
  %3576 = vmatmul.mubr.f32.gmra.mrb[0].mxu0 %v3376
  %v3577 = vpop.f32.mrb[0].mxu0
  %v3578 = vadd.f32 %v3348, %v3577
  %v3579 = vpop.f32.mrb[0].mxu0
  %3580 = vmatprep.mubr.f32.mxu0 0.0
  %3581 = vmatmul.mubr.f32.gmra.mrb[0].mxu0 %v3379
  %v3582 = vpop.f32.mrb[0].mxu0
  %v3583 = vadd.f32 %v3348, %v3582
  %v3584 = vpop.f32.mrb[0].mxu0
  %3585 = vmatprep.mubr.f32.mxu0 0.0
  %3586 = vmatmul.mubr.f32.gmra.mrb[0].mxu0 %v3382
  %v3587 = vpop.f32.mrb[0].mxu0
  %v3588 = vadd.f32 %v3348, %v3587
  %v3589 = vpop.f32.mrb[0].mxu0
  %3590 = vmatprep.mubr.f32.mxu0 0.0
  %3591 = vmatmul.mubr.f32.gmra.mrb[0].mxu0 %v3385
  %v3592 = vpop.f32.mrb[0].mxu0
  %v3593 = vadd.f32 %v3348, %v3592
  %v3594 = vpop.f32.mrb[0].mxu0
  %3595 = vmatprep.mubr.f32.mxu0 0.0
  %3596 = vmatmul.mubr.f32.gmra.mrb[0].mxu0 %v3388
  %v3597 = vpop.f32.mrb[0].mxu0
  %v3598 = vadd.f32 %v3348, %v3597
  %v3599 = vpop.f32.mrb[0].mxu0
  %3600 = vmatprep.mubr.f32.mxu0 0.0
  %3601 = vmatmul.mubr.f32.gmra.mrb[0].mxu0 %v3391
  %v3602 = vpop.f32.mrb[0].mxu0
  %v3603 = vadd.f32 %v3348, %v3602
  %v3604 = vpop.f32.mrb[0].mxu0
  %3605 = vmatprep.mubr.f32.mxu0 0.0
  %3606 = vmatmul.mubr.f32.gmra.mrb[0].mxu0 %v3394
  %v3607 = vpop.f32.mrb[0].mxu0
  %v3608 = vadd.f32 %v3348, %v3607
  %v3609 = vpop.f32.mrb[0].mxu0
  %3610 = vmatprep.mubr.f32.mxu0 0.0
  %3611 = vmatmul.mubr.f32.gmra.mrb[0].mxu0 %v3397
  %v3612 = vpop.f32.mrb[0].mxu0
  %v3613 = vadd.f32 %v3348, %v3612
  %v3614 = vpop.f32.mrb[0].mxu0
  %3615 = vmatprep.mubr.f32.mxu0 0.0
  %3616 = vmatmul.mubr.f32.gmra.mrb[0].mxu0 %v3400
  %v3617 = vpop.f32.mrb[0].mxu0
  %v3618 = vadd.f32 %v3348, %v3617
  %v3619 = vpop.f32.mrb[0].mxu0
  %3620 = vmatprep.mubr.f32.mxu0 0.0
  %3621 = vmatmul.mubr.f32.gmra.mrb[0].mxu0 %v3403
  %v3622 = vpop.f32.mrb[0].mxu0
  %v3623 = vadd.f32 %v3348, %v3622
  %v3624 = vpop.f32.mrb[0].mxu0
  %3625 = vmatprep.mubr.f32.mxu0 0.0
  %3626 = vmatmul.mubr.f32.gmra.mrb[0].mxu0 %v3406
  %v3627 = vpop.f32.mrb[0].mxu0
  %v3628 = vadd.f32 %v3348, %v3627
  %v3629 = vpop.f32.mrb[0].mxu0
  %3630 = vmatprep.mubr.f32.mxu0 0.0
  %3631 = vmatmul.mubr.f32.gmra.mrb[0].mxu0 %v3409
  %v3632 = vpop.f32.mrb[0].mxu0
  %v3633 = vadd.f32 %v3348, %v3632
  %v3634 = vpop.f32.mrb[0].mxu0
  %3635 = vmatprep.mubr.f32.mxu0 0.0
  %3636 = vmatmul.mubr.f32.gmra.mrb[0].mxu0 %v3412
  %v3637 = vpop.f32.mrb[0].mxu0
  %v3638 = vadd.f32 %v3348, %v3637
  %v3639 = vpop.f32.mrb[0].mxu0
  %3640 = vmatprep.mubr.f32.mxu0 0.0
  %3641 = vmatmul.mubr.f32.gmra.mrb[0].mxu0 %v3415
  %v3642 = vpop.f32.mrb[0].mxu0
  %v3643 = vadd.f32 %v3348, %v3642
  %v3644 = vpop.f32.mrb[0].mxu0
  %3645 = vmatprep.mubr.f32.mxu0 0.0
  %3646 = vmatmul.mubr.f32.gmra.mrb[0].mxu0 %v3418
  %v3647 = vpop.f32.mrb[0].mxu0
  %v3648 = vadd.f32 %v3348, %v3647
  %v3649 = vpop.f32.mrb[0].mxu0
  %3650 = vmatprep.mubr.f32.mxu0 0.0
  %3651 = vmatmul.mubr.f32.gmra.mrb[0].mxu0 %v3421
  %v3652 = vpop.f32.mrb[0].mxu0
  %v3653 = vadd.f32 %v3348, %v3652
  %v3654 = vpop.f32.mrb[0].mxu0
  %3655 = vmatprep.mubr.f32.mxu0 0.0
  %3656 = vmatmul.mubr.f32.gmra.mrb[0].mxu0 %v3424
  %v3657 = vpop.f32.mrb[0].mxu0
  %v3658 = vadd.f32 %v3348, %v3657
  %v3659 = vpop.f32.mrb[0].mxu0
  %3660 = vmatprep.mubr.f32.mxu0 0.0
  %3661 = vmatmul.mubr.f32.gmra.mrb[0].mxu0 %v3427
  %v3662 = vpop.f32.mrb[0].mxu0
  %v3663 = vadd.f32 %v3348, %v3662
  %v3664 = vpop.f32.mrb[0].mxu0
  %3665 = vmatprep.mubr.f32.mxu0 0.0
  %3666 = vmatmul.mubr.f32.gmra.mrb[0].mxu0 %v3430
  %v3667 = vpop.f32.mrb[0].mxu0
  %v3668 = vadd.f32 %v3348, %v3667
  %v3669 = vpop.f32.mrb[0].mxu0
  %3670 = vmatprep.mubr.f32.mxu0 0.0
  %3671 = vmatmul.mubr.f32.gmra.mrb[0].mxu0 %v3433
  %v3672 = vpop.f32.mrb[0].mxu0
  %v3673 = vadd.f32 %v3348, %v3672
  %v3674 = vpop.f32.mrb[0].mxu0
  %3675 = vmatprep.mubr.f32.mxu0 0.0
  %3676 = vmatmul.mubr.f32.gmra.mrb[0].mxu0 %v3436
  %v3677 = vpop.f32.mrb[0].mxu0
  %v3678 = vadd.f32 %v3348, %v3677
  %v3679 = vpop.f32.mrb[0].mxu0
  %3680 = vmatprep.mubr.f32.mxu0 0.0
  %3681 = vmatmul.mubr.f32.gmra.mrb[0].mxu0 %v3439
  %v3682 = vpop.f32.mrb[0].mxu0
  %v3683 = vadd.f32 %v3348, %v3682
  %v3684 = vpop.f32.mrb[0].mxu0
  %3685 = vmatprep.mubr.f32.mxu0 0.0
  %3686 = vmatmul.mubr.f32.gmra.mrb[0].mxu0 %v3442
  %v3687 = vpop.f32.mrb[0].mxu0
  %v3688 = vadd.f32 %v3348, %v3687
  %v3689 = vpop.f32.mrb[0].mxu0
  %3690 = vmatprep.mubr.f32.mxu0 0.0
  %3691 = vmatmul.mubr.f32.gmra.mrb[0].mxu0 %v3445
  %v3692 = vpop.f32.mrb[0].mxu0
  %v3693 = vadd.f32 %v3348, %v3692
  %v3694 = vpop.f32.mrb[0].mxu0
  %3695 = vmatprep.mubr.f32.mxu0 0.0
  %3696 = vmatmul.mubr.f32.gmra.mrb[0].mxu0 %v3448
  %v3697 = vpop.f32.mrb[0].mxu0
  %v3698 = vadd.f32 %v3348, %v3697
  %v3699 = vpop.f32.mrb[0].mxu0
  %3700 = vmatprep.mubr.f32.mxu0 0.0
  %3701 = vmatmul.mubr.f32.gmra.mrb[0].mxu0 %v3451
  %v3702 = vpop.f32.mrb[0].mxu0
  %v3703 = vadd.f32 %v3348, %v3702
  %v3704 = vpop.f32.mrb[0].mxu0
  %3705 = vmatprep.mubr.f32.mxu0 0.0
  %3706 = vmatmul.mubr.f32.gmra.mrb[0].mxu0 %v3454
  %v3707 = vpop.f32.mrb[0].mxu0
  %v3708 = vadd.f32 %v3348, %v3707
  %v3709 = vpop.f32.mrb[0].mxu0
  %3710 = vmatprep.mubr.f32.mxu0 0.0
  %3711 = vmatmul.mubr.f32.gmra.mrb[0].mxu0 %v3457
  %v3712 = vpop.f32.mrb[0].mxu0
  %v3713 = vadd.f32 %v3348, %v3712
  %v3714 = vpop.f32.mrb[0].mxu0
  %3715 = vmatprep.mubr.f32.mxu0 0.0
  %3716 = vmatmul.mubr.f32.gmra.mrb[0].mxu0 %v3460
  %v3717 = vpop.f32.mrb[0].mxu0
  %v3718 = vadd.f32 %v3348, %v3717
  %v3719 = vpop.f32.mrb[0].mxu0
  %3720 = vmatprep.mubr.f32.mxu0 0.0
  %3721 = vmatmul.mubr.f32.gmra.mrb[0].mxu0 %v3463
  %v3722 = vpop.f32.mrb[0].mxu0
  %v3723 = vadd.f32 %v3348, %v3722
  %v3724 = vpop.f32.mrb[0].mxu0
  %3725 = vmatprep.mubr.f32.mxu0 0.0
  %3726 = vmatmul.mubr.f32.gmra.mrb[0].mxu0 %v3466
  %v3727 = vpop.f32.mrb[0].mxu0
  %v3728 = vadd.f32 %v3348, %v3727
  %v3729 = vpop.f32.mrb[0].mxu0
  %3730 = vmatprep.mubr.f32.mxu0 0.0
  %3731 = vmatmul.mubr.f32.gmra.mrb[0].mxu0 %v3469
  %v3732 = vpop.f32.mrb[0].mxu0
  %v3733 = vadd.f32 %v3348, %v3732
  %v3734 = vpop.f32.mrb[0].mxu0
  %3735 = vdwg.mxu0
  %v3736 = vmax.f32 %v3538, 0.0
  %v3737 = vmax.f32 %v3543, 0.0
  %v3738 = vmax.f32 %v3548, 0.0
  %v3739 = vmax.f32 %v3553, 0.0
  %v3740 = vmax.f32 %v3558, 0.0
  %v3741 = vmax.f32 %v3563, 0.0
  %v3742 = vmax.f32 %v3568, 0.0
  %v3743 = vmax.f32 %v3573, 0.0
  %v3744 = vmax.f32 %v3578, 0.0
  %v3745 = vmax.f32 %v3583, 0.0
  %v3746 = vmax.f32 %v3588, 0.0
  %v3747 = vmax.f32 %v3593, 0.0
  %v3748 = vmax.f32 %v3598, 0.0
  %v3749 = vmax.f32 %v3603, 0.0
  %v3750 = vmax.f32 %v3608, 0.0
  %v3751 = vmax.f32 %v3613, 0.0
  %v3752 = vmax.f32 %v3618, 0.0
  %v3753 = vmax.f32 %v3623, 0.0
  %v3754 = vmax.f32 %v3628, 0.0
  %v3755 = vmax.f32 %v3633, 0.0
  %v3756 = vmax.f32 %v3638, 0.0
  %v3757 = vmax.f32 %v3643, 0.0
  %v3758 = vmax.f32 %v3648, 0.0
  %v3759 = vmax.f32 %v3653, 0.0
  %v3760 = vmax.f32 %v3658, 0.0
  %v3761 = vmax.f32 %v3663, 0.0
  %v3762 = vmax.f32 %v3668, 0.0
  %v3763 = vmax.f32 %v3673, 0.0
  %v3764 = vmax.f32 %v3678, 0.0
  %v3765 = vmax.f32 %v3683, 0.0
  %v3766 = vmax.f32 %v3688, 0.0
  %v3767 = vmax.f32 %v3693, 0.0
  %v3768 = vmax.f32 %v3698, 0.0
  %v3769 = vmax.f32 %v3703, 0.0
  %v3770 = vmax.f32 %v3708, 0.0
  %v3771 = vmax.f32 %v3713, 0.0
  %v3772 = vmax.f32 %v3718, 0.0
  %v3773 = vmax.f32 %v3723, 0.0
  %v3774 = vmax.f32 %v3728, 0.0
  %v3775 = vmax.f32 %v3733, 0.0
  %3808 = vrot.lane.b32.xlu0 %v3738, 32
  %v3809 = vpop.permute.xlu0 %3808
  %3810 = vrot.lane.b32.xlu0 %v3739, 32
  %v3811 = vpop.permute.xlu0 %3810
  %3812 = vrot.lane.b32.xlu0 %v3740, 32
  %v3813 = vpop.permute.xlu0 %3812
  %3814 = vrot.lane.b32.xlu0 %v3741, 32
  %v3815 = vpop.permute.xlu0 %3814
  %3816 = vrot.lane.b32.xlu0 %v3742, 32
  %v3817 = vpop.permute.xlu0 %3816
  %3818 = vrot.lane.b32.xlu0 %v3743, 32
  %v3819 = vpop.permute.xlu0 %3818
  %3820 = vrot.lane.b32.xlu0 %v3744, 32
  %v3821 = vpop.permute.xlu0 %3820
  %3822 = vrot.lane.b32.xlu0 %v3745, 32
  %v3823 = vpop.permute.xlu0 %3822
  %3824 = vrot.lane.b32.xlu0 %v3746, 32
  %v3825 = vpop.permute.xlu0 %3824
  %3826 = vrot.lane.b32.xlu0 %v3747, 32
  %v3827 = vpop.permute.xlu0 %3826
  %3828 = vrot.lane.b32.xlu0 %v3748, 32
  %v3829 = vpop.permute.xlu0 %3828
  %3830 = vrot.lane.b32.xlu0 %v3749, 32
  %v3831 = vpop.permute.xlu0 %3830
  %3832 = vrot.lane.b32.xlu0 %v3750, 32
  %v3833 = vpop.permute.xlu0 %3832
  %3834 = vrot.lane.b32.xlu0 %v3751, 32
  %v3835 = vpop.permute.xlu0 %3834
  %3836 = vrot.lane.b32.xlu0 %v3752, 32
  %v3837 = vpop.permute.xlu0 %3836
  %3838 = vrot.lane.b32.xlu0 %v3753, 32
  %v3839 = vpop.permute.xlu0 %3838
  %3840 = vrot.lane.b32.xlu0 %v3758, 32
  %v3841 = vpop.permute.xlu0 %3840
  %3842 = vrot.lane.b32.xlu0 %v3759, 32
  %v3843 = vpop.permute.xlu0 %3842
  %3844 = vrot.lane.b32.xlu0 %v3760, 32
  %v3845 = vpop.permute.xlu0 %3844
  %3846 = vrot.lane.b32.xlu0 %v3761, 32
  %v3847 = vpop.permute.xlu0 %3846
  %3848 = vrot.lane.b32.xlu0 %v3762, 32
  %v3849 = vpop.permute.xlu0 %3848
  %3850 = vrot.lane.b32.xlu0 %v3763, 32
  %v3851 = vpop.permute.xlu0 %3850
  %3852 = vrot.lane.b32.xlu0 %v3764, 32
  %v3853 = vpop.permute.xlu0 %3852
  %3854 = vrot.lane.b32.xlu0 %v3765, 32
  %v3855 = vpop.permute.xlu0 %3854
  %3856 = vrot.lane.b32.xlu0 %v3766, 32
  %v3857 = vpop.permute.xlu0 %3856
  %3858 = vrot.lane.b32.xlu0 %v3767, 32
  %v3859 = vpop.permute.xlu0 %3858
  %3860 = vrot.lane.b32.xlu0 %v3768, 32
  %v3861 = vpop.permute.xlu0 %3860
  %3862 = vrot.lane.b32.xlu0 %v3769, 32
  %v3863 = vpop.permute.xlu0 %3862
  %3864 = vrot.lane.b32.xlu0 %v3770, 32
  %v3865 = vpop.permute.xlu0 %3864
  %3866 = vrot.lane.b32.xlu0 %v3771, 32
  %v3867 = vpop.permute.xlu0 %3866
  %3868 = vrot.lane.b32.xlu0 %v3772, 32
  %v3869 = vpop.permute.xlu0 %3868
  %3870 = vrot.lane.b32.xlu0 %v3773, 32
  %v3871 = vpop.permute.xlu0 %3870
  %3908 = vrot.lane.b32.xlu0 %v3740, 64
  %v3909 = vpop.permute.xlu0 %3908
  %3910 = vrot.lane.b32.xlu0 %v3741, 64
  %v3911 = vpop.permute.xlu0 %3910
  %3912 = vrot.lane.b32.xlu0 %v3742, 64
  %v3913 = vpop.permute.xlu0 %3912
  %3914 = vrot.lane.b32.xlu0 %v3743, 64
  %v3915 = vpop.permute.xlu0 %3914
  %3916 = vrot.lane.b32.xlu0 %v3744, 64
  %v3917 = vpop.permute.xlu0 %3916
  %3918 = vrot.lane.b32.xlu0 %v3745, 64
  %v3919 = vpop.permute.xlu0 %3918
  %3920 = vrot.lane.b32.xlu0 %v3746, 64
  %v3921 = vpop.permute.xlu0 %3920
  %3922 = vrot.lane.b32.xlu0 %v3747, 64
  %v3923 = vpop.permute.xlu0 %3922
  %3924 = vrot.lane.b32.xlu0 %v3748, 64
  %v3925 = vpop.permute.xlu0 %3924
  %3926 = vrot.lane.b32.xlu0 %v3749, 64
  %v3927 = vpop.permute.xlu0 %3926
  %3928 = vrot.lane.b32.xlu0 %v3750, 64
  %v3929 = vpop.permute.xlu0 %3928
  %3930 = vrot.lane.b32.xlu0 %v3751, 64
  %v3931 = vpop.permute.xlu0 %3930
  %3932 = vrot.lane.b32.xlu0 %v3752, 64
  %v3933 = vpop.permute.xlu0 %3932
  %3934 = vrot.lane.b32.xlu0 %v3753, 64
  %v3935 = vpop.permute.xlu0 %3934
  %3936 = vrot.lane.b32.xlu0 %v3754, 64
  %v3937 = vpop.permute.xlu0 %3936
  %3938 = vrot.lane.b32.xlu0 %v3755, 64
  %v3939 = vpop.permute.xlu0 %3938
  %3940 = vrot.lane.b32.xlu0 %v3760, 64
  %v3941 = vpop.permute.xlu0 %3940
  %3942 = vrot.lane.b32.xlu0 %v3761, 64
  %v3943 = vpop.permute.xlu0 %3942
  %3944 = vrot.lane.b32.xlu0 %v3762, 64
  %v3945 = vpop.permute.xlu0 %3944
  %3946 = vrot.lane.b32.xlu0 %v3763, 64
  %v3947 = vpop.permute.xlu0 %3946
  %3948 = vrot.lane.b32.xlu0 %v3764, 64
  %v3949 = vpop.permute.xlu0 %3948
  %3950 = vrot.lane.b32.xlu0 %v3765, 64
  %v3951 = vpop.permute.xlu0 %3950
  %3952 = vrot.lane.b32.xlu0 %v3766, 64
  %v3953 = vpop.permute.xlu0 %3952
  %3954 = vrot.lane.b32.xlu0 %v3767, 64
  %v3955 = vpop.permute.xlu0 %3954
  %3956 = vrot.lane.b32.xlu0 %v3768, 64
  %v3957 = vpop.permute.xlu0 %3956
  %3958 = vrot.lane.b32.xlu0 %v3769, 64
  %v3959 = vpop.permute.xlu0 %3958
  %3960 = vrot.lane.b32.xlu0 %v3770, 64
  %v3961 = vpop.permute.xlu0 %3960
  %3962 = vrot.lane.b32.xlu0 %v3771, 64
  %v3963 = vpop.permute.xlu0 %3962
  %3964 = vrot.lane.b32.xlu0 %v3772, 64
  %v3965 = vpop.permute.xlu0 %3964
  %3966 = vrot.lane.b32.xlu0 %v3773, 64
  %v3967 = vpop.permute.xlu0 %3966
  %3968 = vrot.lane.b32.xlu0 %v3774, 64
  %v3969 = vpop.permute.xlu0 %3968
  %3970 = vrot.lane.b32.xlu0 %v3775, 64
  %v3971 = vpop.permute.xlu0 %3970
  %v4004 = vsel %vm3250, %v3736, %v3809
  %v4005 = vsel %vm3250, %v3737, %v3811
  %v4006 = vsel %vm3250, %v3738, %v3813
  %v4007 = vsel %vm3250, %v3739, %v3815
  %v4008 = vsel %vm3250, %v3740, %v3817
  %v4009 = vsel %vm3250, %v3741, %v3819
  %v4010 = vsel %vm3250, %v3742, %v3821
  %v4011 = vsel %vm3250, %v3743, %v3823
  %v4012 = vsel %vm3250, %v3744, %v3825
  %v4013 = vsel %vm3250, %v3745, %v3827
  %v4014 = vsel %vm3250, %v3746, %v3829
  %v4015 = vsel %vm3250, %v3747, %v3831
  %v4016 = vsel %vm3250, %v3748, %v3833
  %v4017 = vsel %vm3250, %v3749, %v3835
  %v4018 = vsel %vm3250, %v3750, %v3837
  %v4019 = vsel %vm3250, %v3751, %v3839
  %v4020 = vsel %vm3250, %v3756, %v3841
  %v4021 = vsel %vm3250, %v3757, %v3843
  %v4022 = vsel %vm3250, %v3758, %v3845
  %v4023 = vsel %vm3250, %v3759, %v3847
  %v4024 = vsel %vm3250, %v3760, %v3849
  %v4025 = vsel %vm3250, %v3761, %v3851
  %v4026 = vsel %vm3250, %v3762, %v3853
  %v4027 = vsel %vm3250, %v3763, %v3855
  %v4028 = vsel %vm3250, %v3764, %v3857
  %v4029 = vsel %vm3250, %v3765, %v3859
  %v4030 = vsel %vm3250, %v3766, %v3861
  %v4031 = vsel %vm3250, %v3767, %v3863
  %v4032 = vsel %vm3250, %v3768, %v3865
  %v4033 = vsel %vm3250, %v3769, %v3867
  %v4034 = vsel %vm3250, %v3770, %v3869
  %v4035 = vsel %vm3250, %v3771, %v3871
  %v4036 = vsel %vm1669, %v4004, %v3909
  %v4037 = vsel %vm1669, %v4005, %v3911
  %v4038 = vsel %vm1669, %v4006, %v3913
  %v4039 = vsel %vm1669, %v4007, %v3915
  %v4040 = vsel %vm1669, %v4008, %v3917
  %v4041 = vsel %vm1669, %v4009, %v3919
  %v4042 = vsel %vm1669, %v4010, %v3921
  %v4043 = vsel %vm1669, %v4011, %v3923
  %v4044 = vsel %vm1669, %v4012, %v3925
  %v4045 = vsel %vm1669, %v4013, %v3927
  %v4046 = vsel %vm1669, %v4014, %v3929
  %v4047 = vsel %vm1669, %v4015, %v3931
  %v4048 = vsel %vm1669, %v4016, %v3933
  %v4049 = vsel %vm1669, %v4017, %v3935
  %v4050 = vsel %vm1669, %v4018, %v3937
  %v4051 = vsel %vm1669, %v4019, %v3939
  %v4052 = vsel %vm1669, %v4020, %v3941
  %v4053 = vsel %vm1669, %v4021, %v3943
  %v4054 = vsel %vm1669, %v4022, %v3945
  %v4055 = vsel %vm1669, %v4023, %v3947
  %v4056 = vsel %vm1669, %v4024, %v3949
  %v4057 = vsel %vm1669, %v4025, %v3951
  %v4058 = vsel %vm1669, %v4026, %v3953
  %v4059 = vsel %vm1669, %v4027, %v3955
  %v4060 = vsel %vm1669, %v4028, %v3957
  %v4061 = vsel %vm1669, %v4029, %v3959
  %v4062 = vsel %vm1669, %v4030, %v3961
  %v4063 = vsel %vm1669, %v4031, %v3963
  %v4064 = vsel %vm1669, %v4032, %v3965
  %v4065 = vsel %vm1669, %v4033, %v3967
  %v4066 = vsel %vm1669, %v4034, %v3969
  %v4067 = vsel %vm1669, %v4035, %v3971
  %v4068 = vld [vmem:[%s7] sm:$0xff]
  %v4069 = vld [vmem:[%s7 + $0x8] sm:$0xff]
  %v4070 = vld [vmem:[%s7 + $0x10] sm:$0xff]
  %v4071 = vld [vmem:[%s7 + $0x18] sm:$0xff]
  %v4072 = vld [vmem:[%s7 + $0x20] sm:$0xff]
  %v4073 = vld [vmem:[%s7 + $0x28] sm:$0xff]
  %v4074 = vld [vmem:[%s7 + $0x30] sm:$0xff]
  %v4075 = vld [vmem:[%s7 + $0x38] sm:$0xff]
  %v4076 = vld [vmem:[%s7 + $0x40] sm:$0xff]
  %v4077 = vld [vmem:[%s7 + $0x48] sm:$0xff]
  %v4078 = vld [vmem:[%s7 + $0x50] sm:$0xff]
  %v4079 = vld [vmem:[%s7 + $0x58] sm:$0xff]
  %v4080 = vld [vmem:[%s8] sm:$0x1]
  %v4082 = vlaneseq
  %v4083 = vshrl.u32 %v4082, 7
  %v4084 = vsub.s32 0, %v4083
  %v4085 = vrot.slane %v4080, %v4084
  %v4088 = vsel %vm3350, %v4036, 0
  %v4091 = vsel %vm3350, %v4037, 0
  %v4094 = vsel %vm3350, %v4038, 0
  %v4097 = vsel %vm3350, %v4039, 0
  %v4100 = vsel %vm3350, %v4040, 0
  %v4103 = vsel %vm3350, %v4041, 0
  %v4106 = vsel %vm3350, %v4042, 0
  %v4109 = vsel %vm3350, %v4043, 0
  %v4112 = vsel %vm3350, %v4044, 0
  %v4115 = vsel %vm3350, %v4045, 0
  %v4118 = vsel %vm3350, %v4046, 0
  %v4121 = vsel %vm3350, %v4047, 0
  %v4124 = vsel %vm3350, %v4048, 0
  %v4127 = vsel %vm3350, %v4049, 0
  %v4130 = vsel %vm3350, %v4050, 0
  %v4133 = vsel %vm3350, %v4051, 0
  %v4136 = vsel %vm3350, %v4052, 0
  %v4139 = vsel %vm3350, %v4053, 0
  %v4142 = vsel %vm3350, %v4054, 0
  %v4145 = vsel %vm3350, %v4055, 0
  %v4148 = vsel %vm3350, %v4056, 0
  %v4151 = vsel %vm3350, %v4057, 0
  %v4154 = vsel %vm3350, %v4058, 0
  %v4157 = vsel %vm3350, %v4059, 0
  %v4160 = vsel %vm3350, %v4060, 0
  %v4163 = vsel %vm3350, %v4061, 0
  %v4166 = vsel %vm3350, %v4062, 0
  %v4169 = vsel %vm3350, %v4063, 0
  %v4172 = vsel %vm3350, %v4064, 0
  %v4175 = vsel %vm3350, %v4065, 0
  %v4178 = vsel %vm3350, %v4066, 0
  %v4181 = vsel %vm3350, %v4067, 0
  %4183 = vmatprep.subr.mxu0 0.0
  %4184 = vmatpush1.msra.mxu0 %v4068
  %4185 = vmatprep.subr.mxu0 0.0
  %4186 = vmatpush1.msra.mxu0 %v4069
  %4187 = vmatprep.subr.mxu0 0.0
  %4188 = vmatpush1.msra.mxu0 %v4070
  %4189 = vmatprep.subr.mxu0 0.0
  %4190 = vmatpush1.msra.mxu0 %v4071
  %4191 = vmatprep.subr.mxu0 0.0
  %4192 = vmatpush1.msra.mxu0 %v4072
  %4193 = vmatprep.subr.mxu0 0.0
  %4194 = vmatpush1.msra.mxu0 %v4073
  %4195 = vmatprep.subr.mxu0 0.0
  %4196 = vmatpush1.msra.mxu0 %v4074
  %4197 = vmatprep.subr.mxu0 0.0
  %4198 = vmatpush1.msra.mxu0 %v4075
  %4199 = vmatprep.subr.mxu0 0.0
  %4200 = vmatpush1.msra.mxu0 %v4076
  %4201 = vmatprep.subr.mxu0 0.0
  %4202 = vmatpush1.msra.mxu0 %v4077
  %4203 = vmatprep.subr.mxu0 0.0
  %4204 = vmatpush1.msra.mxu0 %v4078
  %4205 = vmatprep.subr.mxu0 0.0
  %4206 = vmatpush1.msra.mxu0 %v4079
  %4207 = vmatprep.subr.mxu0 0.0
  %4208 = vmatpush1.msra.mxu0 0.0
  %4209 = vmatprep.subr.mxu0 0.0
  %4210 = vmatpush1.msra.mxu0 0.0
  %4211 = vmatprep.subr.mxu0 0.0
  %4212 = vmatpush1.msra.mxu0 0.0
  %4213 = vmatprep.subr.mxu0 0.0
  %4214 = vmatpush1.msra.mxu0 0.0
  %4215 = vmatprep.subr.mxu0 0.0
  %4216 = vmatpush1.msra.mxu0 0.0
  %4217 = vmatprep.subr.mxu0 0.0
  %4218 = vmatpush1.msra.mxu0 0.0
  %4219 = vmatprep.subr.mxu0 0.0
  %4220 = vmatpush1.msra.mxu0 0.0
  %4221 = vmatprep.subr.mxu0 0.0
  %4222 = vmatpush1.msra.mxu0 0.0
  %4223 = vmatprep.subr.mxu0 0.0
  %4224 = vmatpush1.msra.mxu0 0.0
  %4225 = vmatprep.subr.mxu0 0.0
  %4226 = vmatpush1.msra.mxu0 0.0
  %4227 = vmatprep.subr.mxu0 0.0
  %4228 = vmatpush1.msra.mxu0 0.0
  %4229 = vmatprep.subr.mxu0 0.0
  %4230 = vmatpush1.msra.mxu0 0.0
  %4231 = vmatprep.subr.mxu0 0.0
  %4232 = vmatpush1.msra.mxu0 0.0
  %4233 = vmatprep.subr.mxu0 0.0
  %4234 = vmatpush1.msra.mxu0 0.0
  %4235 = vmatprep.subr.mxu0 0.0
  %4236 = vmatpush1.msra.mxu0 0.0
  %4237 = vmatprep.subr.mxu0 0.0
  %4238 = vmatpush1.msra.mxu0 0.0
  %4239 = vmatprep.subr.mxu0 0.0
  %4240 = vmatpush1.msra.mxu0 0.0
  %4241 = vmatprep.subr.mxu0 0.0
  %4242 = vmatpush1.msra.mxu0 0.0
  %4243 = vmatprep.subr.mxu0 0.0
  %4244 = vmatpush1.msra.mxu0 0.0
  %4245 = vmatprep.subr.mxu0 0.0
  %4246 = vmatpush1.msra.mxu0 0.0
  %4247 = vmatprep.mubr.f32.mxu0 0.0
  %4248 = vmatmul.mubr.f32.gmra.mrb[0].mxu0 %v4088
  %v4249 = vpop.f32.mrb[0].mxu0
  %v4250 = vadd.f32 %v4085, %v4249
  %v4251 = vpop.f32.mrb[0].mxu0
  %4252 = vmatprep.mubr.f32.mxu0 0.0
  %4253 = vmatmul.mubr.f32.gmra.mrb[0].mxu0 %v4091
  %v4254 = vpop.f32.mrb[0].mxu0
  %v4255 = vadd.f32 %v4085, %v4254
  %v4256 = vpop.f32.mrb[0].mxu0
  %4257 = vmatprep.mubr.f32.mxu0 0.0
  %4258 = vmatmul.mubr.f32.gmra.mrb[0].mxu0 %v4094
  %v4259 = vpop.f32.mrb[0].mxu0
  %v4260 = vadd.f32 %v4085, %v4259
  %v4261 = vpop.f32.mrb[0].mxu0
  %4262 = vmatprep.mubr.f32.mxu0 0.0
  %4263 = vmatmul.mubr.f32.gmra.mrb[0].mxu0 %v4097
  %v4264 = vpop.f32.mrb[0].mxu0
  %v4265 = vadd.f32 %v4085, %v4264
  %v4266 = vpop.f32.mrb[0].mxu0
  %4267 = vmatprep.mubr.f32.mxu0 0.0
  %4268 = vmatmul.mubr.f32.gmra.mrb[0].mxu0 %v4100
  %v4269 = vpop.f32.mrb[0].mxu0
  %v4270 = vadd.f32 %v4085, %v4269
  %v4271 = vpop.f32.mrb[0].mxu0
  %4272 = vmatprep.mubr.f32.mxu0 0.0
  %4273 = vmatmul.mubr.f32.gmra.mrb[0].mxu0 %v4103
  %v4274 = vpop.f32.mrb[0].mxu0
  %v4275 = vadd.f32 %v4085, %v4274
  %v4276 = vpop.f32.mrb[0].mxu0
  %4277 = vmatprep.mubr.f32.mxu0 0.0
  %4278 = vmatmul.mubr.f32.gmra.mrb[0].mxu0 %v4106
  %v4279 = vpop.f32.mrb[0].mxu0
  %v4280 = vadd.f32 %v4085, %v4279
  %v4281 = vpop.f32.mrb[0].mxu0
  %4282 = vmatprep.mubr.f32.mxu0 0.0
  %4283 = vmatmul.mubr.f32.gmra.mrb[0].mxu0 %v4109
  %v4284 = vpop.f32.mrb[0].mxu0
  %v4285 = vadd.f32 %v4085, %v4284
  %v4286 = vpop.f32.mrb[0].mxu0
  %4287 = vmatprep.mubr.f32.mxu0 0.0
  %4288 = vmatmul.mubr.f32.gmra.mrb[0].mxu0 %v4112
  %v4289 = vpop.f32.mrb[0].mxu0
  %v4290 = vadd.f32 %v4085, %v4289
  %v4291 = vpop.f32.mrb[0].mxu0
  %4292 = vmatprep.mubr.f32.mxu0 0.0
  %4293 = vmatmul.mubr.f32.gmra.mrb[0].mxu0 %v4115
  %v4294 = vpop.f32.mrb[0].mxu0
  %v4295 = vadd.f32 %v4085, %v4294
  %v4296 = vpop.f32.mrb[0].mxu0
  %4297 = vmatprep.mubr.f32.mxu0 0.0
  %4298 = vmatmul.mubr.f32.gmra.mrb[0].mxu0 %v4118
  %v4299 = vpop.f32.mrb[0].mxu0
  %v4300 = vadd.f32 %v4085, %v4299
  %v4301 = vpop.f32.mrb[0].mxu0
  %4302 = vmatprep.mubr.f32.mxu0 0.0
  %4303 = vmatmul.mubr.f32.gmra.mrb[0].mxu0 %v4121
  %v4304 = vpop.f32.mrb[0].mxu0
  %v4305 = vadd.f32 %v4085, %v4304
  %v4306 = vpop.f32.mrb[0].mxu0
  %4307 = vmatprep.mubr.f32.mxu0 0.0
  %4308 = vmatmul.mubr.f32.gmra.mrb[0].mxu0 %v4124
  %v4309 = vpop.f32.mrb[0].mxu0
  %v4310 = vadd.f32 %v4085, %v4309
  %v4311 = vpop.f32.mrb[0].mxu0
  %4312 = vmatprep.mubr.f32.mxu0 0.0
  %4313 = vmatmul.mubr.f32.gmra.mrb[0].mxu0 %v4127
  %v4314 = vpop.f32.mrb[0].mxu0
  %v4315 = vadd.f32 %v4085, %v4314
  %v4316 = vpop.f32.mrb[0].mxu0
  %4317 = vmatprep.mubr.f32.mxu0 0.0
  %4318 = vmatmul.mubr.f32.gmra.mrb[0].mxu0 %v4130
  %v4319 = vpop.f32.mrb[0].mxu0
  %v4320 = vadd.f32 %v4085, %v4319
  %v4321 = vpop.f32.mrb[0].mxu0
  %4322 = vmatprep.mubr.f32.mxu0 0.0
  %4323 = vmatmul.mubr.f32.gmra.mrb[0].mxu0 %v4133
  %v4324 = vpop.f32.mrb[0].mxu0
  %v4325 = vadd.f32 %v4085, %v4324
  %v4326 = vpop.f32.mrb[0].mxu0
  %4327 = vmatprep.mubr.f32.mxu0 0.0
  %4328 = vmatmul.mubr.f32.gmra.mrb[0].mxu0 %v4136
  %v4329 = vpop.f32.mrb[0].mxu0
  %v4330 = vadd.f32 %v4085, %v4329
  %v4331 = vpop.f32.mrb[0].mxu0
  %4332 = vmatprep.mubr.f32.mxu0 0.0
  %4333 = vmatmul.mubr.f32.gmra.mrb[0].mxu0 %v4139
  %v4334 = vpop.f32.mrb[0].mxu0
  %v4335 = vadd.f32 %v4085, %v4334
  %v4336 = vpop.f32.mrb[0].mxu0
  %4337 = vmatprep.mubr.f32.mxu0 0.0
  %4338 = vmatmul.mubr.f32.gmra.mrb[0].mxu0 %v4142
  %v4339 = vpop.f32.mrb[0].mxu0
  %v4340 = vadd.f32 %v4085, %v4339
  %v4341 = vpop.f32.mrb[0].mxu0
  %4342 = vmatprep.mubr.f32.mxu0 0.0
  %4343 = vmatmul.mubr.f32.gmra.mrb[0].mxu0 %v4145
  %v4344 = vpop.f32.mrb[0].mxu0
  %v4345 = vadd.f32 %v4085, %v4344
  %v4346 = vpop.f32.mrb[0].mxu0
  %4347 = vmatprep.mubr.f32.mxu0 0.0
  %4348 = vmatmul.mubr.f32.gmra.mrb[0].mxu0 %v4148
  %v4349 = vpop.f32.mrb[0].mxu0
  %v4350 = vadd.f32 %v4085, %v4349
  %v4351 = vpop.f32.mrb[0].mxu0
  %4352 = vmatprep.mubr.f32.mxu0 0.0
  %4353 = vmatmul.mubr.f32.gmra.mrb[0].mxu0 %v4151
  %v4354 = vpop.f32.mrb[0].mxu0
  %v4355 = vadd.f32 %v4085, %v4354
  %v4356 = vpop.f32.mrb[0].mxu0
  %4357 = vmatprep.mubr.f32.mxu0 0.0
  %4358 = vmatmul.mubr.f32.gmra.mrb[0].mxu0 %v4154
  %v4359 = vpop.f32.mrb[0].mxu0
  %v4360 = vadd.f32 %v4085, %v4359
  %v4361 = vpop.f32.mrb[0].mxu0
  %4362 = vmatprep.mubr.f32.mxu0 0.0
  %4363 = vmatmul.mubr.f32.gmra.mrb[0].mxu0 %v4157
  %v4364 = vpop.f32.mrb[0].mxu0
  %v4365 = vadd.f32 %v4085, %v4364
  %v4366 = vpop.f32.mrb[0].mxu0
  %4367 = vmatprep.mubr.f32.mxu0 0.0
  %4368 = vmatmul.mubr.f32.gmra.mrb[0].mxu0 %v4160
  %v4369 = vpop.f32.mrb[0].mxu0
  %v4370 = vadd.f32 %v4085, %v4369
  %v4371 = vpop.f32.mrb[0].mxu0
  %4372 = vmatprep.mubr.f32.mxu0 0.0
  %4373 = vmatmul.mubr.f32.gmra.mrb[0].mxu0 %v4163
  %v4374 = vpop.f32.mrb[0].mxu0
  %v4375 = vadd.f32 %v4085, %v4374
  %v4376 = vpop.f32.mrb[0].mxu0
  %4377 = vmatprep.mubr.f32.mxu0 0.0
  %4378 = vmatmul.mubr.f32.gmra.mrb[0].mxu0 %v4166
  %v4379 = vpop.f32.mrb[0].mxu0
  %v4380 = vadd.f32 %v4085, %v4379
  %v4381 = vpop.f32.mrb[0].mxu0
  %4382 = vmatprep.mubr.f32.mxu0 0.0
  %4383 = vmatmul.mubr.f32.gmra.mrb[0].mxu0 %v4169
  %v4384 = vpop.f32.mrb[0].mxu0
  %v4385 = vadd.f32 %v4085, %v4384
  %v4386 = vpop.f32.mrb[0].mxu0
  %4387 = vmatprep.mubr.f32.mxu0 0.0
  %4388 = vmatmul.mubr.f32.gmra.mrb[0].mxu0 %v4172
  %v4389 = vpop.f32.mrb[0].mxu0
  %v4390 = vadd.f32 %v4085, %v4389
  %v4391 = vpop.f32.mrb[0].mxu0
  %4392 = vmatprep.mubr.f32.mxu0 0.0
  %4393 = vmatmul.mubr.f32.gmra.mrb[0].mxu0 %v4175
  %v4394 = vpop.f32.mrb[0].mxu0
  %v4395 = vadd.f32 %v4085, %v4394
  %v4396 = vpop.f32.mrb[0].mxu0
  %4397 = vmatprep.mubr.f32.mxu0 0.0
  %4398 = vmatmul.mubr.f32.gmra.mrb[0].mxu0 %v4178
  %v4399 = vpop.f32.mrb[0].mxu0
  %v4400 = vadd.f32 %v4085, %v4399
  %v4401 = vpop.f32.mrb[0].mxu0
  %4402 = vmatprep.mubr.f32.mxu0 0.0
  %4403 = vmatmul.mubr.f32.gmra.mrb[0].mxu0 %v4181
  %v4404 = vpop.f32.mrb[0].mxu0
  %v4405 = vadd.f32 %v4085, %v4404
  %v4406 = vpop.f32.mrb[0].mxu0
  %4407 = vdwg.mxu0
  %v4408 = vsub.f32 0.0, %v4250
  %v4409 = vsub.f32 0.0, %v4255
  %v4410 = vsub.f32 0.0, %v4260
  %v4411 = vsub.f32 0.0, %v4265
  %v4412 = vsub.f32 0.0, %v4270
  %v4413 = vsub.f32 0.0, %v4275
  %v4414 = vsub.f32 0.0, %v4280
  %v4415 = vsub.f32 0.0, %v4285
  %v4416 = vsub.f32 0.0, %v4290
  %v4417 = vsub.f32 0.0, %v4295
  %v4418 = vsub.f32 0.0, %v4300
  %v4419 = vsub.f32 0.0, %v4305
  %v4420 = vsub.f32 0.0, %v4310
  %v4421 = vsub.f32 0.0, %v4315
  %v4422 = vsub.f32 0.0, %v4320
  %v4423 = vsub.f32 0.0, %v4325
  %v4424 = vsub.f32 0.0, %v4330
  %v4425 = vsub.f32 0.0, %v4335
  %v4426 = vsub.f32 0.0, %v4340
  %v4427 = vsub.f32 0.0, %v4345
  %v4428 = vsub.f32 0.0, %v4350
  %v4429 = vsub.f32 0.0, %v4355
  %v4430 = vsub.f32 0.0, %v4360
  %v4431 = vsub.f32 0.0, %v4365
  %v4432 = vsub.f32 0.0, %v4370
  %v4433 = vsub.f32 0.0, %v4375
  %v4434 = vsub.f32 0.0, %v4380
  %v4435 = vsub.f32 0.0, %v4385
  %v4436 = vsub.f32 0.0, %v4390
  %v4437 = vsub.f32 0.0, %v4395
  %v4438 = vsub.f32 0.0, %v4400
  %v4439 = vsub.f32 0.0, %v4405
  %v4440 = vmul.f32 %v4408, 1.442695
  %v4441 = vpow.pop %v4440
  %v4442 = vmul.f32 %v4409, 1.442695
  %v4443 = vpow.pop %v4442
  %v4444 = vmul.f32 %v4410, 1.442695
  %v4445 = vpow.pop %v4444
  %v4446 = vmul.f32 %v4411, 1.442695
  %v4447 = vpow.pop %v4446
  %v4448 = vmul.f32 %v4412, 1.442695
  %v4449 = vpow.pop %v4448
  %v4450 = vmul.f32 %v4413, 1.442695
  %v4451 = vpow.pop %v4450
  %v4452 = vmul.f32 %v4414, 1.442695
  %v4453 = vpow.pop %v4452
  %v4454 = vmul.f32 %v4415, 1.442695
  %v4455 = vpow.pop %v4454
  %v4456 = vmul.f32 %v4416, 1.442695
  %v4457 = vpow.pop %v4456
  %v4458 = vmul.f32 %v4417, 1.442695
  %v4459 = vpow.pop %v4458
  %v4460 = vmul.f32 %v4418, 1.442695
  %v4461 = vpow.pop %v4460
  %v4462 = vmul.f32 %v4419, 1.442695
  %v4463 = vpow.pop %v4462
  %v4464 = vmul.f32 %v4420, 1.442695
  %v4465 = vpow.pop %v4464
  %v4466 = vmul.f32 %v4421, 1.442695
  %v4467 = vpow.pop %v4466
  %v4468 = vmul.f32 %v4422, 1.442695
  %v4469 = vpow.pop %v4468
  %v4470 = vmul.f32 %v4423, 1.442695
  %v4471 = vpow.pop %v4470
  %v4472 = vmul.f32 %v4424, 1.442695
  %v4473 = vpow.pop %v4472
  %v4474 = vmul.f32 %v4425, 1.442695
  %v4475 = vpow.pop %v4474
  %v4476 = vmul.f32 %v4426, 1.442695
  %v4477 = vpow.pop %v4476
  %v4478 = vmul.f32 %v4427, 1.442695
  %v4479 = vpow.pop %v4478
  %v4480 = vmul.f32 %v4428, 1.442695
  %v4481 = vpow.pop %v4480
  %v4482 = vmul.f32 %v4429, 1.442695
  %v4483 = vpow.pop %v4482
  %v4484 = vmul.f32 %v4430, 1.442695
  %v4485 = vpow.pop %v4484
  %v4486 = vmul.f32 %v4431, 1.442695
  %v4487 = vpow.pop %v4486
  %v4488 = vmul.f32 %v4432, 1.442695
  %v4489 = vpow.pop %v4488
  %v4490 = vmul.f32 %v4433, 1.442695
  %v4491 = vpow.pop %v4490
  %v4492 = vmul.f32 %v4434, 1.442695
  %v4493 = vpow.pop %v4492
  %v4494 = vmul.f32 %v4435, 1.442695
  %v4495 = vpow.pop %v4494
  %v4496 = vmul.f32 %v4436, 1.442695
  %v4497 = vpow.pop %v4496
  %v4498 = vmul.f32 %v4437, 1.442695
  %v4499 = vpow.pop %v4498
  %v4500 = vmul.f32 %v4438, 1.442695
  %v4501 = vpow.pop %v4500
  %v4502 = vmul.f32 %v4439, 1.442695
  %v4503 = vpow.pop %v4502
  %v4504 = vadd.f32 %v4441, 1.0
  %v4505 = vadd.f32 %v4443, 1.0
  %v4506 = vadd.f32 %v4445, 1.0
  %v4507 = vadd.f32 %v4447, 1.0
  %v4508 = vadd.f32 %v4449, 1.0
  %v4509 = vadd.f32 %v4451, 1.0
  %v4510 = vadd.f32 %v4453, 1.0
  %v4511 = vadd.f32 %v4455, 1.0
  %v4512 = vadd.f32 %v4457, 1.0
  %v4513 = vadd.f32 %v4459, 1.0
  %v4514 = vadd.f32 %v4461, 1.0
  %v4515 = vadd.f32 %v4463, 1.0
  %v4516 = vadd.f32 %v4465, 1.0
  %v4517 = vadd.f32 %v4467, 1.0
  %v4518 = vadd.f32 %v4469, 1.0
  %v4519 = vadd.f32 %v4471, 1.0
  %v4520 = vadd.f32 %v4473, 1.0
  %v4521 = vadd.f32 %v4475, 1.0
  %v4522 = vadd.f32 %v4477, 1.0
  %v4523 = vadd.f32 %v4479, 1.0
  %v4524 = vadd.f32 %v4481, 1.0
  %v4525 = vadd.f32 %v4483, 1.0
  %v4526 = vadd.f32 %v4485, 1.0
  %v4527 = vadd.f32 %v4487, 1.0
  %v4528 = vadd.f32 %v4489, 1.0
  %v4529 = vadd.f32 %v4491, 1.0
  %v4530 = vadd.f32 %v4493, 1.0
  %v4531 = vadd.f32 %v4495, 1.0
  %v4532 = vadd.f32 %v4497, 1.0
  %v4533 = vadd.f32 %v4499, 1.0
  %v4534 = vadd.f32 %v4501, 1.0
  %v4535 = vadd.f32 %v4503, 1.0
  %v4536 = vrcp.pop %v4504
  %v4537 = vmul.f32 1.0, %v4536
  %v4538 = vrcp.pop %v4505
  %v4539 = vmul.f32 1.0, %v4538
  %v4540 = vrcp.pop %v4506
  %v4541 = vmul.f32 1.0, %v4540
  %v4542 = vrcp.pop %v4507
  %v4543 = vmul.f32 1.0, %v4542
  %v4544 = vrcp.pop %v4508
  %v4545 = vmul.f32 1.0, %v4544
  %v4546 = vrcp.pop %v4509
  %v4547 = vmul.f32 1.0, %v4546
  %v4548 = vrcp.pop %v4510
  %v4549 = vmul.f32 1.0, %v4548
  %v4550 = vrcp.pop %v4511
  %v4551 = vmul.f32 1.0, %v4550
  %v4552 = vrcp.pop %v4512
  %v4553 = vmul.f32 1.0, %v4552
  %v4554 = vrcp.pop %v4513
  %v4555 = vmul.f32 1.0, %v4554
  %v4556 = vrcp.pop %v4514
  %v4557 = vmul.f32 1.0, %v4556
  %v4558 = vrcp.pop %v4515
  %v4559 = vmul.f32 1.0, %v4558
  %v4560 = vrcp.pop %v4516
  %v4561 = vmul.f32 1.0, %v4560
  %v4562 = vrcp.pop %v4517
  %v4563 = vmul.f32 1.0, %v4562
  %v4564 = vrcp.pop %v4518
  %v4565 = vmul.f32 1.0, %v4564
  %v4566 = vrcp.pop %v4519
  %v4567 = vmul.f32 1.0, %v4566
  %v4568 = vrcp.pop %v4520
  %v4569 = vmul.f32 1.0, %v4568
  %v4570 = vrcp.pop %v4521
  %v4571 = vmul.f32 1.0, %v4570
  %v4572 = vrcp.pop %v4522
  %v4573 = vmul.f32 1.0, %v4572
  %v4574 = vrcp.pop %v4523
  %v4575 = vmul.f32 1.0, %v4574
  %v4576 = vrcp.pop %v4524
  %v4577 = vmul.f32 1.0, %v4576
  %v4578 = vrcp.pop %v4525
  %v4579 = vmul.f32 1.0, %v4578
  %v4580 = vrcp.pop %v4526
  %v4581 = vmul.f32 1.0, %v4580
  %v4582 = vrcp.pop %v4527
  %v4583 = vmul.f32 1.0, %v4582
  %v4584 = vrcp.pop %v4528
  %v4585 = vmul.f32 1.0, %v4584
  %v4586 = vrcp.pop %v4529
  %v4587 = vmul.f32 1.0, %v4586
  %v4588 = vrcp.pop %v4530
  %v4589 = vmul.f32 1.0, %v4588
  %v4590 = vrcp.pop %v4531
  %v4591 = vmul.f32 1.0, %v4590
  %v4592 = vrcp.pop %v4532
  %v4593 = vmul.f32 1.0, %v4592
  %v4594 = vrcp.pop %v4533
  %v4595 = vmul.f32 1.0, %v4594
  %v4596 = vrcp.pop %v4534
  %v4597 = vmul.f32 1.0, %v4596
  %v4598 = vrcp.pop %v4535
  %v4599 = vmul.f32 1.0, %v4598
  %4632 = vrot.lane.b32.xlu0 %v4537, 96
  %v4633 = vpop.permute.xlu0 %4632
  %4634 = vrot.lane.b32.xlu0 %v4539, 96
  %v4635 = vpop.permute.xlu0 %4634
  %4636 = vrot.lane.b32.xlu0 %v4541, 96
  %v4637 = vpop.permute.xlu0 %4636
  %4638 = vrot.lane.b32.xlu0 %v4543, 96
  %v4639 = vpop.permute.xlu0 %4638
  %4640 = vrot.lane.b32.xlu0 %v4545, 96
  %v4641 = vpop.permute.xlu0 %4640
  %4642 = vrot.lane.b32.xlu0 %v4547, 96
  %v4643 = vpop.permute.xlu0 %4642
  %4644 = vrot.lane.b32.xlu0 %v4549, 96
  %v4645 = vpop.permute.xlu0 %4644
  %4646 = vrot.lane.b32.xlu0 %v4551, 96
  %v4647 = vpop.permute.xlu0 %4646
  %4648 = vrot.lane.b32.xlu0 %v4553, 96
  %v4649 = vpop.permute.xlu0 %4648
  %4650 = vrot.lane.b32.xlu0 %v4555, 96
  %v4651 = vpop.permute.xlu0 %4650
  %4652 = vrot.lane.b32.xlu0 %v4557, 96
  %v4653 = vpop.permute.xlu0 %4652
  %4654 = vrot.lane.b32.xlu0 %v4559, 96
  %v4655 = vpop.permute.xlu0 %4654
  %4656 = vrot.lane.b32.xlu0 %v4561, 96
  %v4657 = vpop.permute.xlu0 %4656
  %4658 = vrot.lane.b32.xlu0 %v4563, 96
  %v4659 = vpop.permute.xlu0 %4658
  %4660 = vrot.lane.b32.xlu0 %v4565, 96
  %v4661 = vpop.permute.xlu0 %4660
  %4662 = vrot.lane.b32.xlu0 %v4567, 96
  %v4663 = vpop.permute.xlu0 %4662
  %4664 = vrot.lane.b32.xlu0 %v4569, 96
  %v4665 = vpop.permute.xlu0 %4664
  %4666 = vrot.lane.b32.xlu0 %v4571, 96
  %v4667 = vpop.permute.xlu0 %4666
  %4668 = vrot.lane.b32.xlu0 %v4573, 96
  %v4669 = vpop.permute.xlu0 %4668
  %4670 = vrot.lane.b32.xlu0 %v4575, 96
  %v4671 = vpop.permute.xlu0 %4670
  %4672 = vrot.lane.b32.xlu0 %v4577, 96
  %v4673 = vpop.permute.xlu0 %4672
  %4674 = vrot.lane.b32.xlu0 %v4579, 96
  %v4675 = vpop.permute.xlu0 %4674
  %4676 = vrot.lane.b32.xlu0 %v4581, 96
  %v4677 = vpop.permute.xlu0 %4676
  %4678 = vrot.lane.b32.xlu0 %v4583, 96
  %v4679 = vpop.permute.xlu0 %4678
  %4680 = vrot.lane.b32.xlu0 %v4585, 96
  %v4681 = vpop.permute.xlu0 %4680
  %4682 = vrot.lane.b32.xlu0 %v4587, 96
  %v4683 = vpop.permute.xlu0 %4682
  %4684 = vrot.lane.b32.xlu0 %v4589, 96
  %v4685 = vpop.permute.xlu0 %4684
  %4686 = vrot.lane.b32.xlu0 %v4591, 96
  %v4687 = vpop.permute.xlu0 %4686
  %4688 = vrot.lane.b32.xlu0 %v4593, 96
  %v4689 = vpop.permute.xlu0 %4688
  %4690 = vrot.lane.b32.xlu0 %v4595, 96
  %v4691 = vpop.permute.xlu0 %4690
  %4692 = vrot.lane.b32.xlu0 %v4597, 96
  %v4693 = vpop.permute.xlu0 %4692
  %4694 = vrot.lane.b32.xlu0 %v4599, 96
  %v4695 = vpop.permute.xlu0 %4694
  %v4728 = vmul.f32 %v4250, %v4633
  %v4729 = vmul.f32 %v4255, %v4635
  %v4730 = vmul.f32 %v4260, %v4637
  %v4731 = vmul.f32 %v4265, %v4639
  %v4732 = vmul.f32 %v4270, %v4641
  %v4733 = vmul.f32 %v4275, %v4643
  %v4734 = vmul.f32 %v4280, %v4645
  %v4735 = vmul.f32 %v4285, %v4647
  %v4736 = vmul.f32 %v4290, %v4649
  %v4737 = vmul.f32 %v4295, %v4651
  %v4738 = vmul.f32 %v4300, %v4653
  %v4739 = vmul.f32 %v4305, %v4655
  %v4740 = vmul.f32 %v4310, %v4657
  %v4741 = vmul.f32 %v4315, %v4659
  %v4742 = vmul.f32 %v4320, %v4661
  %v4743 = vmul.f32 %v4325, %v4663
  %v4744 = vmul.f32 %v4330, %v4665
  %v4745 = vmul.f32 %v4335, %v4667
  %v4746 = vmul.f32 %v4340, %v4669
  %v4747 = vmul.f32 %v4345, %v4671
  %v4748 = vmul.f32 %v4350, %v4673
  %v4749 = vmul.f32 %v4355, %v4675
  %v4750 = vmul.f32 %v4360, %v4677
  %v4751 = vmul.f32 %v4365, %v4679
  %v4752 = vmul.f32 %v4370, %v4681
  %v4753 = vmul.f32 %v4375, %v4683
  %v4754 = vmul.f32 %v4380, %v4685
  %v4755 = vmul.f32 %v4385, %v4687
  %v4756 = vmul.f32 %v4390, %v4689
  %v4757 = vmul.f32 %v4395, %v4691
  %v4758 = vmul.f32 %v4400, %v4693
  %v4759 = vmul.f32 %v4405, %v4695
  %4792 = vrot.lane.b32.xlu0 %v4250, 64
  %v4793 = vpop.permute.xlu0 %4792
  %4794 = vrot.lane.b32.xlu0 %v4255, 64
  %v4795 = vpop.permute.xlu0 %4794
  %4796 = vrot.lane.b32.xlu0 %v4260, 64
  %v4797 = vpop.permute.xlu0 %4796
  %4798 = vrot.lane.b32.xlu0 %v4265, 64
  %v4799 = vpop.permute.xlu0 %4798
  %4800 = vrot.lane.b32.xlu0 %v4270, 64
  %v4801 = vpop.permute.xlu0 %4800
  %4802 = vrot.lane.b32.xlu0 %v4275, 64
  %v4803 = vpop.permute.xlu0 %4802
  %4804 = vrot.lane.b32.xlu0 %v4280, 64
  %v4805 = vpop.permute.xlu0 %4804
  %4806 = vrot.lane.b32.xlu0 %v4285, 64
  %v4807 = vpop.permute.xlu0 %4806
  %4808 = vrot.lane.b32.xlu0 %v4290, 64
  %v4809 = vpop.permute.xlu0 %4808
  %4810 = vrot.lane.b32.xlu0 %v4295, 64
  %v4811 = vpop.permute.xlu0 %4810
  %4812 = vrot.lane.b32.xlu0 %v4300, 64
  %v4813 = vpop.permute.xlu0 %4812
  %4814 = vrot.lane.b32.xlu0 %v4305, 64
  %v4815 = vpop.permute.xlu0 %4814
  %4816 = vrot.lane.b32.xlu0 %v4310, 64
  %v4817 = vpop.permute.xlu0 %4816
  %4818 = vrot.lane.b32.xlu0 %v4315, 64
  %v4819 = vpop.permute.xlu0 %4818
  %4820 = vrot.lane.b32.xlu0 %v4320, 64
  %v4821 = vpop.permute.xlu0 %4820
  %4822 = vrot.lane.b32.xlu0 %v4325, 64
  %v4823 = vpop.permute.xlu0 %4822
  %4824 = vrot.lane.b32.xlu0 %v4330, 64
  %v4825 = vpop.permute.xlu0 %4824
  %4826 = vrot.lane.b32.xlu0 %v4335, 64
  %v4827 = vpop.permute.xlu0 %4826
  %4828 = vrot.lane.b32.xlu0 %v4340, 64
  %v4829 = vpop.permute.xlu0 %4828
  %4830 = vrot.lane.b32.xlu0 %v4345, 64
  %v4831 = vpop.permute.xlu0 %4830
  %4832 = vrot.lane.b32.xlu0 %v4350, 64
  %v4833 = vpop.permute.xlu0 %4832
  %4834 = vrot.lane.b32.xlu0 %v4355, 64
  %v4835 = vpop.permute.xlu0 %4834
  %4836 = vrot.lane.b32.xlu0 %v4360, 64
  %v4837 = vpop.permute.xlu0 %4836
  %4838 = vrot.lane.b32.xlu0 %v4365, 64
  %v4839 = vpop.permute.xlu0 %4838
  %4840 = vrot.lane.b32.xlu0 %v4370, 64
  %v4841 = vpop.permute.xlu0 %4840
  %4842 = vrot.lane.b32.xlu0 %v4375, 64
  %v4843 = vpop.permute.xlu0 %4842
  %4844 = vrot.lane.b32.xlu0 %v4380, 64
  %v4845 = vpop.permute.xlu0 %4844
  %4846 = vrot.lane.b32.xlu0 %v4385, 64
  %v4847 = vpop.permute.xlu0 %4846
  %4848 = vrot.lane.b32.xlu0 %v4390, 64
  %v4849 = vpop.permute.xlu0 %4848
  %4850 = vrot.lane.b32.xlu0 %v4395, 64
  %v4851 = vpop.permute.xlu0 %4850
  %4852 = vrot.lane.b32.xlu0 %v4400, 64
  %v4853 = vpop.permute.xlu0 %4852
  %4854 = vrot.lane.b32.xlu0 %v4405, 64
  %v4855 = vpop.permute.xlu0 %4854
  %v4888 = vadd.f32 %v4728, %v4793
  %v4889 = vadd.f32 %v4729, %v4795
  %v4890 = vadd.f32 %v4730, %v4797
  %v4891 = vadd.f32 %v4731, %v4799
  %v4892 = vadd.f32 %v4732, %v4801
  %v4893 = vadd.f32 %v4733, %v4803
  %v4894 = vadd.f32 %v4734, %v4805
  %v4895 = vadd.f32 %v4735, %v4807
  %v4896 = vadd.f32 %v4736, %v4809
  %v4897 = vadd.f32 %v4737, %v4811
  %v4898 = vadd.f32 %v4738, %v4813
  %v4899 = vadd.f32 %v4739, %v4815
  %v4900 = vadd.f32 %v4740, %v4817
  %v4901 = vadd.f32 %v4741, %v4819
  %v4902 = vadd.f32 %v4742, %v4821
  %v4903 = vadd.f32 %v4743, %v4823
  %v4904 = vadd.f32 %v4744, %v4825
  %v4905 = vadd.f32 %v4745, %v4827
  %v4906 = vadd.f32 %v4746, %v4829
  %v4907 = vadd.f32 %v4747, %v4831
  %v4908 = vadd.f32 %v4748, %v4833
  %v4909 = vadd.f32 %v4749, %v4835
  %v4910 = vadd.f32 %v4750, %v4837
  %v4911 = vadd.f32 %v4751, %v4839
  %v4912 = vadd.f32 %v4752, %v4841
  %v4913 = vadd.f32 %v4753, %v4843
  %v4914 = vadd.f32 %v4754, %v4845
  %v4915 = vadd.f32 %v4755, %v4847
  %v4916 = vadd.f32 %v4756, %v4849
  %v4917 = vadd.f32 %v4757, %v4851
  %v4918 = vadd.f32 %v4758, %v4853
  %v4919 = vadd.f32 %v4759, %v4855
  %v4920 = vmax.f32 %v4888, 0.0
  %v4921 = vmax.f32 %v4889, 0.0
  %v4922 = vmax.f32 %v4890, 0.0
  %v4923 = vmax.f32 %v4891, 0.0
  %v4924 = vmax.f32 %v4892, 0.0
  %v4925 = vmax.f32 %v4893, 0.0
  %v4926 = vmax.f32 %v4894, 0.0
  %v4927 = vmax.f32 %v4895, 0.0
  %v4928 = vmax.f32 %v4896, 0.0
  %v4929 = vmax.f32 %v4897, 0.0
  %v4930 = vmax.f32 %v4898, 0.0
  %v4931 = vmax.f32 %v4899, 0.0
  %v4932 = vmax.f32 %v4900, 0.0
  %v4933 = vmax.f32 %v4901, 0.0
  %v4934 = vmax.f32 %v4902, 0.0
  %v4935 = vmax.f32 %v4903, 0.0
  %v4936 = vmax.f32 %v4904, 0.0
  %v4937 = vmax.f32 %v4905, 0.0
  %v4938 = vmax.f32 %v4906, 0.0
  %v4939 = vmax.f32 %v4907, 0.0
  %v4940 = vmax.f32 %v4908, 0.0
  %v4941 = vmax.f32 %v4909, 0.0
  %v4942 = vmax.f32 %v4910, 0.0
  %v4943 = vmax.f32 %v4911, 0.0
  %v4944 = vmax.f32 %v4912, 0.0
  %v4945 = vmax.f32 %v4913, 0.0
  %v4946 = vmax.f32 %v4914, 0.0
  %v4947 = vmax.f32 %v4915, 0.0
  %v4948 = vmax.f32 %v4916, 0.0
  %v4949 = vmax.f32 %v4917, 0.0
  %v4950 = vmax.f32 %v4918, 0.0
  %v4951 = vmax.f32 %v4919, 0.0
  %v4952 = vsel %vm3250, %v4920, 0.0
  %v4953 = vsel %vm3250, %v4936, 0.0
  %v4954 = vadd.f32 %v4952, %v4953
  %v4955 = vsel %vm3250, %v4921, 0.0
  %v4956 = vsel %vm3250, %v4937, 0.0
  %v4957 = vadd.f32 %v4955, %v4956
  %v4958 = vsel %vm3250, %v4922, 0.0
  %v4959 = vsel %vm3250, %v4938, 0.0
  %v4960 = vadd.f32 %v4958, %v4959
  %v4961 = vsel %vm3250, %v4923, 0.0
  %v4962 = vsel %vm3250, %v4939, 0.0
  %v4963 = vadd.f32 %v4961, %v4962
  %v4964 = vsel %vm3250, %v4924, 0.0
  %v4965 = vsel %vm3250, %v4940, 0.0
  %v4966 = vadd.f32 %v4964, %v4965
  %v4967 = vsel %vm3250, %v4925, 0.0
  %v4968 = vsel %vm3250, %v4941, 0.0
  %v4969 = vadd.f32 %v4967, %v4968
  %v4970 = vsel %vm3250, %v4926, 0.0
  %v4971 = vsel %vm3250, %v4942, 0.0
  %v4972 = vadd.f32 %v4970, %v4971
  %v4973 = vsel %vm3250, %v4927, 0.0
  %v4974 = vsel %vm3250, %v4943, 0.0
  %v4975 = vadd.f32 %v4973, %v4974
  %v4976 = vsel %vm3250, %v4928, 0.0
  %v4977 = vsel %vm3250, %v4944, 0.0
  %v4978 = vadd.f32 %v4976, %v4977
  %v4979 = vsel %vm3250, %v4929, 0.0
  %v4980 = vsel %vm3250, %v4945, 0.0
  %v4981 = vadd.f32 %v4979, %v4980
  %v4982 = vsel %vm3250, %v4930, 0.0
  %v4983 = vsel %vm3250, %v4946, 0.0
  %v4984 = vadd.f32 %v4982, %v4983
  %v4985 = vsel %vm3250, %v4931, 0.0
  %v4986 = vsel %vm3250, %v4947, 0.0
  %v4987 = vadd.f32 %v4985, %v4986
  %v4988 = vsel %vm3250, %v4932, 0.0
  %v4989 = vsel %vm3250, %v4948, 0.0
  %v4990 = vadd.f32 %v4988, %v4989
  %v4991 = vsel %vm3250, %v4933, 0.0
  %v4992 = vsel %vm3250, %v4949, 0.0
  %v4993 = vadd.f32 %v4991, %v4992
  %v4994 = vsel %vm3250, %v4934, 0.0
  %v4995 = vsel %vm3250, %v4950, 0.0
  %v4996 = vadd.f32 %v4994, %v4995
  %v4997 = vsel %vm3250, %v4935, 0.0
  %v4998 = vsel %vm3250, %v4951, 0.0
  %v4999 = vadd.f32 %v4997, %v4998
  %v5000 = vsel %vm3250, %v4954, 0.0
  %v5001 = vsel %vm3250, %v4960, 0.0
  %v5002 = vadd.f32 %v5000, %v5001
  %v5003 = vsel %vm3250, %v4966, 0.0
  %v5004 = vadd.f32 %v5002, %v5003
  %v5005 = vsel %vm3250, %v4972, 0.0
  %v5006 = vadd.f32 %v5004, %v5005
  %v5007 = vsel %vm3250, %v4978, 0.0
  %v5008 = vadd.f32 %v5006, %v5007
  %v5009 = vsel %vm3250, %v4984, 0.0
  %v5010 = vadd.f32 %v5008, %v5009
  %v5011 = vsel %vm3250, %v4990, 0.0
  %v5012 = vadd.f32 %v5010, %v5011
  %v5013 = vsel %vm3250, %v4996, 0.0
  %v5014 = vadd.f32 %v5012, %v5013
  %v5015 = vsel %vm3250, %v4957, 0.0
  %v5016 = vsel %vm3250, %v4963, 0.0
  %v5017 = vadd.f32 %v5015, %v5016
  %v5018 = vsel %vm3250, %v4969, 0.0
  %v5019 = vadd.f32 %v5017, %v5018
  %v5020 = vsel %vm3250, %v4975, 0.0
  %v5021 = vadd.f32 %v5019, %v5020
  %v5022 = vsel %vm3250, %v4981, 0.0
  %v5023 = vadd.f32 %v5021, %v5022
  %v5024 = vsel %vm3250, %v4987, 0.0
  %v5025 = vadd.f32 %v5023, %v5024
  %v5026 = vsel %vm3250, %v4993, 0.0
  %v5027 = vadd.f32 %v5025, %v5026
  %v5028 = vsel %vm3250, %v4999, 0.0
  %v5029 = vadd.f32 %v5027, %v5028
  %v5030 = vsel %vm3250, %v5014, 0.0
  %5031 = vadd.xlane.f32.xlu0 %v5030
  %v5032 = vpop.xlane.xlu0 %5031
  %v5033 = vsel %vm3250, %v5029, 0.0
  %5034 = vadd.xlane.f32.xlu0 %v5033
  %v5035 = vpop.xlane.xlu0 %5034
  %v5036 = vmul.f32 %v5032, 0.001953125
  %v5037 = vmul.f32 %v5035, 0.001953125
  %v5038 = vsub.f32 %v4920, %v5036
  %v5039 = vsub.f32 %v4921, %v5037
  %v5040 = vsub.f32 %v4922, %v5036
  %v5041 = vsub.f32 %v4923, %v5037
  %v5042 = vsub.f32 %v4924, %v5036
  %v5043 = vsub.f32 %v4925, %v5037
  %v5044 = vsub.f32 %v4926, %v5036
  %v5045 = vsub.f32 %v4927, %v5037
  %v5046 = vsub.f32 %v4928, %v5036
  %v5047 = vsub.f32 %v4929, %v5037
  %v5048 = vsub.f32 %v4930, %v5036
  %v5049 = vsub.f32 %v4931, %v5037
  %v5050 = vsub.f32 %v4932, %v5036
  %v5051 = vsub.f32 %v4933, %v5037
  %v5052 = vsub.f32 %v4934, %v5036
  %v5053 = vsub.f32 %v4935, %v5037
  %v5054 = vsub.f32 %v4936, %v5036
  %v5055 = vsub.f32 %v4937, %v5037
  %v5056 = vsub.f32 %v4938, %v5036
  %v5057 = vsub.f32 %v4939, %v5037
  %v5058 = vsub.f32 %v4940, %v5036
  %v5059 = vsub.f32 %v4941, %v5037
  %v5060 = vsub.f32 %v4942, %v5036
  %v5061 = vsub.f32 %v4943, %v5037
  %v5062 = vsub.f32 %v4944, %v5036
  %v5063 = vsub.f32 %v4945, %v5037
  %v5064 = vsub.f32 %v4946, %v5036
  %v5065 = vsub.f32 %v4947, %v5037
  %v5066 = vsub.f32 %v4948, %v5036
  %v5067 = vsub.f32 %v4949, %v5037
  %v5068 = vsub.f32 %v4950, %v5036
  %v5069 = vsub.f32 %v4951, %v5037
  %v5070 = vmul.f32 %v5038, %v5038
  %v5071 = vmul.f32 %v5039, %v5039
  %v5072 = vmul.f32 %v5040, %v5040
  %v5073 = vmul.f32 %v5041, %v5041
  %v5074 = vmul.f32 %v5042, %v5042
  %v5075 = vmul.f32 %v5043, %v5043
  %v5076 = vmul.f32 %v5044, %v5044
  %v5077 = vmul.f32 %v5045, %v5045
  %v5078 = vmul.f32 %v5046, %v5046
  %v5079 = vmul.f32 %v5047, %v5047
  %v5080 = vmul.f32 %v5048, %v5048
  %v5081 = vmul.f32 %v5049, %v5049
  %v5082 = vmul.f32 %v5050, %v5050
  %v5083 = vmul.f32 %v5051, %v5051
  %v5084 = vmul.f32 %v5052, %v5052
  %v5085 = vmul.f32 %v5053, %v5053
  %v5086 = vmul.f32 %v5054, %v5054
  %v5087 = vmul.f32 %v5055, %v5055
  %v5088 = vmul.f32 %v5056, %v5056
  %v5089 = vmul.f32 %v5057, %v5057
  %v5090 = vmul.f32 %v5058, %v5058
  %v5091 = vmul.f32 %v5059, %v5059
  %v5092 = vmul.f32 %v5060, %v5060
  %v5093 = vmul.f32 %v5061, %v5061
  %v5094 = vmul.f32 %v5062, %v5062
  %v5095 = vmul.f32 %v5063, %v5063
  %v5096 = vmul.f32 %v5064, %v5064
  %v5097 = vmul.f32 %v5065, %v5065
  %v5098 = vmul.f32 %v5066, %v5066
  %v5099 = vmul.f32 %v5067, %v5067
  %v5100 = vmul.f32 %v5068, %v5068
  %v5101 = vmul.f32 %v5069, %v5069
  %v5102 = vsel %vm3250, %v5070, 0.0
  %v5103 = vsel %vm3250, %v5086, 0.0
  %v5104 = vadd.f32 %v5102, %v5103
  %v5105 = vsel %vm3250, %v5071, 0.0
  %v5106 = vsel %vm3250, %v5087, 0.0
  %v5107 = vadd.f32 %v5105, %v5106
  %v5108 = vsel %vm3250, %v5072, 0.0
  %v5109 = vsel %vm3250, %v5088, 0.0
  %v5110 = vadd.f32 %v5108, %v5109
  %v5111 = vsel %vm3250, %v5073, 0.0
  %v5112 = vsel %vm3250, %v5089, 0.0
  %v5113 = vadd.f32 %v5111, %v5112
  %v5114 = vsel %vm3250, %v5074, 0.0
  %v5115 = vsel %vm3250, %v5090, 0.0
  %v5116 = vadd.f32 %v5114, %v5115
  %v5117 = vsel %vm3250, %v5075, 0.0
  %v5118 = vsel %vm3250, %v5091, 0.0
  %v5119 = vadd.f32 %v5117, %v5118
  %v5120 = vsel %vm3250, %v5076, 0.0
  %v5121 = vsel %vm3250, %v5092, 0.0
  %v5122 = vadd.f32 %v5120, %v5121
  %v5123 = vsel %vm3250, %v5077, 0.0
  %v5124 = vsel %vm3250, %v5093, 0.0
  %v5125 = vadd.f32 %v5123, %v5124
  %v5126 = vsel %vm3250, %v5078, 0.0
  %v5127 = vsel %vm3250, %v5094, 0.0
  %v5128 = vadd.f32 %v5126, %v5127
  %v5129 = vsel %vm3250, %v5079, 0.0
  %v5130 = vsel %vm3250, %v5095, 0.0
  %v5131 = vadd.f32 %v5129, %v5130
  %v5132 = vsel %vm3250, %v5080, 0.0
  %v5133 = vsel %vm3250, %v5096, 0.0
  %v5134 = vadd.f32 %v5132, %v5133
  %v5135 = vsel %vm3250, %v5081, 0.0
  %v5136 = vsel %vm3250, %v5097, 0.0
  %v5137 = vadd.f32 %v5135, %v5136
  %v5138 = vsel %vm3250, %v5082, 0.0
  %v5139 = vsel %vm3250, %v5098, 0.0
  %v5140 = vadd.f32 %v5138, %v5139
  %v5141 = vsel %vm3250, %v5083, 0.0
  %v5142 = vsel %vm3250, %v5099, 0.0
  %v5143 = vadd.f32 %v5141, %v5142
  %v5144 = vsel %vm3250, %v5084, 0.0
  %v5145 = vsel %vm3250, %v5100, 0.0
  %v5146 = vadd.f32 %v5144, %v5145
  %v5147 = vsel %vm3250, %v5085, 0.0
  %v5148 = vsel %vm3250, %v5101, 0.0
  %v5149 = vadd.f32 %v5147, %v5148
  %v5150 = vsel %vm3250, %v5104, 0.0
  %v5151 = vsel %vm3250, %v5110, 0.0
  %v5152 = vadd.f32 %v5150, %v5151
  %v5153 = vsel %vm3250, %v5116, 0.0
  %v5154 = vadd.f32 %v5152, %v5153
  %v5155 = vsel %vm3250, %v5122, 0.0
  %v5156 = vadd.f32 %v5154, %v5155
  %v5157 = vsel %vm3250, %v5128, 0.0
  %v5158 = vadd.f32 %v5156, %v5157
  %v5159 = vsel %vm3250, %v5134, 0.0
  %v5160 = vadd.f32 %v5158, %v5159
  %v5161 = vsel %vm3250, %v5140, 0.0
  %v5162 = vadd.f32 %v5160, %v5161
  %v5163 = vsel %vm3250, %v5146, 0.0
  %v5164 = vadd.f32 %v5162, %v5163
  %v5165 = vsel %vm3250, %v5107, 0.0
  %v5166 = vsel %vm3250, %v5113, 0.0
  %v5167 = vadd.f32 %v5165, %v5166
  %v5168 = vsel %vm3250, %v5119, 0.0
  %v5169 = vadd.f32 %v5167, %v5168
  %v5170 = vsel %vm3250, %v5125, 0.0
  %v5171 = vadd.f32 %v5169, %v5170
  %v5172 = vsel %vm3250, %v5131, 0.0
  %v5173 = vadd.f32 %v5171, %v5172
  %v5174 = vsel %vm3250, %v5137, 0.0
  %v5175 = vadd.f32 %v5173, %v5174
  %v5176 = vsel %vm3250, %v5143, 0.0
  %v5177 = vadd.f32 %v5175, %v5176
  %v5178 = vsel %vm3250, %v5149, 0.0
  %v5179 = vadd.f32 %v5177, %v5178
  %v5180 = vsel %vm3250, %v5164, 0.0
  %5181 = vadd.xlane.f32.xlu0 %v5180
  %v5182 = vpop.xlane.xlu0 %5181
  %v5183 = vsel %vm3250, %v5179, 0.0
  %5184 = vadd.xlane.f32.xlu0 %v5183
  %v5185 = vpop.xlane.xlu0 %5184
  %v5186 = vmul.f32 %v5182, 0.001953125
  %v5187 = vmul.f32 %v5185, 0.001953125
  %v5188 = vadd.f32 %v5186, 1e-05
  %v5189 = vadd.f32 %v5187, 1e-05
  %v5190 = vrsqrt.pop %v5188
  %v5191 = vrsqrt.pop %v5189
  %v5192 = vmul.f32 %v5038, %v5190
  %v5193 = vmul.f32 %v5039, %v5191
  %v5194 = vmul.f32 %v5040, %v5190
  %v5195 = vmul.f32 %v5041, %v5191
  %v5196 = vmul.f32 %v5042, %v5190
  %v5197 = vmul.f32 %v5043, %v5191
  %v5198 = vmul.f32 %v5044, %v5190
  %v5199 = vmul.f32 %v5045, %v5191
  %v5200 = vmul.f32 %v5046, %v5190
  %v5201 = vmul.f32 %v5047, %v5191
  %v5202 = vmul.f32 %v5048, %v5190
  %v5203 = vmul.f32 %v5049, %v5191
  %v5204 = vmul.f32 %v5050, %v5190
  %v5205 = vmul.f32 %v5051, %v5191
  %v5206 = vmul.f32 %v5052, %v5190
  %v5207 = vmul.f32 %v5053, %v5191
  %v5208 = vmul.f32 %v5054, %v5190
  %v5209 = vmul.f32 %v5055, %v5191
  %v5210 = vmul.f32 %v5056, %v5190
  %v5211 = vmul.f32 %v5057, %v5191
  %v5212 = vmul.f32 %v5058, %v5190
  %v5213 = vmul.f32 %v5059, %v5191
  %v5214 = vmul.f32 %v5060, %v5190
  %v5215 = vmul.f32 %v5061, %v5191
  %v5216 = vmul.f32 %v5062, %v5190
  %v5217 = vmul.f32 %v5063, %v5191
  %v5218 = vmul.f32 %v5064, %v5190
  %v5219 = vmul.f32 %v5065, %v5191
  %v5220 = vmul.f32 %v5066, %v5190
  %v5221 = vmul.f32 %v5067, %v5191
  %v5222 = vmul.f32 %v5068, %v5190
  %v5223 = vmul.f32 %v5069, %v5191
  %5248 = vrot.lane.b32.xlu0 %v5194, 32
  %v5249 = vpop.permute.xlu0 %5248
  %5250 = vrot.lane.b32.xlu0 %v5195, 32
  %v5251 = vpop.permute.xlu0 %5250
  %5252 = vrot.lane.b32.xlu0 %v5196, 32
  %v5253 = vpop.permute.xlu0 %5252
  %5254 = vrot.lane.b32.xlu0 %v5197, 32
  %v5255 = vpop.permute.xlu0 %5254
  %5256 = vrot.lane.b32.xlu0 %v5198, 32
  %v5257 = vpop.permute.xlu0 %5256
  %5258 = vrot.lane.b32.xlu0 %v5199, 32
  %v5259 = vpop.permute.xlu0 %5258
  %5260 = vrot.lane.b32.xlu0 %v5200, 32
  %v5261 = vpop.permute.xlu0 %5260
  %5262 = vrot.lane.b32.xlu0 %v5201, 32
  %v5263 = vpop.permute.xlu0 %5262
  %5264 = vrot.lane.b32.xlu0 %v5202, 32
  %v5265 = vpop.permute.xlu0 %5264
  %5266 = vrot.lane.b32.xlu0 %v5203, 32
  %v5267 = vpop.permute.xlu0 %5266
  %5268 = vrot.lane.b32.xlu0 %v5204, 32
  %v5269 = vpop.permute.xlu0 %5268
  %5270 = vrot.lane.b32.xlu0 %v5205, 32
  %v5271 = vpop.permute.xlu0 %5270
  %5272 = vrot.lane.b32.xlu0 %v5210, 32
  %v5273 = vpop.permute.xlu0 %5272
  %5274 = vrot.lane.b32.xlu0 %v5211, 32
  %v5275 = vpop.permute.xlu0 %5274
  %5276 = vrot.lane.b32.xlu0 %v5212, 32
  %v5277 = vpop.permute.xlu0 %5276
  %5278 = vrot.lane.b32.xlu0 %v5213, 32
  %v5279 = vpop.permute.xlu0 %5278
  %5280 = vrot.lane.b32.xlu0 %v5214, 32
  %v5281 = vpop.permute.xlu0 %5280
  %5282 = vrot.lane.b32.xlu0 %v5215, 32
  %v5283 = vpop.permute.xlu0 %5282
  %5284 = vrot.lane.b32.xlu0 %v5216, 32
  %v5285 = vpop.permute.xlu0 %5284
  %5286 = vrot.lane.b32.xlu0 %v5217, 32
  %v5287 = vpop.permute.xlu0 %5286
  %5288 = vrot.lane.b32.xlu0 %v5218, 32
  %v5289 = vpop.permute.xlu0 %5288
  %5290 = vrot.lane.b32.xlu0 %v5219, 32
  %v5291 = vpop.permute.xlu0 %5290
  %5292 = vrot.lane.b32.xlu0 %v5220, 32
  %v5293 = vpop.permute.xlu0 %5292
  %5294 = vrot.lane.b32.xlu0 %v5221, 32
  %v5295 = vpop.permute.xlu0 %5294
  %5324 = vrot.lane.b32.xlu0 %v5196, 64
  %v5325 = vpop.permute.xlu0 %5324
  %5326 = vrot.lane.b32.xlu0 %v5197, 64
  %v5327 = vpop.permute.xlu0 %5326
  %5328 = vrot.lane.b32.xlu0 %v5198, 64
  %v5329 = vpop.permute.xlu0 %5328
  %5330 = vrot.lane.b32.xlu0 %v5199, 64
  %v5331 = vpop.permute.xlu0 %5330
  %5332 = vrot.lane.b32.xlu0 %v5200, 64
  %v5333 = vpop.permute.xlu0 %5332
  %5334 = vrot.lane.b32.xlu0 %v5201, 64
  %v5335 = vpop.permute.xlu0 %5334
  %5336 = vrot.lane.b32.xlu0 %v5202, 64
  %v5337 = vpop.permute.xlu0 %5336
  %5338 = vrot.lane.b32.xlu0 %v5203, 64
  %v5339 = vpop.permute.xlu0 %5338
  %5340 = vrot.lane.b32.xlu0 %v5204, 64
  %v5341 = vpop.permute.xlu0 %5340
  %5342 = vrot.lane.b32.xlu0 %v5205, 64
  %v5343 = vpop.permute.xlu0 %5342
  %5344 = vrot.lane.b32.xlu0 %v5206, 64
  %v5345 = vpop.permute.xlu0 %5344
  %5346 = vrot.lane.b32.xlu0 %v5207, 64
  %v5347 = vpop.permute.xlu0 %5346
  %5348 = vrot.lane.b32.xlu0 %v5212, 64
  %v5349 = vpop.permute.xlu0 %5348
  %5350 = vrot.lane.b32.xlu0 %v5213, 64
  %v5351 = vpop.permute.xlu0 %5350
  %5352 = vrot.lane.b32.xlu0 %v5214, 64
  %v5353 = vpop.permute.xlu0 %5352
  %5354 = vrot.lane.b32.xlu0 %v5215, 64
  %v5355 = vpop.permute.xlu0 %5354
  %5356 = vrot.lane.b32.xlu0 %v5216, 64
  %v5357 = vpop.permute.xlu0 %5356
  %5358 = vrot.lane.b32.xlu0 %v5217, 64
  %v5359 = vpop.permute.xlu0 %5358
  %5360 = vrot.lane.b32.xlu0 %v5218, 64
  %v5361 = vpop.permute.xlu0 %5360
  %5362 = vrot.lane.b32.xlu0 %v5219, 64
  %v5363 = vpop.permute.xlu0 %5362
  %5364 = vrot.lane.b32.xlu0 %v5220, 64
  %v5365 = vpop.permute.xlu0 %5364
  %5366 = vrot.lane.b32.xlu0 %v5221, 64
  %v5367 = vpop.permute.xlu0 %5366
  %5368 = vrot.lane.b32.xlu0 %v5222, 64
  %v5369 = vpop.permute.xlu0 %5368
  %5370 = vrot.lane.b32.xlu0 %v5223, 64
  %v5371 = vpop.permute.xlu0 %5370
  %v5396 = vsel %vm3250, %v5192, %v5249
  %v5397 = vsel %vm3250, %v5193, %v5251
  %v5398 = vsel %vm3250, %v5194, %v5253
  %v5399 = vsel %vm3250, %v5195, %v5255
  %v5400 = vsel %vm3250, %v5196, %v5257
  %v5401 = vsel %vm3250, %v5197, %v5259
  %v5402 = vsel %vm3250, %v5198, %v5261
  %v5403 = vsel %vm3250, %v5199, %v5263
  %v5404 = vsel %vm3250, %v5200, %v5265
  %v5405 = vsel %vm3250, %v5201, %v5267
  %v5406 = vsel %vm3250, %v5202, %v5269
  %v5407 = vsel %vm3250, %v5203, %v5271
  %v5408 = vsel %vm3250, %v5208, %v5273
  %v5409 = vsel %vm3250, %v5209, %v5275
  %v5410 = vsel %vm3250, %v5210, %v5277
  %v5411 = vsel %vm3250, %v5211, %v5279
  %v5412 = vsel %vm3250, %v5212, %v5281
  %v5413 = vsel %vm3250, %v5213, %v5283
  %v5414 = vsel %vm3250, %v5214, %v5285
  %v5415 = vsel %vm3250, %v5215, %v5287
  %v5416 = vsel %vm3250, %v5216, %v5289
  %v5417 = vsel %vm3250, %v5217, %v5291
  %v5418 = vsel %vm3250, %v5218, %v5293
  %v5419 = vsel %vm3250, %v5219, %v5295
  %v5420 = vsel %vm1669, %v5396, %v5325
  %v5421 = vsel %vm1669, %v5397, %v5327
  %v5422 = vsel %vm1669, %v5398, %v5329
  %v5423 = vsel %vm1669, %v5399, %v5331
  %v5424 = vsel %vm1669, %v5400, %v5333
  %v5425 = vsel %vm1669, %v5401, %v5335
  %v5426 = vsel %vm1669, %v5402, %v5337
  %v5427 = vsel %vm1669, %v5403, %v5339
  %v5428 = vsel %vm1669, %v5404, %v5341
  %v5429 = vsel %vm1669, %v5405, %v5343
  %v5430 = vsel %vm1669, %v5406, %v5345
  %v5431 = vsel %vm1669, %v5407, %v5347
  %v5432 = vsel %vm1669, %v5408, %v5349
  %v5433 = vsel %vm1669, %v5409, %v5351
  %v5434 = vsel %vm1669, %v5410, %v5353
  %v5435 = vsel %vm1669, %v5411, %v5355
  %v5436 = vsel %vm1669, %v5412, %v5357
  %v5437 = vsel %vm1669, %v5413, %v5359
  %v5438 = vsel %vm1669, %v5414, %v5361
  %v5439 = vsel %vm1669, %v5415, %v5363
  %v5440 = vsel %vm1669, %v5416, %v5365
  %v5441 = vsel %vm1669, %v5417, %v5367
  %v5442 = vsel %vm1669, %v5418, %v5369
  %v5443 = vsel %vm1669, %v5419, %v5371
  %v5444 = vld [vmem:[%s9] sm:$0xff]
  %v5445 = vld [vmem:[%s9 + $0x8] sm:$0xff]
  %v5446 = vld [vmem:[%s9 + $0x10] sm:$0xff]
  %v5447 = vld [vmem:[%s9 + $0x18] sm:$0xff]
  %v5448 = vld [vmem:[%s9 + $0x20] sm:$0xff]
  %v5449 = vld [vmem:[%s9 + $0x28] sm:$0xff]
  %v5450 = vld [vmem:[%s9 + $0x30] sm:$0xff]
  %v5451 = vld [vmem:[%s9 + $0x38] sm:$0xff]
  %v5452 = vld [vmem:[%s9 + $0x40] sm:$0xff]
  %v5453 = vld [vmem:[%s9 + $0x48] sm:$0xff]
  %v5454 = vld [vmem:[%s9 + $0x50] sm:$0xff]
  %v5455 = vld [vmem:[%s9 + $0x58] sm:$0xff]
  %v5456 = vld [vmem:[%s10] sm:$0x1]
  %v5458 = vlaneseq
  %v5459 = vshrl.u32 %v5458, 7
  %v5460 = vsub.s32 0, %v5459
  %v5461 = vrot.slane %v5456, %v5460
  %v5464 = vsel %vm3350, %v5420, 0
  %v5467 = vsel %vm3350, %v5421, 0
  %v5470 = vsel %vm3350, %v5422, 0
  %v5473 = vsel %vm3350, %v5423, 0
  %v5476 = vsel %vm3350, %v5424, 0
  %v5479 = vsel %vm3350, %v5425, 0
  %v5482 = vsel %vm3350, %v5426, 0
  %v5485 = vsel %vm3350, %v5427, 0
  %v5488 = vsel %vm3350, %v5428, 0
  %v5491 = vsel %vm3350, %v5429, 0
  %v5494 = vsel %vm3350, %v5430, 0
  %v5497 = vsel %vm3350, %v5431, 0
  %v5500 = vsel %vm3350, %v5432, 0
  %v5503 = vsel %vm3350, %v5433, 0
  %v5506 = vsel %vm3350, %v5434, 0
  %v5509 = vsel %vm3350, %v5435, 0
  %v5512 = vsel %vm3350, %v5436, 0
  %v5515 = vsel %vm3350, %v5437, 0
  %v5518 = vsel %vm3350, %v5438, 0
  %v5521 = vsel %vm3350, %v5439, 0
  %v5524 = vsel %vm3350, %v5440, 0
  %v5527 = vsel %vm3350, %v5441, 0
  %v5530 = vsel %vm3350, %v5442, 0
  %v5533 = vsel %vm3350, %v5443, 0
  %5535 = vmatprep.subr.mxu0 0.0
  %5536 = vmatpush1.msra.mxu0 %v5444
  %5537 = vmatprep.subr.mxu0 0.0
  %5538 = vmatpush1.msra.mxu0 %v5445
  %5539 = vmatprep.subr.mxu0 0.0
  %5540 = vmatpush1.msra.mxu0 %v5446
  %5541 = vmatprep.subr.mxu0 0.0
  %5542 = vmatpush1.msra.mxu0 %v5447
  %5543 = vmatprep.subr.mxu0 0.0
  %5544 = vmatpush1.msra.mxu0 %v5448
  %5545 = vmatprep.subr.mxu0 0.0
  %5546 = vmatpush1.msra.mxu0 %v5449
  %5547 = vmatprep.subr.mxu0 0.0
  %5548 = vmatpush1.msra.mxu0 %v5450
  %5549 = vmatprep.subr.mxu0 0.0
  %5550 = vmatpush1.msra.mxu0 %v5451
  %5551 = vmatprep.subr.mxu0 0.0
  %5552 = vmatpush1.msra.mxu0 %v5452
  %5553 = vmatprep.subr.mxu0 0.0
  %5554 = vmatpush1.msra.mxu0 %v5453
  %5555 = vmatprep.subr.mxu0 0.0
  %5556 = vmatpush1.msra.mxu0 %v5454
  %5557 = vmatprep.subr.mxu0 0.0
  %5558 = vmatpush1.msra.mxu0 %v5455
  %5559 = vmatprep.subr.mxu0 0.0
  %5560 = vmatpush1.msra.mxu0 0.0
  %5561 = vmatprep.subr.mxu0 0.0
  %5562 = vmatpush1.msra.mxu0 0.0
  %5563 = vmatprep.subr.mxu0 0.0
  %5564 = vmatpush1.msra.mxu0 0.0
  %5565 = vmatprep.subr.mxu0 0.0
  %5566 = vmatpush1.msra.mxu0 0.0
  %5567 = vmatprep.subr.mxu0 0.0
  %5568 = vmatpush1.msra.mxu0 0.0
  %5569 = vmatprep.subr.mxu0 0.0
  %5570 = vmatpush1.msra.mxu0 0.0
  %5571 = vmatprep.subr.mxu0 0.0
  %5572 = vmatpush1.msra.mxu0 0.0
  %5573 = vmatprep.subr.mxu0 0.0
  %5574 = vmatpush1.msra.mxu0 0.0
  %5575 = vmatprep.subr.mxu0 0.0
  %5576 = vmatpush1.msra.mxu0 0.0
  %5577 = vmatprep.subr.mxu0 0.0
  %5578 = vmatpush1.msra.mxu0 0.0
  %5579 = vmatprep.subr.mxu0 0.0
  %5580 = vmatpush1.msra.mxu0 0.0
  %5581 = vmatprep.subr.mxu0 0.0
  %5582 = vmatpush1.msra.mxu0 0.0
  %5583 = vmatprep.subr.mxu0 0.0
  %5584 = vmatpush1.msra.mxu0 0.0
  %5585 = vmatprep.subr.mxu0 0.0
  %5586 = vmatpush1.msra.mxu0 0.0
  %5587 = vmatprep.subr.mxu0 0.0
  %5588 = vmatpush1.msra.mxu0 0.0
  %5589 = vmatprep.subr.mxu0 0.0
  %5590 = vmatpush1.msra.mxu0 0.0
  %5591 = vmatprep.subr.mxu0 0.0
  %5592 = vmatpush1.msra.mxu0 0.0
  %5593 = vmatprep.subr.mxu0 0.0
  %5594 = vmatpush1.msra.mxu0 0.0
  %5595 = vmatprep.subr.mxu0 0.0
  %5596 = vmatpush1.msra.mxu0 0.0
  %5597 = vmatprep.subr.mxu0 0.0
  %5598 = vmatpush1.msra.mxu0 0.0
  %5599 = vmatprep.mubr.f32.mxu0 0.0
  %5600 = vmatmul.mubr.f32.gmra.mrb[0].mxu0 %v5464
  %v5601 = vpop.f32.mrb[0].mxu0
  %v5602 = vadd.f32 %v5461, %v5601
  %v5603 = vpop.f32.mrb[0].mxu0
  %5604 = vmatprep.mubr.f32.mxu0 0.0
  %5605 = vmatmul.mubr.f32.gmra.mrb[0].mxu0 %v5467
  %v5606 = vpop.f32.mrb[0].mxu0
  %v5607 = vadd.f32 %v5461, %v5606
  %v5608 = vpop.f32.mrb[0].mxu0
  %5609 = vmatprep.mubr.f32.mxu0 0.0
  %5610 = vmatmul.mubr.f32.gmra.mrb[0].mxu0 %v5470
  %v5611 = vpop.f32.mrb[0].mxu0
  %v5612 = vadd.f32 %v5461, %v5611
  %v5613 = vpop.f32.mrb[0].mxu0
  %5614 = vmatprep.mubr.f32.mxu0 0.0
  %5615 = vmatmul.mubr.f32.gmra.mrb[0].mxu0 %v5473
  %v5616 = vpop.f32.mrb[0].mxu0
  %v5617 = vadd.f32 %v5461, %v5616
  %v5618 = vpop.f32.mrb[0].mxu0
  %5619 = vmatprep.mubr.f32.mxu0 0.0
  %5620 = vmatmul.mubr.f32.gmra.mrb[0].mxu0 %v5476
  %v5621 = vpop.f32.mrb[0].mxu0
  %v5622 = vadd.f32 %v5461, %v5621
  %v5623 = vpop.f32.mrb[0].mxu0
  %5624 = vmatprep.mubr.f32.mxu0 0.0
  %5625 = vmatmul.mubr.f32.gmra.mrb[0].mxu0 %v5479
  %v5626 = vpop.f32.mrb[0].mxu0
  %v5627 = vadd.f32 %v5461, %v5626
  %v5628 = vpop.f32.mrb[0].mxu0
  %5629 = vmatprep.mubr.f32.mxu0 0.0
  %5630 = vmatmul.mubr.f32.gmra.mrb[0].mxu0 %v5482
  %v5631 = vpop.f32.mrb[0].mxu0
  %v5632 = vadd.f32 %v5461, %v5631
  %v5633 = vpop.f32.mrb[0].mxu0
  %5634 = vmatprep.mubr.f32.mxu0 0.0
  %5635 = vmatmul.mubr.f32.gmra.mrb[0].mxu0 %v5485
  %v5636 = vpop.f32.mrb[0].mxu0
  %v5637 = vadd.f32 %v5461, %v5636
  %v5638 = vpop.f32.mrb[0].mxu0
  %5639 = vmatprep.mubr.f32.mxu0 0.0
  %5640 = vmatmul.mubr.f32.gmra.mrb[0].mxu0 %v5488
  %v5641 = vpop.f32.mrb[0].mxu0
  %v5642 = vadd.f32 %v5461, %v5641
  %v5643 = vpop.f32.mrb[0].mxu0
  %5644 = vmatprep.mubr.f32.mxu0 0.0
  %5645 = vmatmul.mubr.f32.gmra.mrb[0].mxu0 %v5491
  %v5646 = vpop.f32.mrb[0].mxu0
  %v5647 = vadd.f32 %v5461, %v5646
  %v5648 = vpop.f32.mrb[0].mxu0
  %5649 = vmatprep.mubr.f32.mxu0 0.0
  %5650 = vmatmul.mubr.f32.gmra.mrb[0].mxu0 %v5494
  %v5651 = vpop.f32.mrb[0].mxu0
  %v5652 = vadd.f32 %v5461, %v5651
  %v5653 = vpop.f32.mrb[0].mxu0
  %5654 = vmatprep.mubr.f32.mxu0 0.0
  %5655 = vmatmul.mubr.f32.gmra.mrb[0].mxu0 %v5497
  %v5656 = vpop.f32.mrb[0].mxu0
  %v5657 = vadd.f32 %v5461, %v5656
  %v5658 = vpop.f32.mrb[0].mxu0
  %5659 = vmatprep.mubr.f32.mxu0 0.0
  %5660 = vmatmul.mubr.f32.gmra.mrb[0].mxu0 %v5500
  %v5661 = vpop.f32.mrb[0].mxu0
  %v5662 = vadd.f32 %v5461, %v5661
  %v5663 = vpop.f32.mrb[0].mxu0
  %5664 = vmatprep.mubr.f32.mxu0 0.0
  %5665 = vmatmul.mubr.f32.gmra.mrb[0].mxu0 %v5503
  %v5666 = vpop.f32.mrb[0].mxu0
  %v5667 = vadd.f32 %v5461, %v5666
  %v5668 = vpop.f32.mrb[0].mxu0
  %5669 = vmatprep.mubr.f32.mxu0 0.0
  %5670 = vmatmul.mubr.f32.gmra.mrb[0].mxu0 %v5506
  %v5671 = vpop.f32.mrb[0].mxu0
  %v5672 = vadd.f32 %v5461, %v5671
  %v5673 = vpop.f32.mrb[0].mxu0
  %5674 = vmatprep.mubr.f32.mxu0 0.0
  %5675 = vmatmul.mubr.f32.gmra.mrb[0].mxu0 %v5509
  %v5676 = vpop.f32.mrb[0].mxu0
  %v5677 = vadd.f32 %v5461, %v5676
  %v5678 = vpop.f32.mrb[0].mxu0
  %5679 = vmatprep.mubr.f32.mxu0 0.0
  %5680 = vmatmul.mubr.f32.gmra.mrb[0].mxu0 %v5512
  %v5681 = vpop.f32.mrb[0].mxu0
  %v5682 = vadd.f32 %v5461, %v5681
  %v5683 = vpop.f32.mrb[0].mxu0
  %5684 = vmatprep.mubr.f32.mxu0 0.0
  %5685 = vmatmul.mubr.f32.gmra.mrb[0].mxu0 %v5515
  %v5686 = vpop.f32.mrb[0].mxu0
  %v5687 = vadd.f32 %v5461, %v5686
  %v5688 = vpop.f32.mrb[0].mxu0
  %5689 = vmatprep.mubr.f32.mxu0 0.0
  %5690 = vmatmul.mubr.f32.gmra.mrb[0].mxu0 %v5518
  %v5691 = vpop.f32.mrb[0].mxu0
  %v5692 = vadd.f32 %v5461, %v5691
  %v5693 = vpop.f32.mrb[0].mxu0
  %5694 = vmatprep.mubr.f32.mxu0 0.0
  %5695 = vmatmul.mubr.f32.gmra.mrb[0].mxu0 %v5521
  %v5696 = vpop.f32.mrb[0].mxu0
  %v5697 = vadd.f32 %v5461, %v5696
  %v5698 = vpop.f32.mrb[0].mxu0
  %5699 = vmatprep.mubr.f32.mxu0 0.0
  %5700 = vmatmul.mubr.f32.gmra.mrb[0].mxu0 %v5524
  %v5701 = vpop.f32.mrb[0].mxu0
  %v5702 = vadd.f32 %v5461, %v5701
  %v5703 = vpop.f32.mrb[0].mxu0
  %5704 = vmatprep.mubr.f32.mxu0 0.0
  %5705 = vmatmul.mubr.f32.gmra.mrb[0].mxu0 %v5527
  %v5706 = vpop.f32.mrb[0].mxu0
  %v5707 = vadd.f32 %v5461, %v5706
  %v5708 = vpop.f32.mrb[0].mxu0
  %5709 = vmatprep.mubr.f32.mxu0 0.0
  %5710 = vmatmul.mubr.f32.gmra.mrb[0].mxu0 %v5530
  %v5711 = vpop.f32.mrb[0].mxu0
  %v5712 = vadd.f32 %v5461, %v5711
  %v5713 = vpop.f32.mrb[0].mxu0
  %5714 = vmatprep.mubr.f32.mxu0 0.0
  %5715 = vmatmul.mubr.f32.gmra.mrb[0].mxu0 %v5533
  %v5716 = vpop.f32.mrb[0].mxu0
  %v5717 = vadd.f32 %v5461, %v5716
  %v5718 = vpop.f32.mrb[0].mxu0
  %5719 = vdwg.mxu0
  %v5720 = vsub.f32 0.0, %v5602
  %v5721 = vsub.f32 0.0, %v5607
  %v5722 = vsub.f32 0.0, %v5612
  %v5723 = vsub.f32 0.0, %v5617
  %v5724 = vsub.f32 0.0, %v5622
  %v5725 = vsub.f32 0.0, %v5627
  %v5726 = vsub.f32 0.0, %v5632
  %v5727 = vsub.f32 0.0, %v5637
  %v5728 = vsub.f32 0.0, %v5642
  %v5729 = vsub.f32 0.0, %v5647
  %v5730 = vsub.f32 0.0, %v5652
  %v5731 = vsub.f32 0.0, %v5657
  %v5732 = vsub.f32 0.0, %v5662
  %v5733 = vsub.f32 0.0, %v5667
  %v5734 = vsub.f32 0.0, %v5672
  %v5735 = vsub.f32 0.0, %v5677
  %v5736 = vsub.f32 0.0, %v5682
  %v5737 = vsub.f32 0.0, %v5687
  %v5738 = vsub.f32 0.0, %v5692
  %v5739 = vsub.f32 0.0, %v5697
  %v5740 = vsub.f32 0.0, %v5702
  %v5741 = vsub.f32 0.0, %v5707
  %v5742 = vsub.f32 0.0, %v5712
  %v5743 = vsub.f32 0.0, %v5717
  %v5744 = vmul.f32 %v5720, 1.442695
  %v5745 = vpow.pop %v5744
  %v5746 = vmul.f32 %v5721, 1.442695
  %v5747 = vpow.pop %v5746
  %v5748 = vmul.f32 %v5722, 1.442695
  %v5749 = vpow.pop %v5748
  %v5750 = vmul.f32 %v5723, 1.442695
  %v5751 = vpow.pop %v5750
  %v5752 = vmul.f32 %v5724, 1.442695
  %v5753 = vpow.pop %v5752
  %v5754 = vmul.f32 %v5725, 1.442695
  %v5755 = vpow.pop %v5754
  %v5756 = vmul.f32 %v5726, 1.442695
  %v5757 = vpow.pop %v5756
  %v5758 = vmul.f32 %v5727, 1.442695
  %v5759 = vpow.pop %v5758
  %v5760 = vmul.f32 %v5728, 1.442695
  %v5761 = vpow.pop %v5760
  %v5762 = vmul.f32 %v5729, 1.442695
  %v5763 = vpow.pop %v5762
  %v5764 = vmul.f32 %v5730, 1.442695
  %v5765 = vpow.pop %v5764
  %v5766 = vmul.f32 %v5731, 1.442695
  %v5767 = vpow.pop %v5766
  %v5768 = vmul.f32 %v5732, 1.442695
  %v5769 = vpow.pop %v5768
  %v5770 = vmul.f32 %v5733, 1.442695
  %v5771 = vpow.pop %v5770
  %v5772 = vmul.f32 %v5734, 1.442695
  %v5773 = vpow.pop %v5772
  %v5774 = vmul.f32 %v5735, 1.442695
  %v5775 = vpow.pop %v5774
  %v5776 = vmul.f32 %v5736, 1.442695
  %v5777 = vpow.pop %v5776
  %v5778 = vmul.f32 %v5737, 1.442695
  %v5779 = vpow.pop %v5778
  %v5780 = vmul.f32 %v5738, 1.442695
  %v5781 = vpow.pop %v5780
  %v5782 = vmul.f32 %v5739, 1.442695
  %v5783 = vpow.pop %v5782
  %v5784 = vmul.f32 %v5740, 1.442695
  %v5785 = vpow.pop %v5784
  %v5786 = vmul.f32 %v5741, 1.442695
  %v5787 = vpow.pop %v5786
  %v5788 = vmul.f32 %v5742, 1.442695
  %v5789 = vpow.pop %v5788
  %v5790 = vmul.f32 %v5743, 1.442695
  %v5791 = vpow.pop %v5790
  %v5792 = vadd.f32 %v5745, 1.0
  %v5793 = vadd.f32 %v5747, 1.0
  %v5794 = vadd.f32 %v5749, 1.0
  %v5795 = vadd.f32 %v5751, 1.0
  %v5796 = vadd.f32 %v5753, 1.0
  %v5797 = vadd.f32 %v5755, 1.0
  %v5798 = vadd.f32 %v5757, 1.0
  %v5799 = vadd.f32 %v5759, 1.0
  %v5800 = vadd.f32 %v5761, 1.0
  %v5801 = vadd.f32 %v5763, 1.0
  %v5802 = vadd.f32 %v5765, 1.0
  %v5803 = vadd.f32 %v5767, 1.0
  %v5804 = vadd.f32 %v5769, 1.0
  %v5805 = vadd.f32 %v5771, 1.0
  %v5806 = vadd.f32 %v5773, 1.0
  %v5807 = vadd.f32 %v5775, 1.0
  %v5808 = vadd.f32 %v5777, 1.0
  %v5809 = vadd.f32 %v5779, 1.0
  %v5810 = vadd.f32 %v5781, 1.0
  %v5811 = vadd.f32 %v5783, 1.0
  %v5812 = vadd.f32 %v5785, 1.0
  %v5813 = vadd.f32 %v5787, 1.0
  %v5814 = vadd.f32 %v5789, 1.0
  %v5815 = vadd.f32 %v5791, 1.0
  %v5816 = vrcp.pop %v5792
  %v5817 = vmul.f32 1.0, %v5816
  %v5818 = vrcp.pop %v5793
  %v5819 = vmul.f32 1.0, %v5818
  %v5820 = vrcp.pop %v5794
  %v5821 = vmul.f32 1.0, %v5820
  %v5822 = vrcp.pop %v5795
  %v5823 = vmul.f32 1.0, %v5822
  %v5824 = vrcp.pop %v5796
  %v5825 = vmul.f32 1.0, %v5824
  %v5826 = vrcp.pop %v5797
  %v5827 = vmul.f32 1.0, %v5826
  %v5828 = vrcp.pop %v5798
  %v5829 = vmul.f32 1.0, %v5828
  %v5830 = vrcp.pop %v5799
  %v5831 = vmul.f32 1.0, %v5830
  %v5832 = vrcp.pop %v5800
  %v5833 = vmul.f32 1.0, %v5832
  %v5834 = vrcp.pop %v5801
  %v5835 = vmul.f32 1.0, %v5834
  %v5836 = vrcp.pop %v5802
  %v5837 = vmul.f32 1.0, %v5836
  %v5838 = vrcp.pop %v5803
  %v5839 = vmul.f32 1.0, %v5838
  %v5840 = vrcp.pop %v5804
  %v5841 = vmul.f32 1.0, %v5840
  %v5842 = vrcp.pop %v5805
  %v5843 = vmul.f32 1.0, %v5842
  %v5844 = vrcp.pop %v5806
  %v5845 = vmul.f32 1.0, %v5844
  %v5846 = vrcp.pop %v5807
  %v5847 = vmul.f32 1.0, %v5846
  %v5848 = vrcp.pop %v5808
  %v5849 = vmul.f32 1.0, %v5848
  %v5850 = vrcp.pop %v5809
  %v5851 = vmul.f32 1.0, %v5850
  %v5852 = vrcp.pop %v5810
  %v5853 = vmul.f32 1.0, %v5852
  %v5854 = vrcp.pop %v5811
  %v5855 = vmul.f32 1.0, %v5854
  %v5856 = vrcp.pop %v5812
  %v5857 = vmul.f32 1.0, %v5856
  %v5858 = vrcp.pop %v5813
  %v5859 = vmul.f32 1.0, %v5858
  %v5860 = vrcp.pop %v5814
  %v5861 = vmul.f32 1.0, %v5860
  %v5862 = vrcp.pop %v5815
  %v5863 = vmul.f32 1.0, %v5862
  %5888 = vrot.lane.b32.xlu0 %v5817, 96
  %v5889 = vpop.permute.xlu0 %5888
  %5890 = vrot.lane.b32.xlu0 %v5819, 96
  %v5891 = vpop.permute.xlu0 %5890
  %5892 = vrot.lane.b32.xlu0 %v5821, 96
  %v5893 = vpop.permute.xlu0 %5892
  %5894 = vrot.lane.b32.xlu0 %v5823, 96
  %v5895 = vpop.permute.xlu0 %5894
  %5896 = vrot.lane.b32.xlu0 %v5825, 96
  %v5897 = vpop.permute.xlu0 %5896
  %5898 = vrot.lane.b32.xlu0 %v5827, 96
  %v5899 = vpop.permute.xlu0 %5898
  %5900 = vrot.lane.b32.xlu0 %v5829, 96
  %v5901 = vpop.permute.xlu0 %5900
  %5902 = vrot.lane.b32.xlu0 %v5831, 96
  %v5903 = vpop.permute.xlu0 %5902
  %5904 = vrot.lane.b32.xlu0 %v5833, 96
  %v5905 = vpop.permute.xlu0 %5904
  %5906 = vrot.lane.b32.xlu0 %v5835, 96
  %v5907 = vpop.permute.xlu0 %5906
  %5908 = vrot.lane.b32.xlu0 %v5837, 96
  %v5909 = vpop.permute.xlu0 %5908
  %5910 = vrot.lane.b32.xlu0 %v5839, 96
  %v5911 = vpop.permute.xlu0 %5910
  %5912 = vrot.lane.b32.xlu0 %v5841, 96
  %v5913 = vpop.permute.xlu0 %5912
  %5914 = vrot.lane.b32.xlu0 %v5843, 96
  %v5915 = vpop.permute.xlu0 %5914
  %5916 = vrot.lane.b32.xlu0 %v5845, 96
  %v5917 = vpop.permute.xlu0 %5916
  %5918 = vrot.lane.b32.xlu0 %v5847, 96
  %v5919 = vpop.permute.xlu0 %5918
  %5920 = vrot.lane.b32.xlu0 %v5849, 96
  %v5921 = vpop.permute.xlu0 %5920
  %5922 = vrot.lane.b32.xlu0 %v5851, 96
  %v5923 = vpop.permute.xlu0 %5922
  %5924 = vrot.lane.b32.xlu0 %v5853, 96
  %v5925 = vpop.permute.xlu0 %5924
  %5926 = vrot.lane.b32.xlu0 %v5855, 96
  %v5927 = vpop.permute.xlu0 %5926
  %5928 = vrot.lane.b32.xlu0 %v5857, 96
  %v5929 = vpop.permute.xlu0 %5928
  %5930 = vrot.lane.b32.xlu0 %v5859, 96
  %v5931 = vpop.permute.xlu0 %5930
  %5932 = vrot.lane.b32.xlu0 %v5861, 96
  %v5933 = vpop.permute.xlu0 %5932
  %5934 = vrot.lane.b32.xlu0 %v5863, 96
  %v5935 = vpop.permute.xlu0 %5934
  %v5960 = vmul.f32 %v5602, %v5889
  %v5961 = vmul.f32 %v5607, %v5891
  %v5962 = vmul.f32 %v5612, %v5893
  %v5963 = vmul.f32 %v5617, %v5895
  %v5964 = vmul.f32 %v5622, %v5897
  %v5965 = vmul.f32 %v5627, %v5899
  %v5966 = vmul.f32 %v5632, %v5901
  %v5967 = vmul.f32 %v5637, %v5903
  %v5968 = vmul.f32 %v5642, %v5905
  %v5969 = vmul.f32 %v5647, %v5907
  %v5970 = vmul.f32 %v5652, %v5909
  %v5971 = vmul.f32 %v5657, %v5911
  %v5972 = vmul.f32 %v5662, %v5913
  %v5973 = vmul.f32 %v5667, %v5915
  %v5974 = vmul.f32 %v5672, %v5917
  %v5975 = vmul.f32 %v5677, %v5919
  %v5976 = vmul.f32 %v5682, %v5921
  %v5977 = vmul.f32 %v5687, %v5923
  %v5978 = vmul.f32 %v5692, %v5925
  %v5979 = vmul.f32 %v5697, %v5927
  %v5980 = vmul.f32 %v5702, %v5929
  %v5981 = vmul.f32 %v5707, %v5931
  %v5982 = vmul.f32 %v5712, %v5933
  %v5983 = vmul.f32 %v5717, %v5935
  %6008 = vrot.lane.b32.xlu0 %v5602, 64
  %v6009 = vpop.permute.xlu0 %6008
  %6010 = vrot.lane.b32.xlu0 %v5607, 64
  %v6011 = vpop.permute.xlu0 %6010
  %6012 = vrot.lane.b32.xlu0 %v5612, 64
  %v6013 = vpop.permute.xlu0 %6012
  %6014 = vrot.lane.b32.xlu0 %v5617, 64
  %v6015 = vpop.permute.xlu0 %6014
  %6016 = vrot.lane.b32.xlu0 %v5622, 64
  %v6017 = vpop.permute.xlu0 %6016
  %6018 = vrot.lane.b32.xlu0 %v5627, 64
  %v6019 = vpop.permute.xlu0 %6018
  %6020 = vrot.lane.b32.xlu0 %v5632, 64
  %v6021 = vpop.permute.xlu0 %6020
  %6022 = vrot.lane.b32.xlu0 %v5637, 64
  %v6023 = vpop.permute.xlu0 %6022
  %6024 = vrot.lane.b32.xlu0 %v5642, 64
  %v6025 = vpop.permute.xlu0 %6024
  %6026 = vrot.lane.b32.xlu0 %v5647, 64
  %v6027 = vpop.permute.xlu0 %6026
  %6028 = vrot.lane.b32.xlu0 %v5652, 64
  %v6029 = vpop.permute.xlu0 %6028
  %6030 = vrot.lane.b32.xlu0 %v5657, 64
  %v6031 = vpop.permute.xlu0 %6030
  %6032 = vrot.lane.b32.xlu0 %v5662, 64
  %v6033 = vpop.permute.xlu0 %6032
  %6034 = vrot.lane.b32.xlu0 %v5667, 64
  %v6035 = vpop.permute.xlu0 %6034
  %6036 = vrot.lane.b32.xlu0 %v5672, 64
  %v6037 = vpop.permute.xlu0 %6036
  %6038 = vrot.lane.b32.xlu0 %v5677, 64
  %v6039 = vpop.permute.xlu0 %6038
  %6040 = vrot.lane.b32.xlu0 %v5682, 64
  %v6041 = vpop.permute.xlu0 %6040
  %6042 = vrot.lane.b32.xlu0 %v5687, 64
  %v6043 = vpop.permute.xlu0 %6042
  %6044 = vrot.lane.b32.xlu0 %v5692, 64
  %v6045 = vpop.permute.xlu0 %6044
  %6046 = vrot.lane.b32.xlu0 %v5697, 64
  %v6047 = vpop.permute.xlu0 %6046
  %6048 = vrot.lane.b32.xlu0 %v5702, 64
  %v6049 = vpop.permute.xlu0 %6048
  %6050 = vrot.lane.b32.xlu0 %v5707, 64
  %v6051 = vpop.permute.xlu0 %6050
  %6052 = vrot.lane.b32.xlu0 %v5712, 64
  %v6053 = vpop.permute.xlu0 %6052
  %6054 = vrot.lane.b32.xlu0 %v5717, 64
  %v6055 = vpop.permute.xlu0 %6054
  %v6080 = vadd.f32 %v5960, %v6009
  %v6081 = vadd.f32 %v5961, %v6011
  %v6082 = vadd.f32 %v5962, %v6013
  %v6083 = vadd.f32 %v5963, %v6015
  %v6084 = vadd.f32 %v5964, %v6017
  %v6085 = vadd.f32 %v5965, %v6019
  %v6086 = vadd.f32 %v5966, %v6021
  %v6087 = vadd.f32 %v5967, %v6023
  %v6088 = vadd.f32 %v5968, %v6025
  %v6089 = vadd.f32 %v5969, %v6027
  %v6090 = vadd.f32 %v5970, %v6029
  %v6091 = vadd.f32 %v5971, %v6031
  %v6092 = vadd.f32 %v5972, %v6033
  %v6093 = vadd.f32 %v5973, %v6035
  %v6094 = vadd.f32 %v5974, %v6037
  %v6095 = vadd.f32 %v5975, %v6039
  %v6096 = vadd.f32 %v5976, %v6041
  %v6097 = vadd.f32 %v5977, %v6043
  %v6098 = vadd.f32 %v5978, %v6045
  %v6099 = vadd.f32 %v5979, %v6047
  %v6100 = vadd.f32 %v5980, %v6049
  %v6101 = vadd.f32 %v5981, %v6051
  %v6102 = vadd.f32 %v5982, %v6053
  %v6103 = vadd.f32 %v5983, %v6055
  %v6104 = vmax.f32 %v6080, 0.0
  %v6105 = vmax.f32 %v6081, 0.0
  %v6106 = vmax.f32 %v6082, 0.0
  %v6107 = vmax.f32 %v6083, 0.0
  %v6108 = vmax.f32 %v6084, 0.0
  %v6109 = vmax.f32 %v6085, 0.0
  %v6110 = vmax.f32 %v6086, 0.0
  %v6111 = vmax.f32 %v6087, 0.0
  %v6112 = vmax.f32 %v6088, 0.0
  %v6113 = vmax.f32 %v6089, 0.0
  %v6114 = vmax.f32 %v6090, 0.0
  %v6115 = vmax.f32 %v6091, 0.0
  %v6116 = vmax.f32 %v6092, 0.0
  %v6117 = vmax.f32 %v6093, 0.0
  %v6118 = vmax.f32 %v6094, 0.0
  %v6119 = vmax.f32 %v6095, 0.0
  %v6120 = vmax.f32 %v6096, 0.0
  %v6121 = vmax.f32 %v6097, 0.0
  %v6122 = vmax.f32 %v6098, 0.0
  %v6123 = vmax.f32 %v6099, 0.0
  %v6124 = vmax.f32 %v6100, 0.0
  %v6125 = vmax.f32 %v6101, 0.0
  %v6126 = vmax.f32 %v6102, 0.0
  %v6127 = vmax.f32 %v6103, 0.0
  %v6128 = vld [vmem:[%s2] sm:$0xff]
  %v6129 = vld [vmem:[%s2 + $0x8] sm:$0xff]
  %v6130 = vld [vmem:[%s2 + $0x10] sm:$0xff]
  %v6131 = vld [vmem:[%s2 + $0x18] sm:$0xff]
  %v6132 = vld [vmem:[%s2 + $0x20] sm:$0xff]
  %v6133 = vld [vmem:[%s2 + $0x28] sm:$0xff]
  %v6134 = vld [vmem:[%s2 + $0x30] sm:$0xff]
  %v6135 = vld [vmem:[%s2 + $0x38] sm:$0xff]
  %v6136 = vld [vmem:[%s2 + $0x40] sm:$0xff]
  %v6137 = vld [vmem:[%s2 + $0x48] sm:$0xff]
  %v6138 = vld [vmem:[%s2 + $0x50] sm:$0xff]
  %v6139 = vld [vmem:[%s2 + $0x58] sm:$0xff]
  %v6140 = vld [vmem:[%s2 + $0x60] sm:$0xff]
  %v6141 = vld [vmem:[%s2 + $0x68] sm:$0xff]
  %v6142 = vld [vmem:[%s2 + $0x70] sm:$0xff]
  %v6143 = vld [vmem:[%s2 + $0x78] sm:$0xff]
  %v6144 = vld [vmem:[%s2 + $0x80] sm:$0xff]
  %v6145 = vld [vmem:[%s2 + $0x88] sm:$0xff]
  %v6146 = vld [vmem:[%s2 + $0x90] sm:$0xff]
  %v6147 = vld [vmem:[%s2 + $0x98] sm:$0xff]
  %v6148 = vld [vmem:[%s2 + $0xa0] sm:$0xff]
  %v6149 = vld [vmem:[%s2 + $0xa8] sm:$0xff]
  %v6150 = vld [vmem:[%s2 + $0xb0] sm:$0xff]
  %v6151 = vld [vmem:[%s2 + $0xb8] sm:$0xff]
  %v6152 = vld [vmem:[%s2 + $0xc0] sm:$0xff]
  %v6153 = vld [vmem:[%s2 + $0xc8] sm:$0xff]
  %v6154 = vld [vmem:[%s2 + $0xd0] sm:$0xff]
  %v6155 = vld [vmem:[%s2 + $0xd8] sm:$0xff]
  %v6156 = vld [vmem:[%s2 + $0xe0] sm:$0xff]
  %v6157 = vld [vmem:[%s2 + $0xe8] sm:$0xff]
  %v6158 = vld [vmem:[%s2 + $0xf0] sm:$0xff]
  %v6159 = vld [vmem:[%s2 + $0xf8] sm:$0xff]
  %v6160 = vld [vmem:[%s2 + $0x100] sm:$0xff]
  %v6161 = vld [vmem:[%s2 + $0x108] sm:$0xff]
  %v6162 = vld [vmem:[%s2 + $0x110] sm:$0xff]
  %v6163 = vld [vmem:[%s2 + $0x118] sm:$0xff]
  %v6164 = vld [vmem:[%s2 + $0x120] sm:$0xff]
  %v6165 = vld [vmem:[%s2 + $0x128] sm:$0xff]
  %v6166 = vld [vmem:[%s2 + $0x130] sm:$0xff]
  %v6167 = vld [vmem:[%s2 + $0x138] sm:$0xff]
  %v6168 = vld [vmem:[%s2 + $0x140] sm:$0xff]
  %v6169 = vld [vmem:[%s2 + $0x148] sm:$0xff]
  %v6170 = vld [vmem:[%s2 + $0x150] sm:$0xff]
  %v6171 = vld [vmem:[%s2 + $0x158] sm:$0xff]
  %v6172 = vld [vmem:[%s2 + $0x160] sm:$0xff]
  %v6173 = vld [vmem:[%s2 + $0x168] sm:$0xff]
  %v6174 = vld [vmem:[%s2 + $0x170] sm:$0xff]
  %v6175 = vld [vmem:[%s2 + $0x178] sm:$0xff]
  %v6177 = vsel %vm1669, %v6129, 0
  %v6180 = vsel %vm1669, %v6131, 0
  %v6183 = vsel %vm1669, %v6133, 0
  %v6186 = vsel %vm1669, %v6135, 0
  %v6189 = vsel %vm1669, %v6137, 0
  %v6192 = vsel %vm1669, %v6139, 0
  %v6195 = vsel %vm1669, %v6141, 0
  %v6198 = vsel %vm1669, %v6143, 0
  %v6201 = vsel %vm1669, %v6145, 0
  %v6204 = vsel %vm1669, %v6147, 0
  %v6207 = vsel %vm1669, %v6149, 0
  %v6210 = vsel %vm1669, %v6151, 0
  %v6213 = vsel %vm1669, %v6153, 0
  %v6216 = vsel %vm1669, %v6155, 0
  %v6219 = vsel %vm1669, %v6157, 0
  %v6222 = vsel %vm1669, %v6159, 0
  %v6225 = vsel %vm1669, %v6161, 0
  %v6228 = vsel %vm1669, %v6163, 0
  %v6231 = vsel %vm1669, %v6165, 0
  %v6234 = vsel %vm1669, %v6167, 0
  %v6237 = vsel %vm1669, %v6169, 0
  %v6240 = vsel %vm1669, %v6171, 0
  %v6243 = vsel %vm1669, %v6173, 0
  %v6246 = vsel %vm1669, %v6175, 0
  %6248 = vmatprep.subr.mxu0 0.0
  %6249 = vmatpush1.msra.mxu0 %v6104
  %6250 = vmatprep.subr.mxu0 0.0
  %6251 = vmatpush1.msra.mxu0 %v6105
  %6252 = vmatprep.subr.mxu0 0.0
  %6253 = vmatpush1.msra.mxu0 %v6106
  %6254 = vmatprep.subr.mxu0 0.0
  %6255 = vmatpush1.msra.mxu0 %v6107
  %6256 = vmatprep.subr.mxu0 0.0
  %6257 = vmatpush1.msra.mxu0 %v6108
  %6258 = vmatprep.subr.mxu0 0.0
  %6259 = vmatpush1.msra.mxu0 %v6109
  %6260 = vmatprep.subr.mxu0 0.0
  %6261 = vmatpush1.msra.mxu0 %v6110
  %6262 = vmatprep.subr.mxu0 0.0
  %6263 = vmatpush1.msra.mxu0 %v6111
  %6264 = vmatprep.subr.mxu0 0.0
  %6265 = vmatpush1.msra.mxu0 %v6112
  %6266 = vmatprep.subr.mxu0 0.0
  %6267 = vmatpush1.msra.mxu0 %v6113
  %6268 = vmatprep.subr.mxu0 0.0
  %6269 = vmatpush1.msra.mxu0 %v6114
  %6270 = vmatprep.subr.mxu0 0.0
  %6271 = vmatpush1.msra.mxu0 %v6115
  %6272 = vmatprep.subr.mxu0 0.0
  %6273 = vmatpush1.msra.mxu0 %v6116
  %6274 = vmatprep.subr.mxu0 0.0
  %6275 = vmatpush1.msra.mxu0 %v6117
  %6276 = vmatprep.subr.mxu0 0.0
  %6277 = vmatpush1.msra.mxu0 %v6118
  %6278 = vmatprep.subr.mxu0 0.0
  %6279 = vmatpush1.msra.mxu0 %v6119
  %6280 = vmatprep.subr.mxu0 0.0
  %6281 = vmatpush1.msra.mxu0 %v6120
  %6282 = vmatprep.subr.mxu0 0.0
  %6283 = vmatpush1.msra.mxu0 %v6121
  %6284 = vmatprep.subr.mxu0 0.0
  %6285 = vmatpush1.msra.mxu0 %v6122
  %6286 = vmatprep.subr.mxu0 0.0
  %6287 = vmatpush1.msra.mxu0 %v6123
  %6288 = vmatprep.subr.mxu0 0.0
  %6289 = vmatpush1.msra.mxu0 %v6124
  %6290 = vmatprep.subr.mxu0 0.0
  %6291 = vmatpush1.msra.mxu0 %v6125
  %6292 = vmatprep.subr.mxu0 0.0
  %6293 = vmatpush1.msra.mxu0 %v6126
  %6294 = vmatprep.subr.mxu0 0.0
  %6295 = vmatpush1.msra.mxu0 %v6127
  %6296 = vmatprep.subr.mxu0 0.0
  %6297 = vmatpush1.msra.mxu0 0.0
  %6298 = vmatprep.subr.mxu0 0.0
  %6299 = vmatpush1.msra.mxu0 0.0
  %6300 = vmatprep.subr.mxu0 0.0
  %6301 = vmatpush1.msra.mxu0 0.0
  %6302 = vmatprep.subr.mxu0 0.0
  %6303 = vmatpush1.msra.mxu0 0.0
  %6304 = vmatprep.subr.mxu0 0.0
  %6305 = vmatpush1.msra.mxu0 0.0
  %6306 = vmatprep.subr.mxu0 0.0
  %6307 = vmatpush1.msra.mxu0 0.0
  %6308 = vmatprep.subr.mxu0 0.0
  %6309 = vmatpush1.msra.mxu0 0.0
  %6310 = vmatprep.subr.mxu0 0.0
  %6311 = vmatpush1.msra.mxu0 0.0
  %6312 = vmatprep.mubr.f32.mxu0 %v6177
  %6313 = vmatmul.mubr.f32.gmra.mrb[0].mxu0 %v6128
  %v6314 = vpop.f32.mrb[0].mxu0
  %v6315 = vadd.f32 0.0, %v6314
  %v6316 = vpop.f32.mrb[0].mxu0
  %6317 = vmatprep.mubr.f32.mxu0 %v6180
  %6318 = vmatmul.mubr.f32.gmra.mrb[0].mxu0 %v6130
  %v6319 = vpop.f32.mrb[0].mxu0
  %v6320 = vadd.f32 0.0, %v6319
  %v6321 = vpop.f32.mrb[0].mxu0
  %6322 = vmatprep.mubr.f32.mxu0 %v6183
  %6323 = vmatmul.mubr.f32.gmra.mrb[0].mxu0 %v6132
  %v6324 = vpop.f32.mrb[0].mxu0
  %v6325 = vadd.f32 0.0, %v6324
  %v6326 = vpop.f32.mrb[0].mxu0
  %6327 = vmatprep.mubr.f32.mxu0 %v6186
  %6328 = vmatmul.mubr.f32.gmra.mrb[0].mxu0 %v6134
  %v6329 = vpop.f32.mrb[0].mxu0
  %v6330 = vadd.f32 0.0, %v6329
  %v6331 = vpop.f32.mrb[0].mxu0
  %6332 = vmatprep.mubr.f32.mxu0 %v6189
  %6333 = vmatmul.mubr.f32.gmra.mrb[0].mxu0 %v6136
  %v6334 = vpop.f32.mrb[0].mxu0
  %v6335 = vadd.f32 0.0, %v6334
  %v6336 = vpop.f32.mrb[0].mxu0
  %6337 = vmatprep.mubr.f32.mxu0 %v6192
  %6338 = vmatmul.mubr.f32.gmra.mrb[0].mxu0 %v6138
  %v6339 = vpop.f32.mrb[0].mxu0
  %v6340 = vadd.f32 0.0, %v6339
  %v6341 = vpop.f32.mrb[0].mxu0
  %6342 = vmatprep.mubr.f32.mxu0 %v6195
  %6343 = vmatmul.mubr.f32.gmra.mrb[0].mxu0 %v6140
  %v6344 = vpop.f32.mrb[0].mxu0
  %v6345 = vadd.f32 0.0, %v6344
  %v6346 = vpop.f32.mrb[0].mxu0
  %6347 = vmatprep.mubr.f32.mxu0 %v6198
  %6348 = vmatmul.mubr.f32.gmra.mrb[0].mxu0 %v6142
  %v6349 = vpop.f32.mrb[0].mxu0
  %v6350 = vadd.f32 0.0, %v6349
  %v6351 = vpop.f32.mrb[0].mxu0
  %6352 = vmatprep.mubr.f32.mxu0 %v6201
  %6353 = vmatmul.mubr.f32.gmra.mrb[0].mxu0 %v6144
  %v6354 = vpop.f32.mrb[0].mxu0
  %v6355 = vadd.f32 0.0, %v6354
  %v6356 = vpop.f32.mrb[0].mxu0
  %6357 = vmatprep.mubr.f32.mxu0 %v6204
  %6358 = vmatmul.mubr.f32.gmra.mrb[0].mxu0 %v6146
  %v6359 = vpop.f32.mrb[0].mxu0
  %v6360 = vadd.f32 0.0, %v6359
  %v6361 = vpop.f32.mrb[0].mxu0
  %6362 = vmatprep.mubr.f32.mxu0 %v6207
  %6363 = vmatmul.mubr.f32.gmra.mrb[0].mxu0 %v6148
  %v6364 = vpop.f32.mrb[0].mxu0
  %v6365 = vadd.f32 0.0, %v6364
  %v6366 = vpop.f32.mrb[0].mxu0
  %6367 = vmatprep.mubr.f32.mxu0 %v6210
  %6368 = vmatmul.mubr.f32.gmra.mrb[0].mxu0 %v6150
  %v6369 = vpop.f32.mrb[0].mxu0
  %v6370 = vadd.f32 0.0, %v6369
  %v6371 = vpop.f32.mrb[0].mxu0
  %6372 = vmatprep.mubr.f32.mxu0 %v6213
  %6373 = vmatmul.mubr.f32.gmra.mrb[0].mxu0 %v6152
  %v6374 = vpop.f32.mrb[0].mxu0
  %v6375 = vadd.f32 0.0, %v6374
  %v6376 = vpop.f32.mrb[0].mxu0
  %6377 = vmatprep.mubr.f32.mxu0 %v6216
  %6378 = vmatmul.mubr.f32.gmra.mrb[0].mxu0 %v6154
  %v6379 = vpop.f32.mrb[0].mxu0
  %v6380 = vadd.f32 0.0, %v6379
  %v6381 = vpop.f32.mrb[0].mxu0
  %6382 = vmatprep.mubr.f32.mxu0 %v6219
  %6383 = vmatmul.mubr.f32.gmra.mrb[0].mxu0 %v6156
  %v6384 = vpop.f32.mrb[0].mxu0
  %v6385 = vadd.f32 0.0, %v6384
  %v6386 = vpop.f32.mrb[0].mxu0
  %6387 = vmatprep.mubr.f32.mxu0 %v6222
  %6388 = vmatmul.mubr.f32.gmra.mrb[0].mxu0 %v6158
  %v6389 = vpop.f32.mrb[0].mxu0
  %v6390 = vadd.f32 0.0, %v6389
  %v6391 = vpop.f32.mrb[0].mxu0
  %6392 = vmatprep.mubr.f32.mxu0 %v6225
  %6393 = vmatmul.mubr.f32.gmra.mrb[0].mxu0 %v6160
  %v6394 = vpop.f32.mrb[0].mxu0
  %v6395 = vadd.f32 0.0, %v6394
  %v6396 = vpop.f32.mrb[0].mxu0
  %6397 = vmatprep.mubr.f32.mxu0 %v6228
  %6398 = vmatmul.mubr.f32.gmra.mrb[0].mxu0 %v6162
  %v6399 = vpop.f32.mrb[0].mxu0
  %v6400 = vadd.f32 0.0, %v6399
  %v6401 = vpop.f32.mrb[0].mxu0
  %6402 = vmatprep.mubr.f32.mxu0 %v6231
  %6403 = vmatmul.mubr.f32.gmra.mrb[0].mxu0 %v6164
  %v6404 = vpop.f32.mrb[0].mxu0
  %v6405 = vadd.f32 0.0, %v6404
  %v6406 = vpop.f32.mrb[0].mxu0
  %6407 = vmatprep.mubr.f32.mxu0 %v6234
  %6408 = vmatmul.mubr.f32.gmra.mrb[0].mxu0 %v6166
  %v6409 = vpop.f32.mrb[0].mxu0
  %v6410 = vadd.f32 0.0, %v6409
  %v6411 = vpop.f32.mrb[0].mxu0
  %6412 = vmatprep.mubr.f32.mxu0 %v6237
  %6413 = vmatmul.mubr.f32.gmra.mrb[0].mxu0 %v6168
  %v6414 = vpop.f32.mrb[0].mxu0
  %v6415 = vadd.f32 0.0, %v6414
  %v6416 = vpop.f32.mrb[0].mxu0
  %6417 = vmatprep.mubr.f32.mxu0 %v6240
  %6418 = vmatmul.mubr.f32.gmra.mrb[0].mxu0 %v6170
  %v6419 = vpop.f32.mrb[0].mxu0
  %v6420 = vadd.f32 0.0, %v6419
  %v6421 = vpop.f32.mrb[0].mxu0
  %6422 = vmatprep.mubr.f32.mxu0 %v6243
  %6423 = vmatmul.mubr.f32.gmra.mrb[0].mxu0 %v6172
  %v6424 = vpop.f32.mrb[0].mxu0
  %v6425 = vadd.f32 0.0, %v6424
  %v6426 = vpop.f32.mrb[0].mxu0
  %6427 = vmatprep.mubr.f32.mxu0 %v6246
  %6428 = vmatmul.mubr.f32.gmra.mrb[0].mxu0 %v6174
  %v6429 = vpop.f32.mrb[0].mxu0
  %v6430 = vadd.f32 0.0, %v6429
  %v6431 = vpop.f32.mrb[0].mxu0
  %6432 = vdwg.mxu0
  %6433 = vmatprep.subr.mxu0 0.0
  %6434 = vmatpush1.msra.mxu0 %v6315
  %6435 = vmatprep.subr.mxu0 0.0
  %6436 = vmatpush1.msra.mxu0 %v6320
  %6437 = vmatprep.subr.mxu0 0.0
  %6438 = vmatpush1.msra.mxu0 %v6325
  %6439 = vmatprep.subr.mxu0 0.0
  %6440 = vmatpush1.msra.mxu0 %v6330
  %6441 = vmatprep.subr.mxu0 0.0
  %6442 = vmatpush1.msra.mxu0 %v6335
  %6443 = vmatprep.subr.mxu0 0.0
  %6444 = vmatpush1.msra.mxu0 %v6340
  %6445 = vmatprep.subr.mxu0 0.0
  %6446 = vmatpush1.msra.mxu0 %v6345
  %6447 = vmatprep.subr.mxu0 0.0
  %6448 = vmatpush1.msra.mxu0 %v6350
  %6449 = vmatprep.subr.mxu0 0.0
  %6450 = vmatpush1.msra.mxu0 %v6355
  %6451 = vmatprep.subr.mxu0 0.0
  %6452 = vmatpush1.msra.mxu0 %v6360
  %6453 = vmatprep.subr.mxu0 0.0
  %6454 = vmatpush1.msra.mxu0 %v6365
  %6455 = vmatprep.subr.mxu0 0.0
  %6456 = vmatpush1.msra.mxu0 %v6370
  %6457 = vmatprep.subr.mxu0 0.0
  %6458 = vmatpush1.msra.mxu0 %v6375
  %6459 = vmatprep.subr.mxu0 0.0
  %6460 = vmatpush1.msra.mxu0 %v6380
  %6461 = vmatprep.subr.mxu0 0.0
  %6462 = vmatpush1.msra.mxu0 %v6385
  %6463 = vmatprep.subr.mxu0 0.0
  %6464 = vmatpush1.msra.mxu0 %v6390
  %6465 = vmatprep.subr.mxu0 0.0
  %6466 = vmatpush1.msra.mxu0 %v6395
  %6467 = vmatprep.subr.mxu0 0.0
  %6468 = vmatpush1.msra.mxu0 %v6400
  %6469 = vmatprep.subr.mxu0 0.0
  %6470 = vmatpush1.msra.mxu0 %v6405
  %6471 = vmatprep.subr.mxu0 0.0
  %6472 = vmatpush1.msra.mxu0 %v6410
  %6473 = vmatprep.subr.mxu0 0.0
  %6474 = vmatpush1.msra.mxu0 %v6415
  %6475 = vmatprep.subr.mxu0 0.0
  %6476 = vmatpush1.msra.mxu0 %v6420
  %6477 = vmatprep.subr.mxu0 0.0
  %6478 = vmatpush1.msra.mxu0 %v6425
  %6479 = vmatprep.subr.mxu0 0.0
  %6480 = vmatpush1.msra.mxu0 %v6430
  %6481 = vmatprep.subr.mxu0 0.0
  %6482 = vmatpush1.msra.mxu0 0.0
  %6483 = vmatprep.subr.mxu0 0.0
  %6484 = vmatpush1.msra.mxu0 0.0
  %6485 = vmatprep.subr.mxu0 0.0
  %6486 = vmatpush1.msra.mxu0 0.0
  %6487 = vmatprep.subr.mxu0 0.0
  %6488 = vmatpush1.msra.mxu0 0.0
  %6489 = vmatprep.subr.mxu0 0.0
  %6490 = vmatpush1.msra.mxu0 0.0
  %6491 = vmatprep.subr.mxu0 0.0
  %6492 = vmatpush1.msra.mxu0 0.0
  %6493 = vmatprep.subr.mxu0 0.0
  %6494 = vmatpush1.msra.mxu0 0.0
  %6495 = vmatprep.subr.mxu0 0.0
  %6496 = vmatpush1.msra.mxu0 0.0
  %6497 = vmatprep.mubr.f32.mxu0 %v6177
  %6498 = vmatmul.mubr.f32.gmra.mrb[0].mxu0 %v6128
  %v6499 = vpop.f32.mrb[0].mxu0
  %v6500 = vadd.f32 0.0, %v6499
  %v6501 = vpop.f32.mrb[0].mxu0
  %6502 = vmatprep.mubr.f32.mxu0 %v6180
  %6503 = vmatmul.mubr.f32.gmra.mrb[0].mxu0 %v6130
  %v6504 = vpop.f32.mrb[0].mxu0
  %v6505 = vadd.f32 0.0, %v6504
  %v6506 = vpop.f32.mrb[0].mxu0
  %6507 = vmatprep.mubr.f32.mxu0 %v6183
  %6508 = vmatmul.mubr.f32.gmra.mrb[0].mxu0 %v6132
  %v6509 = vpop.f32.mrb[0].mxu0
  %v6510 = vadd.f32 0.0, %v6509
  %v6511 = vpop.f32.mrb[0].mxu0
  %6512 = vmatprep.mubr.f32.mxu0 %v6186
  %6513 = vmatmul.mubr.f32.gmra.mrb[0].mxu0 %v6134
  %v6514 = vpop.f32.mrb[0].mxu0
  %v6515 = vadd.f32 0.0, %v6514
  %v6516 = vpop.f32.mrb[0].mxu0
  %6517 = vmatprep.mubr.f32.mxu0 %v6189
  %6518 = vmatmul.mubr.f32.gmra.mrb[0].mxu0 %v6136
  %v6519 = vpop.f32.mrb[0].mxu0
  %v6520 = vadd.f32 0.0, %v6519
  %v6521 = vpop.f32.mrb[0].mxu0
  %6522 = vmatprep.mubr.f32.mxu0 %v6192
  %6523 = vmatmul.mubr.f32.gmra.mrb[0].mxu0 %v6138
  %v6524 = vpop.f32.mrb[0].mxu0
  %v6525 = vadd.f32 0.0, %v6524
  %v6526 = vpop.f32.mrb[0].mxu0
  %6527 = vmatprep.mubr.f32.mxu0 %v6195
  %6528 = vmatmul.mubr.f32.gmra.mrb[0].mxu0 %v6140
  %v6529 = vpop.f32.mrb[0].mxu0
  %v6530 = vadd.f32 0.0, %v6529
  %v6531 = vpop.f32.mrb[0].mxu0
  %6532 = vmatprep.mubr.f32.mxu0 %v6198
  %6533 = vmatmul.mubr.f32.gmra.mrb[0].mxu0 %v6142
  %v6534 = vpop.f32.mrb[0].mxu0
  %v6535 = vadd.f32 0.0, %v6534
  %v6536 = vpop.f32.mrb[0].mxu0
  %6537 = vmatprep.mubr.f32.mxu0 %v6201
  %6538 = vmatmul.mubr.f32.gmra.mrb[0].mxu0 %v6144
  %v6539 = vpop.f32.mrb[0].mxu0
  %v6540 = vadd.f32 0.0, %v6539
  %v6541 = vpop.f32.mrb[0].mxu0
  %6542 = vmatprep.mubr.f32.mxu0 %v6204
  %6543 = vmatmul.mubr.f32.gmra.mrb[0].mxu0 %v6146
  %v6544 = vpop.f32.mrb[0].mxu0
  %v6545 = vadd.f32 0.0, %v6544
  %v6546 = vpop.f32.mrb[0].mxu0
  %6547 = vmatprep.mubr.f32.mxu0 %v6207
  %6548 = vmatmul.mubr.f32.gmra.mrb[0].mxu0 %v6148
  %v6549 = vpop.f32.mrb[0].mxu0
  %v6550 = vadd.f32 0.0, %v6549
  %v6551 = vpop.f32.mrb[0].mxu0
  %6552 = vmatprep.mubr.f32.mxu0 %v6210
  %6553 = vmatmul.mubr.f32.gmra.mrb[0].mxu0 %v6150
  %v6554 = vpop.f32.mrb[0].mxu0
  %v6555 = vadd.f32 0.0, %v6554
  %v6556 = vpop.f32.mrb[0].mxu0
  %6557 = vmatprep.mubr.f32.mxu0 %v6213
  %6558 = vmatmul.mubr.f32.gmra.mrb[0].mxu0 %v6152
  %v6559 = vpop.f32.mrb[0].mxu0
  %v6560 = vadd.f32 0.0, %v6559
  %v6561 = vpop.f32.mrb[0].mxu0
  %6562 = vmatprep.mubr.f32.mxu0 %v6216
  %6563 = vmatmul.mubr.f32.gmra.mrb[0].mxu0 %v6154
  %v6564 = vpop.f32.mrb[0].mxu0
  %v6565 = vadd.f32 0.0, %v6564
  %v6566 = vpop.f32.mrb[0].mxu0
  %6567 = vmatprep.mubr.f32.mxu0 %v6219
  %6568 = vmatmul.mubr.f32.gmra.mrb[0].mxu0 %v6156
  %v6569 = vpop.f32.mrb[0].mxu0
  %v6570 = vadd.f32 0.0, %v6569
  %v6571 = vpop.f32.mrb[0].mxu0
  %6572 = vmatprep.mubr.f32.mxu0 %v6222
  %6573 = vmatmul.mubr.f32.gmra.mrb[0].mxu0 %v6158
  %v6574 = vpop.f32.mrb[0].mxu0
  %v6575 = vadd.f32 0.0, %v6574
  %v6576 = vpop.f32.mrb[0].mxu0
  %6577 = vmatprep.mubr.f32.mxu0 %v6225
  %6578 = vmatmul.mubr.f32.gmra.mrb[0].mxu0 %v6160
  %v6579 = vpop.f32.mrb[0].mxu0
  %v6580 = vadd.f32 0.0, %v6579
  %v6581 = vpop.f32.mrb[0].mxu0
  %6582 = vmatprep.mubr.f32.mxu0 %v6228
  %6583 = vmatmul.mubr.f32.gmra.mrb[0].mxu0 %v6162
  %v6584 = vpop.f32.mrb[0].mxu0
  %v6585 = vadd.f32 0.0, %v6584
  %v6586 = vpop.f32.mrb[0].mxu0
  %6587 = vmatprep.mubr.f32.mxu0 %v6231
  %6588 = vmatmul.mubr.f32.gmra.mrb[0].mxu0 %v6164
  %v6589 = vpop.f32.mrb[0].mxu0
  %v6590 = vadd.f32 0.0, %v6589
  %v6591 = vpop.f32.mrb[0].mxu0
  %6592 = vmatprep.mubr.f32.mxu0 %v6234
  %6593 = vmatmul.mubr.f32.gmra.mrb[0].mxu0 %v6166
  %v6594 = vpop.f32.mrb[0].mxu0
  %v6595 = vadd.f32 0.0, %v6594
  %v6596 = vpop.f32.mrb[0].mxu0
  %6597 = vmatprep.mubr.f32.mxu0 %v6237
  %6598 = vmatmul.mubr.f32.gmra.mrb[0].mxu0 %v6168
  %v6599 = vpop.f32.mrb[0].mxu0
  %v6600 = vadd.f32 0.0, %v6599
  %v6601 = vpop.f32.mrb[0].mxu0
  %6602 = vmatprep.mubr.f32.mxu0 %v6240
  %6603 = vmatmul.mubr.f32.gmra.mrb[0].mxu0 %v6170
  %v6604 = vpop.f32.mrb[0].mxu0
  %v6605 = vadd.f32 0.0, %v6604
  %v6606 = vpop.f32.mrb[0].mxu0
  %6607 = vmatprep.mubr.f32.mxu0 %v6243
  %6608 = vmatmul.mubr.f32.gmra.mrb[0].mxu0 %v6172
  %v6609 = vpop.f32.mrb[0].mxu0
  %v6610 = vadd.f32 0.0, %v6609
  %v6611 = vpop.f32.mrb[0].mxu0
  %6612 = vmatprep.mubr.f32.mxu0 %v6246
  %6613 = vmatmul.mubr.f32.gmra.mrb[0].mxu0 %v6174
  %v6614 = vpop.f32.mrb[0].mxu0
  %v6615 = vadd.f32 0.0, %v6614
  %v6616 = vpop.f32.mrb[0].mxu0
  %6617 = vdwg.mxu0
  %v6618 = vmul.f32 %v6500, 2.0
  %v6619 = vmul.f32 %v6505, 2.0
  %v6620 = vmul.f32 %v6510, 2.0
  %v6621 = vmul.f32 %v6515, 2.0
  %v6622 = vmul.f32 %v6520, 2.0
  %v6623 = vmul.f32 %v6525, 2.0
  %v6624 = vmul.f32 %v6530, 2.0
  %v6625 = vmul.f32 %v6535, 2.0
  %v6626 = vmul.f32 %v6540, 2.0
  %v6627 = vmul.f32 %v6545, 2.0
  %v6628 = vmul.f32 %v6550, 2.0
  %v6629 = vmul.f32 %v6555, 2.0
  %v6630 = vmul.f32 %v6560, 2.0
  %v6631 = vmul.f32 %v6565, 2.0
  %v6632 = vmul.f32 %v6570, 2.0
  %v6633 = vmul.f32 %v6575, 2.0
  %v6634 = vmul.f32 %v6580, 2.0
  %v6635 = vmul.f32 %v6585, 2.0
  %v6636 = vmul.f32 %v6590, 2.0
  %v6637 = vmul.f32 %v6595, 2.0
  %v6638 = vmul.f32 %v6600, 2.0
  %v6639 = vmul.f32 %v6605, 2.0
  %v6640 = vmul.f32 %v6610, 2.0
  %v6641 = vmul.f32 %v6615, 2.0
  %v6642 = vsub.f32 %v6618, %v6104
  %v6643 = vsub.f32 %v6619, %v6105
  %v6644 = vsub.f32 %v6620, %v6106
  %v6645 = vsub.f32 %v6621, %v6107
  %v6646 = vsub.f32 %v6622, %v6108
  %v6647 = vsub.f32 %v6623, %v6109
  %v6648 = vsub.f32 %v6624, %v6110
  %v6649 = vsub.f32 %v6625, %v6111
  %v6650 = vsub.f32 %v6626, %v6112
  %v6651 = vsub.f32 %v6627, %v6113
  %v6652 = vsub.f32 %v6628, %v6114
  %v6653 = vsub.f32 %v6629, %v6115
  %v6654 = vsub.f32 %v6630, %v6116
  %v6655 = vsub.f32 %v6631, %v6117
  %v6656 = vsub.f32 %v6632, %v6118
  %v6657 = vsub.f32 %v6633, %v6119
  %v6658 = vsub.f32 %v6634, %v6120
  %v6659 = vsub.f32 %v6635, %v6121
  %v6660 = vsub.f32 %v6636, %v6122
  %v6661 = vsub.f32 %v6637, %v6123
  %v6662 = vsub.f32 %v6638, %v6124
  %v6663 = vsub.f32 %v6639, %v6125
  %v6664 = vsub.f32 %v6640, %v6126
  %v6665 = vsub.f32 %v6641, %v6127
  %6690 = vrot.lane.b32.xlu0 %v6315, 32
  %v6691 = vpop.permute.xlu0 %6690
  %6692 = vrot.lane.b32.xlu0 %v6320, 32
  %v6693 = vpop.permute.xlu0 %6692
  %6694 = vrot.lane.b32.xlu0 %v6325, 32
  %v6695 = vpop.permute.xlu0 %6694
  %6696 = vrot.lane.b32.xlu0 %v6330, 32
  %v6697 = vpop.permute.xlu0 %6696
  %6698 = vrot.lane.b32.xlu0 %v6335, 32
  %v6699 = vpop.permute.xlu0 %6698
  %6700 = vrot.lane.b32.xlu0 %v6340, 32
  %v6701 = vpop.permute.xlu0 %6700
  %6702 = vrot.lane.b32.xlu0 %v6345, 32
  %v6703 = vpop.permute.xlu0 %6702
  %6704 = vrot.lane.b32.xlu0 %v6350, 32
  %v6705 = vpop.permute.xlu0 %6704
  %6706 = vrot.lane.b32.xlu0 %v6355, 32
  %v6707 = vpop.permute.xlu0 %6706
  %6708 = vrot.lane.b32.xlu0 %v6360, 32
  %v6709 = vpop.permute.xlu0 %6708
  %6710 = vrot.lane.b32.xlu0 %v6365, 32
  %v6711 = vpop.permute.xlu0 %6710
  %6712 = vrot.lane.b32.xlu0 %v6370, 32
  %v6713 = vpop.permute.xlu0 %6712
  %6714 = vrot.lane.b32.xlu0 %v6375, 32
  %v6715 = vpop.permute.xlu0 %6714
  %6716 = vrot.lane.b32.xlu0 %v6380, 32
  %v6717 = vpop.permute.xlu0 %6716
  %6718 = vrot.lane.b32.xlu0 %v6385, 32
  %v6719 = vpop.permute.xlu0 %6718
  %6720 = vrot.lane.b32.xlu0 %v6390, 32
  %v6721 = vpop.permute.xlu0 %6720
  %6722 = vrot.lane.b32.xlu0 %v6395, 32
  %v6723 = vpop.permute.xlu0 %6722
  %6724 = vrot.lane.b32.xlu0 %v6400, 32
  %v6725 = vpop.permute.xlu0 %6724
  %6726 = vrot.lane.b32.xlu0 %v6405, 32
  %v6727 = vpop.permute.xlu0 %6726
  %6728 = vrot.lane.b32.xlu0 %v6410, 32
  %v6729 = vpop.permute.xlu0 %6728
  %6730 = vrot.lane.b32.xlu0 %v6415, 32
  %v6731 = vpop.permute.xlu0 %6730
  %6732 = vrot.lane.b32.xlu0 %v6420, 32
  %v6733 = vpop.permute.xlu0 %6732
  %6734 = vrot.lane.b32.xlu0 %v6425, 32
  %v6735 = vpop.permute.xlu0 %6734
  %6736 = vrot.lane.b32.xlu0 %v6430, 32
  %v6737 = vpop.permute.xlu0 %6736
  %6786 = vrot.lane.b32.xlu0 %v6642, 64
  %v6787 = vpop.permute.xlu0 %6786
  %6788 = vrot.lane.b32.xlu0 %v6643, 64
  %v6789 = vpop.permute.xlu0 %6788
  %6790 = vrot.lane.b32.xlu0 %v6644, 64
  %v6791 = vpop.permute.xlu0 %6790
  %6792 = vrot.lane.b32.xlu0 %v6645, 64
  %v6793 = vpop.permute.xlu0 %6792
  %6794 = vrot.lane.b32.xlu0 %v6646, 64
  %v6795 = vpop.permute.xlu0 %6794
  %6796 = vrot.lane.b32.xlu0 %v6647, 64
  %v6797 = vpop.permute.xlu0 %6796
  %6798 = vrot.lane.b32.xlu0 %v6648, 64
  %v6799 = vpop.permute.xlu0 %6798
  %6800 = vrot.lane.b32.xlu0 %v6649, 64
  %v6801 = vpop.permute.xlu0 %6800
  %6802 = vrot.lane.b32.xlu0 %v6650, 64
  %v6803 = vpop.permute.xlu0 %6802
  %6804 = vrot.lane.b32.xlu0 %v6651, 64
  %v6805 = vpop.permute.xlu0 %6804
  %6806 = vrot.lane.b32.xlu0 %v6652, 64
  %v6807 = vpop.permute.xlu0 %6806
  %6808 = vrot.lane.b32.xlu0 %v6653, 64
  %v6809 = vpop.permute.xlu0 %6808
  %6810 = vrot.lane.b32.xlu0 %v6654, 64
  %v6811 = vpop.permute.xlu0 %6810
  %6812 = vrot.lane.b32.xlu0 %v6655, 64
  %v6813 = vpop.permute.xlu0 %6812
  %6814 = vrot.lane.b32.xlu0 %v6656, 64
  %v6815 = vpop.permute.xlu0 %6814
  %6816 = vrot.lane.b32.xlu0 %v6657, 64
  %v6817 = vpop.permute.xlu0 %6816
  %6818 = vrot.lane.b32.xlu0 %v6658, 64
  %v6819 = vpop.permute.xlu0 %6818
  %6820 = vrot.lane.b32.xlu0 %v6659, 64
  %v6821 = vpop.permute.xlu0 %6820
  %6822 = vrot.lane.b32.xlu0 %v6660, 64
  %v6823 = vpop.permute.xlu0 %6822
  %6824 = vrot.lane.b32.xlu0 %v6661, 64
  %v6825 = vpop.permute.xlu0 %6824
  %6826 = vrot.lane.b32.xlu0 %v6662, 64
  %v6827 = vpop.permute.xlu0 %6826
  %6828 = vrot.lane.b32.xlu0 %v6663, 64
  %v6829 = vpop.permute.xlu0 %6828
  %6830 = vrot.lane.b32.xlu0 %v6664, 64
  %v6831 = vpop.permute.xlu0 %6830
  %6832 = vrot.lane.b32.xlu0 %v6665, 64
  %v6833 = vpop.permute.xlu0 %6832
  %v6858 = vsel %vm3250, %v6104, %v6691
  %v6859 = vsel %vm3250, %v6105, %v6693
  %v6860 = vsel %vm3250, %v6106, %v6695
  %v6861 = vsel %vm3250, %v6107, %v6697
  %v6862 = vsel %vm3250, %v6108, %v6699
  %v6863 = vsel %vm3250, %v6109, %v6701
  %v6864 = vsel %vm3250, %v6110, %v6703
  %v6865 = vsel %vm3250, %v6111, %v6705
  %v6866 = vsel %vm3250, %v6112, %v6707
  %v6867 = vsel %vm3250, %v6113, %v6709
  %v6868 = vsel %vm3250, %v6114, %v6711
  %v6869 = vsel %vm3250, %v6115, %v6713
  %v6870 = vsel %vm3250, %v6116, %v6715
  %v6871 = vsel %vm3250, %v6117, %v6717
  %v6872 = vsel %vm3250, %v6118, %v6719
  %v6873 = vsel %vm3250, %v6119, %v6721
  %v6874 = vsel %vm3250, %v6120, %v6723
  %v6875 = vsel %vm3250, %v6121, %v6725
  %v6876 = vsel %vm3250, %v6122, %v6727
  %v6877 = vsel %vm3250, %v6123, %v6729
  %v6878 = vsel %vm3250, %v6124, %v6731
  %v6879 = vsel %vm3250, %v6125, %v6733
  %v6880 = vsel %vm3250, %v6126, %v6735
  %v6881 = vsel %vm3250, %v6127, %v6737
  %v6882 = vsel %vm1669, %v6858, %v6787
  %v6883 = vsel %vm1669, %v6859, %v6789
  %v6884 = vsel %vm1669, %v6860, %v6791
  %v6885 = vsel %vm1669, %v6861, %v6793
  %v6886 = vsel %vm1669, %v6862, %v6795
  %v6887 = vsel %vm1669, %v6863, %v6797
  %v6888 = vsel %vm1669, %v6864, %v6799
  %v6889 = vsel %vm1669, %v6865, %v6801
  %v6890 = vsel %vm1669, %v6866, %v6803
  %v6891 = vsel %vm1669, %v6867, %v6805
  %v6892 = vsel %vm1669, %v6868, %v6807
  %v6893 = vsel %vm1669, %v6869, %v6809
  %v6894 = vsel %vm1669, %v6870, %v6811
  %v6895 = vsel %vm1669, %v6871, %v6813
  %v6896 = vsel %vm1669, %v6872, %v6815
  %v6897 = vsel %vm1669, %v6873, %v6817
  %v6898 = vsel %vm1669, %v6874, %v6819
  %v6899 = vsel %vm1669, %v6875, %v6821
  %v6900 = vsel %vm1669, %v6876, %v6823
  %v6901 = vsel %vm1669, %v6877, %v6825
  %v6902 = vsel %vm1669, %v6878, %v6827
  %v6903 = vsel %vm1669, %v6879, %v6829
  %v6904 = vsel %vm1669, %v6880, %v6831
  %v6905 = vsel %vm1669, %v6881, %v6833
  %v6906 = vld [vmem:[%s11] sm:$0xff]
  %v6907 = vld [vmem:[%s11 + $0x8] sm:$0xff]
  %v6908 = vld [vmem:[%s11 + $0x10] sm:$0xff]
  %v6909 = vld [vmem:[%s11 + $0x18] sm:$0xff]
  %v6910 = vld [vmem:[%s11 + $0x20] sm:$0xff]
  %v6911 = vld [vmem:[%s11 + $0x28] sm:$0xff]
  %v6912 = vld [vmem:[%s11 + $0x30] sm:$0xff]
  %v6913 = vld [vmem:[%s11 + $0x38] sm:$0xff]
  %v6914 = vld [vmem:[%s11 + $0x40] sm:$0xff]
  %v6915 = vld [vmem:[%s11 + $0x48] sm:$0xff]
  %v6916 = vld [vmem:[%s11 + $0x50] sm:$0xff]
  %v6917 = vld [vmem:[%s11 + $0x58] sm:$0xff]
  %v6918 = vld [vmem:[%s12] sm:$0x1]
  %v6920 = vlaneseq
  %v6921 = vshrl.u32 %v6920, 7
  %v6922 = vsub.s32 0, %v6921
  %v6923 = vrot.slane %v6918, %v6922
  %v6926 = vsel %vm3350, %v6882, 0
  %v6929 = vsel %vm3350, %v6883, 0
  %v6932 = vsel %vm3350, %v6884, 0
  %v6935 = vsel %vm3350, %v6885, 0
  %v6938 = vsel %vm3350, %v6886, 0
  %v6941 = vsel %vm3350, %v6887, 0
  %v6944 = vsel %vm3350, %v6888, 0
  %v6947 = vsel %vm3350, %v6889, 0
  %v6950 = vsel %vm3350, %v6890, 0
  %v6953 = vsel %vm3350, %v6891, 0
  %v6956 = vsel %vm3350, %v6892, 0
  %v6959 = vsel %vm3350, %v6893, 0
  %v6962 = vsel %vm3350, %v6894, 0
  %v6965 = vsel %vm3350, %v6895, 0
  %v6968 = vsel %vm3350, %v6896, 0
  %v6971 = vsel %vm3350, %v6897, 0
  %v6974 = vsel %vm3350, %v6898, 0
  %v6977 = vsel %vm3350, %v6899, 0
  %v6980 = vsel %vm3350, %v6900, 0
  %v6983 = vsel %vm3350, %v6901, 0
  %v6986 = vsel %vm3350, %v6902, 0
  %v6989 = vsel %vm3350, %v6903, 0
  %v6992 = vsel %vm3350, %v6904, 0
  %v6995 = vsel %vm3350, %v6905, 0
  %6997 = vmatprep.subr.mxu0 0.0
  %6998 = vmatpush1.msra.mxu0 %v6906
  %6999 = vmatprep.subr.mxu0 0.0
  %7000 = vmatpush1.msra.mxu0 %v6907
  %7001 = vmatprep.subr.mxu0 0.0
  %7002 = vmatpush1.msra.mxu0 %v6908
  %7003 = vmatprep.subr.mxu0 0.0
  %7004 = vmatpush1.msra.mxu0 %v6909
  %7005 = vmatprep.subr.mxu0 0.0
  %7006 = vmatpush1.msra.mxu0 %v6910
  %7007 = vmatprep.subr.mxu0 0.0
  %7008 = vmatpush1.msra.mxu0 %v6911
  %7009 = vmatprep.subr.mxu0 0.0
  %7010 = vmatpush1.msra.mxu0 %v6912
  %7011 = vmatprep.subr.mxu0 0.0
  %7012 = vmatpush1.msra.mxu0 %v6913
  %7013 = vmatprep.subr.mxu0 0.0
  %7014 = vmatpush1.msra.mxu0 %v6914
  %7015 = vmatprep.subr.mxu0 0.0
  %7016 = vmatpush1.msra.mxu0 %v6915
  %7017 = vmatprep.subr.mxu0 0.0
  %7018 = vmatpush1.msra.mxu0 %v6916
  %7019 = vmatprep.subr.mxu0 0.0
  %7020 = vmatpush1.msra.mxu0 %v6917
  %7021 = vmatprep.subr.mxu0 0.0
  %7022 = vmatpush1.msra.mxu0 0.0
  %7023 = vmatprep.subr.mxu0 0.0
  %7024 = vmatpush1.msra.mxu0 0.0
  %7025 = vmatprep.subr.mxu0 0.0
  %7026 = vmatpush1.msra.mxu0 0.0
  %7027 = vmatprep.subr.mxu0 0.0
  %7028 = vmatpush1.msra.mxu0 0.0
  %7029 = vmatprep.subr.mxu0 0.0
  %7030 = vmatpush1.msra.mxu0 0.0
  %7031 = vmatprep.subr.mxu0 0.0
  %7032 = vmatpush1.msra.mxu0 0.0
  %7033 = vmatprep.subr.mxu0 0.0
  %7034 = vmatpush1.msra.mxu0 0.0
  %7035 = vmatprep.subr.mxu0 0.0
  %7036 = vmatpush1.msra.mxu0 0.0
  %7037 = vmatprep.subr.mxu0 0.0
  %7038 = vmatpush1.msra.mxu0 0.0
  %7039 = vmatprep.subr.mxu0 0.0
  %7040 = vmatpush1.msra.mxu0 0.0
  %7041 = vmatprep.subr.mxu0 0.0
  %7042 = vmatpush1.msra.mxu0 0.0
  %7043 = vmatprep.subr.mxu0 0.0
  %7044 = vmatpush1.msra.mxu0 0.0
  %7045 = vmatprep.subr.mxu0 0.0
  %7046 = vmatpush1.msra.mxu0 0.0
  %7047 = vmatprep.subr.mxu0 0.0
  %7048 = vmatpush1.msra.mxu0 0.0
  %7049 = vmatprep.subr.mxu0 0.0
  %7050 = vmatpush1.msra.mxu0 0.0
  %7051 = vmatprep.subr.mxu0 0.0
  %7052 = vmatpush1.msra.mxu0 0.0
  %7053 = vmatprep.subr.mxu0 0.0
  %7054 = vmatpush1.msra.mxu0 0.0
  %7055 = vmatprep.subr.mxu0 0.0
  %7056 = vmatpush1.msra.mxu0 0.0
  %7057 = vmatprep.subr.mxu0 0.0
  %7058 = vmatpush1.msra.mxu0 0.0
  %7059 = vmatprep.subr.mxu0 0.0
  %7060 = vmatpush1.msra.mxu0 0.0
  %7061 = vmatprep.mubr.f32.mxu0 0.0
  %7062 = vmatmul.mubr.f32.gmra.mrb[0].mxu0 %v6926
  %v7063 = vpop.f32.mrb[0].mxu0
  %v7064 = vadd.f32 %v6923, %v7063
  %v7065 = vpop.f32.mrb[0].mxu0
  %7066 = vmatprep.mubr.f32.mxu0 0.0
  %7067 = vmatmul.mubr.f32.gmra.mrb[0].mxu0 %v6929
  %v7068 = vpop.f32.mrb[0].mxu0
  %v7069 = vadd.f32 %v6923, %v7068
  %v7070 = vpop.f32.mrb[0].mxu0
  %7071 = vmatprep.mubr.f32.mxu0 0.0
  %7072 = vmatmul.mubr.f32.gmra.mrb[0].mxu0 %v6932
  %v7073 = vpop.f32.mrb[0].mxu0
  %v7074 = vadd.f32 %v6923, %v7073
  %v7075 = vpop.f32.mrb[0].mxu0
  %7076 = vmatprep.mubr.f32.mxu0 0.0
  %7077 = vmatmul.mubr.f32.gmra.mrb[0].mxu0 %v6935
  %v7078 = vpop.f32.mrb[0].mxu0
  %v7079 = vadd.f32 %v6923, %v7078
  %v7080 = vpop.f32.mrb[0].mxu0
  %7081 = vmatprep.mubr.f32.mxu0 0.0
  %7082 = vmatmul.mubr.f32.gmra.mrb[0].mxu0 %v6938
  %v7083 = vpop.f32.mrb[0].mxu0
  %v7084 = vadd.f32 %v6923, %v7083
  %v7085 = vpop.f32.mrb[0].mxu0
  %7086 = vmatprep.mubr.f32.mxu0 0.0
  %7087 = vmatmul.mubr.f32.gmra.mrb[0].mxu0 %v6941
  %v7088 = vpop.f32.mrb[0].mxu0
  %v7089 = vadd.f32 %v6923, %v7088
  %v7090 = vpop.f32.mrb[0].mxu0
  %7091 = vmatprep.mubr.f32.mxu0 0.0
  %7092 = vmatmul.mubr.f32.gmra.mrb[0].mxu0 %v6944
  %v7093 = vpop.f32.mrb[0].mxu0
  %v7094 = vadd.f32 %v6923, %v7093
  %v7095 = vpop.f32.mrb[0].mxu0
  %7096 = vmatprep.mubr.f32.mxu0 0.0
  %7097 = vmatmul.mubr.f32.gmra.mrb[0].mxu0 %v6947
  %v7098 = vpop.f32.mrb[0].mxu0
  %v7099 = vadd.f32 %v6923, %v7098
  %v7100 = vpop.f32.mrb[0].mxu0
  %7101 = vmatprep.mubr.f32.mxu0 0.0
  %7102 = vmatmul.mubr.f32.gmra.mrb[0].mxu0 %v6950
  %v7103 = vpop.f32.mrb[0].mxu0
  %v7104 = vadd.f32 %v6923, %v7103
  %v7105 = vpop.f32.mrb[0].mxu0
  %7106 = vmatprep.mubr.f32.mxu0 0.0
  %7107 = vmatmul.mubr.f32.gmra.mrb[0].mxu0 %v6953
  %v7108 = vpop.f32.mrb[0].mxu0
  %v7109 = vadd.f32 %v6923, %v7108
  %v7110 = vpop.f32.mrb[0].mxu0
  %7111 = vmatprep.mubr.f32.mxu0 0.0
  %7112 = vmatmul.mubr.f32.gmra.mrb[0].mxu0 %v6956
  %v7113 = vpop.f32.mrb[0].mxu0
  %v7114 = vadd.f32 %v6923, %v7113
  %v7115 = vpop.f32.mrb[0].mxu0
  %7116 = vmatprep.mubr.f32.mxu0 0.0
  %7117 = vmatmul.mubr.f32.gmra.mrb[0].mxu0 %v6959
  %v7118 = vpop.f32.mrb[0].mxu0
  %v7119 = vadd.f32 %v6923, %v7118
  %v7120 = vpop.f32.mrb[0].mxu0
  %7121 = vmatprep.mubr.f32.mxu0 0.0
  %7122 = vmatmul.mubr.f32.gmra.mrb[0].mxu0 %v6962
  %v7123 = vpop.f32.mrb[0].mxu0
  %v7124 = vadd.f32 %v6923, %v7123
  %v7125 = vpop.f32.mrb[0].mxu0
  %7126 = vmatprep.mubr.f32.mxu0 0.0
  %7127 = vmatmul.mubr.f32.gmra.mrb[0].mxu0 %v6965
  %v7128 = vpop.f32.mrb[0].mxu0
  %v7129 = vadd.f32 %v6923, %v7128
  %v7130 = vpop.f32.mrb[0].mxu0
  %7131 = vmatprep.mubr.f32.mxu0 0.0
  %7132 = vmatmul.mubr.f32.gmra.mrb[0].mxu0 %v6968
  %v7133 = vpop.f32.mrb[0].mxu0
  %v7134 = vadd.f32 %v6923, %v7133
  %v7135 = vpop.f32.mrb[0].mxu0
  %7136 = vmatprep.mubr.f32.mxu0 0.0
  %7137 = vmatmul.mubr.f32.gmra.mrb[0].mxu0 %v6971
  %v7138 = vpop.f32.mrb[0].mxu0
  %v7139 = vadd.f32 %v6923, %v7138
  %v7140 = vpop.f32.mrb[0].mxu0
  %7141 = vmatprep.mubr.f32.mxu0 0.0
  %7142 = vmatmul.mubr.f32.gmra.mrb[0].mxu0 %v6974
  %v7143 = vpop.f32.mrb[0].mxu0
  %v7144 = vadd.f32 %v6923, %v7143
  %v7145 = vpop.f32.mrb[0].mxu0
  %7146 = vmatprep.mubr.f32.mxu0 0.0
  %7147 = vmatmul.mubr.f32.gmra.mrb[0].mxu0 %v6977
  %v7148 = vpop.f32.mrb[0].mxu0
  %v7149 = vadd.f32 %v6923, %v7148
  %v7150 = vpop.f32.mrb[0].mxu0
  %7151 = vmatprep.mubr.f32.mxu0 0.0
  %7152 = vmatmul.mubr.f32.gmra.mrb[0].mxu0 %v6980
  %v7153 = vpop.f32.mrb[0].mxu0
  %v7154 = vadd.f32 %v6923, %v7153
  %v7155 = vpop.f32.mrb[0].mxu0
  %7156 = vmatprep.mubr.f32.mxu0 0.0
  %7157 = vmatmul.mubr.f32.gmra.mrb[0].mxu0 %v6983
  %v7158 = vpop.f32.mrb[0].mxu0
  %v7159 = vadd.f32 %v6923, %v7158
  %v7160 = vpop.f32.mrb[0].mxu0
  %7161 = vmatprep.mubr.f32.mxu0 0.0
  %7162 = vmatmul.mubr.f32.gmra.mrb[0].mxu0 %v6986
  %v7163 = vpop.f32.mrb[0].mxu0
  %v7164 = vadd.f32 %v6923, %v7163
  %v7165 = vpop.f32.mrb[0].mxu0
  %7166 = vmatprep.mubr.f32.mxu0 0.0
  %7167 = vmatmul.mubr.f32.gmra.mrb[0].mxu0 %v6989
  %v7168 = vpop.f32.mrb[0].mxu0
  %v7169 = vadd.f32 %v6923, %v7168
  %v7170 = vpop.f32.mrb[0].mxu0
  %7171 = vmatprep.mubr.f32.mxu0 0.0
  %7172 = vmatmul.mubr.f32.gmra.mrb[0].mxu0 %v6992
  %v7173 = vpop.f32.mrb[0].mxu0
  %v7174 = vadd.f32 %v6923, %v7173
  %v7175 = vpop.f32.mrb[0].mxu0
  %7176 = vmatprep.mubr.f32.mxu0 0.0
  %7177 = vmatmul.mubr.f32.gmra.mrb[0].mxu0 %v6995
  %v7178 = vpop.f32.mrb[0].mxu0
  %v7179 = vadd.f32 %v6923, %v7178
  %v7180 = vpop.f32.mrb[0].mxu0
  %7181 = vdwg.mxu0
  %v7182 = vmax.f32 %v7064, 0.0
  %v7183 = vmax.f32 %v7069, 0.0
  %v7184 = vmax.f32 %v7074, 0.0
  %v7185 = vmax.f32 %v7079, 0.0
  %v7186 = vmax.f32 %v7084, 0.0
  %v7187 = vmax.f32 %v7089, 0.0
  %v7188 = vmax.f32 %v7094, 0.0
  %v7189 = vmax.f32 %v7099, 0.0
  %v7190 = vmax.f32 %v7104, 0.0
  %v7191 = vmax.f32 %v7109, 0.0
  %v7192 = vmax.f32 %v7114, 0.0
  %v7193 = vmax.f32 %v7119, 0.0
  %v7194 = vmax.f32 %v7124, 0.0
  %v7195 = vmax.f32 %v7129, 0.0
  %v7196 = vmax.f32 %v7134, 0.0
  %v7197 = vmax.f32 %v7139, 0.0
  %v7198 = vmax.f32 %v7144, 0.0
  %v7199 = vmax.f32 %v7149, 0.0
  %v7200 = vmax.f32 %v7154, 0.0
  %v7201 = vmax.f32 %v7159, 0.0
  %v7202 = vmax.f32 %v7164, 0.0
  %v7203 = vmax.f32 %v7169, 0.0
  %v7204 = vmax.f32 %v7174, 0.0
  %v7205 = vmax.f32 %v7179, 0.0
  %7222 = vrot.lane.b32.xlu0 %v7184, 32
  %v7223 = vpop.permute.xlu0 %7222
  %7224 = vrot.lane.b32.xlu0 %v7185, 32
  %v7225 = vpop.permute.xlu0 %7224
  %7226 = vrot.lane.b32.xlu0 %v7186, 32
  %v7227 = vpop.permute.xlu0 %7226
  %7228 = vrot.lane.b32.xlu0 %v7187, 32
  %v7229 = vpop.permute.xlu0 %7228
  %7230 = vrot.lane.b32.xlu0 %v7188, 32
  %v7231 = vpop.permute.xlu0 %7230
  %7232 = vrot.lane.b32.xlu0 %v7189, 32
  %v7233 = vpop.permute.xlu0 %7232
  %7234 = vrot.lane.b32.xlu0 %v7190, 32
  %v7235 = vpop.permute.xlu0 %7234
  %7236 = vrot.lane.b32.xlu0 %v7191, 32
  %v7237 = vpop.permute.xlu0 %7236
  %7238 = vrot.lane.b32.xlu0 %v7196, 32
  %v7239 = vpop.permute.xlu0 %7238
  %7240 = vrot.lane.b32.xlu0 %v7197, 32
  %v7241 = vpop.permute.xlu0 %7240
  %7242 = vrot.lane.b32.xlu0 %v7198, 32
  %v7243 = vpop.permute.xlu0 %7242
  %7244 = vrot.lane.b32.xlu0 %v7199, 32
  %v7245 = vpop.permute.xlu0 %7244
  %7246 = vrot.lane.b32.xlu0 %v7200, 32
  %v7247 = vpop.permute.xlu0 %7246
  %7248 = vrot.lane.b32.xlu0 %v7201, 32
  %v7249 = vpop.permute.xlu0 %7248
  %7250 = vrot.lane.b32.xlu0 %v7202, 32
  %v7251 = vpop.permute.xlu0 %7250
  %7252 = vrot.lane.b32.xlu0 %v7203, 32
  %v7253 = vpop.permute.xlu0 %7252
  %7274 = vrot.lane.b32.xlu0 %v7186, 64
  %v7275 = vpop.permute.xlu0 %7274
  %7276 = vrot.lane.b32.xlu0 %v7187, 64
  %v7277 = vpop.permute.xlu0 %7276
  %7278 = vrot.lane.b32.xlu0 %v7188, 64
  %v7279 = vpop.permute.xlu0 %7278
  %7280 = vrot.lane.b32.xlu0 %v7189, 64
  %v7281 = vpop.permute.xlu0 %7280
  %7282 = vrot.lane.b32.xlu0 %v7190, 64
  %v7283 = vpop.permute.xlu0 %7282
  %7284 = vrot.lane.b32.xlu0 %v7191, 64
  %v7285 = vpop.permute.xlu0 %7284
  %7286 = vrot.lane.b32.xlu0 %v7192, 64
  %v7287 = vpop.permute.xlu0 %7286
  %7288 = vrot.lane.b32.xlu0 %v7193, 64
  %v7289 = vpop.permute.xlu0 %7288
  %7290 = vrot.lane.b32.xlu0 %v7198, 64
  %v7291 = vpop.permute.xlu0 %7290
  %7292 = vrot.lane.b32.xlu0 %v7199, 64
  %v7293 = vpop.permute.xlu0 %7292
  %7294 = vrot.lane.b32.xlu0 %v7200, 64
  %v7295 = vpop.permute.xlu0 %7294
  %7296 = vrot.lane.b32.xlu0 %v7201, 64
  %v7297 = vpop.permute.xlu0 %7296
  %7298 = vrot.lane.b32.xlu0 %v7202, 64
  %v7299 = vpop.permute.xlu0 %7298
  %7300 = vrot.lane.b32.xlu0 %v7203, 64
  %v7301 = vpop.permute.xlu0 %7300
  %7302 = vrot.lane.b32.xlu0 %v7204, 64
  %v7303 = vpop.permute.xlu0 %7302
  %7304 = vrot.lane.b32.xlu0 %v7205, 64
  %v7305 = vpop.permute.xlu0 %7304
  %v7322 = vsel %vm3250, %v7182, %v7223
  %v7323 = vsel %vm3250, %v7183, %v7225
  %v7324 = vsel %vm3250, %v7184, %v7227
  %v7325 = vsel %vm3250, %v7185, %v7229
  %v7326 = vsel %vm3250, %v7186, %v7231
  %v7327 = vsel %vm3250, %v7187, %v7233
  %v7328 = vsel %vm3250, %v7188, %v7235
  %v7329 = vsel %vm3250, %v7189, %v7237
  %v7330 = vsel %vm3250, %v7194, %v7239
  %v7331 = vsel %vm3250, %v7195, %v7241
  %v7332 = vsel %vm3250, %v7196, %v7243
  %v7333 = vsel %vm3250, %v7197, %v7245
  %v7334 = vsel %vm3250, %v7198, %v7247
  %v7335 = vsel %vm3250, %v7199, %v7249
  %v7336 = vsel %vm3250, %v7200, %v7251
  %v7337 = vsel %vm3250, %v7201, %v7253
  %v7338 = vsel %vm1669, %v7322, %v7275
  %v7339 = vsel %vm1669, %v7323, %v7277
  %v7340 = vsel %vm1669, %v7324, %v7279
  %v7341 = vsel %vm1669, %v7325, %v7281
  %v7342 = vsel %vm1669, %v7326, %v7283
  %v7343 = vsel %vm1669, %v7327, %v7285
  %v7344 = vsel %vm1669, %v7328, %v7287
  %v7345 = vsel %vm1669, %v7329, %v7289
  %v7346 = vsel %vm1669, %v7330, %v7291
  %v7347 = vsel %vm1669, %v7331, %v7293
  %v7348 = vsel %vm1669, %v7332, %v7295
  %v7349 = vsel %vm1669, %v7333, %v7297
  %v7350 = vsel %vm1669, %v7334, %v7299
  %v7351 = vsel %vm1669, %v7335, %v7301
  %v7352 = vsel %vm1669, %v7336, %v7303
  %v7353 = vsel %vm1669, %v7337, %v7305
  %v7354 = vld [vmem:[%s13] sm:$0xff]
  %v7355 = vld [vmem:[%s13 + $0x8] sm:$0xff]
  %v7356 = vld [vmem:[%s13 + $0x10] sm:$0xff]
  %v7357 = vld [vmem:[%s13 + $0x18] sm:$0xff]
  %v7358 = vld [vmem:[%s13 + $0x20] sm:$0xff]
  %v7359 = vld [vmem:[%s13 + $0x28] sm:$0xff]
  %v7360 = vld [vmem:[%s13 + $0x30] sm:$0xff]
  %v7361 = vld [vmem:[%s13 + $0x38] sm:$0xff]
  %v7362 = vld [vmem:[%s13 + $0x40] sm:$0xff]
  %v7363 = vld [vmem:[%s13 + $0x48] sm:$0xff]
  %v7364 = vld [vmem:[%s13 + $0x50] sm:$0xff]
  %v7365 = vld [vmem:[%s13 + $0x58] sm:$0xff]
  %v7366 = vld [vmem:[%s14] sm:$0x1]
  %v7368 = vlaneseq
  %v7369 = vshrl.u32 %v7368, 7
  %v7370 = vsub.s32 0, %v7369
  %v7371 = vrot.slane %v7366, %v7370
  %v7374 = vsel %vm3350, %v7338, 0
  %v7377 = vsel %vm3350, %v7339, 0
  %v7380 = vsel %vm3350, %v7340, 0
  %v7383 = vsel %vm3350, %v7341, 0
  %v7386 = vsel %vm3350, %v7342, 0
  %v7389 = vsel %vm3350, %v7343, 0
  %v7392 = vsel %vm3350, %v7344, 0
  %v7395 = vsel %vm3350, %v7345, 0
  %v7398 = vsel %vm3350, %v7346, 0
  %v7401 = vsel %vm3350, %v7347, 0
  %v7404 = vsel %vm3350, %v7348, 0
  %v7407 = vsel %vm3350, %v7349, 0
  %v7410 = vsel %vm3350, %v7350, 0
  %v7413 = vsel %vm3350, %v7351, 0
  %v7416 = vsel %vm3350, %v7352, 0
  %v7419 = vsel %vm3350, %v7353, 0
  %7421 = vmatprep.subr.mxu0 0.0
  %7422 = vmatpush1.msra.mxu0 %v7354
  %7423 = vmatprep.subr.mxu0 0.0
  %7424 = vmatpush1.msra.mxu0 %v7355
  %7425 = vmatprep.subr.mxu0 0.0
  %7426 = vmatpush1.msra.mxu0 %v7356
  %7427 = vmatprep.subr.mxu0 0.0
  %7428 = vmatpush1.msra.mxu0 %v7357
  %7429 = vmatprep.subr.mxu0 0.0
  %7430 = vmatpush1.msra.mxu0 %v7358
  %7431 = vmatprep.subr.mxu0 0.0
  %7432 = vmatpush1.msra.mxu0 %v7359
  %7433 = vmatprep.subr.mxu0 0.0
  %7434 = vmatpush1.msra.mxu0 %v7360
  %7435 = vmatprep.subr.mxu0 0.0
  %7436 = vmatpush1.msra.mxu0 %v7361
  %7437 = vmatprep.subr.mxu0 0.0
  %7438 = vmatpush1.msra.mxu0 %v7362
  %7439 = vmatprep.subr.mxu0 0.0
  %7440 = vmatpush1.msra.mxu0 %v7363
  %7441 = vmatprep.subr.mxu0 0.0
  %7442 = vmatpush1.msra.mxu0 %v7364
  %7443 = vmatprep.subr.mxu0 0.0
  %7444 = vmatpush1.msra.mxu0 %v7365
  %7445 = vmatprep.subr.mxu0 0.0
  %7446 = vmatpush1.msra.mxu0 0.0
  %7447 = vmatprep.subr.mxu0 0.0
  %7448 = vmatpush1.msra.mxu0 0.0
  %7449 = vmatprep.subr.mxu0 0.0
  %7450 = vmatpush1.msra.mxu0 0.0
  %7451 = vmatprep.subr.mxu0 0.0
  %7452 = vmatpush1.msra.mxu0 0.0
  %7453 = vmatprep.subr.mxu0 0.0
  %7454 = vmatpush1.msra.mxu0 0.0
  %7455 = vmatprep.subr.mxu0 0.0
  %7456 = vmatpush1.msra.mxu0 0.0
  %7457 = vmatprep.subr.mxu0 0.0
  %7458 = vmatpush1.msra.mxu0 0.0
  %7459 = vmatprep.subr.mxu0 0.0
  %7460 = vmatpush1.msra.mxu0 0.0
  %7461 = vmatprep.subr.mxu0 0.0
  %7462 = vmatpush1.msra.mxu0 0.0
  %7463 = vmatprep.subr.mxu0 0.0
  %7464 = vmatpush1.msra.mxu0 0.0
  %7465 = vmatprep.subr.mxu0 0.0
  %7466 = vmatpush1.msra.mxu0 0.0
  %7467 = vmatprep.subr.mxu0 0.0
  %7468 = vmatpush1.msra.mxu0 0.0
  %7469 = vmatprep.subr.mxu0 0.0
  %7470 = vmatpush1.msra.mxu0 0.0
  %7471 = vmatprep.subr.mxu0 0.0
  %7472 = vmatpush1.msra.mxu0 0.0
  %7473 = vmatprep.subr.mxu0 0.0
  %7474 = vmatpush1.msra.mxu0 0.0
  %7475 = vmatprep.subr.mxu0 0.0
  %7476 = vmatpush1.msra.mxu0 0.0
  %7477 = vmatprep.subr.mxu0 0.0
  %7478 = vmatpush1.msra.mxu0 0.0
  %7479 = vmatprep.subr.mxu0 0.0
  %7480 = vmatpush1.msra.mxu0 0.0
  %7481 = vmatprep.subr.mxu0 0.0
  %7482 = vmatpush1.msra.mxu0 0.0
  %7483 = vmatprep.subr.mxu0 0.0
  %7484 = vmatpush1.msra.mxu0 0.0
  %7485 = vmatprep.mubr.f32.mxu0 0.0
  %7486 = vmatmul.mubr.f32.gmra.mrb[0].mxu0 %v7374
  %v7487 = vpop.f32.mrb[0].mxu0
  %v7488 = vadd.f32 %v7371, %v7487
  %v7489 = vpop.f32.mrb[0].mxu0
  %7490 = vmatprep.mubr.f32.mxu0 0.0
  %7491 = vmatmul.mubr.f32.gmra.mrb[0].mxu0 %v7377
  %v7492 = vpop.f32.mrb[0].mxu0
  %v7493 = vadd.f32 %v7371, %v7492
  %v7494 = vpop.f32.mrb[0].mxu0
  %7495 = vmatprep.mubr.f32.mxu0 0.0
  %7496 = vmatmul.mubr.f32.gmra.mrb[0].mxu0 %v7380
  %v7497 = vpop.f32.mrb[0].mxu0
  %v7498 = vadd.f32 %v7371, %v7497
  %v7499 = vpop.f32.mrb[0].mxu0
  %7500 = vmatprep.mubr.f32.mxu0 0.0
  %7501 = vmatmul.mubr.f32.gmra.mrb[0].mxu0 %v7383
  %v7502 = vpop.f32.mrb[0].mxu0
  %v7503 = vadd.f32 %v7371, %v7502
  %v7504 = vpop.f32.mrb[0].mxu0
  %7505 = vmatprep.mubr.f32.mxu0 0.0
  %7506 = vmatmul.mubr.f32.gmra.mrb[0].mxu0 %v7386
  %v7507 = vpop.f32.mrb[0].mxu0
  %v7508 = vadd.f32 %v7371, %v7507
  %v7509 = vpop.f32.mrb[0].mxu0
  %7510 = vmatprep.mubr.f32.mxu0 0.0
  %7511 = vmatmul.mubr.f32.gmra.mrb[0].mxu0 %v7389
  %v7512 = vpop.f32.mrb[0].mxu0
  %v7513 = vadd.f32 %v7371, %v7512
  %v7514 = vpop.f32.mrb[0].mxu0
  %7515 = vmatprep.mubr.f32.mxu0 0.0
  %7516 = vmatmul.mubr.f32.gmra.mrb[0].mxu0 %v7392
  %v7517 = vpop.f32.mrb[0].mxu0
  %v7518 = vadd.f32 %v7371, %v7517
  %v7519 = vpop.f32.mrb[0].mxu0
  %7520 = vmatprep.mubr.f32.mxu0 0.0
  %7521 = vmatmul.mubr.f32.gmra.mrb[0].mxu0 %v7395
  %v7522 = vpop.f32.mrb[0].mxu0
  %v7523 = vadd.f32 %v7371, %v7522
  %v7524 = vpop.f32.mrb[0].mxu0
  %7525 = vmatprep.mubr.f32.mxu0 0.0
  %7526 = vmatmul.mubr.f32.gmra.mrb[0].mxu0 %v7398
  %v7527 = vpop.f32.mrb[0].mxu0
  %v7528 = vadd.f32 %v7371, %v7527
  %v7529 = vpop.f32.mrb[0].mxu0
  %7530 = vmatprep.mubr.f32.mxu0 0.0
  %7531 = vmatmul.mubr.f32.gmra.mrb[0].mxu0 %v7401
  %v7532 = vpop.f32.mrb[0].mxu0
  %v7533 = vadd.f32 %v7371, %v7532
  %v7534 = vpop.f32.mrb[0].mxu0
  %7535 = vmatprep.mubr.f32.mxu0 0.0
  %7536 = vmatmul.mubr.f32.gmra.mrb[0].mxu0 %v7404
  %v7537 = vpop.f32.mrb[0].mxu0
  %v7538 = vadd.f32 %v7371, %v7537
  %v7539 = vpop.f32.mrb[0].mxu0
  %7540 = vmatprep.mubr.f32.mxu0 0.0
  %7541 = vmatmul.mubr.f32.gmra.mrb[0].mxu0 %v7407
  %v7542 = vpop.f32.mrb[0].mxu0
  %v7543 = vadd.f32 %v7371, %v7542
  %v7544 = vpop.f32.mrb[0].mxu0
  %7545 = vmatprep.mubr.f32.mxu0 0.0
  %7546 = vmatmul.mubr.f32.gmra.mrb[0].mxu0 %v7410
  %v7547 = vpop.f32.mrb[0].mxu0
  %v7548 = vadd.f32 %v7371, %v7547
  %v7549 = vpop.f32.mrb[0].mxu0
  %7550 = vmatprep.mubr.f32.mxu0 0.0
  %7551 = vmatmul.mubr.f32.gmra.mrb[0].mxu0 %v7413
  %v7552 = vpop.f32.mrb[0].mxu0
  %v7553 = vadd.f32 %v7371, %v7552
  %v7554 = vpop.f32.mrb[0].mxu0
  %7555 = vmatprep.mubr.f32.mxu0 0.0
  %7556 = vmatmul.mubr.f32.gmra.mrb[0].mxu0 %v7416
  %v7557 = vpop.f32.mrb[0].mxu0
  %v7558 = vadd.f32 %v7371, %v7557
  %v7559 = vpop.f32.mrb[0].mxu0
  %7560 = vmatprep.mubr.f32.mxu0 0.0
  %7561 = vmatmul.mubr.f32.gmra.mrb[0].mxu0 %v7419
  %v7562 = vpop.f32.mrb[0].mxu0
  %v7563 = vadd.f32 %v7371, %v7562
  %v7564 = vpop.f32.mrb[0].mxu0
  %7565 = vdwg.mxu0
  %v7566 = vsub.f32 0.0, %v7488
  %v7567 = vsub.f32 0.0, %v7493
  %v7568 = vsub.f32 0.0, %v7498
  %v7569 = vsub.f32 0.0, %v7503
  %v7570 = vsub.f32 0.0, %v7508
  %v7571 = vsub.f32 0.0, %v7513
  %v7572 = vsub.f32 0.0, %v7518
  %v7573 = vsub.f32 0.0, %v7523
  %v7574 = vsub.f32 0.0, %v7528
  %v7575 = vsub.f32 0.0, %v7533
  %v7576 = vsub.f32 0.0, %v7538
  %v7577 = vsub.f32 0.0, %v7543
  %v7578 = vsub.f32 0.0, %v7548
  %v7579 = vsub.f32 0.0, %v7553
  %v7580 = vsub.f32 0.0, %v7558
  %v7581 = vsub.f32 0.0, %v7563
  %v7582 = vmul.f32 %v7566, 1.442695
  %v7583 = vpow.pop %v7582
  %v7584 = vmul.f32 %v7567, 1.442695
  %v7585 = vpow.pop %v7584
  %v7586 = vmul.f32 %v7568, 1.442695
  %v7587 = vpow.pop %v7586
  %v7588 = vmul.f32 %v7569, 1.442695
  %v7589 = vpow.pop %v7588
  %v7590 = vmul.f32 %v7570, 1.442695
  %v7591 = vpow.pop %v7590
  %v7592 = vmul.f32 %v7571, 1.442695
  %v7593 = vpow.pop %v7592
  %v7594 = vmul.f32 %v7572, 1.442695
  %v7595 = vpow.pop %v7594
  %v7596 = vmul.f32 %v7573, 1.442695
  %v7597 = vpow.pop %v7596
  %v7598 = vmul.f32 %v7574, 1.442695
  %v7599 = vpow.pop %v7598
  %v7600 = vmul.f32 %v7575, 1.442695
  %v7601 = vpow.pop %v7600
  %v7602 = vmul.f32 %v7576, 1.442695
  %v7603 = vpow.pop %v7602
  %v7604 = vmul.f32 %v7577, 1.442695
  %v7605 = vpow.pop %v7604
  %v7606 = vmul.f32 %v7578, 1.442695
  %v7607 = vpow.pop %v7606
  %v7608 = vmul.f32 %v7579, 1.442695
  %v7609 = vpow.pop %v7608
  %v7610 = vmul.f32 %v7580, 1.442695
  %v7611 = vpow.pop %v7610
  %v7612 = vmul.f32 %v7581, 1.442695
  %v7613 = vpow.pop %v7612
  %v7614 = vadd.f32 %v7583, 1.0
  %v7615 = vadd.f32 %v7585, 1.0
  %v7616 = vadd.f32 %v7587, 1.0
  %v7617 = vadd.f32 %v7589, 1.0
  %v7618 = vadd.f32 %v7591, 1.0
  %v7619 = vadd.f32 %v7593, 1.0
  %v7620 = vadd.f32 %v7595, 1.0
  %v7621 = vadd.f32 %v7597, 1.0
  %v7622 = vadd.f32 %v7599, 1.0
  %v7623 = vadd.f32 %v7601, 1.0
  %v7624 = vadd.f32 %v7603, 1.0
  %v7625 = vadd.f32 %v7605, 1.0
  %v7626 = vadd.f32 %v7607, 1.0
  %v7627 = vadd.f32 %v7609, 1.0
  %v7628 = vadd.f32 %v7611, 1.0
  %v7629 = vadd.f32 %v7613, 1.0
  %v7630 = vrcp.pop %v7614
  %v7631 = vmul.f32 1.0, %v7630
  %v7632 = vrcp.pop %v7615
  %v7633 = vmul.f32 1.0, %v7632
  %v7634 = vrcp.pop %v7616
  %v7635 = vmul.f32 1.0, %v7634
  %v7636 = vrcp.pop %v7617
  %v7637 = vmul.f32 1.0, %v7636
  %v7638 = vrcp.pop %v7618
  %v7639 = vmul.f32 1.0, %v7638
  %v7640 = vrcp.pop %v7619
  %v7641 = vmul.f32 1.0, %v7640
  %v7642 = vrcp.pop %v7620
  %v7643 = vmul.f32 1.0, %v7642
  %v7644 = vrcp.pop %v7621
  %v7645 = vmul.f32 1.0, %v7644
  %v7646 = vrcp.pop %v7622
  %v7647 = vmul.f32 1.0, %v7646
  %v7648 = vrcp.pop %v7623
  %v7649 = vmul.f32 1.0, %v7648
  %v7650 = vrcp.pop %v7624
  %v7651 = vmul.f32 1.0, %v7650
  %v7652 = vrcp.pop %v7625
  %v7653 = vmul.f32 1.0, %v7652
  %v7654 = vrcp.pop %v7626
  %v7655 = vmul.f32 1.0, %v7654
  %v7656 = vrcp.pop %v7627
  %v7657 = vmul.f32 1.0, %v7656
  %v7658 = vrcp.pop %v7628
  %v7659 = vmul.f32 1.0, %v7658
  %v7660 = vrcp.pop %v7629
  %v7661 = vmul.f32 1.0, %v7660
  %7678 = vrot.lane.b32.xlu0 %v7631, 96
  %v7679 = vpop.permute.xlu0 %7678
  %7680 = vrot.lane.b32.xlu0 %v7633, 96
  %v7681 = vpop.permute.xlu0 %7680
  %7682 = vrot.lane.b32.xlu0 %v7635, 96
  %v7683 = vpop.permute.xlu0 %7682
  %7684 = vrot.lane.b32.xlu0 %v7637, 96
  %v7685 = vpop.permute.xlu0 %7684
  %7686 = vrot.lane.b32.xlu0 %v7639, 96
  %v7687 = vpop.permute.xlu0 %7686
  %7688 = vrot.lane.b32.xlu0 %v7641, 96
  %v7689 = vpop.permute.xlu0 %7688
  %7690 = vrot.lane.b32.xlu0 %v7643, 96
  %v7691 = vpop.permute.xlu0 %7690
  %7692 = vrot.lane.b32.xlu0 %v7645, 96
  %v7693 = vpop.permute.xlu0 %7692
  %7694 = vrot.lane.b32.xlu0 %v7647, 96
  %v7695 = vpop.permute.xlu0 %7694
  %7696 = vrot.lane.b32.xlu0 %v7649, 96
  %v7697 = vpop.permute.xlu0 %7696
  %7698 = vrot.lane.b32.xlu0 %v7651, 96
  %v7699 = vpop.permute.xlu0 %7698
  %7700 = vrot.lane.b32.xlu0 %v7653, 96
  %v7701 = vpop.permute.xlu0 %7700
  %7702 = vrot.lane.b32.xlu0 %v7655, 96
  %v7703 = vpop.permute.xlu0 %7702
  %7704 = vrot.lane.b32.xlu0 %v7657, 96
  %v7705 = vpop.permute.xlu0 %7704
  %7706 = vrot.lane.b32.xlu0 %v7659, 96
  %v7707 = vpop.permute.xlu0 %7706
  %7708 = vrot.lane.b32.xlu0 %v7661, 96
  %v7709 = vpop.permute.xlu0 %7708
  %v7726 = vmul.f32 %v7488, %v7679
  %v7727 = vmul.f32 %v7493, %v7681
  %v7728 = vmul.f32 %v7498, %v7683
  %v7729 = vmul.f32 %v7503, %v7685
  %v7730 = vmul.f32 %v7508, %v7687
  %v7731 = vmul.f32 %v7513, %v7689
  %v7732 = vmul.f32 %v7518, %v7691
  %v7733 = vmul.f32 %v7523, %v7693
  %v7734 = vmul.f32 %v7528, %v7695
  %v7735 = vmul.f32 %v7533, %v7697
  %v7736 = vmul.f32 %v7538, %v7699
  %v7737 = vmul.f32 %v7543, %v7701
  %v7738 = vmul.f32 %v7548, %v7703
  %v7739 = vmul.f32 %v7553, %v7705
  %v7740 = vmul.f32 %v7558, %v7707
  %v7741 = vmul.f32 %v7563, %v7709
  %7758 = vrot.lane.b32.xlu0 %v7488, 64
  %v7759 = vpop.permute.xlu0 %7758
  %7760 = vrot.lane.b32.xlu0 %v7493, 64
  %v7761 = vpop.permute.xlu0 %7760
  %7762 = vrot.lane.b32.xlu0 %v7498, 64
  %v7763 = vpop.permute.xlu0 %7762
  %7764 = vrot.lane.b32.xlu0 %v7503, 64
  %v7765 = vpop.permute.xlu0 %7764
  %7766 = vrot.lane.b32.xlu0 %v7508, 64
  %v7767 = vpop.permute.xlu0 %7766
  %7768 = vrot.lane.b32.xlu0 %v7513, 64
  %v7769 = vpop.permute.xlu0 %7768
  %7770 = vrot.lane.b32.xlu0 %v7518, 64
  %v7771 = vpop.permute.xlu0 %7770
  %7772 = vrot.lane.b32.xlu0 %v7523, 64
  %v7773 = vpop.permute.xlu0 %7772
  %7774 = vrot.lane.b32.xlu0 %v7528, 64
  %v7775 = vpop.permute.xlu0 %7774
  %7776 = vrot.lane.b32.xlu0 %v7533, 64
  %v7777 = vpop.permute.xlu0 %7776
  %7778 = vrot.lane.b32.xlu0 %v7538, 64
  %v7779 = vpop.permute.xlu0 %7778
  %7780 = vrot.lane.b32.xlu0 %v7543, 64
  %v7781 = vpop.permute.xlu0 %7780
  %7782 = vrot.lane.b32.xlu0 %v7548, 64
  %v7783 = vpop.permute.xlu0 %7782
  %7784 = vrot.lane.b32.xlu0 %v7553, 64
  %v7785 = vpop.permute.xlu0 %7784
  %7786 = vrot.lane.b32.xlu0 %v7558, 64
  %v7787 = vpop.permute.xlu0 %7786
  %7788 = vrot.lane.b32.xlu0 %v7563, 64
  %v7789 = vpop.permute.xlu0 %7788
  %v7806 = vadd.f32 %v7726, %v7759
  %v7807 = vadd.f32 %v7727, %v7761
  %v7808 = vadd.f32 %v7728, %v7763
  %v7809 = vadd.f32 %v7729, %v7765
  %v7810 = vadd.f32 %v7730, %v7767
  %v7811 = vadd.f32 %v7731, %v7769
  %v7812 = vadd.f32 %v7732, %v7771
  %v7813 = vadd.f32 %v7733, %v7773
  %v7814 = vadd.f32 %v7734, %v7775
  %v7815 = vadd.f32 %v7735, %v7777
  %v7816 = vadd.f32 %v7736, %v7779
  %v7817 = vadd.f32 %v7737, %v7781
  %v7818 = vadd.f32 %v7738, %v7783
  %v7819 = vadd.f32 %v7739, %v7785
  %v7820 = vadd.f32 %v7740, %v7787
  %v7821 = vadd.f32 %v7741, %v7789
  %v7822 = vmax.f32 %v7806, 0.0
  %v7823 = vmax.f32 %v7807, 0.0
  %v7824 = vmax.f32 %v7808, 0.0
  %v7825 = vmax.f32 %v7809, 0.0
  %v7826 = vmax.f32 %v7810, 0.0
  %v7827 = vmax.f32 %v7811, 0.0
  %v7828 = vmax.f32 %v7812, 0.0
  %v7829 = vmax.f32 %v7813, 0.0
  %v7830 = vmax.f32 %v7814, 0.0
  %v7831 = vmax.f32 %v7815, 0.0
  %v7832 = vmax.f32 %v7816, 0.0
  %v7833 = vmax.f32 %v7817, 0.0
  %v7834 = vmax.f32 %v7818, 0.0
  %v7835 = vmax.f32 %v7819, 0.0
  %v7836 = vmax.f32 %v7820, 0.0
  %v7837 = vmax.f32 %v7821, 0.0
  %v7838 = vsel %vm3250, %v7822, 0.0
  %v7839 = vsel %vm3250, %v7830, 0.0
  %v7840 = vadd.f32 %v7838, %v7839
  %v7841 = vsel %vm3250, %v7823, 0.0
  %v7842 = vsel %vm3250, %v7831, 0.0
  %v7843 = vadd.f32 %v7841, %v7842
  %v7844 = vsel %vm3250, %v7824, 0.0
  %v7845 = vsel %vm3250, %v7832, 0.0
  %v7846 = vadd.f32 %v7844, %v7845
  %v7847 = vsel %vm3250, %v7825, 0.0
  %v7848 = vsel %vm3250, %v7833, 0.0
  %v7849 = vadd.f32 %v7847, %v7848
  %v7850 = vsel %vm3250, %v7826, 0.0
  %v7851 = vsel %vm3250, %v7834, 0.0
  %v7852 = vadd.f32 %v7850, %v7851
  %v7853 = vsel %vm3250, %v7827, 0.0
  %v7854 = vsel %vm3250, %v7835, 0.0
  %v7855 = vadd.f32 %v7853, %v7854
  %v7856 = vsel %vm3250, %v7828, 0.0
  %v7857 = vsel %vm3250, %v7836, 0.0
  %v7858 = vadd.f32 %v7856, %v7857
  %v7859 = vsel %vm3250, %v7829, 0.0
  %v7860 = vsel %vm3250, %v7837, 0.0
  %v7861 = vadd.f32 %v7859, %v7860
  %v7862 = vsel %vm3250, %v7840, 0.0
  %v7863 = vsel %vm3250, %v7846, 0.0
  %v7864 = vadd.f32 %v7862, %v7863
  %v7865 = vsel %vm3250, %v7852, 0.0
  %v7866 = vadd.f32 %v7864, %v7865
  %v7867 = vsel %vm3250, %v7858, 0.0
  %v7868 = vadd.f32 %v7866, %v7867
  %v7869 = vsel %vm3250, %v7843, 0.0
  %v7870 = vsel %vm3250, %v7849, 0.0
  %v7871 = vadd.f32 %v7869, %v7870
  %v7872 = vsel %vm3250, %v7855, 0.0
  %v7873 = vadd.f32 %v7871, %v7872
  %v7874 = vsel %vm3250, %v7861, 0.0
  %v7875 = vadd.f32 %v7873, %v7874
  %v7876 = vsel %vm3250, %v7868, 0.0
  %7877 = vadd.xlane.f32.xlu0 %v7876
  %v7878 = vpop.xlane.xlu0 %7877
  %v7879 = vsel %vm3250, %v7875, 0.0
  %7880 = vadd.xlane.f32.xlu0 %v7879
  %v7881 = vpop.xlane.xlu0 %7880
  %v7882 = vmul.f32 %v7878, 0.00390625
  %v7883 = vmul.f32 %v7881, 0.00390625
  %v7884 = vsub.f32 %v7822, %v7882
  %v7885 = vsub.f32 %v7823, %v7883
  %v7886 = vsub.f32 %v7824, %v7882
  %v7887 = vsub.f32 %v7825, %v7883
  %v7888 = vsub.f32 %v7826, %v7882
  %v7889 = vsub.f32 %v7827, %v7883
  %v7890 = vsub.f32 %v7828, %v7882
  %v7891 = vsub.f32 %v7829, %v7883
  %v7892 = vsub.f32 %v7830, %v7882
  %v7893 = vsub.f32 %v7831, %v7883
  %v7894 = vsub.f32 %v7832, %v7882
  %v7895 = vsub.f32 %v7833, %v7883
  %v7896 = vsub.f32 %v7834, %v7882
  %v7897 = vsub.f32 %v7835, %v7883
  %v7898 = vsub.f32 %v7836, %v7882
  %v7899 = vsub.f32 %v7837, %v7883
  %v7900 = vmul.f32 %v7884, %v7884
  %v7901 = vmul.f32 %v7885, %v7885
  %v7902 = vmul.f32 %v7886, %v7886
  %v7903 = vmul.f32 %v7887, %v7887
  %v7904 = vmul.f32 %v7888, %v7888
  %v7905 = vmul.f32 %v7889, %v7889
  %v7906 = vmul.f32 %v7890, %v7890
  %v7907 = vmul.f32 %v7891, %v7891
  %v7908 = vmul.f32 %v7892, %v7892
  %v7909 = vmul.f32 %v7893, %v7893
  %v7910 = vmul.f32 %v7894, %v7894
  %v7911 = vmul.f32 %v7895, %v7895
  %v7912 = vmul.f32 %v7896, %v7896
  %v7913 = vmul.f32 %v7897, %v7897
  %v7914 = vmul.f32 %v7898, %v7898
  %v7915 = vmul.f32 %v7899, %v7899
  %v7916 = vsel %vm3250, %v7900, 0.0
  %v7917 = vsel %vm3250, %v7908, 0.0
  %v7918 = vadd.f32 %v7916, %v7917
  %v7919 = vsel %vm3250, %v7901, 0.0
  %v7920 = vsel %vm3250, %v7909, 0.0
  %v7921 = vadd.f32 %v7919, %v7920
  %v7922 = vsel %vm3250, %v7902, 0.0
  %v7923 = vsel %vm3250, %v7910, 0.0
  %v7924 = vadd.f32 %v7922, %v7923
  %v7925 = vsel %vm3250, %v7903, 0.0
  %v7926 = vsel %vm3250, %v7911, 0.0
  %v7927 = vadd.f32 %v7925, %v7926
  %v7928 = vsel %vm3250, %v7904, 0.0
  %v7929 = vsel %vm3250, %v7912, 0.0
  %v7930 = vadd.f32 %v7928, %v7929
  %v7931 = vsel %vm3250, %v7905, 0.0
  %v7932 = vsel %vm3250, %v7913, 0.0
  %v7933 = vadd.f32 %v7931, %v7932
  %v7934 = vsel %vm3250, %v7906, 0.0
  %v7935 = vsel %vm3250, %v7914, 0.0
  %v7936 = vadd.f32 %v7934, %v7935
  %v7937 = vsel %vm3250, %v7907, 0.0
  %v7938 = vsel %vm3250, %v7915, 0.0
  %v7939 = vadd.f32 %v7937, %v7938
  %v7940 = vsel %vm3250, %v7918, 0.0
  %v7941 = vsel %vm3250, %v7924, 0.0
  %v7942 = vadd.f32 %v7940, %v7941
  %v7943 = vsel %vm3250, %v7930, 0.0
  %v7944 = vadd.f32 %v7942, %v7943
  %v7945 = vsel %vm3250, %v7936, 0.0
  %v7946 = vadd.f32 %v7944, %v7945
  %v7947 = vsel %vm3250, %v7921, 0.0
  %v7948 = vsel %vm3250, %v7927, 0.0
  %v7949 = vadd.f32 %v7947, %v7948
  %v7950 = vsel %vm3250, %v7933, 0.0
  %v7951 = vadd.f32 %v7949, %v7950
  %v7952 = vsel %vm3250, %v7939, 0.0
  %v7953 = vadd.f32 %v7951, %v7952
  %v7954 = vsel %vm3250, %v7946, 0.0
  %7955 = vadd.xlane.f32.xlu0 %v7954
  %v7956 = vpop.xlane.xlu0 %7955
  %v7957 = vsel %vm3250, %v7953, 0.0
  %7958 = vadd.xlane.f32.xlu0 %v7957
  %v7959 = vpop.xlane.xlu0 %7958
  %v7960 = vmul.f32 %v7956, 0.00390625
  %v7961 = vmul.f32 %v7959, 0.00390625
  %v7962 = vadd.f32 %v7960, 1e-05
  %v7963 = vadd.f32 %v7961, 1e-05
  %v7964 = vrsqrt.pop %v7962
  %v7965 = vrsqrt.pop %v7963
  %v7966 = vmul.f32 %v7884, %v7964
  %v7967 = vmul.f32 %v7885, %v7965
  %v7968 = vmul.f32 %v7886, %v7964
  %v7969 = vmul.f32 %v7887, %v7965
  %v7970 = vmul.f32 %v7888, %v7964
  %v7971 = vmul.f32 %v7889, %v7965
  %v7972 = vmul.f32 %v7890, %v7964
  %v7973 = vmul.f32 %v7891, %v7965
  %v7974 = vmul.f32 %v7892, %v7964
  %v7975 = vmul.f32 %v7893, %v7965
  %v7976 = vmul.f32 %v7894, %v7964
  %v7977 = vmul.f32 %v7895, %v7965
  %v7978 = vmul.f32 %v7896, %v7964
  %v7979 = vmul.f32 %v7897, %v7965
  %v7980 = vmul.f32 %v7898, %v7964
  %v7981 = vmul.f32 %v7899, %v7965
  %7986 = vrot.lane.b32.xlu0 %v7968, 32
  %v7987 = vpop.permute.xlu0 %7986
  %7988 = vrot.lane.b32.xlu0 %v7969, 32
  %v7989 = vpop.permute.xlu0 %7988
  %7990 = vrot.lane.b32.xlu0 %v7976, 32
  %v7991 = vpop.permute.xlu0 %7990
  %7992 = vrot.lane.b32.xlu0 %v7977, 32
  %v7993 = vpop.permute.xlu0 %7992
  %8002 = vrot.lane.b32.xlu0 %v7970, 64
  %v8003 = vpop.permute.xlu0 %8002
  %8004 = vrot.lane.b32.xlu0 %v7971, 64
  %v8005 = vpop.permute.xlu0 %8004
  %8006 = vrot.lane.b32.xlu0 %v7978, 64
  %v8007 = vpop.permute.xlu0 %8006
  %8008 = vrot.lane.b32.xlu0 %v7979, 64
  %v8009 = vpop.permute.xlu0 %8008
  %8018 = vrot.lane.b32.xlu0 %v7972, 96
  %v8019 = vpop.permute.xlu0 %8018
  %8020 = vrot.lane.b32.xlu0 %v7973, 96
  %v8021 = vpop.permute.xlu0 %8020
  %8022 = vrot.lane.b32.xlu0 %v7980, 96
  %v8023 = vpop.permute.xlu0 %8022
  %8024 = vrot.lane.b32.xlu0 %v7981, 96
  %v8025 = vpop.permute.xlu0 %8024
  %v8030 = vsel %vm3250, %v7966, %v7987
  %v8031 = vsel %vm3250, %v7967, %v7989
  %v8032 = vsel %vm3250, %v7974, %v7991
  %v8033 = vsel %vm3250, %v7975, %v7993
  %v8034 = vsel %vm1669, %v8030, %v8003
  %v8035 = vsel %vm1669, %v8031, %v8005
  %v8036 = vsel %vm1669, %v8032, %v8007
  %v8037 = vsel %vm1669, %v8033, %v8009
  %v8038 = vsel %vm3350, %v8034, %v8019
  %v8039 = vsel %vm3350, %v8035, %v8021
  %v8040 = vsel %vm3350, %v8036, %v8023
  %v8041 = vsel %vm3350, %v8037, %v8025
  %v8042 = vld [vmem:[%s15] sm:$0xff]
  %v8043 = vld [vmem:[%s15 + $0x8] sm:$0xff]
  %v8044 = vld [vmem:[%s15 + $0x10] sm:$0xff]
  %v8045 = vld [vmem:[%s15 + $0x18] sm:$0xff]
  %v8046 = vld [vmem:[%s15 + $0x20] sm:$0xff]
  %v8047 = vld [vmem:[%s15 + $0x28] sm:$0xff]
  %v8048 = vld [vmem:[%s15 + $0x30] sm:$0xff]
  %v8049 = vld [vmem:[%s15 + $0x38] sm:$0xff]
  %v8050 = vld [vmem:[%s15 + $0x40] sm:$0xff]
  %v8051 = vld [vmem:[%s15 + $0x48] sm:$0xff]
  %v8052 = vld [vmem:[%s15 + $0x50] sm:$0xff]
  %v8053 = vld [vmem:[%s15 + $0x58] sm:$0xff]
  %v8054 = vld [vmem:[%s15 + $0x60] sm:$0xff]
  %v8055 = vld [vmem:[%s15 + $0x68] sm:$0xff]
  %v8056 = vld [vmem:[%s15 + $0x70] sm:$0xff]
  %v8057 = vld [vmem:[%s15 + $0x78] sm:$0xff]
  %v8058 = vld [vmem:[%s16] sm:$0x1]
  %v8060 = vlaneseq
  %v8061 = vshrl.u32 %v8060, 7
  %v8062 = vsub.s32 0, %v8061
  %v8063 = vrot.slane %v8058, %v8062
  %8065 = vmatprep.subr.mxu0 0.0
  %8066 = vmatpush1.msra.mxu0 %v8042
  %8067 = vmatprep.subr.mxu0 0.0
  %8068 = vmatpush1.msra.mxu0 %v8043
  %8069 = vmatprep.subr.mxu0 0.0
  %8070 = vmatpush1.msra.mxu0 %v8044
  %8071 = vmatprep.subr.mxu0 0.0
  %8072 = vmatpush1.msra.mxu0 %v8045
  %8073 = vmatprep.subr.mxu0 0.0
  %8074 = vmatpush1.msra.mxu0 %v8046
  %8075 = vmatprep.subr.mxu0 0.0
  %8076 = vmatpush1.msra.mxu0 %v8047
  %8077 = vmatprep.subr.mxu0 0.0
  %8078 = vmatpush1.msra.mxu0 %v8048
  %8079 = vmatprep.subr.mxu0 0.0
  %8080 = vmatpush1.msra.mxu0 %v8049
  %8081 = vmatprep.subr.mxu0 0.0
  %8082 = vmatpush1.msra.mxu0 %v8050
  %8083 = vmatprep.subr.mxu0 0.0
  %8084 = vmatpush1.msra.mxu0 %v8051
  %8085 = vmatprep.subr.mxu0 0.0
  %8086 = vmatpush1.msra.mxu0 %v8052
  %8087 = vmatprep.subr.mxu0 0.0
  %8088 = vmatpush1.msra.mxu0 %v8053
  %8089 = vmatprep.subr.mxu0 0.0
  %8090 = vmatpush1.msra.mxu0 %v8054
  %8091 = vmatprep.subr.mxu0 0.0
  %8092 = vmatpush1.msra.mxu0 %v8055
  %8093 = vmatprep.subr.mxu0 0.0
  %8094 = vmatpush1.msra.mxu0 %v8056
  %8095 = vmatprep.subr.mxu0 0.0
  %8096 = vmatpush1.msra.mxu0 %v8057
  %8097 = vmatprep.subr.mxu0 0.0
  %8098 = vmatpush1.msra.mxu0 0.0
  %8099 = vmatprep.subr.mxu0 0.0
  %8100 = vmatpush1.msra.mxu0 0.0
  %8101 = vmatprep.subr.mxu0 0.0
  %8102 = vmatpush1.msra.mxu0 0.0
  %8103 = vmatprep.subr.mxu0 0.0
  %8104 = vmatpush1.msra.mxu0 0.0
  %8105 = vmatprep.subr.mxu0 0.0
  %8106 = vmatpush1.msra.mxu0 0.0
  %8107 = vmatprep.subr.mxu0 0.0
  %8108 = vmatpush1.msra.mxu0 0.0
  %8109 = vmatprep.subr.mxu0 0.0
  %8110 = vmatpush1.msra.mxu0 0.0
  %8111 = vmatprep.subr.mxu0 0.0
  %8112 = vmatpush1.msra.mxu0 0.0
  %8113 = vmatprep.subr.mxu0 0.0
  %8114 = vmatpush1.msra.mxu0 0.0
  %8115 = vmatprep.subr.mxu0 0.0
  %8116 = vmatpush1.msra.mxu0 0.0
  %8117 = vmatprep.subr.mxu0 0.0
  %8118 = vmatpush1.msra.mxu0 0.0
  %8119 = vmatprep.subr.mxu0 0.0
  %8120 = vmatpush1.msra.mxu0 0.0
  %8121 = vmatprep.subr.mxu0 0.0
  %8122 = vmatpush1.msra.mxu0 0.0
  %8123 = vmatprep.subr.mxu0 0.0
  %8124 = vmatpush1.msra.mxu0 0.0
  %8125 = vmatprep.subr.mxu0 0.0
  %8126 = vmatpush1.msra.mxu0 0.0
  %8127 = vmatprep.subr.mxu0 0.0
  %8128 = vmatpush1.msra.mxu0 0.0
  %8129 = vmatprep.mubr.f32.mxu0 0.0
  %8130 = vmatmul.mubr.f32.gmra.mrb[0].mxu0 %v8038
  %v8131 = vpop.f32.mrb[0].mxu0
  %v8132 = vadd.f32 %v8063, %v8131
  %v8133 = vpop.f32.mrb[0].mxu0
  %8134 = vmatprep.mubr.f32.mxu0 0.0
  %8135 = vmatmul.mubr.f32.gmra.mrb[0].mxu0 %v8039
  %v8136 = vpop.f32.mrb[0].mxu0
  %v8137 = vadd.f32 %v8063, %v8136
  %v8138 = vpop.f32.mrb[0].mxu0
  %8139 = vmatprep.mubr.f32.mxu0 0.0
  %8140 = vmatmul.mubr.f32.gmra.mrb[0].mxu0 %v8040
  %v8141 = vpop.f32.mrb[0].mxu0
  %v8142 = vadd.f32 %v8063, %v8141
  %v8143 = vpop.f32.mrb[0].mxu0
  %8144 = vmatprep.mubr.f32.mxu0 0.0
  %8145 = vmatmul.mubr.f32.gmra.mrb[0].mxu0 %v8041
  %v8146 = vpop.f32.mrb[0].mxu0
  %v8147 = vadd.f32 %v8063, %v8146
  %v8148 = vpop.f32.mrb[0].mxu0
  %8149 = vdwg.mxu0
  %8150 = vst [vmem:[%s17] sm:$0xff] %v8132
  %8151 = vst [vmem:[%s17 + $0x8] sm:$0xff] %v8137
  %8152 = vst [vmem:[%s17 + $0x10] sm:$0xff] %v8142
  %8153 = vst [vmem:[%s17 + $0x18] sm:$0xff] %v8147
  // Predicated region
  $region70: #{stgcn_forward.1} parent=0 // pred_check
    _
  $region71: #{stgcn_forward.1} parent=0 // pred_check_branch
    %8155 = sbr.rel (0) target = $region73
  $region72: #{stgcn_forward.1} parent=0 // pred_region
    _
  $region73: #{stgcn_forward.1} parent=0 // pred_fallthru
    _
  // Predicated region
  $region74: #{stgcn_forward.1} parent=0 // pred_check
    _
  $region75: #{stgcn_forward.1} parent=0 // pred_check_branch
    %8157 = sbr.rel (0) target = $region77
  $region76: #{stgcn_forward.1} parent=0 // pred_region
    _
  $region77: #{stgcn_forward.1} parent=0 // pred_fallthru
    _

</llo_original>
